<compile_context>
chip_gen: v7x
topology: tpu7x:2x2x1
jax: 0.10.0
libtpu: 0.0.40
codegen_flags: <defaults>
</compile_context>

<pallas_src>
import functools
import math

import numpy as np
import jax
import jax.numpy as jnp
from jax import lax
from jax.experimental import pallas as pl
from jax.experimental.pallas import tpu as pltpu

LANE = 128  # TPU lane width; channel dims are padded to a multiple of this.


def _round_up(n, m):
    return ((n + m - 1) // m) * m


def _vmem_limit(blocks, extra_bytes=0):
    """Scoped-VMEM budget from the per-step block footprint (double-buffered)."""
    est = extra_bytes
    for shape, dtype in blocks:
        est += math.prod(shape) * np.dtype(dtype).itemsize
    est = 2 * est + (8 << 20)                      # double-buffering + headroom
    return int(min(max(est, 32 << 20), 64 << 20))  # portable to v7x (64 MiB)


# ---------------------------------------------------------------------------
# Pallas kernel
# ---------------------------------------------------------------------------
def _conv3x3_bn_kernel(*args, stride, Ho, Wo, relu, short_mode):
    """Fused 3x3 conv (BN scale pre-folded into W) + shift
       (+ identity / fused-1x1-projection shortcut) (+ ReLU).

    One grid step = one image x one 128-wide block of output channels.
    Refs (in order): stride*stride input phases (1, Hp, Wp, Cin_p) bf16,
    weight (3, 3, Cin_p, bc) bf16, shift (1, bc) f32,
    [identity shortcut (1, Ho, Wo, bc) bf16 |
     proj: x_strided (1, Ho, Wo, Cin_p) bf16, w_sc (Cin_p, bc) bf16,
           shift_sc (1, bc) f32],
    output (1, Ho, Wo, bc).
    """
    nph = stride * stride
    idx = 0
    phases = args[idx:idx + nph]; idx += nph
    w_ref = args[idx]; idx += 1
    shift_ref = args[idx]; idx += 1
    short_ref = scx_ref = scw_ref = scshift_ref = None
    if short_mode == "identity":
        short_ref = args[idx]; idx += 1
    elif short_mode == "proj":
        scx_ref, scw_ref, scshift_ref = args[idx:idx + 3]; idx += 3
    o_ref = args[-1]

    cin = phases[0].shape[-1]
    bc = o_ref.shape[-1]
    m = Ho * Wo

    acc = jnp.zeros((m, bc), jnp.float32)
    for dy in range(3):
        for dx in range(3):
            ph = phases[(dy % stride) * stride + (dx % stride)]
            oy, ox = dy // stride, dx // stride
            patch = ph[0, oy:oy + Ho, ox:ox + Wo, :]          # (Ho, Wo, cin) bf16
            acc = acc + jnp.dot(patch.reshape(m, cin), w_ref[dy, dx],
                                preferred_element_type=jnp.float32)

    out = acc + shift_ref[...]
    if short_mode == "identity":
        out = out + short_ref[0].reshape(m, bc).astype(jnp.float32)
    elif short_mode == "proj":
        sc_cin = scx_ref.shape[-1]
        sc = jnp.dot(scx_ref[0].reshape(m, sc_cin), scw_ref[...],
                     preferred_element_type=jnp.float32)
        out = out + sc + scshift_ref[...]
    if relu:
        out = jnp.maximum(out, 0.0)
    o_ref[...] = out.reshape(1, Ho, Wo, bc).astype(o_ref.dtype)


# ---------------------------------------------------------------------------
# Wrappers (pallas_call plumbing) + plain-JAX glue
# ---------------------------------------------------------------------------
def _phase_split(xp, stride):
    """Split padded NHWC input into stride*stride phase grids so a strided conv
    becomes contiguous slices inside the kernel (1 HBM pass, no 9x im2col)."""
    if stride == 1:
        return [xp]
    _, hp, wp, _ = xp.shape
    pad_h = (-hp) % stride
    pad_w = (-wp) % stride
    if pad_h or pad_w:
        xp = jnp.pad(xp, ((0, 0), (0, pad_h), (0, pad_w), (0, 0)))
    return [xp[:, p::stride, q::stride, :]
            for p in range(stride) for q in range(stride)]


def conv3x3_bn(x, w, shift, *, stride, relu=True, shortcut=None, proj=None,
               out_dtype=jnp.bfloat16, block_cout=LANE):
    """y = [relu]( conv3x3_stride_s(x; W*bn_scale) + shift [+ shortcut] ).

    `shortcut`: identity residual tensor (N, Ho, Wo, Cout_p), added as-is.
    `proj`: (x_strided, w_sc, shift_sc) — the 1x1-conv + BN projection shortcut,
            computed inside this kernel (fused).
    """
    n, h, wd, cin = x.shape
    cout = w.shape[-1]
    assert cout % block_cout == 0 and cin % LANE == 0
    assert shortcut is None or proj is None
    ho = (h - 1) // stride + 1
    wo = (wd - 1) // stride + 1

    xp = jnp.pad(x, ((0, 0), (1, 1), (1, 1), (0, 0)))   # spatial padding = 1
    phases = _phase_split(xp, stride)

    grid = (n, cout // block_cout)

    in_specs = [pl.BlockSpec((1,) + ph.shape[1:], lambda i, co: (i, 0, 0, 0))
                for ph in phases]
    in_specs += [
        pl.BlockSpec((3, 3, cin, block_cout), lambda i, co: (0, 0, 0, co)),
        pl.BlockSpec((1, block_cout), lambda i, co: (0, co)),
    ]
    args = list(phases) + [w, shift]

    blocks = [((1,) + ph.shape[1:], ph.dtype) for ph in phases]
    blocks += [((3, 3, cin, block_cout), w.dtype),
               ((1, block_cout), jnp.float32),
               ((1, ho, wo, block_cout), out_dtype)]

    short_mode = None
    if shortcut is not None:
        short_mode = "identity"
        in_specs.append(pl.BlockSpec((1, ho, wo, block_cout),
                                     lambda i, co: (i, 0, 0, co)))
        args.append(shortcut)
        blocks.append(((1, ho, wo, block_cout), shortcut.dtype))
    elif proj is not None:
        short_mode = "proj"
        sc_x, sc_w, sc_shift = proj
        sc_cin = sc_x.shape[-1]
        assert sc_x.shape == (n, ho, wo, sc_cin) and sc_cin % LANE == 0
        in_specs += [
            pl.BlockSpec((1, ho, wo, sc_cin), lambda i, co: (i, 0, 0, 0)),
            pl.BlockSpec((sc_cin, block_cout), lambda i, co: (0, co)),
            pl.BlockSpec((1, block_cout), lambda i, co: (0, co)),
        ]
        args += [sc_x, sc_w, sc_shift]
        blocks += [((1, ho, wo, sc_cin), sc_x.dtype),
                   ((sc_cin, block_cout), sc_w.dtype),
                   ((1, block_cout), jnp.float32)]

    vmem = _vmem_limit(blocks, extra_bytes=ho * wo * block_cout * 4)  # f32 acc

    kernel = functools.partial(_conv3x3_bn_kernel, stride=stride, Ho=ho, Wo=wo,
                               relu=relu, short_mode=short_mode)

    return pl.pallas_call(
        kernel,
        out_shape=jax.ShapeDtypeStruct((n, ho, wo, cout), out_dtype),
        grid=grid,
        in_specs=in_specs,
        out_specs=pl.BlockSpec((1, ho, wo, block_cout),
                               lambda i, co: (i, 0, 0, co)),
        compiler_params=pltpu.CompilerParams(
            dimension_semantics=("parallel", "parallel"),
            vmem_limit_bytes=vmem),
    )(*args)


def _fold_bn_into_conv(w_oihw, bn, cin_p, cout_p, eps=1e-5):
    """torch (Cout, Cin, kh, kw) + eval-mode BN ->
       (kh, kw, Cin_p, Cout_p) bf16 weights with BN scale folded in,
       plus a (1, Cout_p) f32 shift."""
    gamma, beta, mean, var = bn
    scale = gamma / jnp.sqrt(var + eps)          # f32, per out-channel
    shift = beta - mean * scale
    cout, cin = w_oihw.shape[0], w_oihw.shape[1]
    w = jnp.transpose(w_oihw, (2, 3, 1, 0)) * scale      # fold scale in f32
    w = jnp.pad(w, ((0, 0), (0, 0), (0, cin_p - cin), (0, cout_p - cout)))
    shift = jnp.pad(shift, (0, cout_p - cout))
    return w.astype(jnp.bfloat16), shift.astype(jnp.float32).reshape(1, cout_p)


@functools.partial(jax.jit, static_argnames=("stride",))
def basic_block_forward(x_nchw, params, stride):
    # TODO(synk): a real network should carry NHWC end-to-end so these
    # NCHW<->NHWC transposes are hoisted out of the per-block hot path.
    x = jnp.transpose(x_nchw, (0, 2, 3, 1))          # NHWC
    _, _, _, cin = x.shape
    cout = params["conv1_w"].shape[0]
    cin_p = _round_up(cin, LANE)
    cout_p = _round_up(cout, LANE)

    x_p = jnp.pad(x, ((0, 0), (0, 0), (0, 0), (0, cin_p - cin))).astype(jnp.bfloat16)

    # conv1 -> bn1 -> relu (fused, BN scale folded into W)
    w1, b1 = _fold_bn_into_conv(params["conv1_w"], params["bn1"], cin_p, cout_p)
    out1 = conv3x3_bn(x_p, w1, b1, stride=stride, relu=True)

    # conv2 -> bn2 -> (+shortcut) -> relu (fused); final output in f32
    w2, b2 = _fold_bn_into_conv(params["conv2_w"], params["bn2"], cout_p, cout_p)

    if stride != 1:
        # 1x1/stride-s projection shortcut fused into the conv2 kernel:
        # one extra MXU matmul per grid step, no separate pallas_call / HBM pass.
        sc_x = x_p[:, ::stride, ::stride, :]
        w_sc, b_sc = _fold_bn_into_conv(params["sc_w"], params["bn_sc"],
                                        cin_p, cout_p)
        w_sc = w_sc.reshape(cin_p, cout_p)
        out = conv3x3_bn(out1, w2, b2, stride=1, relu=True,
                         proj=(sc_x, w_sc, b_sc), out_dtype=jnp.float32)
    else:
        # identity shortcut (in_planes == out_planes for stride==1)
        out = conv3x3_bn(out1, w2, b2, stride=1, relu=True, shortcut=x_p,
                         out_dtype=jnp.float32)

    return jnp.transpose(out[..., :cout], (0, 3, 1, 2))   # back to NCHW


def init_params(key, in_planes, stride):
    out_planes = in_planes * stride
    ks = jax.random.split(key, 8)

    def bn_init(k, c):
        k1, k2, k3, k4 = jax.random.split(k, 4)
        gamma = 1.0 + 0.1 * jax.random.normal(k1, (c,), jnp.float32)
        beta = 0.1 * jax.random.normal(k2, (c,), jnp.float32)
        mean = 0.1 * jax.random.normal(k3, (c,), jnp.float32)
        var = 1.0 + 0.1 * jnp.abs(jax.random.normal(k4, (c,), jnp.float32))
        return (gamma, beta, mean, var)

    params = {
        "conv1_w": 0.1 * jax.random.normal(ks[0], (out_planes, in_planes, 3, 3), jnp.float32),
        "bn1": bn_init(ks[1], out_planes),
        "conv2_w": 0.1 * jax.random.normal(ks[2], (out_planes, out_planes, 3, 3), jnp.float32),
        "bn2": bn_init(ks[3], out_planes),
    }
    if stride != 1:
        params["sc_w"] = 0.1 * jax.random.normal(ks[4], (out_planes, in_planes, 1, 1), jnp.float32)
        params["bn_sc"] = bn_init(ks[5], out_planes)
    return params


# ---------------------------------------------------------------------------
# Pure-JAX reference (lax conv, eval-mode BN) for correctness checking
# ---------------------------------------------------------------------------
def conv_ref(x, w, stride, padding):
    return lax.conv_general_dilated(
        x, w, (stride, stride), [(padding, padding)] * 2,
        dimension_numbers=("NCHW", "OIHW", "NCHW"))


def bn_ref(x, bn, eps=1e-5):
    gamma, beta, mean, var = (a[None, :, None, None] for a in bn)
    return (x - mean) / jnp.sqrt(var + eps) * gamma + beta


def basic_block_ref(x, params, stride):
    out = jax.nn.relu(bn_ref(conv_ref(x, params["conv1_w"], stride, 1), params["bn1"]))
    out = bn_ref(conv_ref(out, params["conv2_w"], 1, 1), params["bn2"])
    if stride != 1:
        short = bn_ref(conv_ref(x, params["sc_w"], stride, 0), params["bn_sc"])
    else:
        short = x
    return jax.nn.relu(out + short)


if __name__ == "__main__":
    key = jax.random.PRNGKey(0)
    kx, kp1, kp2 = jax.random.split(key, 3)
    x = jax.random.normal(kx, (2, 4, 16, 16), jnp.float32)  # NCHW, as in PyTorch

    # stride = 1 (identity shortcut)
    p1 = init_params(kp1, in_planes=4, stride=1)
    y1 = jax.block_until_ready(basic_block_forward(x, p1, stride=1))
    r1 = basic_block_ref(x, p1, stride=1)
    assert y1.shape == (2, 4, 16, 16)
    err1 = float(jnp.max(jnp.abs(y1 - r1)))
    assert jnp.allclose(y1, r1, atol=5e-2, rtol=5e-2), err1   # bf16 compute tolerance

    # stride = 2 (fused conv1x1 + BN projection shortcut path)
    p2 = init_params(kp2, in_planes=4, stride=2)
    y2 = jax.block_until_ready(basic_block_forward(x, p2, stride=2))
    r2 = basic_block_ref(x, p2, stride=2)
    assert y2.shape == (2, 8, 8, 8)
    err2 = float(jnp.max(jnp.abs(y2 - r2)))
    assert jnp.allclose(y2, r2, atol=5e-2, rtol=5e-2), err2

    print("KERNEL_OK")
</pallas_src>

<mosaic_0001>
module attributes {stable_mosaic.version = 11 : i64} {
  func.func @_conv3x3_bn_kernel(%arg0: i32, %arg1: i32, %arg2: memref<1x18x18x128xbf16, #tpu.memory_space<vmem>>, %arg3: memref<3x3x128x128xbf16, #tpu.memory_space<vmem>>, %arg4: memref<1x128xf32, #tpu.memory_space<vmem>>, %arg5: memref<1x16x16x128xbf16, #tpu.memory_space<vmem>>) attributes {dimension_semantics = [#tpu.dimension_semantics<parallel>, #tpu.dimension_semantics<parallel>], iteration_bounds = array<i64: 2, 1>, scalar_prefetch = 0 : i64, scratch_operands = 0 : i64, tpu.core_type = #tpu.core_type<tc>, window_params = [{transform_indices = @transform_0, window_bounds = array<i64: 1, 18, 18, 128>}, {transform_indices = @transform_1, window_bounds = array<i64: 3, 3, 128, 128>}, {transform_indices = @transform_2, window_bounds = array<i64: 1, 128>}, {transform_indices = @transform_3, window_bounds = array<i64: 1, 16, 16, 128>}]} {
    %cst = arith.constant 0.000000e+00 : f32
    %0 = vector.broadcast %cst : f32 to vector<256x128xf32>
    %c0 = arith.constant 0 : index
    %c0_0 = arith.constant 0 : index
    %c0_1 = arith.constant 0 : index
    %c0_2 = arith.constant 0 : index
    %1 = vector.load %arg2[%c0, %c0_0, %c0_1, %c0_2] : memref<1x18x18x128xbf16, #tpu.memory_space<vmem>>, vector<1x16x16x128xbf16>
    %2 = vector.shape_cast %1 : vector<1x16x16x128xbf16> to vector<16x16x128xbf16>
    %3 = vector.shape_cast %2 : vector<16x16x128xbf16> to vector<256x128xbf16>
    %c0_3 = arith.constant 0 : index
    %c0_4 = arith.constant 0 : index
    %c0_5 = arith.constant 0 : index
    %c0_6 = arith.constant 0 : index
    %4 = vector.load %arg3[%c0_3, %c0_4, %c0_5, %c0_6] : memref<3x3x128x128xbf16, #tpu.memory_space<vmem>>, vector<1x1x128x128xbf16>
    %5 = vector.shape_cast %4 : vector<1x1x128x128xbf16> to vector<128x128xbf16>
    %cst_7 = arith.constant dense<0.000000e+00> : vector<256x128xf32>
    %6 = tpu.matmul %3, %5, %cst_7 {dimension_numbers = #tpu.dot_dimension_numbers<[1], [0], [0], [1], [0, 0, 1, 1], [], []>} : vector<256x128xbf16>, vector<128x128xbf16>, vector<256x128xf32> -> vector<256x128xf32>
    %7 = arith.addf %0, %6 : vector<256x128xf32>
    %c0_8 = arith.constant 0 : index
    %c0_9 = arith.constant 0 : index
    %c1 = arith.constant 1 : index
    %c0_10 = arith.constant 0 : index
    %8 = vector.load %arg2[%c0_8, %c0_9, %c1, %c0_10] : memref<1x18x18x128xbf16, #tpu.memory_space<vmem>>, vector<1x16x16x128xbf16>
    %9 = vector.shape_cast %8 : vector<1x16x16x128xbf16> to vector<16x16x128xbf16>
    %10 = vector.shape_cast %9 : vector<16x16x128xbf16> to vector<256x128xbf16>
    %c0_11 = arith.constant 0 : index
    %c1_12 = arith.constant 1 : index
    %c0_13 = arith.constant 0 : index
    %c0_14 = arith.constant 0 : index
    %11 = vector.load %arg3[%c0_11, %c1_12, %c0_13, %c0_14] : memref<3x3x128x128xbf16, #tpu.memory_space<vmem>>, vector<1x1x128x128xbf16>
    %12 = vector.shape_cast %11 : vector<1x1x128x128xbf16> to vector<128x128xbf16>
    %cst_15 = arith.constant dense<0.000000e+00> : vector<256x128xf32>
    %13 = tpu.matmul %10, %12, %cst_15 {dimension_numbers = #tpu.dot_dimension_numbers<[1], [0], [0], [1], [0, 0, 1, 1], [], []>} : vector<256x128xbf16>, vector<128x128xbf16>, vector<256x128xf32> -> vector<256x128xf32>
    %14 = arith.addf %7, %13 : vector<256x128xf32>
    %c0_16 = arith.constant 0 : index
    %c0_17 = arith.constant 0 : index
    %c2 = arith.constant 2 : index
    %c0_18 = arith.constant 0 : index
    %15 = vector.load %arg2[%c0_16, %c0_17, %c2, %c0_18] : memref<1x18x18x128xbf16, #tpu.memory_space<vmem>>, vector<1x16x16x128xbf16>
    %16 = vector.shape_cast %15 : vector<1x16x16x128xbf16> to vector<16x16x128xbf16>
    %17 = vector.shape_cast %16 : vector<16x16x128xbf16> to vector<256x128xbf16>
    %c0_19 = arith.constant 0 : index
    %c2_20 = arith.constant 2 : index
    %c0_21 = arith.constant 0 : index
    %c0_22 = arith.constant 0 : index
    %18 = vector.load %arg3[%c0_19, %c2_20, %c0_21, %c0_22] : memref<3x3x128x128xbf16, #tpu.memory_space<vmem>>, vector<1x1x128x128xbf16>
    %19 = vector.shape_cast %18 : vector<1x1x128x128xbf16> to vector<128x128xbf16>
    %cst_23 = arith.constant dense<0.000000e+00> : vector<256x128xf32>
    %20 = tpu.matmul %17, %19, %cst_23 {dimension_numbers = #tpu.dot_dimension_numbers<[1], [0], [0], [1], [0, 0, 1, 1], [], []>} : vector<256x128xbf16>, vector<128x128xbf16>, vector<256x128xf32> -> vector<256x128xf32>
    %21 = arith.addf %14, %20 : vector<256x128xf32>
    %c0_24 = arith.constant 0 : index
    %c1_25 = arith.constant 1 : index
    %c0_26 = arith.constant 0 : index
    %c0_27 = arith.constant 0 : index
    %22 = vector.load %arg2[%c0_24, %c1_25, %c0_26, %c0_27] : memref<1x18x18x128xbf16, #tpu.memory_space<vmem>>, vector<1x16x16x128xbf16>
    %23 = vector.shape_cast %22 : vector<1x16x16x128xbf16> to vector<16x16x128xbf16>
    %24 = vector.shape_cast %23 : vector<16x16x128xbf16> to vector<256x128xbf16>
    %c1_28 = arith.constant 1 : index
    %c0_29 = arith.constant 0 : index
    %c0_30 = arith.constant 0 : index
    %c0_31 = arith.constant 0 : index
    %25 = vector.load %arg3[%c1_28, %c0_29, %c0_30, %c0_31] : memref<3x3x128x128xbf16, #tpu.memory_space<vmem>>, vector<1x1x128x128xbf16>
    %26 = vector.shape_cast %25 : vector<1x1x128x128xbf16> to vector<128x128xbf16>
    %cst_32 = arith.constant dense<0.000000e+00> : vector<256x128xf32>
    %27 = tpu.matmul %24, %26, %cst_32 {dimension_numbers = #tpu.dot_dimension_numbers<[1], [0], [0], [1], [0, 0, 1, 1], [], []>} : vector<256x128xbf16>, vector<128x128xbf16>, vector<256x128xf32> -> vector<256x128xf32>
    %28 = arith.addf %21, %27 : vector<256x128xf32>
    %c0_33 = arith.constant 0 : index
    %c1_34 = arith.constant 1 : index
    %c1_35 = arith.constant 1 : index
    %c0_36 = arith.constant 0 : index
    %29 = vector.load %arg2[%c0_33, %c1_34, %c1_35, %c0_36] : memref<1x18x18x128xbf16, #tpu.memory_space<vmem>>, vector<1x16x16x128xbf16>
    %30 = vector.shape_cast %29 : vector<1x16x16x128xbf16> to vector<16x16x128xbf16>
    %31 = vector.shape_cast %30 : vector<16x16x128xbf16> to vector<256x128xbf16>
    %c1_37 = arith.constant 1 : index
    %c1_38 = arith.constant 1 : index
    %c0_39 = arith.constant 0 : index
    %c0_40 = arith.constant 0 : index
    %32 = vector.load %arg3[%c1_37, %c1_38, %c0_39, %c0_40] : memref<3x3x128x128xbf16, #tpu.memory_space<vmem>>, vector<1x1x128x128xbf16>
    %33 = vector.shape_cast %32 : vector<1x1x128x128xbf16> to vector<128x128xbf16>
    %cst_41 = arith.constant dense<0.000000e+00> : vector<256x128xf32>
    %34 = tpu.matmul %31, %33, %cst_41 {dimension_numbers = #tpu.dot_dimension_numbers<[1], [0], [0], [1], [0, 0, 1, 1], [], []>} : vector<256x128xbf16>, vector<128x128xbf16>, vector<256x128xf32> -> vector<256x128xf32>
    %35 = arith.addf %28, %34 : vector<256x128xf32>
    %c0_42 = arith.constant 0 : index
    %c1_43 = arith.constant 1 : index
    %c2_44 = arith.constant 2 : index
    %c0_45 = arith.constant 0 : index
    %36 = vector.load %arg2[%c0_42, %c1_43, %c2_44, %c0_45] : memref<1x18x18x128xbf16, #tpu.memory_space<vmem>>, vector<1x16x16x128xbf16>
    %37 = vector.shape_cast %36 : vector<1x16x16x128xbf16> to vector<16x16x128xbf16>
    %38 = vector.shape_cast %37 : vector<16x16x128xbf16> to vector<256x128xbf16>
    %c1_46 = arith.constant 1 : index
    %c2_47 = arith.constant 2 : index
    %c0_48 = arith.constant 0 : index
    %c0_49 = arith.constant 0 : index
    %39 = vector.load %arg3[%c1_46, %c2_47, %c0_48, %c0_49] : memref<3x3x128x128xbf16, #tpu.memory_space<vmem>>, vector<1x1x128x128xbf16>
    %40 = vector.shape_cast %39 : vector<1x1x128x128xbf16> to vector<128x128xbf16>
    %cst_50 = arith.constant dense<0.000000e+00> : vector<256x128xf32>
    %41 = tpu.matmul %38, %40, %cst_50 {dimension_numbers = #tpu.dot_dimension_numbers<[1], [0], [0], [1], [0, 0, 1, 1], [], []>} : vector<256x128xbf16>, vector<128x128xbf16>, vector<256x128xf32> -> vector<256x128xf32>
    %42 = arith.addf %35, %41 : vector<256x128xf32>
    %c0_51 = arith.constant 0 : index
    %c2_52 = arith.constant 2 : index
    %c0_53 = arith.constant 0 : index
    %c0_54 = arith.constant 0 : index
    %43 = vector.load %arg2[%c0_51, %c2_52, %c0_53, %c0_54] : memref<1x18x18x128xbf16, #tpu.memory_space<vmem>>, vector<1x16x16x128xbf16>
    %44 = vector.shape_cast %43 : vector<1x16x16x128xbf16> to vector<16x16x128xbf16>
    %45 = vector.shape_cast %44 : vector<16x16x128xbf16> to vector<256x128xbf16>
    %c2_55 = arith.constant 2 : index
    %c0_56 = arith.constant 0 : index
    %c0_57 = arith.constant 0 : index
    %c0_58 = arith.constant 0 : index
    %46 = vector.load %arg3[%c2_55, %c0_56, %c0_57, %c0_58] : memref<3x3x128x128xbf16, #tpu.memory_space<vmem>>, vector<1x1x128x128xbf16>
    %47 = vector.shape_cast %46 : vector<1x1x128x128xbf16> to vector<128x128xbf16>
    %cst_59 = arith.constant dense<0.000000e+00> : vector<256x128xf32>
    %48 = tpu.matmul %45, %47, %cst_59 {dimension_numbers = #tpu.dot_dimension_numbers<[1], [0], [0], [1], [0, 0, 1, 1], [], []>} : vector<256x128xbf16>, vector<128x128xbf16>, vector<256x128xf32> -> vector<256x128xf32>
    %49 = arith.addf %42, %48 : vector<256x128xf32>
    %c0_60 = arith.constant 0 : index
    %c2_61 = arith.constant 2 : index
    %c1_62 = arith.constant 1 : index
    %c0_63 = arith.constant 0 : index
    %50 = vector.load %arg2[%c0_60, %c2_61, %c1_62, %c0_63] : memref<1x18x18x128xbf16, #tpu.memory_space<vmem>>, vector<1x16x16x128xbf16>
    %51 = vector.shape_cast %50 : vector<1x16x16x128xbf16> to vector<16x16x128xbf16>
    %52 = vector.shape_cast %51 : vector<16x16x128xbf16> to vector<256x128xbf16>
    %c2_64 = arith.constant 2 : index
    %c1_65 = arith.constant 1 : index
    %c0_66 = arith.constant 0 : index
    %c0_67 = arith.constant 0 : index
    %53 = vector.load %arg3[%c2_64, %c1_65, %c0_66, %c0_67] : memref<3x3x128x128xbf16, #tpu.memory_space<vmem>>, vector<1x1x128x128xbf16>
    %54 = vector.shape_cast %53 : vector<1x1x128x128xbf16> to vector<128x128xbf16>
    %cst_68 = arith.constant dense<0.000000e+00> : vector<256x128xf32>
    %55 = tpu.matmul %52, %54, %cst_68 {dimension_numbers = #tpu.dot_dimension_numbers<[1], [0], [0], [1], [0, 0, 1, 1], [], []>} : vector<256x128xbf16>, vector<128x128xbf16>, vector<256x128xf32> -> vector<256x128xf32>
    %56 = arith.addf %49, %55 : vector<256x128xf32>
    %c0_69 = arith.constant 0 : index
    %c2_70 = arith.constant 2 : index
    %c2_71 = arith.constant 2 : index
    %c0_72 = arith.constant 0 : index
    %57 = vector.load %arg2[%c0_69, %c2_70, %c2_71, %c0_72] : memref<1x18x18x128xbf16, #tpu.memory_space<vmem>>, vector<1x16x16x128xbf16>
    %58 = vector.shape_cast %57 : vector<1x16x16x128xbf16> to vector<16x16x128xbf16>
    %59 = vector.shape_cast %58 : vector<16x16x128xbf16> to vector<256x128xbf16>
    %c2_73 = arith.constant 2 : index
    %c2_74 = arith.constant 2 : index
    %c0_75 = arith.constant 0 : index
    %c0_76 = arith.constant 0 : index
    %60 = vector.load %arg3[%c2_73, %c2_74, %c0_75, %c0_76] : memref<3x3x128x128xbf16, #tpu.memory_space<vmem>>, vector<1x1x128x128xbf16>
    %61 = vector.shape_cast %60 : vector<1x1x128x128xbf16> to vector<128x128xbf16>
    %cst_77 = arith.constant dense<0.000000e+00> : vector<256x128xf32>
    %62 = tpu.matmul %59, %61, %cst_77 {dimension_numbers = #tpu.dot_dimension_numbers<[1], [0], [0], [1], [0, 0, 1, 1], [], []>} : vector<256x128xbf16>, vector<128x128xbf16>, vector<256x128xf32> -> vector<256x128xf32>
    %63 = arith.addf %56, %62 : vector<256x128xf32>
    %c0_78 = arith.constant 0 : index
    %c0_79 = arith.constant 0 : index
    %64 = vector.load %arg4[%c0_78, %c0_79] : memref<1x128xf32, #tpu.memory_space<vmem>>, vector<1x128xf32>
    %65 = vector.broadcast %64 : vector<1x128xf32> to vector<256x128xf32>
    %66 = arith.addf %63, %65 : vector<256x128xf32>
    %cst_80 = arith.constant 0.000000e+00 : f32
    %67 = vector.broadcast %cst_80 : f32 to vector<256x128xf32>
    %68 = arith.maximumf %66, %67 : vector<256x128xf32>
    %69 = vector.shape_cast %68 : vector<256x128xf32> to vector<1x16x16x128xf32>
    %70 = arith.truncf %69 : vector<1x16x16x128xf32> to vector<1x16x16x128xbf16>
    %c0_81 = arith.constant 0 : index
    %c0_82 = arith.constant 0 : index
    %c0_83 = arith.constant 0 : index
    %c0_84 = arith.constant 0 : index
    %71 = vector.load %arg5[%c0_81, %c0_82, %c0_83, %c0_84] : memref<1x16x16x128xbf16, #tpu.memory_space<vmem>>, vector<1x16x16x128xbf16>
    tpu.vector_store %arg5[%c0_81, %c0_82, %c0_83, %c0_84], %70 {strides = array<i32>} : memref<1x16x16x128xbf16, #tpu.memory_space<vmem>>, vector<1x16x16x128xbf16>,
    return
  }
  func.func @transform_0(%arg0: i32, %arg1: i32) -> (i32, i32, i32, i32) {
    %c0_i32 = arith.constant 0 : i32
    %c0_i32_0 = arith.constant 0 : i32
    %c0_i32_1 = arith.constant 0 : i32
    %c0_i32_2 = arith.constant 0 : i32
    return %arg0, %c0_i32, %c0_i32_0, %c0_i32_1 : i32, i32, i32, i32
  }
  func.func @transform_1(%arg0: i32, %arg1: i32) -> (i32, i32, i32, i32) {
    %c0_i32 = arith.constant 0 : i32
    %c0_i32_0 = arith.constant 0 : i32
    %c0_i32_1 = arith.constant 0 : i32
    %c0_i32_2 = arith.constant 0 : i32
    return %c0_i32, %c0_i32_0, %c0_i32_1, %arg1 : i32, i32, i32, i32
  }
  func.func @transform_2(%arg0: i32, %arg1: i32) -> (i32, i32) {
    %c0_i32 = arith.constant 0 : i32
    %c0_i32_0 = arith.constant 0 : i32
    return %c0_i32, %arg1 : i32, i32
  }
  func.func @transform_3(%arg0: i32, %arg1: i32) -> (i32, i32, i32, i32) {
    %c0_i32 = arith.constant 0 : i32
    %c0_i32_0 = arith.constant 0 : i32
    %c0_i32_1 = arith.constant 0 : i32
    return %arg0, %c0_i32, %c0_i32_0, %arg1 : i32, i32, i32, i32
  }
}

module attributes {stable_mosaic.version = 11 : i64} {
  func.func @_conv3x3_bn_kernel(%arg0: i32, %arg1: i32, %arg2: memref<1x18x18x128xbf16, #tpu.memory_space<vmem>>, %arg3: memref<3x3x128x128xbf16, #tpu.memory_space<vmem>>, %arg4: memref<1x128xf32, #tpu.memory_space<vmem>>, %arg5: memref<1x16x16x128xbf16, #tpu.memory_space<vmem>>, %arg6: memref<1x16x16x128xf32, #tpu.memory_space<vmem>>) attributes {dimension_semantics = [#tpu.dimension_semantics<parallel>, #tpu.dimension_semantics<parallel>], iteration_bounds = array<i64: 2, 1>, scalar_prefetch = 0 : i64, scratch_operands = 0 : i64, tpu.core_type = #tpu.core_type<tc>, window_params = [{transform_indices = @transform_0, window_bounds = array<i64: 1, 18, 18, 128>}, {transform_indices = @transform_1, window_bounds = array<i64: 3, 3, 128, 128>}, {transform_indices = @transform_2, window_bounds = array<i64: 1, 128>}, {transform_indices = @transform_3, window_bounds = array<i64: 1, 16, 16, 128>}, {transform_indices = @transform_4, window_bounds = array<i64: 1, 16, 16, 128>}]} {
    %cst = arith.constant 0.000000e+00 : f32
    %0 = vector.broadcast %cst : f32 to vector<256x128xf32>
    %c0 = arith.constant 0 : index
    %c0_0 = arith.constant 0 : index
    %c0_1 = arith.constant 0 : index
    %c0_2 = arith.constant 0 : index
    %1 = vector.load %arg2[%c0, %c0_0, %c0_1, %c0_2] : memref<1x18x18x128xbf16, #tpu.memory_space<vmem>>, vector<1x16x16x128xbf16>
    %2 = vector.shape_cast %1 : vector<1x16x16x128xbf16> to vector<16x16x128xbf16>
    %3 = vector.shape_cast %2 : vector<16x16x128xbf16> to vector<256x128xbf16>
    %c0_3 = arith.constant 0 : index
    %c0_4 = arith.constant 0 : index
    %c0_5 = arith.constant 0 : index
    %c0_6 = arith.constant 0 : index
    %4 = vector.load %arg3[%c0_3, %c0_4, %c0_5, %c0_6] : memref<3x3x128x128xbf16, #tpu.memory_space<vmem>>, vector<1x1x128x128xbf16>
    %5 = vector.shape_cast %4 : vector<1x1x128x128xbf16> to vector<128x128xbf16>
    %cst_7 = arith.constant dense<0.000000e+00> : vector<256x128xf32>
    %6 = tpu.matmul %3, %5, %cst_7 {dimension_numbers = #tpu.dot_dimension_numbers<[1], [0], [0], [1], [0, 0, 1, 1], [], []>} : vector<256x128xbf16>, vector<128x128xbf16>, vector<256x128xf32> -> vector<256x128xf32>
    %7 = arith.addf %0, %6 : vector<256x128xf32>
    %c0_8 = arith.constant 0 : index
    %c0_9 = arith.constant 0 : index
    %c1 = arith.constant 1 : index
    %c0_10 = arith.constant 0 : index
    %8 = vector.load %arg2[%c0_8, %c0_9, %c1, %c0_10] : memref<1x18x18x128xbf16, #tpu.memory_space<vmem>>, vector<1x16x16x128xbf16>
    %9 = vector.shape_cast %8 : vector<1x16x16x128xbf16> to vector<16x16x128xbf16>
    %10 = vector.shape_cast %9 : vector<16x16x128xbf16> to vector<256x128xbf16>
    %c0_11 = arith.constant 0 : index
    %c1_12 = arith.constant 1 : index
    %c0_13 = arith.constant 0 : index
    %c0_14 = arith.constant 0 : index
    %11 = vector.load %arg3[%c0_11, %c1_12, %c0_13, %c0_14] : memref<3x3x128x128xbf16, #tpu.memory_space<vmem>>, vector<1x1x128x128xbf16>
    %12 = vector.shape_cast %11 : vector<1x1x128x128xbf16> to vector<128x128xbf16>
    %cst_15 = arith.constant dense<0.000000e+00> : vector<256x128xf32>
    %13 = tpu.matmul %10, %12, %cst_15 {dimension_numbers = #tpu.dot_dimension_numbers<[1], [0], [0], [1], [0, 0, 1, 1], [], []>} : vector<256x128xbf16>, vector<128x128xbf16>, vector<256x128xf32> -> vector<256x128xf32>
    %14 = arith.addf %7, %13 : vector<256x128xf32>
    %c0_16 = arith.constant 0 : index
    %c0_17 = arith.constant 0 : index
    %c2 = arith.constant 2 : index
    %c0_18 = arith.constant 0 : index
    %15 = vector.load %arg2[%c0_16, %c0_17, %c2, %c0_18] : memref<1x18x18x128xbf16, #tpu.memory_space<vmem>>, vector<1x16x16x128xbf16>
    %16 = vector.shape_cast %15 : vector<1x16x16x128xbf16> to vector<16x16x128xbf16>
    %17 = vector.shape_cast %16 : vector<16x16x128xbf16> to vector<256x128xbf16>
    %c0_19 = arith.constant 0 : index
    %c2_20 = arith.constant 2 : index
    %c0_21 = arith.constant 0 : index
    %c0_22 = arith.constant 0 : index
    %18 = vector.load %arg3[%c0_19, %c2_20, %c0_21, %c0_22] : memref<3x3x128x128xbf16, #tpu.memory_space<vmem>>, vector<1x1x128x128xbf16>
    %19 = vector.shape_cast %18 : vector<1x1x128x128xbf16> to vector<128x128xbf16>
    %cst_23 = arith.constant dense<0.000000e+00> : vector<256x128xf32>
    %20 = tpu.matmul %17, %19, %cst_23 {dimension_numbers = #tpu.dot_dimension_numbers<[1], [0], [0], [1], [0, 0, 1, 1], [], []>} : vector<256x128xbf16>, vector<128x128xbf16>, vector<256x128xf32> -> vector<256x128xf32>
    %21 = arith.addf %14, %20 : vector<256x128xf32>
    %c0_24 = arith.constant 0 : index
    %c1_25 = arith.constant 1 : index
    %c0_26 = arith.constant 0 : index
    %c0_27 = arith.constant 0 : index
    %22 = vector.load %arg2[%c0_24, %c1_25, %c0_26, %c0_27] : memref<1x18x18x128xbf16, #tpu.memory_space<vmem>>, vector<1x16x16x128xbf16>
    %23 = vector.shape_cast %22 : vector<1x16x16x128xbf16> to vector<16x16x128xbf16>
    %24 = vector.shape_cast %23 : vector<16x16x128xbf16> to vector<256x128xbf16>
    %c1_28 = arith.constant 1 : index
    %c0_29 = arith.constant 0 : index
    %c0_30 = arith.constant 0 : index
    %c0_31 = arith.constant 0 : index
    %25 = vector.load %arg3[%c1_28, %c0_29, %c0_30, %c0_31] : memref<3x3x128x128xbf16, #tpu.memory_space<vmem>>, vector<1x1x128x128xbf16>
    %26 = vector.shape_cast %25 : vector<1x1x128x128xbf16> to vector<128x128xbf16>
    %cst_32 = arith.constant dense<0.000000e+00> : vector<256x128xf32>
    %27 = tpu.matmul %24, %26, %cst_32 {dimension_numbers = #tpu.dot_dimension_numbers<[1], [0], [0], [1], [0, 0, 1, 1], [], []>} : vector<256x128xbf16>, vector<128x128xbf16>, vector<256x128xf32> -> vector<256x128xf32>
    %28 = arith.addf %21, %27 : vector<256x128xf32>
    %c0_33 = arith.constant 0 : index
    %c1_34 = arith.constant 1 : index
    %c1_35 = arith.constant 1 : index
    %c0_36 = arith.constant 0 : index
    %29 = vector.load %arg2[%c0_33, %c1_34, %c1_35, %c0_36] : memref<1x18x18x128xbf16, #tpu.memory_space<vmem>>, vector<1x16x16x128xbf16>
    %30 = vector.shape_cast %29 : vector<1x16x16x128xbf16> to vector<16x16x128xbf16>
    %31 = vector.shape_cast %30 : vector<16x16x128xbf16> to vector<256x128xbf16>
    %c1_37 = arith.constant 1 : index
    %c1_38 = arith.constant 1 : index
    %c0_39 = arith.constant 0 : index
    %c0_40 = arith.constant 0 : index
    %32 = vector.load %arg3[%c1_37, %c1_38, %c0_39, %c0_40] : memref<3x3x128x128xbf16, #tpu.memory_space<vmem>>, vector<1x1x128x128xbf16>
    %33 = vector.shape_cast %32 : vector<1x1x128x128xbf16> to vector<128x128xbf16>
    %cst_41 = arith.constant dense<0.000000e+00> : vector<256x128xf32>
    %34 = tpu.matmul %31, %33, %cst_41 {dimension_numbers = #tpu.dot_dimension_numbers<[1], [0], [0], [1], [0, 0, 1, 1], [], []>} : vector<256x128xbf16>, vector<128x128xbf16>, vector<256x128xf32> -> vector<256x128xf32>
    %35 = arith.addf %28, %34 : vector<256x128xf32>
    %c0_42 = arith.constant 0 : index
    %c1_43 = arith.constant 1 : index
    %c2_44 = arith.constant 2 : index
    %c0_45 = arith.constant 0 : index
    %36 = vector.load %arg2[%c0_42, %c1_43, %c2_44, %c0_45] : memref<1x18x18x128xbf16, #tpu.memory_space<vmem>>, vector<1x16x16x128xbf16>
    %37 = vector.shape_cast %36 : vector<1x16x16x128xbf16> to vector<16x16x128xbf16>
    %38 = vector.shape_cast %37 : vector<16x16x128xbf16> to vector<256x128xbf16>
    %c1_46 = arith.constant 1 : index
    %c2_47 = arith.constant 2 : index
    %c0_48 = arith.constant 0 : index
    %c0_49 = arith.constant 0 : index
    %39 = vector.load %arg3[%c1_46, %c2_47, %c0_48, %c0_49] : memref<3x3x128x128xbf16, #tpu.memory_space<vmem>>, vector<1x1x128x128xbf16>
    %40 = vector.shape_cast %39 : vector<1x1x128x128xbf16> to vector<128x128xbf16>
    %cst_50 = arith.constant dense<0.000000e+00> : vector<256x128xf32>
    %41 = tpu.matmul %38, %40, %cst_50 {dimension_numbers = #tpu.dot_dimension_numbers<[1], [0], [0], [1], [0, 0, 1, 1], [], []>} : vector<256x128xbf16>, vector<128x128xbf16>, vector<256x128xf32> -> vector<256x128xf32>
    %42 = arith.addf %35, %41 : vector<256x128xf32>
    %c0_51 = arith.constant 0 : index
    %c2_52 = arith.constant 2 : index
    %c0_53 = arith.constant 0 : index
    %c0_54 = arith.constant 0 : index
    %43 = vector.load %arg2[%c0_51, %c2_52, %c0_53, %c0_54] : memref<1x18x18x128xbf16, #tpu.memory_space<vmem>>, vector<1x16x16x128xbf16>
    %44 = vector.shape_cast %43 : vector<1x16x16x128xbf16> to vector<16x16x128xbf16>
    %45 = vector.shape_cast %44 : vector<16x16x128xbf16> to vector<256x128xbf16>
    %c2_55 = arith.constant 2 : index
    %c0_56 = arith.constant 0 : index
    %c0_57 = arith.constant 0 : index
    %c0_58 = arith.constant 0 : index
    %46 = vector.load %arg3[%c2_55, %c0_56, %c0_57, %c0_58] : memref<3x3x128x128xbf16, #tpu.memory_space<vmem>>, vector<1x1x128x128xbf16>
    %47 = vector.shape_cast %46 : vector<1x1x128x128xbf16> to vector<128x128xbf16>
    %cst_59 = arith.constant dense<0.000000e+00> : vector<256x128xf32>
    %48 = tpu.matmul %45, %47, %cst_59 {dimension_numbers = #tpu.dot_dimension_numbers<[1], [0], [0], [1], [0, 0, 1, 1], [], []>} : vector<256x128xbf16>, vector<128x128xbf16>, vector<256x128xf32> -> vector<256x128xf32>
    %49 = arith.addf %42, %48 : vector<256x128xf32>
    %c0_60 = arith.constant 0 : index
    %c2_61 = arith.constant 2 : index
    %c1_62 = arith.constant 1 : index
    %c0_63 = arith.constant 0 : index
    %50 = vector.load %arg2[%c0_60, %c2_61, %c1_62, %c0_63] : memref<1x18x18x128xbf16, #tpu.memory_space<vmem>>, vector<1x16x16x128xbf16>
    %51 = vector.shape_cast %50 : vector<1x16x16x128xbf16> to vector<16x16x128xbf16>
    %52 = vector.shape_cast %51 : vector<16x16x128xbf16> to vector<256x128xbf16>
    %c2_64 = arith.constant 2 : index
    %c1_65 = arith.constant 1 : index
    %c0_66 = arith.constant 0 : index
    %c0_67 = arith.constant 0 : index
    %53 = vector.load %arg3[%c2_64, %c1_65, %c0_66, %c0_67] : memref<3x3x128x128xbf16, #tpu.memory_space<vmem>>, vector<1x1x128x128xbf16>
    %54 = vector.shape_cast %53 : vector<1x1x128x128xbf16> to vector<128x128xbf16>
    %cst_68 = arith.constant dense<0.000000e+00> : vector<256x128xf32>
    %55 = tpu.matmul %52, %54, %cst_68 {dimension_numbers = #tpu.dot_dimension_numbers<[1], [0], [0], [1], [0, 0, 1, 1], [], []>} : vector<256x128xbf16>, vector<128x128xbf16>, vector<256x128xf32> -> vector<256x128xf32>
    %56 = arith.addf %49, %55 : vector<256x128xf32>
    %c0_69 = arith.constant 0 : index
    %c2_70 = arith.constant 2 : index
    %c2_71 = arith.constant 2 : index
    %c0_72 = arith.constant 0 : index
    %57 = vector.load %arg2[%c0_69, %c2_70, %c2_71, %c0_72] : memref<1x18x18x128xbf16, #tpu.memory_space<vmem>>, vector<1x16x16x128xbf16>
    %58 = vector.shape_cast %57 : vector<1x16x16x128xbf16> to vector<16x16x128xbf16>
    %59 = vector.shape_cast %58 : vector<16x16x128xbf16> to vector<256x128xbf16>
    %c2_73 = arith.constant 2 : index
    %c2_74 = arith.constant 2 : index
    %c0_75 = arith.constant 0 : index
    %c0_76 = arith.constant 0 : index
    %60 = vector.load %arg3[%c2_73, %c2_74, %c0_75, %c0_76] : memref<3x3x128x128xbf16, #tpu.memory_space<vmem>>, vector<1x1x128x128xbf16>
    %61 = vector.shape_cast %60 : vector<1x1x128x128xbf16> to vector<128x128xbf16>
    %cst_77 = arith.constant dense<0.000000e+00> : vector<256x128xf32>
    %62 = tpu.matmul %59, %61, %cst_77 {dimension_numbers = #tpu.dot_dimension_numbers<[1], [0], [0], [1], [0, 0, 1, 1], [], []>} : vector<256x128xbf16>, vector<128x128xbf16>, vector<256x128xf32> -> vector<256x128xf32>
    %63 = arith.addf %56, %62 : vector<256x128xf32>
    %c0_78 = arith.constant 0 : index
    %c0_79 = arith.constant 0 : index
    %64 = vector.load %arg4[%c0_78, %c0_79] : memref<1x128xf32, #tpu.memory_space<vmem>>, vector<1x128xf32>
    %65 = vector.broadcast %64 : vector<1x128xf32> to vector<256x128xf32>
    %66 = arith.addf %63, %65 : vector<256x128xf32>
    %c0_80 = arith.constant 0 : index
    %c0_81 = arith.constant 0 : index
    %c0_82 = arith.constant 0 : index
    %c0_83 = arith.constant 0 : index
    %67 = vector.load %arg5[%c0_80, %c0_81, %c0_82, %c0_83] : memref<1x16x16x128xbf16, #tpu.memory_space<vmem>>, vector<1x16x16x128xbf16>
    %68 = vector.shape_cast %67 : vector<1x16x16x128xbf16> to vector<16x16x128xbf16>
    %69 = vector.shape_cast %68 : vector<16x16x128xbf16> to vector<256x128xbf16>
    %70 = arith.extf %69 : vector<256x128xbf16> to vector<256x128xf32>
    %71 = arith.addf %66, %70 : vector<256x128xf32>
    %cst_84 = arith.constant 0.000000e+00 : f32
    %72 = vector.broadcast %cst_84 : f32 to vector<256x128xf32>
    %73 = arith.maximumf %71, %72 : vector<256x128xf32>
    %74 = vector.shape_cast %73 : vector<256x128xf32> to vector<1x16x16x128xf32>
    %c0_85 = arith.constant 0 : index
    %c0_86 = arith.constant 0 : index
    %c0_87 = arith.constant 0 : index
    %c0_88 = arith.constant 0 : index
    %75 = vector.load %arg6[%c0_85, %c0_86, %c0_87, %c0_88] : memref<1x16x16x128xf32, #tpu.memory_space<vmem>>, vector<1x16x16x128xf32>
    tpu.vector_store %arg6[%c0_85, %c0_86, %c0_87, %c0_88], %74 {strides = array<i32>} : memref<1x16x16x128xf32, #tpu.memory_space<vmem>>, vector<1x16x16x128xf32>,
    return
  }
  func.func @transform_0(%arg0: i32, %arg1: i32) -> (i32, i32, i32, i32) {
    %c0_i32 = arith.constant 0 : i32
    %c0_i32_0 = arith.constant 0 : i32
    %c0_i32_1 = arith.constant 0 : i32
    %c0_i32_2 = arith.constant 0 : i32
    return %arg0, %c0_i32, %c0_i32_0, %c0_i32_1 : i32, i32, i32, i32
  }
  func.func @transform_1(%arg0: i32, %arg1: i32) -> (i32, i32, i32, i32) {
    %c0_i32 = arith.constant 0 : i32
    %c0_i32_0 = arith.constant 0 : i32
    %c0_i32_1 = arith.constant 0 : i32
    %c0_i32_2 = arith.constant 0 : i32
    return %c0_i32, %c0_i32_0, %c0_i32_1, %arg1 : i32, i32, i32, i32
  }
  func.func @transform_2(%arg0: i32, %arg1: i32) -> (i32, i32) {
    %c0_i32 = arith.constant 0 : i32
    %c0_i32_0 = arith.constant 0 : i32
    return %c0_i32, %arg1 : i32, i32
  }
  func.func @transform_3(%arg0: i32, %arg1: i32) -> (i32, i32, i32, i32) {
    %c0_i32 = arith.constant 0 : i32
    %c0_i32_0 = arith.constant 0 : i32
    %c0_i32_1 = arith.constant 0 : i32
    return %arg0, %c0_i32, %c0_i32_0, %arg1 : i32, i32, i32, i32
  }
  func.func @transform_4(%arg0: i32, %arg1: i32) -> (i32, i32, i32, i32) {
    %c0_i32 = arith.constant 0 : i32
    %c0_i32_0 = arith.constant 0 : i32
    %c0_i32_1 = arith.constant 0 : i32
    return %arg0, %c0_i32, %c0_i32_0, %arg1 : i32, i32, i32, i32
  }
}

</mosaic_0001>

<llo_original>
// kernel: basic_block_forward.3
$region0: #{basic_block_forward.3}
  #allocation0 [shape = 'u32[]', space=smem, size = 0x4, offset = 0x4, fixed_abs, tag = 'smem constant byte address 0x4 - core index']
  #allocation1 [shape = 'u32[144,128]{1,0:T(1,128)}', space=vmem, size = 0x12000, scoped, tag = 'internal scratch']
  %s0 = inlined_call_operand.vmem [shape: bf16[2,18,18,128], index: 0, kind: input, shape index: {}]
  %s1 = inlined_call_operand.vmem [shape: bf16[3,3,128,128], index: 1, kind: input, shape index: {}]
  %s2 = inlined_call_operand.vmem [shape: f32[1,128], index: 2, kind: input, shape index: {}]
  %s3 = inlined_call_operand.vmem [shape: bf16[2,16,16,128], index: 3, kind: input, shape index: {}]
  %s4 = inlined_call_operand.vmem [shape: f32[2,16,16,128], index: 4, kind: output, shape index: {}]
  %s5 = sld [smem:[#allocation0]]
  $region49: #{basic_block_forward.3} parent=0
    _
  %s7 = ssub.s32 1, %s5
  %s8 = scalar_select 0, %s7, %s5
  loop: start=0, step=1, limit=4
  $region2: #{basic_block_forward.3} parent=0 // loop_pre_header
    _
  $region3: #{basic_block_forward.3} parent=0 // loop_header
    %s10 = sphi 0, %s14
    %p11 = scmp.ge.s32.totalorder %s10, 4
    %s17 = sphi 0, %s29
    %s18 = sphi 0, %s25
    %s19 = sphi 0, %s17
    %s20 = sphi 0, %s18
    %s21 = sphi 0, %s19
    %s22 = sphi 0, %s20
    %s32 = sphi 0, %s34
    %s35 = sphi 0, %s32
    %s36 = sphi 0, %s35
    %s52 = sphi 0, %s36
    %s58 = sphi 0, %s60
    %s61 = sphi 0, %s58
    %s62 = sphi 0, %s61
    %s78 = sphi 0, %s62
    %s84 = sphi 0, %s86
    %s87 = sphi 0, %s84
    %s88 = sphi 0, %s87
    %s104 = sphi 0, %s88
    %s112 = sphi 0, %s114
    %s115 = sphi 0, %s112
    %s116 = sphi 0, %s115
    %s132 = sphi 0, %s116
    %s140 = sphi 0, %s142
    %s143 = sphi 0, %s140
    %s144 = sphi 0, %s143
    %s160 = sphi 0, %s144
  $region4: #{basic_block_forward.3} parent=0 // loop_header_branch
    %13 = sbr.rel (%p11) target = $region8
  $region5: #{basic_block_forward.3} parent=0 // loop_body
    %s15 = ssub.s32 %s10, 1
    %s16 = ssub.s32 %s10, 2
    %s23 = sadd.s32 1, %s18
    %p24 = scmp.ge.s32.totalorder %s23, 1
    %s25 = scalar_select %p24, 0, %s23
    %s26 = sadd.s32 1, %s17
    %s27 = scalar_select %p24, %s26, %s17
    %p28 = scmp.ge.s32.totalorder %s27, 2
    %s29 = scalar_select %p28, 0, %s27
    %s30 = ssub.s32 %s17, %s29
    %p31 = scmp.eq.s32.totalorder %s30, 0
    %s33 = sadd.s32 %s32, 1
    %s34 = scalar_select %p31, %s32, %s33
    %p37 = pneg %p31
    %p38 = scmp.eq.s32.totalorder %s10, 1
    %p39 = por %p37, %p38
    %p40 = scmp.ne.s32.totalorder %s32, %s35
    %p41 = scmp.eq.s32.totalorder %s10, 0
    %p42 = por %p40, %p41
    %p43 = scmp.ne.s32.totalorder %s32, %s35
    %p44 = scmp.eq.s32.totalorder %s15, 1
    %p45 = por %p43, %p44
    %p46 = scmp.ne.s32.totalorder %s35, %s36
    %p47 = scmp.eq.s32.totalorder %s15, 0
    %p48 = por %p46, %p47
    %p49 = scmp.ne.s32.totalorder %s35, %s36
    %p50 = scmp.eq.s32.totalorder %s16, 1
    %p51 = por %p49, %p50
    %p53 = scmp.ne.s32.totalorder %s36, %s52
    %p54 = scmp.eq.s32.totalorder %s16, 0
    %p55 = por %p53, %p54
    %s56 = ssub.s32 %s18, %s25
    %p57 = scmp.eq.s32.totalorder %s56, 0
    %s59 = sadd.s32 %s58, 1
    %s60 = scalar_select %p57, %s58, %s59
    %p63 = pneg %p57
    %p64 = scmp.eq.s32.totalorder %s10, 1
    %p65 = por %p63, %p64
    %p66 = scmp.ne.s32.totalorder %s58, %s61
    %p67 = scmp.eq.s32.totalorder %s10, 0
    %p68 = por %p66, %p67
    %p69 = scmp.ne.s32.totalorder %s58, %s61
    %p70 = scmp.eq.s32.totalorder %s15, 1
    %p71 = por %p69, %p70
    %p72 = scmp.ne.s32.totalorder %s61, %s62
    %p73 = scmp.eq.s32.totalorder %s15, 0
    %p74 = por %p72, %p73
    %p75 = scmp.ne.s32.totalorder %s61, %s62
    %p76 = scmp.eq.s32.totalorder %s16, 1
    %p77 = por %p75, %p76
    %p79 = scmp.ne.s32.totalorder %s62, %s78
    %p80 = scmp.eq.s32.totalorder %s16, 0
    %p81 = por %p79, %p80
    %s82 = ssub.s32 %s18, %s25
    %p83 = scmp.eq.s32.totalorder %s82, 0
    %s85 = sadd.s32 %s84, 1
    %s86 = scalar_select %p83, %s84, %s85
    %p89 = pneg %p83
    %p90 = scmp.eq.s32.totalorder %s10, 1
    %p91 = por %p89, %p90
    %p92 = scmp.ne.s32.totalorder %s84, %s87
    %p93 = scmp.eq.s32.totalorder %s10, 0
    %p94 = por %p92, %p93
    %p95 = scmp.ne.s32.totalorder %s84, %s87
    %p96 = scmp.eq.s32.totalorder %s15, 1
    %p97 = por %p95, %p96
    %p98 = scmp.ne.s32.totalorder %s87, %s88
    %p99 = scmp.eq.s32.totalorder %s15, 0
    %p100 = por %p98, %p99
    %p101 = scmp.ne.s32.totalorder %s87, %s88
    %p102 = scmp.eq.s32.totalorder %s16, 1
    %p103 = por %p101, %p102
    %p105 = scmp.ne.s32.totalorder %s88, %s104
    %p106 = scmp.eq.s32.totalorder %s16, 0
    %p107 = por %p105, %p106
    %s108 = ssub.s32 %s17, %s29
    %s109 = ssub.s32 %s18, %s25
    %s110 = sor.u32 %s108, %s109
    %p111 = scmp.eq.s32.totalorder %s110, 0
    %s113 = sadd.s32 %s112, 1
    %s114 = scalar_select %p111, %s112, %s113
    %p117 = pneg %p111
    %p118 = scmp.eq.s32.totalorder %s10, 1
    %p119 = por %p117, %p118
    %p120 = scmp.ne.s32.totalorder %s112, %s115
    %p121 = scmp.eq.s32.totalorder %s10, 0
    %p122 = por %p120, %p121
    %p123 = scmp.ne.s32.totalorder %s112, %s115
    %p124 = scmp.eq.s32.totalorder %s15, 1
    %p125 = por %p123, %p124
    %p126 = scmp.ne.s32.totalorder %s115, %s116
    %p127 = scmp.eq.s32.totalorder %s15, 0
    %p128 = por %p126, %p127
    %p129 = scmp.ne.s32.totalorder %s115, %s116
    %p130 = scmp.eq.s32.totalorder %s16, 1
    %p131 = por %p129, %p130
    %p133 = scmp.ne.s32.totalorder %s116, %s132
    %p134 = scmp.eq.s32.totalorder %s16, 0
    %p135 = por %p133, %p134
    %s136 = ssub.s32 %s17, %s29
    %s137 = ssub.s32 %s18, %s25
    %s138 = sor.u32 %s136, %s137
    %p139 = scmp.eq.s32.totalorder %s138, 0
    %s141 = sadd.s32 %s140, 1
    %s142 = scalar_select %p139, %s140, %s141
    %p145 = pneg %p139
    %p146 = scmp.eq.s32.totalorder %s10, 1
    %p147 = por %p145, %p146
    %p148 = scmp.ne.s32.totalorder %s140, %s143
    %p149 = scmp.eq.s32.totalorder %s10, 0
    %p150 = por %p148, %p149
    %p151 = scmp.ne.s32.totalorder %s140, %s143
    %p152 = scmp.eq.s32.totalorder %s15, 1
    %p153 = por %p151, %p152
    %p154 = scmp.ne.s32.totalorder %s143, %s144
    %p155 = scmp.eq.s32.totalorder %s15, 0
    %p156 = por %p154, %p155
    %p157 = scmp.ne.s32.totalorder %s143, %s144
    %p158 = scmp.eq.s32.totalorder %s16, 1
    %p159 = por %p157, %p158
    %p161 = scmp.ne.s32.totalorder %s144, %s160
    %p162 = scmp.eq.s32.totalorder %s16, 0
    %p163 = por %p161, %p162
    %p164 = scmp.le.s32.totalorder 1, %s10
    %p165 = scmp.lt.s32.totalorder %s10, 3
    %p166 = pnand %p164, %p165
    %p167 = pneg %p166
    // Predicated region
    $region9: #{basic_block_forward.3} parent=5 // pred_check
      _
    $region10: #{basic_block_forward.3} parent=5 // pred_check_branch
      %169 = sbr.rel (%p166) target = $region12
    $region11: #{basic_block_forward.3} parent=5 // pred_region
      %s170 = ssub.s32 %s10, 1
      // Predicated region
      $region13: #{basic_block_forward.3} parent=11 // pred_check
        %p171 = pneg %p74
      $region14: #{basic_block_forward.3} parent=11 // pred_check_branch
        %173 = sbr.rel (%p171) target = $region16
      $region15: #{basic_block_forward.3} parent=11 // pred_region
        %p174 = scmp.lt.s32.totalorder %s20, 0
        %s175 = scalar_select %p174, %s20, 0
        %s176 = smul.addr %s175, 4
        %s177 = scalar_lea.vmem %s1, %s176
      $region16: #{basic_block_forward.3} parent=11 // pred_fallthru
        _
      // Predicated region
      $region17: #{basic_block_forward.3} parent=11 // pred_check
        %p178 = pneg %p100
      $region18: #{basic_block_forward.3} parent=11 // pred_check_branch
        %180 = sbr.rel (%p178) target = $region20
      $region19: #{basic_block_forward.3} parent=11 // pred_region
        %p181 = scmp.lt.s32.totalorder %s20, 0
        %s182 = scalar_select %p181, %s20, 0
        %s183 = scalar_lea.vmem %s2, %s182
      $region20: #{basic_block_forward.3} parent=11 // pred_fallthru
        _
    $region12: #{basic_block_forward.3} parent=5 // pred_fallthru
      _
    %p184 = scmp.lt.s32.totalorder %s10, 2
    // Predicated region
    $region21: #{basic_block_forward.3} parent=5 // pred_check
      %p185 = pneg %p184
    $region22: #{basic_block_forward.3} parent=5 // pred_check_branch
      %187 = sbr.rel (%p185) target = $region24
    $region23: #{basic_block_forward.3} parent=5 // pred_region
      // Predicated region
      $region25: #{basic_block_forward.3} parent=23 // pred_check
        %p188 = pneg %p42
      $region26: #{basic_block_forward.3} parent=23 // pred_check_branch
        %190 = sbr.rel (%p188) target = $region28
      $region27: #{basic_block_forward.3} parent=23 // pred_region
        %p191 = scmp.lt.s32.totalorder %s17, 1
        %s192 = scalar_select %p191, %s17, 1
        %s193 = smul.addr %s192, 54
        %s194 = smul.addr %s193, 4
        %s195 = scalar_lea.vmem %s0, %s194
      $region28: #{basic_block_forward.3} parent=23 // pred_fallthru
        _
      // Predicated region
      $region29: #{basic_block_forward.3} parent=23 // pred_check
        %p196 = pneg %p122
      $region30: #{basic_block_forward.3} parent=23 // pred_check_branch
        %198 = sbr.rel (%p196) target = $region32
      $region31: #{basic_block_forward.3} parent=23 // pred_region
        %p199 = scmp.lt.s32.totalorder %s17, 1
        %s200 = scalar_select %p199, %s17, 1
        %p201 = scmp.lt.s32.totalorder %s18, 0
        %s202 = scalar_select %p201, %s18, 0
        %s203 = smul.addr %s200, 32
        %s204 = sadd.s32 %s202, %s203
        %s205 = smul.addr %s204, 4
        %s206 = scalar_lea.vmem %s3, %s205
      $region32: #{basic_block_forward.3} parent=23 // pred_fallthru
        _
    $region24: #{basic_block_forward.3} parent=5 // pred_fallthru
      _
    %p207 = scmp.le.s32.totalorder 1, %s10
    %p208 = scmp.lt.s32.totalorder %s10, 3
    %p209 = pnand %p207, %p208
    %p210 = pneg %p209
    // Predicated region
    $region33: #{basic_block_forward.3} parent=5 // pred_check
      _
    $region34: #{basic_block_forward.3} parent=5 // pred_check_branch
      %212 = sbr.rel (%p209) target = $region36
    $region35: #{basic_block_forward.3} parent=5 // pred_region
      %s213 = ssub.s32 %s10, 1
      %p214 = scmp.lt.s32.totalorder %s19, 1
      %s215 = scalar_select %p214, %s19, 1
      %s216 = smul.addr %s215, 54
      %s217 = smul.addr %s216, 4
      %s218 = scalar_lea.vmem %s0, %s217
      %p219 = pneg %p48
      %p220 = pneg %p45
      %p221 = scmp.lt.s32.totalorder %s20, 0
      %s222 = scalar_select %p221, %s20, 0
      %s223 = smul.addr %s222, 4
      %s224 = scalar_lea.vmem %s1, %s223
      %p225 = pneg %p74
      %p226 = pneg %p71
      %p227 = scmp.lt.s32.totalorder %s20, 0
      %s228 = scalar_select %p227, %s20, 0
      %s229 = scalar_lea.vmem %s2, %s228
      %p230 = pneg %p100
      %p231 = pneg %p97
      %p232 = scmp.lt.s32.totalorder %s19, 1
      %s233 = scalar_select %p232, %s19, 1
      %p234 = scmp.lt.s32.totalorder %s20, 0
      %s235 = scalar_select %p234, %s20, 0
      %s236 = smul.addr %s233, 32
      %s237 = sadd.s32 %s235, %s236
      %s238 = smul.addr %s237, 4
      %s239 = scalar_lea.vmem %s3, %s238
      %p240 = pneg %p128
      %p241 = pneg %p125
      %p242 = pneg %p156
      %p243 = pneg %p153
      %p244 = scmp.lt.s32.totalorder %s19, 1
      %s245 = scalar_select %p244, %s19, 1
      %p246 = scmp.lt.s32.totalorder %s20, 0
      %s247 = scalar_select %p246, %s20, 0
      %s248 = smul.addr %s245, 32
      %s249 = sadd.s32 %s247, %s248
      %s250 = smul.addr %s249, 8
      %s251 = scalar_lea.vmem %s4, %s250
      %p252 = scmp.lt.s32.totalorder %s19, 1
      %s253 = scalar_select %p252, %s19, 1
      %s254 = smul.addr %s253, 54
      %s255 = smul.addr %s254, 4
      %s256 = scalar_lea.vmem %s0, %s255
      %p257 = scmp.lt.s32.totalorder %s20, 0
      %s258 = scalar_select %p257, %s20, 0
      %s259 = smul.addr %s258, 4
      %s260 = scalar_lea.vmem %s1, %s259
      %p261 = scmp.lt.s32.totalorder %s20, 0
      %s262 = scalar_select %p261, %s20, 0
      %s263 = scalar_lea.vmem %s2, %s262
      %p264 = scmp.lt.s32.totalorder %s19, 1
      %s265 = scalar_select %p264, %s19, 1
      %p266 = scmp.lt.s32.totalorder %s20, 0
      %s267 = scalar_select %p266, %s20, 0
      %s268 = smul.addr %s265, 32
      %s269 = sadd.s32 %s267, %s268
      %s270 = smul.addr %s269, 4
      %s271 = scalar_lea.vmem %s3, %s270
      %p272 = scmp.lt.s32.totalorder %s19, 1
      %s273 = scalar_select %p272, %s19, 1
      %p274 = scmp.lt.s32.totalorder %s20, 0
      %s275 = scalar_select %p274, %s20, 0
      %s276 = smul.addr %s273, 32
      %s277 = sadd.s32 %s275, %s276
      %s278 = smul.addr %s277, 8
      %s279 = scalar_lea.vmem %s4, %s278
      %v281 = vld [vmem:[%s256] sm:$0xf]
      %v282 = vld [vmem:[%s256 + $0x4] sm:$0xf]
      %v283 = vld [vmem:[%s256 + $0xc] sm:$0xf]
      %v284 = vld [vmem:[%s256 + $0x10] sm:$0xf]
      %v285 = vld [vmem:[%s256 + $0x18] sm:$0xf]
      %v286 = vld [vmem:[%s256 + $0x1c] sm:$0xf]
      %v287 = vld [vmem:[%s256 + $0x24] sm:$0xf]
      %v288 = vld [vmem:[%s256 + $0x28] sm:$0xf]
      %v289 = vld [vmem:[%s256 + $0x30] sm:$0xf]
      %v290 = vld [vmem:[%s256 + $0x34] sm:$0xf]
      %v291 = vld [vmem:[%s256 + $0x3c] sm:$0xf]
      %v292 = vld [vmem:[%s256 + $0x40] sm:$0xf]
      %v293 = vld [vmem:[%s256 + $0x48] sm:$0xf]
      %v294 = vld [vmem:[%s256 + $0x4c] sm:$0xf]
      %v295 = vld [vmem:[%s256 + $0x54] sm:$0xf]
      %v296 = vld [vmem:[%s256 + $0x58] sm:$0xf]
      %v297 = vld [vmem:[%s256 + $0x60] sm:$0xf]
      %v298 = vld [vmem:[%s256 + $0x64] sm:$0xf]
      %v299 = vld [vmem:[%s256 + $0x6c] sm:$0xf]
      %v300 = vld [vmem:[%s256 + $0x70] sm:$0xf]
      %v301 = vld [vmem:[%s256 + $0x78] sm:$0xf]
      %v302 = vld [vmem:[%s256 + $0x7c] sm:$0xf]
      %v303 = vld [vmem:[%s256 + $0x84] sm:$0xf]
      %v304 = vld [vmem:[%s256 + $0x88] sm:$0xf]
      %v305 = vld [vmem:[%s256 + $0x90] sm:$0xf]
      %v306 = vld [vmem:[%s256 + $0x94] sm:$0xf]
      %v307 = vld [vmem:[%s256 + $0x9c] sm:$0xf]
      %v308 = vld [vmem:[%s256 + $0xa0] sm:$0xf]
      %v309 = vld [vmem:[%s256 + $0xa8] sm:$0xf]
      %v310 = vld [vmem:[%s256 + $0xac] sm:$0xf]
      %v311 = vld [vmem:[%s256 + $0xb4] sm:$0xf]
      %v312 = vld [vmem:[%s256 + $0xb8] sm:$0xf]
      %v313 = vld [vmem:[%s260] sm:$0xf]
      %v314 = vld [vmem:[%s260 + $0x4] sm:$0xf]
      %v315 = vld [vmem:[%s260 + $0x8] sm:$0xf]
      %v316 = vld [vmem:[%s260 + $0xc] sm:$0xf]
      %v317 = vld [vmem:[%s260 + $0x10] sm:$0xf]
      %v318 = vld [vmem:[%s260 + $0x14] sm:$0xf]
      %v319 = vld [vmem:[%s260 + $0x18] sm:$0xf]
      %v320 = vld [vmem:[%s260 + $0x1c] sm:$0xf]
      %v321 = vld [vmem:[%s260 + $0x20] sm:$0xf]
      %v322 = vld [vmem:[%s260 + $0x24] sm:$0xf]
      %v323 = vld [vmem:[%s260 + $0x28] sm:$0xf]
      %v324 = vld [vmem:[%s260 + $0x2c] sm:$0xf]
      %v325 = vld [vmem:[%s260 + $0x30] sm:$0xf]
      %v326 = vld [vmem:[%s260 + $0x34] sm:$0xf]
      %v327 = vld [vmem:[%s260 + $0x38] sm:$0xf]
      %v328 = vld [vmem:[%s260 + $0x3c] sm:$0xf]
      %v329 = vld [vmem:[%s256 + $0x8] sm:$0x1]
      %v330 = vld [vmem:[%s256 + $0x14] sm:$0x1]
      %v331 = vld [vmem:[%s256 + $0x20] sm:$0x1]
      %v332 = vld [vmem:[%s256 + $0x2c] sm:$0x1]
      %v333 = vld [vmem:[%s256 + $0x38] sm:$0x1]
      %v334 = vld [vmem:[%s256 + $0x44] sm:$0x1]
      %v335 = vld [vmem:[%s256 + $0x50] sm:$0x1]
      %v336 = vld [vmem:[%s256 + $0x5c] sm:$0x1]
      %v337 = vld [vmem:[%s256 + $0x68] sm:$0x1]
      %v338 = vld [vmem:[%s256 + $0x74] sm:$0x1]
      %v339 = vld [vmem:[%s256 + $0x80] sm:$0x1]
      %v340 = vld [vmem:[%s256 + $0x8c] sm:$0x1]
      %v341 = vld [vmem:[%s256 + $0x98] sm:$0x1]
      %v342 = vld [vmem:[%s256 + $0xa4] sm:$0x1]
      %v343 = vld [vmem:[%s256 + $0xb0] sm:$0x1]
      %v344 = vld [vmem:[%s256 + $0xbc] sm:$0x1]
      %vm345 = vsmask.f32 3328
      %vm346 = vsmask.f32 7440
      %vm347 = vmor %vm345, %vm346
      %v349 = vshrl.u32 %v281, 16
      %v351 = vrot.slane %v349, 4
      %v352 = vshll.u32 %v281, 16
      %v354 = vrot.slane %v352, 5
      %v355 = vor.u32 %v351, %v354
      %v356 = vrot.slane %v355, 4
      %v358 = vshll.u32 %v282, 16
      %v360 = vrot.slane %v358, 5
      %v361 = vsel %vm347, %v356, %v360
      %v362 = vshrl.u32 %v282, 16
      %v364 = vrot.slane %v362, 4
      %v365 = vor.u32 %v364, %v360
      %v366 = vrot.slane %v365, 4
      %v368 = vshll.u32 %v329, 16
      %v370 = vrot.slane %v368, 5
      %v371 = vsel %vm347, %v366, %v370
      %v373 = vshrl.u32 %v283, 16
      %v375 = vrot.slane %v373, 4
      %v376 = vshll.u32 %v283, 16
      %v378 = vrot.slane %v376, 5
      %v379 = vor.u32 %v375, %v378
      %v380 = vrot.slane %v379, 4
      %v382 = vshll.u32 %v284, 16
      %v384 = vrot.slane %v382, 5
      %v385 = vsel %vm347, %v380, %v384
      %v386 = vshrl.u32 %v284, 16
      %v388 = vrot.slane %v386, 4
      %v389 = vor.u32 %v388, %v384
      %v390 = vrot.slane %v389, 4
      %v392 = vshll.u32 %v330, 16
      %v394 = vrot.slane %v392, 5
      %v395 = vsel %vm347, %v390, %v394
      %v397 = vshrl.u32 %v285, 16
      %v399 = vrot.slane %v397, 4
      %v400 = vshll.u32 %v285, 16
      %v402 = vrot.slane %v400, 5
      %v403 = vor.u32 %v399, %v402
      %v404 = vrot.slane %v403, 4
      %v406 = vshll.u32 %v286, 16
      %v408 = vrot.slane %v406, 5
      %v409 = vsel %vm347, %v404, %v408
      %v410 = vshrl.u32 %v286, 16
      %v412 = vrot.slane %v410, 4
      %v413 = vor.u32 %v412, %v408
      %v414 = vrot.slane %v413, 4
      %v416 = vshll.u32 %v331, 16
      %v418 = vrot.slane %v416, 5
      %v419 = vsel %vm347, %v414, %v418
      %v421 = vshrl.u32 %v287, 16
      %v423 = vrot.slane %v421, 4
      %v424 = vshll.u32 %v287, 16
      %v426 = vrot.slane %v424, 5
      %v427 = vor.u32 %v423, %v426
      %v428 = vrot.slane %v427, 4
      %v430 = vshll.u32 %v288, 16
      %v432 = vrot.slane %v430, 5
      %v433 = vsel %vm347, %v428, %v432
      %v434 = vshrl.u32 %v288, 16
      %v436 = vrot.slane %v434, 4
      %v437 = vor.u32 %v436, %v432
      %v438 = vrot.slane %v437, 4
      %v440 = vshll.u32 %v332, 16
      %v442 = vrot.slane %v440, 5
      %v443 = vsel %vm347, %v438, %v442
      %v445 = vshrl.u32 %v289, 16
      %v447 = vrot.slane %v445, 4
      %v448 = vshll.u32 %v289, 16
      %v450 = vrot.slane %v448, 5
      %v451 = vor.u32 %v447, %v450
      %v452 = vrot.slane %v451, 4
      %v454 = vshll.u32 %v290, 16
      %v456 = vrot.slane %v454, 5
      %v457 = vsel %vm347, %v452, %v456
      %v458 = vshrl.u32 %v290, 16
      %v460 = vrot.slane %v458, 4
      %v461 = vor.u32 %v460, %v456
      %v462 = vrot.slane %v461, 4
      %v464 = vshll.u32 %v333, 16
      %v466 = vrot.slane %v464, 5
      %v467 = vsel %vm347, %v462, %v466
      %v469 = vshrl.u32 %v291, 16
      %v471 = vrot.slane %v469, 4
      %v472 = vshll.u32 %v291, 16
      %v474 = vrot.slane %v472, 5
      %v475 = vor.u32 %v471, %v474
      %v476 = vrot.slane %v475, 4
      %v478 = vshll.u32 %v292, 16
      %v480 = vrot.slane %v478, 5
      %v481 = vsel %vm347, %v476, %v480
      %v482 = vshrl.u32 %v292, 16
      %v484 = vrot.slane %v482, 4
      %v485 = vor.u32 %v484, %v480
      %v486 = vrot.slane %v485, 4
      %v488 = vshll.u32 %v334, 16
      %v490 = vrot.slane %v488, 5
      %v491 = vsel %vm347, %v486, %v490
      %v493 = vshrl.u32 %v293, 16
      %v495 = vrot.slane %v493, 4
      %v496 = vshll.u32 %v293, 16
      %v498 = vrot.slane %v496, 5
      %v499 = vor.u32 %v495, %v498
      %v500 = vrot.slane %v499, 4
      %v502 = vshll.u32 %v294, 16
      %v504 = vrot.slane %v502, 5
      %v505 = vsel %vm347, %v500, %v504
      %v506 = vshrl.u32 %v294, 16
      %v508 = vrot.slane %v506, 4
      %v509 = vor.u32 %v508, %v504
      %v510 = vrot.slane %v509, 4
      %v512 = vshll.u32 %v335, 16
      %v514 = vrot.slane %v512, 5
      %v515 = vsel %vm347, %v510, %v514
      %v517 = vshrl.u32 %v295, 16
      %v519 = vrot.slane %v517, 4
      %v520 = vshll.u32 %v295, 16
      %v522 = vrot.slane %v520, 5
      %v523 = vor.u32 %v519, %v522
      %v524 = vrot.slane %v523, 4
      %v526 = vshll.u32 %v296, 16
      %v528 = vrot.slane %v526, 5
      %v529 = vsel %vm347, %v524, %v528
      %v530 = vshrl.u32 %v296, 16
      %v532 = vrot.slane %v530, 4
      %v533 = vor.u32 %v532, %v528
      %v534 = vrot.slane %v533, 4
      %v536 = vshll.u32 %v336, 16
      %v538 = vrot.slane %v536, 5
      %v539 = vsel %vm347, %v534, %v538
      %v541 = vshrl.u32 %v297, 16
      %v543 = vrot.slane %v541, 4
      %v544 = vshll.u32 %v297, 16
      %v546 = vrot.slane %v544, 5
      %v547 = vor.u32 %v543, %v546
      %v548 = vrot.slane %v547, 4
      %v550 = vshll.u32 %v298, 16
      %v552 = vrot.slane %v550, 5
      %v553 = vsel %vm347, %v548, %v552
      %v554 = vshrl.u32 %v298, 16
      %v556 = vrot.slane %v554, 4
      %v557 = vor.u32 %v556, %v552
      %v558 = vrot.slane %v557, 4
      %v560 = vshll.u32 %v337, 16
      %v562 = vrot.slane %v560, 5
      %v563 = vsel %vm347, %v558, %v562
      %v565 = vshrl.u32 %v299, 16
      %v567 = vrot.slane %v565, 4
      %v568 = vshll.u32 %v299, 16
      %v570 = vrot.slane %v568, 5
      %v571 = vor.u32 %v567, %v570
      %v572 = vrot.slane %v571, 4
      %v574 = vshll.u32 %v300, 16
      %v576 = vrot.slane %v574, 5
      %v577 = vsel %vm347, %v572, %v576
      %v578 = vshrl.u32 %v300, 16
      %v580 = vrot.slane %v578, 4
      %v581 = vor.u32 %v580, %v576
      %v582 = vrot.slane %v581, 4
      %v584 = vshll.u32 %v338, 16
      %v586 = vrot.slane %v584, 5
      %v587 = vsel %vm347, %v582, %v586
      %v589 = vshrl.u32 %v301, 16
      %v591 = vrot.slane %v589, 4
      %v592 = vshll.u32 %v301, 16
      %v594 = vrot.slane %v592, 5
      %v595 = vor.u32 %v591, %v594
      %v596 = vrot.slane %v595, 4
      %v598 = vshll.u32 %v302, 16
      %v600 = vrot.slane %v598, 5
      %v601 = vsel %vm347, %v596, %v600
      %v602 = vshrl.u32 %v302, 16
      %v604 = vrot.slane %v602, 4
      %v605 = vor.u32 %v604, %v600
      %v606 = vrot.slane %v605, 4
      %v608 = vshll.u32 %v339, 16
      %v610 = vrot.slane %v608, 5
      %v611 = vsel %vm347, %v606, %v610
      %v613 = vshrl.u32 %v303, 16
      %v615 = vrot.slane %v613, 4
      %v616 = vshll.u32 %v303, 16
      %v618 = vrot.slane %v616, 5
      %v619 = vor.u32 %v615, %v618
      %v620 = vrot.slane %v619, 4
      %v622 = vshll.u32 %v304, 16
      %v624 = vrot.slane %v622, 5
      %v625 = vsel %vm347, %v620, %v624
      %v626 = vshrl.u32 %v304, 16
      %v628 = vrot.slane %v626, 4
      %v629 = vor.u32 %v628, %v624
      %v630 = vrot.slane %v629, 4
      %v632 = vshll.u32 %v340, 16
      %v634 = vrot.slane %v632, 5
      %v635 = vsel %vm347, %v630, %v634
      %v637 = vshrl.u32 %v305, 16
      %v639 = vrot.slane %v637, 4
      %v640 = vshll.u32 %v305, 16
      %v642 = vrot.slane %v640, 5
      %v643 = vor.u32 %v639, %v642
      %v644 = vrot.slane %v643, 4
      %v646 = vshll.u32 %v306, 16
      %v648 = vrot.slane %v646, 5
      %v649 = vsel %vm347, %v644, %v648
      %v650 = vshrl.u32 %v306, 16
      %v652 = vrot.slane %v650, 4
      %v653 = vor.u32 %v652, %v648
      %v654 = vrot.slane %v653, 4
      %v656 = vshll.u32 %v341, 16
      %v658 = vrot.slane %v656, 5
      %v659 = vsel %vm347, %v654, %v658
      %v661 = vshrl.u32 %v307, 16
      %v663 = vrot.slane %v661, 4
      %v664 = vshll.u32 %v307, 16
      %v666 = vrot.slane %v664, 5
      %v667 = vor.u32 %v663, %v666
      %v668 = vrot.slane %v667, 4
      %v670 = vshll.u32 %v308, 16
      %v672 = vrot.slane %v670, 5
      %v673 = vsel %vm347, %v668, %v672
      %v674 = vshrl.u32 %v308, 16
      %v676 = vrot.slane %v674, 4
      %v677 = vor.u32 %v676, %v672
      %v678 = vrot.slane %v677, 4
      %v680 = vshll.u32 %v342, 16
      %v682 = vrot.slane %v680, 5
      %v683 = vsel %vm347, %v678, %v682
      %v685 = vshrl.u32 %v309, 16
      %v687 = vrot.slane %v685, 4
      %v688 = vshll.u32 %v309, 16
      %v690 = vrot.slane %v688, 5
      %v691 = vor.u32 %v687, %v690
      %v692 = vrot.slane %v691, 4
      %v694 = vshll.u32 %v310, 16
      %v696 = vrot.slane %v694, 5
      %v697 = vsel %vm347, %v692, %v696
      %v698 = vshrl.u32 %v310, 16
      %v700 = vrot.slane %v698, 4
      %v701 = vor.u32 %v700, %v696
      %v702 = vrot.slane %v701, 4
      %v704 = vshll.u32 %v343, 16
      %v706 = vrot.slane %v704, 5
      %v707 = vsel %vm347, %v702, %v706
      %v709 = vshrl.u32 %v311, 16
      %v711 = vrot.slane %v709, 4
      %v712 = vshll.u32 %v311, 16
      %v714 = vrot.slane %v712, 5
      %v715 = vor.u32 %v711, %v714
      %v716 = vrot.slane %v715, 4
      %v718 = vshll.u32 %v312, 16
      %v720 = vrot.slane %v718, 5
      %v721 = vsel %vm347, %v716, %v720
      %v722 = vshrl.u32 %v312, 16
      %v724 = vrot.slane %v722, 4
      %v725 = vor.u32 %v724, %v720
      %v726 = vrot.slane %v725, 4
      %v728 = vshll.u32 %v344, 16
      %v730 = vrot.slane %v728, 5
      %v731 = vsel %vm347, %v726, %v730
      %s732 = scalar_lea.vmem %s260, 64
      %v733 = vld [vmem:[%s732] sm:$0xf]
      %v734 = vld [vmem:[%s732 + $0x4] sm:$0xf]
      %v735 = vld [vmem:[%s732 + $0x8] sm:$0xf]
      %v736 = vld [vmem:[%s732 + $0xc] sm:$0xf]
      %v737 = vld [vmem:[%s732 + $0x10] sm:$0xf]
      %v738 = vld [vmem:[%s732 + $0x14] sm:$0xf]
      %v739 = vld [vmem:[%s732 + $0x18] sm:$0xf]
      %v740 = vld [vmem:[%s732 + $0x1c] sm:$0xf]
      %v741 = vld [vmem:[%s732 + $0x20] sm:$0xf]
      %v742 = vld [vmem:[%s732 + $0x24] sm:$0xf]
      %v743 = vld [vmem:[%s732 + $0x28] sm:$0xf]
      %v744 = vld [vmem:[%s732 + $0x2c] sm:$0xf]
      %v745 = vld [vmem:[%s732 + $0x30] sm:$0xf]
      %v746 = vld [vmem:[%s732 + $0x34] sm:$0xf]
      %v747 = vld [vmem:[%s732 + $0x38] sm:$0xf]
      %v748 = vld [vmem:[%s732 + $0x3c] sm:$0xf]
      %v749 = vunpack.c.l.b16 %v361
      %v750 = vunpack.c.l.b16 %v371
      %v751 = vunpack.c.l.b16 %v385
      %v752 = vunpack.c.l.b16 %v395
      %v753 = vunpack.c.l.b16 %v409
      %v754 = vunpack.c.l.b16 %v419
      %v755 = vunpack.c.l.b16 %v433
      %v756 = vunpack.c.l.b16 %v443
      %v757 = vunpack.c.l.b16 %v457
      %v758 = vunpack.c.l.b16 %v467
      %v759 = vunpack.c.l.b16 %v481
      %v760 = vunpack.c.l.b16 %v491
      %v761 = vunpack.c.l.b16 %v505
      %v762 = vunpack.c.l.b16 %v515
      %v763 = vunpack.c.l.b16 %v529
      %v764 = vunpack.c.l.b16 %v539
      %v765 = vunpack.c.l.b16 %v553
      %v766 = vunpack.c.l.b16 %v563
      %v767 = vunpack.c.l.b16 %v577
      %v768 = vunpack.c.l.b16 %v587
      %v769 = vunpack.c.l.b16 %v601
      %v770 = vunpack.c.l.b16 %v611
      %v771 = vunpack.c.l.b16 %v625
      %v772 = vunpack.c.l.b16 %v635
      %v773 = vunpack.c.l.b16 %v649
      %v774 = vunpack.c.l.b16 %v659
      %v775 = vunpack.c.l.b16 %v673
      %v776 = vunpack.c.l.b16 %v683
      %v777 = vunpack.c.l.b16 %v697
      %v778 = vunpack.c.l.b16 %v707
      %v779 = vunpack.c.l.b16 %v721
      %v780 = vunpack.c.l.b16 %v731
      %v781 = vpack.c.b16 %v750, %v749
      %v782 = vpack.c.b16 %v752, %v751
      %v783 = vpack.c.b16 %v754, %v753
      %v784 = vpack.c.b16 %v756, %v755
      %v785 = vpack.c.b16 %v758, %v757
      %v786 = vpack.c.b16 %v760, %v759
      %v787 = vpack.c.b16 %v762, %v761
      %v788 = vpack.c.b16 %v764, %v763
      %v789 = vpack.c.b16 %v766, %v765
      %v790 = vpack.c.b16 %v768, %v767
      %v791 = vpack.c.b16 %v770, %v769
      %v792 = vpack.c.b16 %v772, %v771
      %v793 = vpack.c.b16 %v774, %v773
      %v794 = vpack.c.b16 %v776, %v775
      %v795 = vpack.c.b16 %v778, %v777
      %v796 = vpack.c.b16 %v780, %v779
      %v829 = vunpack.c.l.b16 %v733
      %v830 = vunpack.c.l.b16 %v734
      %v831 = vunpack.c.l.b16 %v735
      %v832 = vunpack.c.l.b16 %v736
      %v833 = vunpack.c.l.b16 %v737
      %v834 = vunpack.c.l.b16 %v738
      %v835 = vunpack.c.l.b16 %v739
      %v836 = vunpack.c.l.b16 %v740
      %v837 = vunpack.c.l.b16 %v741
      %v838 = vunpack.c.l.b16 %v742
      %v839 = vunpack.c.l.b16 %v743
      %v840 = vunpack.c.l.b16 %v744
      %v841 = vunpack.c.l.b16 %v745
      %v842 = vunpack.c.l.b16 %v746
      %v843 = vunpack.c.l.b16 %v747
      %v844 = vunpack.c.l.b16 %v748
      %v845 = vpack.c.b16 %v830, %v829
      %v846 = vpack.c.b16 %v832, %v831
      %v847 = vpack.c.b16 %v834, %v833
      %v848 = vpack.c.b16 %v836, %v835
      %v849 = vpack.c.b16 %v838, %v837
      %v850 = vpack.c.b16 %v840, %v839
      %v851 = vpack.c.b16 %v842, %v841
      %v852 = vpack.c.b16 %v844, %v843
      %861 = vmatprep.subr.bf16.mxu0 0
      %862 = vmatpush1.bf16.msra.mxu0 %v845
      %863 = vmatprep.subr.bf16.mxu0 0
      %864 = vmatpush1.bf16.msra.mxu0 %v846
      %865 = vmatprep.subr.bf16.mxu0 0
      %866 = vmatpush1.bf16.msra.mxu0 %v847
      %867 = vmatprep.subr.bf16.mxu0 0
      %868 = vmatpush1.bf16.msra.mxu0 %v848
      %869 = vmatprep.subr.bf16.mxu0 0
      %870 = vmatpush1.bf16.msra.mxu0 %v849
      %871 = vmatprep.subr.bf16.mxu0 0
      %872 = vmatpush1.bf16.msra.mxu0 %v850
      %873 = vmatprep.subr.bf16.mxu0 0
      %874 = vmatpush1.bf16.msra.mxu0 %v851
      %875 = vmatprep.subr.bf16.mxu0 0
      %876 = vmatpush1.bf16.msra.mxu0 %v852
      %877 = vmatprep.subr.bf16.mxu0 0
      %878 = vmatpush1.bf16.msra.mxu0 0
      %879 = vmatprep.subr.bf16.mxu0 0
      %880 = vmatpush1.bf16.msra.mxu0 0
      %881 = vmatprep.subr.bf16.mxu0 0
      %882 = vmatpush1.bf16.msra.mxu0 0
      %883 = vmatprep.subr.bf16.mxu0 0
      %884 = vmatpush1.bf16.msra.mxu0 0
      %885 = vmatprep.subr.bf16.mxu0 0
      %886 = vmatpush1.bf16.msra.mxu0 0
      %887 = vmatprep.subr.bf16.mxu0 0
      %888 = vmatpush1.bf16.msra.mxu0 0
      %889 = vmatprep.subr.bf16.mxu0 0
      %890 = vmatpush1.bf16.msra.mxu0 0
      %891 = vmatprep.subr.bf16.mxu0 0
      %892 = vmatpush1.bf16.msra.mxu0 0
      %893 = vmatprep.mubr.bf16.mxu0 0
      %894 = vmatmul.mubr.bf16.gmra.mrb[0].mxu0 %v781
      %v895 = vpop.f32.mrb[0].mxu0
      %v896 = vadd.f32 0.0, %v895
      %v897 = vpop.f32.mrb[0].mxu0
      %v898 = vpop.f32.mrb[0].mxu0
      %v899 = vadd.f32 0.0, %v898
      %v900 = vpop.f32.mrb[0].mxu0
      %901 = vmatprep.mubr.bf16.mxu0 0
      %902 = vmatmul.mubr.bf16.gmra.mrb[0].mxu0 %v782
      %v903 = vpop.f32.mrb[0].mxu0
      %v904 = vadd.f32 0.0, %v903
      %v905 = vpop.f32.mrb[0].mxu0
      %v906 = vpop.f32.mrb[0].mxu0
      %v907 = vadd.f32 0.0, %v906
      %v908 = vpop.f32.mrb[0].mxu0
      %909 = vmatprep.mubr.bf16.mxu0 0
      %910 = vmatmul.mubr.bf16.gmra.mrb[0].mxu0 %v783
      %v911 = vpop.f32.mrb[0].mxu0
      %v912 = vadd.f32 0.0, %v911
      %v913 = vpop.f32.mrb[0].mxu0
      %v914 = vpop.f32.mrb[0].mxu0
      %v915 = vadd.f32 0.0, %v914
      %v916 = vpop.f32.mrb[0].mxu0
      %917 = vmatprep.mubr.bf16.mxu0 0
      %918 = vmatmul.mubr.bf16.gmra.mrb[0].mxu0 %v784
      %v919 = vpop.f32.mrb[0].mxu0
      %v920 = vadd.f32 0.0, %v919
      %v921 = vpop.f32.mrb[0].mxu0
      %v922 = vpop.f32.mrb[0].mxu0
      %v923 = vadd.f32 0.0, %v922
      %v924 = vpop.f32.mrb[0].mxu0
      %925 = vmatprep.mubr.bf16.mxu0 0
      %926 = vmatmul.mubr.bf16.gmra.mrb[0].mxu0 %v785
      %v927 = vpop.f32.mrb[0].mxu0
      %v928 = vadd.f32 0.0, %v927
      %v929 = vpop.f32.mrb[0].mxu0
      %v930 = vpop.f32.mrb[0].mxu0
      %v931 = vadd.f32 0.0, %v930
      %v932 = vpop.f32.mrb[0].mxu0
      %933 = vmatprep.mubr.bf16.mxu0 0
      %934 = vmatmul.mubr.bf16.gmra.mrb[0].mxu0 %v786
      %v935 = vpop.f32.mrb[0].mxu0
      %v936 = vadd.f32 0.0, %v935
      %v937 = vpop.f32.mrb[0].mxu0
      %v938 = vpop.f32.mrb[0].mxu0
      %v939 = vadd.f32 0.0, %v938
      %v940 = vpop.f32.mrb[0].mxu0
      %941 = vmatprep.mubr.bf16.mxu0 0
      %942 = vmatmul.mubr.bf16.gmra.mrb[0].mxu0 %v787
      %v943 = vpop.f32.mrb[0].mxu0
      %v944 = vadd.f32 0.0, %v943
      %v945 = vpop.f32.mrb[0].mxu0
      %v946 = vpop.f32.mrb[0].mxu0
      %v947 = vadd.f32 0.0, %v946
      %v948 = vpop.f32.mrb[0].mxu0
      %949 = vmatprep.mubr.bf16.mxu0 0
      %950 = vmatmul.mubr.bf16.gmra.mrb[0].mxu0 %v788
      %v951 = vpop.f32.mrb[0].mxu0
      %v952 = vadd.f32 0.0, %v951
      %v953 = vpop.f32.mrb[0].mxu0
      %v954 = vpop.f32.mrb[0].mxu0
      %v955 = vadd.f32 0.0, %v954
      %v956 = vpop.f32.mrb[0].mxu0
      %957 = vmatprep.mubr.bf16.mxu0 0
      %958 = vmatmul.mubr.bf16.gmra.mrb[0].mxu0 %v789
      %v959 = vpop.f32.mrb[0].mxu0
      %v960 = vadd.f32 0.0, %v959
      %v961 = vpop.f32.mrb[0].mxu0
      %v962 = vpop.f32.mrb[0].mxu0
      %v963 = vadd.f32 0.0, %v962
      %v964 = vpop.f32.mrb[0].mxu0
      %965 = vmatprep.mubr.bf16.mxu0 0
      %966 = vmatmul.mubr.bf16.gmra.mrb[0].mxu0 %v790
      %v967 = vpop.f32.mrb[0].mxu0
      %v968 = vadd.f32 0.0, %v967
      %v969 = vpop.f32.mrb[0].mxu0
      %v970 = vpop.f32.mrb[0].mxu0
      %v971 = vadd.f32 0.0, %v970
      %v972 = vpop.f32.mrb[0].mxu0
      %973 = vmatprep.mubr.bf16.mxu0 0
      %974 = vmatmul.mubr.bf16.gmra.mrb[0].mxu0 %v791
      %v975 = vpop.f32.mrb[0].mxu0
      %v976 = vadd.f32 0.0, %v975
      %v977 = vpop.f32.mrb[0].mxu0
      %v978 = vpop.f32.mrb[0].mxu0
      %v979 = vadd.f32 0.0, %v978
      %v980 = vpop.f32.mrb[0].mxu0
      %981 = vmatprep.mubr.bf16.mxu0 0
      %982 = vmatmul.mubr.bf16.gmra.mrb[0].mxu0 %v792
      %v983 = vpop.f32.mrb[0].mxu0
      %v984 = vadd.f32 0.0, %v983
      %v985 = vpop.f32.mrb[0].mxu0
      %v986 = vpop.f32.mrb[0].mxu0
      %v987 = vadd.f32 0.0, %v986
      %v988 = vpop.f32.mrb[0].mxu0
      %989 = vmatprep.mubr.bf16.mxu0 0
      %990 = vmatmul.mubr.bf16.gmra.mrb[0].mxu0 %v793
      %v991 = vpop.f32.mrb[0].mxu0
      %v992 = vadd.f32 0.0, %v991
      %v993 = vpop.f32.mrb[0].mxu0
      %v994 = vpop.f32.mrb[0].mxu0
      %v995 = vadd.f32 0.0, %v994
      %v996 = vpop.f32.mrb[0].mxu0
      %997 = vmatprep.mubr.bf16.mxu0 0
      %998 = vmatmul.mubr.bf16.gmra.mrb[0].mxu0 %v794
      %v999 = vpop.f32.mrb[0].mxu0
      %v1000 = vadd.f32 0.0, %v999
      %v1001 = vpop.f32.mrb[0].mxu0
      %v1002 = vpop.f32.mrb[0].mxu0
      %v1003 = vadd.f32 0.0, %v1002
      %v1004 = vpop.f32.mrb[0].mxu0
      %1005 = vmatprep.mubr.bf16.mxu0 0
      %1006 = vmatmul.mubr.bf16.gmra.mrb[0].mxu0 %v795
      %v1007 = vpop.f32.mrb[0].mxu0
      %v1008 = vadd.f32 0.0, %v1007
      %v1009 = vpop.f32.mrb[0].mxu0
      %v1010 = vpop.f32.mrb[0].mxu0
      %v1011 = vadd.f32 0.0, %v1010
      %v1012 = vpop.f32.mrb[0].mxu0
      %1013 = vmatprep.mubr.bf16.mxu0 0
      %1014 = vmatmul.mubr.bf16.gmra.mrb[0].mxu0 %v796
      %v1015 = vpop.f32.mrb[0].mxu0
      %v1016 = vadd.f32 0.0, %v1015
      %v1017 = vpop.f32.mrb[0].mxu0
      %v1018 = vpop.f32.mrb[0].mxu0
      %v1019 = vadd.f32 0.0, %v1018
      %v1020 = vpop.f32.mrb[0].mxu0
      %1021 = vdwg.mxu0
      %v1054 = vunpack.c.l.b16 %v281
      %v1055 = vunpack.c.l.b16 %v282
      %v1056 = vunpack.c.l.b16 %v283
      %v1057 = vunpack.c.l.b16 %v284
      %v1058 = vunpack.c.l.b16 %v285
      %v1059 = vunpack.c.l.b16 %v286
      %v1060 = vunpack.c.l.b16 %v287
      %v1061 = vunpack.c.l.b16 %v288
      %v1062 = vunpack.c.l.b16 %v289
      %v1063 = vunpack.c.l.b16 %v290
      %v1064 = vunpack.c.l.b16 %v291
      %v1065 = vunpack.c.l.b16 %v292
      %v1066 = vunpack.c.l.b16 %v293
      %v1067 = vunpack.c.l.b16 %v294
      %v1068 = vunpack.c.l.b16 %v295
      %v1069 = vunpack.c.l.b16 %v296
      %v1070 = vunpack.c.l.b16 %v297
      %v1071 = vunpack.c.l.b16 %v298
      %v1072 = vunpack.c.l.b16 %v299
      %v1073 = vunpack.c.l.b16 %v300
      %v1074 = vunpack.c.l.b16 %v301
      %v1075 = vunpack.c.l.b16 %v302
      %v1076 = vunpack.c.l.b16 %v303
      %v1077 = vunpack.c.l.b16 %v304
      %v1078 = vunpack.c.l.b16 %v305
      %v1079 = vunpack.c.l.b16 %v306
      %v1080 = vunpack.c.l.b16 %v307
      %v1081 = vunpack.c.l.b16 %v308
      %v1082 = vunpack.c.l.b16 %v309
      %v1083 = vunpack.c.l.b16 %v310
      %v1084 = vunpack.c.l.b16 %v311
      %v1085 = vunpack.c.l.b16 %v312
      %v1086 = vpack.c.b16 %v1055, %v1054
      %v1087 = vpack.c.b16 %v1057, %v1056
      %v1088 = vpack.c.b16 %v1059, %v1058
      %v1089 = vpack.c.b16 %v1061, %v1060
      %v1090 = vpack.c.b16 %v1063, %v1062
      %v1091 = vpack.c.b16 %v1065, %v1064
      %v1092 = vpack.c.b16 %v1067, %v1066
      %v1093 = vpack.c.b16 %v1069, %v1068
      %v1094 = vpack.c.b16 %v1071, %v1070
      %v1095 = vpack.c.b16 %v1073, %v1072
      %v1096 = vpack.c.b16 %v1075, %v1074
      %v1097 = vpack.c.b16 %v1077, %v1076
      %v1098 = vpack.c.b16 %v1079, %v1078
      %v1099 = vpack.c.b16 %v1081, %v1080
      %v1100 = vpack.c.b16 %v1083, %v1082
      %v1101 = vpack.c.b16 %v1085, %v1084
      %v1134 = vunpack.c.l.b16 %v313
      %v1135 = vunpack.c.l.b16 %v314
      %v1136 = vunpack.c.l.b16 %v315
      %v1137 = vunpack.c.l.b16 %v316
      %v1138 = vunpack.c.l.b16 %v317
      %v1139 = vunpack.c.l.b16 %v318
      %v1140 = vunpack.c.l.b16 %v319
      %v1141 = vunpack.c.l.b16 %v320
      %v1142 = vunpack.c.l.b16 %v321
      %v1143 = vunpack.c.l.b16 %v322
      %v1144 = vunpack.c.l.b16 %v323
      %v1145 = vunpack.c.l.b16 %v324
      %v1146 = vunpack.c.l.b16 %v325
      %v1147 = vunpack.c.l.b16 %v326
      %v1148 = vunpack.c.l.b16 %v327
      %v1149 = vunpack.c.l.b16 %v328
      %v1150 = vpack.c.b16 %v1135, %v1134
      %v1151 = vpack.c.b16 %v1137, %v1136
      %v1152 = vpack.c.b16 %v1139, %v1138
      %v1153 = vpack.c.b16 %v1141, %v1140
      %v1154 = vpack.c.b16 %v1143, %v1142
      %v1155 = vpack.c.b16 %v1145, %v1144
      %v1156 = vpack.c.b16 %v1147, %v1146
      %v1157 = vpack.c.b16 %v1149, %v1148
      %1166 = vmatprep.subr.bf16.mxu0 0
      %1167 = vmatpush1.bf16.msra.mxu0 %v1150
      %1168 = vmatprep.subr.bf16.mxu0 0
      %1169 = vmatpush1.bf16.msra.mxu0 %v1151
      %1170 = vmatprep.subr.bf16.mxu0 0
      %1171 = vmatpush1.bf16.msra.mxu0 %v1152
      %1172 = vmatprep.subr.bf16.mxu0 0
      %1173 = vmatpush1.bf16.msra.mxu0 %v1153
      %1174 = vmatprep.subr.bf16.mxu0 0
      %1175 = vmatpush1.bf16.msra.mxu0 %v1154
      %1176 = vmatprep.subr.bf16.mxu0 0
      %1177 = vmatpush1.bf16.msra.mxu0 %v1155
      %1178 = vmatprep.subr.bf16.mxu0 0
      %1179 = vmatpush1.bf16.msra.mxu0 %v1156
      %1180 = vmatprep.subr.bf16.mxu0 0
      %1181 = vmatpush1.bf16.msra.mxu0 %v1157
      %1182 = vmatprep.subr.bf16.mxu0 0
      %1183 = vmatpush1.bf16.msra.mxu0 0
      %1184 = vmatprep.subr.bf16.mxu0 0
      %1185 = vmatpush1.bf16.msra.mxu0 0
      %1186 = vmatprep.subr.bf16.mxu0 0
      %1187 = vmatpush1.bf16.msra.mxu0 0
      %1188 = vmatprep.subr.bf16.mxu0 0
      %1189 = vmatpush1.bf16.msra.mxu0 0
      %1190 = vmatprep.subr.bf16.mxu0 0
      %1191 = vmatpush1.bf16.msra.mxu0 0
      %1192 = vmatprep.subr.bf16.mxu0 0
      %1193 = vmatpush1.bf16.msra.mxu0 0
      %1194 = vmatprep.subr.bf16.mxu0 0
      %1195 = vmatpush1.bf16.msra.mxu0 0
      %1196 = vmatprep.subr.bf16.mxu0 0
      %1197 = vmatpush1.bf16.msra.mxu0 0
      %1198 = vmatprep.mubr.bf16.mxu0 0
      %1199 = vmatmul.mubr.bf16.gmra.mrb[0].mxu0 %v1086
      %v1200 = vpop.f32.mrb[0].mxu0
      %v1201 = vadd.f32 %v896, %v1200
      %v1202 = vpop.f32.mrb[0].mxu0
      %v1203 = vpop.f32.mrb[0].mxu0
      %v1204 = vadd.f32 %v899, %v1203
      %v1205 = vpop.f32.mrb[0].mxu0
      %1206 = vmatprep.mubr.bf16.mxu0 0
      %1207 = vmatmul.mubr.bf16.gmra.mrb[0].mxu0 %v1087
      %v1208 = vpop.f32.mrb[0].mxu0
      %v1209 = vadd.f32 %v904, %v1208
      %v1210 = vpop.f32.mrb[0].mxu0
      %v1211 = vpop.f32.mrb[0].mxu0
      %v1212 = vadd.f32 %v907, %v1211
      %v1213 = vpop.f32.mrb[0].mxu0
      %1214 = vmatprep.mubr.bf16.mxu0 0
      %1215 = vmatmul.mubr.bf16.gmra.mrb[0].mxu0 %v1088
      %v1216 = vpop.f32.mrb[0].mxu0
      %v1217 = vadd.f32 %v912, %v1216
      %v1218 = vpop.f32.mrb[0].mxu0
      %v1219 = vpop.f32.mrb[0].mxu0
      %v1220 = vadd.f32 %v915, %v1219
      %v1221 = vpop.f32.mrb[0].mxu0
      %1222 = vmatprep.mubr.bf16.mxu0 0
      %1223 = vmatmul.mubr.bf16.gmra.mrb[0].mxu0 %v1089
      %v1224 = vpop.f32.mrb[0].mxu0
      %v1225 = vadd.f32 %v920, %v1224
      %v1226 = vpop.f32.mrb[0].mxu0
      %v1227 = vpop.f32.mrb[0].mxu0
      %v1228 = vadd.f32 %v923, %v1227
      %v1229 = vpop.f32.mrb[0].mxu0
      %1230 = vmatprep.mubr.bf16.mxu0 0
      %1231 = vmatmul.mubr.bf16.gmra.mrb[0].mxu0 %v1090
      %v1232 = vpop.f32.mrb[0].mxu0
      %v1233 = vadd.f32 %v928, %v1232
      %v1234 = vpop.f32.mrb[0].mxu0
      %v1235 = vpop.f32.mrb[0].mxu0
      %v1236 = vadd.f32 %v931, %v1235
      %v1237 = vpop.f32.mrb[0].mxu0
      %1238 = vmatprep.mubr.bf16.mxu0 0
      %1239 = vmatmul.mubr.bf16.gmra.mrb[0].mxu0 %v1091
      %v1240 = vpop.f32.mrb[0].mxu0
      %v1241 = vadd.f32 %v936, %v1240
      %v1242 = vpop.f32.mrb[0].mxu0
      %v1243 = vpop.f32.mrb[0].mxu0
      %v1244 = vadd.f32 %v939, %v1243
      %v1245 = vpop.f32.mrb[0].mxu0
      %1246 = vmatprep.mubr.bf16.mxu0 0
      %1247 = vmatmul.mubr.bf16.gmra.mrb[0].mxu0 %v1092
      %v1248 = vpop.f32.mrb[0].mxu0
      %v1249 = vadd.f32 %v944, %v1248
      %v1250 = vpop.f32.mrb[0].mxu0
      %v1251 = vpop.f32.mrb[0].mxu0
      %v1252 = vadd.f32 %v947, %v1251
      %v1253 = vpop.f32.mrb[0].mxu0
      %1254 = vmatprep.mubr.bf16.mxu0 0
      %1255 = vmatmul.mubr.bf16.gmra.mrb[0].mxu0 %v1093
      %v1256 = vpop.f32.mrb[0].mxu0
      %v1257 = vadd.f32 %v952, %v1256
      %v1258 = vpop.f32.mrb[0].mxu0
      %v1259 = vpop.f32.mrb[0].mxu0
      %v1260 = vadd.f32 %v955, %v1259
      %v1261 = vpop.f32.mrb[0].mxu0
      %1262 = vmatprep.mubr.bf16.mxu0 0
      %1263 = vmatmul.mubr.bf16.gmra.mrb[0].mxu0 %v1094
      %v1264 = vpop.f32.mrb[0].mxu0
      %v1265 = vadd.f32 %v960, %v1264
      %v1266 = vpop.f32.mrb[0].mxu0
      %v1267 = vpop.f32.mrb[0].mxu0
      %v1268 = vadd.f32 %v963, %v1267
      %v1269 = vpop.f32.mrb[0].mxu0
      %1270 = vmatprep.mubr.bf16.mxu0 0
      %1271 = vmatmul.mubr.bf16.gmra.mrb[0].mxu0 %v1095
      %v1272 = vpop.f32.mrb[0].mxu0
      %v1273 = vadd.f32 %v968, %v1272
      %v1274 = vpop.f32.mrb[0].mxu0
      %v1275 = vpop.f32.mrb[0].mxu0
      %v1276 = vadd.f32 %v971, %v1275
      %v1277 = vpop.f32.mrb[0].mxu0
      %1278 = vmatprep.mubr.bf16.mxu0 0
      %1279 = vmatmul.mubr.bf16.gmra.mrb[0].mxu0 %v1096
      %v1280 = vpop.f32.mrb[0].mxu0
      %v1281 = vadd.f32 %v976, %v1280
      %v1282 = vpop.f32.mrb[0].mxu0
      %v1283 = vpop.f32.mrb[0].mxu0
      %v1284 = vadd.f32 %v979, %v1283
      %v1285 = vpop.f32.mrb[0].mxu0
      %1286 = vmatprep.mubr.bf16.mxu0 0
      %1287 = vmatmul.mubr.bf16.gmra.mrb[0].mxu0 %v1097
      %v1288 = vpop.f32.mrb[0].mxu0
      %v1289 = vadd.f32 %v984, %v1288
      %v1290 = vpop.f32.mrb[0].mxu0
      %v1291 = vpop.f32.mrb[0].mxu0
      %v1292 = vadd.f32 %v987, %v1291
      %v1293 = vpop.f32.mrb[0].mxu0
      %1294 = vmatprep.mubr.bf16.mxu0 0
      %1295 = vmatmul.mubr.bf16.gmra.mrb[0].mxu0 %v1098
      %v1296 = vpop.f32.mrb[0].mxu0
      %v1297 = vadd.f32 %v992, %v1296
      %v1298 = vpop.f32.mrb[0].mxu0
      %v1299 = vpop.f32.mrb[0].mxu0
      %v1300 = vadd.f32 %v995, %v1299
      %v1301 = vpop.f32.mrb[0].mxu0
      %1302 = vmatprep.mubr.bf16.mxu0 0
      %1303 = vmatmul.mubr.bf16.gmra.mrb[0].mxu0 %v1099
      %v1304 = vpop.f32.mrb[0].mxu0
      %v1305 = vadd.f32 %v1000, %v1304
      %v1306 = vpop.f32.mrb[0].mxu0
      %v1307 = vpop.f32.mrb[0].mxu0
      %v1308 = vadd.f32 %v1003, %v1307
      %v1309 = vpop.f32.mrb[0].mxu0
      %1310 = vmatprep.mubr.bf16.mxu0 0
      %1311 = vmatmul.mubr.bf16.gmra.mrb[0].mxu0 %v1100
      %v1312 = vpop.f32.mrb[0].mxu0
      %v1313 = vadd.f32 %v1008, %v1312
      %v1314 = vpop.f32.mrb[0].mxu0
      %v1315 = vpop.f32.mrb[0].mxu0
      %v1316 = vadd.f32 %v1011, %v1315
      %v1317 = vpop.f32.mrb[0].mxu0
      %1318 = vmatprep.mubr.bf16.mxu0 0
      %1319 = vmatmul.mubr.bf16.gmra.mrb[0].mxu0 %v1101
      %v1320 = vpop.f32.mrb[0].mxu0
      %v1321 = vadd.f32 %v1016, %v1320
      %v1322 = vpop.f32.mrb[0].mxu0
      %v1323 = vpop.f32.mrb[0].mxu0
      %v1324 = vadd.f32 %v1019, %v1323
      %v1325 = vpop.f32.mrb[0].mxu0
      %1326 = vdwg.mxu0
      %v1327 = vld [vmem:[%s256] sm:$0xe]
      %v1328 = vld [vmem:[%s256 + $0xc] sm:$0xe]
      %v1329 = vld [vmem:[%s256 + $0x18] sm:$0xe]
      %v1330 = vld [vmem:[%s256 + $0x24] sm:$0xe]
      %v1331 = vld [vmem:[%s256 + $0x30] sm:$0xe]
      %v1332 = vld [vmem:[%s256 + $0x3c] sm:$0xe]
      %v1333 = vld [vmem:[%s256 + $0x48] sm:$0xe]
      %v1334 = vld [vmem:[%s256 + $0x54] sm:$0xe]
      %v1335 = vld [vmem:[%s256 + $0x60] sm:$0xe]
      %v1336 = vld [vmem:[%s256 + $0x6c] sm:$0xe]
      %v1337 = vld [vmem:[%s256 + $0x78] sm:$0xe]
      %v1338 = vld [vmem:[%s256 + $0x84] sm:$0xe]
      %v1339 = vld [vmem:[%s256 + $0x90] sm:$0xe]
      %v1340 = vld [vmem:[%s256 + $0x9c] sm:$0xe]
      %v1341 = vld [vmem:[%s256 + $0xa8] sm:$0xe]
      %v1342 = vld [vmem:[%s256 + $0xb4] sm:$0xe]
      %vm1375 = vcmask 1042432
      %vm1376 = vcmask 1046532
      %vm1377 = vmor %vm1375, %vm1376
      %v1378 = vrot.slane %v1327, 5
      %v1379 = vrot.slane %v1378, 4
      %v1380 = vrot.slane %v282, 5
      %v1381 = vsel %vm1377, %v1379, %v1380
      %v1382 = vrot.slane %v1380, 4
      %v1383 = vrot.slane %v329, 5
      %v1384 = vsel %vm1377, %v1382, %v1383
      %v1385 = vrot.slane %v1328, 5
      %v1386 = vrot.slane %v1385, 4
      %v1387 = vrot.slane %v284, 5
      %v1388 = vsel %vm1377, %v1386, %v1387
      %v1389 = vrot.slane %v1387, 4
      %v1390 = vrot.slane %v330, 5
      %v1391 = vsel %vm1377, %v1389, %v1390
      %v1392 = vrot.slane %v1329, 5
      %v1393 = vrot.slane %v1392, 4
      %v1394 = vrot.slane %v286, 5
      %v1395 = vsel %vm1377, %v1393, %v1394
      %v1396 = vrot.slane %v1394, 4
      %v1397 = vrot.slane %v331, 5
      %v1398 = vsel %vm1377, %v1396, %v1397
      %v1399 = vrot.slane %v1330, 5
      %v1400 = vrot.slane %v1399, 4
      %v1401 = vrot.slane %v288, 5
      %v1402 = vsel %vm1377, %v1400, %v1401
      %v1403 = vrot.slane %v1401, 4
      %v1404 = vrot.slane %v332, 5
      %v1405 = vsel %vm1377, %v1403, %v1404
      %v1406 = vrot.slane %v1331, 5
      %v1407 = vrot.slane %v1406, 4
      %v1408 = vrot.slane %v290, 5
      %v1409 = vsel %vm1377, %v1407, %v1408
      %v1410 = vrot.slane %v1408, 4
      %v1411 = vrot.slane %v333, 5
      %v1412 = vsel %vm1377, %v1410, %v1411
      %v1413 = vrot.slane %v1332, 5
      %v1414 = vrot.slane %v1413, 4
      %v1415 = vrot.slane %v292, 5
      %v1416 = vsel %vm1377, %v1414, %v1415
      %v1417 = vrot.slane %v1415, 4
      %v1418 = vrot.slane %v334, 5
      %v1419 = vsel %vm1377, %v1417, %v1418
      %v1420 = vrot.slane %v1333, 5
      %v1421 = vrot.slane %v1420, 4
      %v1422 = vrot.slane %v294, 5
      %v1423 = vsel %vm1377, %v1421, %v1422
      %v1424 = vrot.slane %v1422, 4
      %v1425 = vrot.slane %v335, 5
      %v1426 = vsel %vm1377, %v1424, %v1425
      %v1427 = vrot.slane %v1334, 5
      %v1428 = vrot.slane %v1427, 4
      %v1429 = vrot.slane %v296, 5
      %v1430 = vsel %vm1377, %v1428, %v1429
      %v1431 = vrot.slane %v1429, 4
      %v1432 = vrot.slane %v336, 5
      %v1433 = vsel %vm1377, %v1431, %v1432
      %v1434 = vrot.slane %v1335, 5
      %v1435 = vrot.slane %v1434, 4
      %v1436 = vrot.slane %v298, 5
      %v1437 = vsel %vm1377, %v1435, %v1436
      %v1438 = vrot.slane %v1436, 4
      %v1439 = vrot.slane %v337, 5
      %v1440 = vsel %vm1377, %v1438, %v1439
      %v1441 = vrot.slane %v1336, 5
      %v1442 = vrot.slane %v1441, 4
      %v1443 = vrot.slane %v300, 5
      %v1444 = vsel %vm1377, %v1442, %v1443
      %v1445 = vrot.slane %v1443, 4
      %v1446 = vrot.slane %v338, 5
      %v1447 = vsel %vm1377, %v1445, %v1446
      %v1448 = vrot.slane %v1337, 5
      %v1449 = vrot.slane %v1448, 4
      %v1450 = vrot.slane %v302, 5
      %v1451 = vsel %vm1377, %v1449, %v1450
      %v1452 = vrot.slane %v1450, 4
      %v1453 = vrot.slane %v339, 5
      %v1454 = vsel %vm1377, %v1452, %v1453
      %v1455 = vrot.slane %v1338, 5
      %v1456 = vrot.slane %v1455, 4
      %v1457 = vrot.slane %v304, 5
      %v1458 = vsel %vm1377, %v1456, %v1457
      %v1459 = vrot.slane %v1457, 4
      %v1460 = vrot.slane %v340, 5
      %v1461 = vsel %vm1377, %v1459, %v1460
      %v1462 = vrot.slane %v1339, 5
      %v1463 = vrot.slane %v1462, 4
      %v1464 = vrot.slane %v306, 5
      %v1465 = vsel %vm1377, %v1463, %v1464
      %v1466 = vrot.slane %v1464, 4
      %v1467 = vrot.slane %v341, 5
      %v1468 = vsel %vm1377, %v1466, %v1467
      %v1469 = vrot.slane %v1340, 5
      %v1470 = vrot.slane %v1469, 4
      %v1471 = vrot.slane %v308, 5
      %v1472 = vsel %vm1377, %v1470, %v1471
      %v1473 = vrot.slane %v1471, 4
      %v1474 = vrot.slane %v342, 5
      %v1475 = vsel %vm1377, %v1473, %v1474
      %v1476 = vrot.slane %v1341, 5
      %v1477 = vrot.slane %v1476, 4
      %v1478 = vrot.slane %v310, 5
      %v1479 = vsel %vm1377, %v1477, %v1478
      %v1480 = vrot.slane %v1478, 4
      %v1481 = vrot.slane %v343, 5
      %v1482 = vsel %vm1377, %v1480, %v1481
      %v1483 = vrot.slane %v1342, 5
      %v1484 = vrot.slane %v1483, 4
      %v1485 = vrot.slane %v312, 5
      %v1486 = vsel %vm1377, %v1484, %v1485
      %v1487 = vrot.slane %v1485, 4
      %v1488 = vrot.slane %v344, 5
      %v1489 = vsel %vm1377, %v1487, %v1488
      %s1490 = scalar_lea.vmem %s260, 128
      %v1491 = vld [vmem:[%s1490] sm:$0xf]
      %v1492 = vld [vmem:[%s1490 + $0x4] sm:$0xf]
      %v1493 = vld [vmem:[%s1490 + $0x8] sm:$0xf]
      %v1494 = vld [vmem:[%s1490 + $0xc] sm:$0xf]
      %v1495 = vld [vmem:[%s1490 + $0x10] sm:$0xf]
      %v1496 = vld [vmem:[%s1490 + $0x14] sm:$0xf]
      %v1497 = vld [vmem:[%s1490 + $0x18] sm:$0xf]
      %v1498 = vld [vmem:[%s1490 + $0x1c] sm:$0xf]
      %v1499 = vld [vmem:[%s1490 + $0x20] sm:$0xf]
      %v1500 = vld [vmem:[%s1490 + $0x24] sm:$0xf]
      %v1501 = vld [vmem:[%s1490 + $0x28] sm:$0xf]
      %v1502 = vld [vmem:[%s1490 + $0x2c] sm:$0xf]
      %v1503 = vld [vmem:[%s1490 + $0x30] sm:$0xf]
      %v1504 = vld [vmem:[%s1490 + $0x34] sm:$0xf]
      %v1505 = vld [vmem:[%s1490 + $0x38] sm:$0xf]
      %v1506 = vld [vmem:[%s1490 + $0x3c] sm:$0xf]
      %v1507 = vunpack.c.l.b16 %v1381
      %v1508 = vunpack.c.l.b16 %v1384
      %v1509 = vunpack.c.l.b16 %v1388
      %v1510 = vunpack.c.l.b16 %v1391
      %v1511 = vunpack.c.l.b16 %v1395
      %v1512 = vunpack.c.l.b16 %v1398
      %v1513 = vunpack.c.l.b16 %v1402
      %v1514 = vunpack.c.l.b16 %v1405
      %v1515 = vunpack.c.l.b16 %v1409
      %v1516 = vunpack.c.l.b16 %v1412
      %v1517 = vunpack.c.l.b16 %v1416
      %v1518 = vunpack.c.l.b16 %v1419
      %v1519 = vunpack.c.l.b16 %v1423
      %v1520 = vunpack.c.l.b16 %v1426
      %v1521 = vunpack.c.l.b16 %v1430
      %v1522 = vunpack.c.l.b16 %v1433
      %v1523 = vunpack.c.l.b16 %v1437
      %v1524 = vunpack.c.l.b16 %v1440
      %v1525 = vunpack.c.l.b16 %v1444
      %v1526 = vunpack.c.l.b16 %v1447
      %v1527 = vunpack.c.l.b16 %v1451
      %v1528 = vunpack.c.l.b16 %v1454
      %v1529 = vunpack.c.l.b16 %v1458
      %v1530 = vunpack.c.l.b16 %v1461
      %v1531 = vunpack.c.l.b16 %v1465
      %v1532 = vunpack.c.l.b16 %v1468
      %v1533 = vunpack.c.l.b16 %v1472
      %v1534 = vunpack.c.l.b16 %v1475
      %v1535 = vunpack.c.l.b16 %v1479
      %v1536 = vunpack.c.l.b16 %v1482
      %v1537 = vunpack.c.l.b16 %v1486
      %v1538 = vunpack.c.l.b16 %v1489
      %v1539 = vpack.c.b16 %v1508, %v1507
      %v1540 = vpack.c.b16 %v1510, %v1509
      %v1541 = vpack.c.b16 %v1512, %v1511
      %v1542 = vpack.c.b16 %v1514, %v1513
      %v1543 = vpack.c.b16 %v1516, %v1515
      %v1544 = vpack.c.b16 %v1518, %v1517
      %v1545 = vpack.c.b16 %v1520, %v1519
      %v1546 = vpack.c.b16 %v1522, %v1521
      %v1547 = vpack.c.b16 %v1524, %v1523
      %v1548 = vpack.c.b16 %v1526, %v1525
      %v1549 = vpack.c.b16 %v1528, %v1527
      %v1550 = vpack.c.b16 %v1530, %v1529
      %v1551 = vpack.c.b16 %v1532, %v1531
      %v1552 = vpack.c.b16 %v1534, %v1533
      %v1553 = vpack.c.b16 %v1536, %v1535
      %v1554 = vpack.c.b16 %v1538, %v1537
      %v1587 = vunpack.c.l.b16 %v1491
      %v1588 = vunpack.c.l.b16 %v1492
      %v1589 = vunpack.c.l.b16 %v1493
      %v1590 = vunpack.c.l.b16 %v1494
      %v1591 = vunpack.c.l.b16 %v1495
      %v1592 = vunpack.c.l.b16 %v1496
      %v1593 = vunpack.c.l.b16 %v1497
      %v1594 = vunpack.c.l.b16 %v1498
      %v1595 = vunpack.c.l.b16 %v1499
      %v1596 = vunpack.c.l.b16 %v1500
      %v1597 = vunpack.c.l.b16 %v1501
      %v1598 = vunpack.c.l.b16 %v1502
      %v1599 = vunpack.c.l.b16 %v1503
      %v1600 = vunpack.c.l.b16 %v1504
      %v1601 = vunpack.c.l.b16 %v1505
      %v1602 = vunpack.c.l.b16 %v1506
      %v1603 = vpack.c.b16 %v1588, %v1587
      %v1604 = vpack.c.b16 %v1590, %v1589
      %v1605 = vpack.c.b16 %v1592, %v1591
      %v1606 = vpack.c.b16 %v1594, %v1593
      %v1607 = vpack.c.b16 %v1596, %v1595
      %v1608 = vpack.c.b16 %v1598, %v1597
      %v1609 = vpack.c.b16 %v1600, %v1599
      %v1610 = vpack.c.b16 %v1602, %v1601
      %1619 = vmatprep.subr.bf16.mxu0 0
      %1620 = vmatpush1.bf16.msra.mxu0 %v1603
      %1621 = vmatprep.subr.bf16.mxu0 0
      %1622 = vmatpush1.bf16.msra.mxu0 %v1604
      %1623 = vmatprep.subr.bf16.mxu0 0
      %1624 = vmatpush1.bf16.msra.mxu0 %v1605
      %1625 = vmatprep.subr.bf16.mxu0 0
      %1626 = vmatpush1.bf16.msra.mxu0 %v1606
      %1627 = vmatprep.subr.bf16.mxu0 0
      %1628 = vmatpush1.bf16.msra.mxu0 %v1607
      %1629 = vmatprep.subr.bf16.mxu0 0
      %1630 = vmatpush1.bf16.msra.mxu0 %v1608
      %1631 = vmatprep.subr.bf16.mxu0 0
      %1632 = vmatpush1.bf16.msra.mxu0 %v1609
      %1633 = vmatprep.subr.bf16.mxu0 0
      %1634 = vmatpush1.bf16.msra.mxu0 %v1610
      %1635 = vmatprep.subr.bf16.mxu0 0
      %1636 = vmatpush1.bf16.msra.mxu0 0
      %1637 = vmatprep.subr.bf16.mxu0 0
      %1638 = vmatpush1.bf16.msra.mxu0 0
      %1639 = vmatprep.subr.bf16.mxu0 0
      %1640 = vmatpush1.bf16.msra.mxu0 0
      %1641 = vmatprep.subr.bf16.mxu0 0
      %1642 = vmatpush1.bf16.msra.mxu0 0
      %1643 = vmatprep.subr.bf16.mxu0 0
      %1644 = vmatpush1.bf16.msra.mxu0 0
      %1645 = vmatprep.subr.bf16.mxu0 0
      %1646 = vmatpush1.bf16.msra.mxu0 0
      %1647 = vmatprep.subr.bf16.mxu0 0
      %1648 = vmatpush1.bf16.msra.mxu0 0
      %1649 = vmatprep.subr.bf16.mxu0 0
      %1650 = vmatpush1.bf16.msra.mxu0 0
      %1651 = vmatprep.mubr.bf16.mxu0 0
      %1652 = vmatmul.mubr.bf16.gmra.mrb[0].mxu0 %v1539
      %v1653 = vpop.f32.mrb[0].mxu0
      %v1654 = vadd.f32 0.0, %v1653
      %v1655 = vpop.f32.mrb[0].mxu0
      %v1656 = vpop.f32.mrb[0].mxu0
      %v1657 = vadd.f32 0.0, %v1656
      %v1658 = vpop.f32.mrb[0].mxu0
      %1659 = vmatprep.mubr.bf16.mxu0 0
      %1660 = vmatmul.mubr.bf16.gmra.mrb[0].mxu0 %v1540
      %v1661 = vpop.f32.mrb[0].mxu0
      %v1662 = vadd.f32 0.0, %v1661
      %v1663 = vpop.f32.mrb[0].mxu0
      %v1664 = vpop.f32.mrb[0].mxu0
      %v1665 = vadd.f32 0.0, %v1664
      %v1666 = vpop.f32.mrb[0].mxu0
      %1667 = vmatprep.mubr.bf16.mxu0 0
      %1668 = vmatmul.mubr.bf16.gmra.mrb[0].mxu0 %v1541
      %v1669 = vpop.f32.mrb[0].mxu0
      %v1670 = vadd.f32 0.0, %v1669
      %v1671 = vpop.f32.mrb[0].mxu0
      %v1672 = vpop.f32.mrb[0].mxu0
      %v1673 = vadd.f32 0.0, %v1672
      %v1674 = vpop.f32.mrb[0].mxu0
      %1675 = vmatprep.mubr.bf16.mxu0 0
      %1676 = vmatmul.mubr.bf16.gmra.mrb[0].mxu0 %v1542
      %v1677 = vpop.f32.mrb[0].mxu0
      %v1678 = vadd.f32 0.0, %v1677
      %v1679 = vpop.f32.mrb[0].mxu0
      %v1680 = vpop.f32.mrb[0].mxu0
      %v1681 = vadd.f32 0.0, %v1680
      %v1682 = vpop.f32.mrb[0].mxu0
      %1683 = vmatprep.mubr.bf16.mxu0 0
      %1684 = vmatmul.mubr.bf16.gmra.mrb[0].mxu0 %v1543
      %v1685 = vpop.f32.mrb[0].mxu0
      %v1686 = vadd.f32 0.0, %v1685
      %v1687 = vpop.f32.mrb[0].mxu0
      %v1688 = vpop.f32.mrb[0].mxu0
      %v1689 = vadd.f32 0.0, %v1688
      %v1690 = vpop.f32.mrb[0].mxu0
      %1691 = vmatprep.mubr.bf16.mxu0 0
      %1692 = vmatmul.mubr.bf16.gmra.mrb[0].mxu0 %v1544
      %v1693 = vpop.f32.mrb[0].mxu0
      %v1694 = vadd.f32 0.0, %v1693
      %v1695 = vpop.f32.mrb[0].mxu0
      %v1696 = vpop.f32.mrb[0].mxu0
      %v1697 = vadd.f32 0.0, %v1696
      %v1698 = vpop.f32.mrb[0].mxu0
      %1699 = vmatprep.mubr.bf16.mxu0 0
      %1700 = vmatmul.mubr.bf16.gmra.mrb[0].mxu0 %v1545
      %v1701 = vpop.f32.mrb[0].mxu0
      %v1702 = vadd.f32 0.0, %v1701
      %v1703 = vpop.f32.mrb[0].mxu0
      %v1704 = vpop.f32.mrb[0].mxu0
      %v1705 = vadd.f32 0.0, %v1704
      %v1706 = vpop.f32.mrb[0].mxu0
      %1707 = vmatprep.mubr.bf16.mxu0 0
      %1708 = vmatmul.mubr.bf16.gmra.mrb[0].mxu0 %v1546
      %v1709 = vpop.f32.mrb[0].mxu0
      %v1710 = vadd.f32 0.0, %v1709
      %v1711 = vpop.f32.mrb[0].mxu0
      %v1712 = vpop.f32.mrb[0].mxu0
      %v1713 = vadd.f32 0.0, %v1712
      %v1714 = vpop.f32.mrb[0].mxu0
      %1715 = vmatprep.mubr.bf16.mxu0 0
      %1716 = vmatmul.mubr.bf16.gmra.mrb[0].mxu0 %v1547
      %v1717 = vpop.f32.mrb[0].mxu0
      %v1718 = vadd.f32 0.0, %v1717
      %v1719 = vpop.f32.mrb[0].mxu0
      %v1720 = vpop.f32.mrb[0].mxu0
      %v1721 = vadd.f32 0.0, %v1720
      %v1722 = vpop.f32.mrb[0].mxu0
      %1723 = vmatprep.mubr.bf16.mxu0 0
      %1724 = vmatmul.mubr.bf16.gmra.mrb[0].mxu0 %v1548
      %v1725 = vpop.f32.mrb[0].mxu0
      %v1726 = vadd.f32 0.0, %v1725
      %v1727 = vpop.f32.mrb[0].mxu0
      %v1728 = vpop.f32.mrb[0].mxu0
      %v1729 = vadd.f32 0.0, %v1728
      %v1730 = vpop.f32.mrb[0].mxu0
      %1731 = vmatprep.mubr.bf16.mxu0 0
      %1732 = vmatmul.mubr.bf16.gmra.mrb[0].mxu0 %v1549
      %v1733 = vpop.f32.mrb[0].mxu0
      %v1734 = vadd.f32 0.0, %v1733
      %v1735 = vpop.f32.mrb[0].mxu0
      %v1736 = vpop.f32.mrb[0].mxu0
      %v1737 = vadd.f32 0.0, %v1736
      %v1738 = vpop.f32.mrb[0].mxu0
      %1739 = vmatprep.mubr.bf16.mxu0 0
      %1740 = vmatmul.mubr.bf16.gmra.mrb[0].mxu0 %v1550
      %v1741 = vpop.f32.mrb[0].mxu0
      %v1742 = vadd.f32 0.0, %v1741
      %v1743 = vpop.f32.mrb[0].mxu0
      %v1744 = vpop.f32.mrb[0].mxu0
      %v1745 = vadd.f32 0.0, %v1744
      %v1746 = vpop.f32.mrb[0].mxu0
      %1747 = vmatprep.mubr.bf16.mxu0 0
      %1748 = vmatmul.mubr.bf16.gmra.mrb[0].mxu0 %v1551
      %v1749 = vpop.f32.mrb[0].mxu0
      %v1750 = vadd.f32 0.0, %v1749
      %v1751 = vpop.f32.mrb[0].mxu0
      %v1752 = vpop.f32.mrb[0].mxu0
      %v1753 = vadd.f32 0.0, %v1752
      %v1754 = vpop.f32.mrb[0].mxu0
      %1755 = vmatprep.mubr.bf16.mxu0 0
      %1756 = vmatmul.mubr.bf16.gmra.mrb[0].mxu0 %v1552
      %v1757 = vpop.f32.mrb[0].mxu0
      %v1758 = vadd.f32 0.0, %v1757
      %v1759 = vpop.f32.mrb[0].mxu0
      %v1760 = vpop.f32.mrb[0].mxu0
      %v1761 = vadd.f32 0.0, %v1760
      %v1762 = vpop.f32.mrb[0].mxu0
      %1763 = vmatprep.mubr.bf16.mxu0 0
      %1764 = vmatmul.mubr.bf16.gmra.mrb[0].mxu0 %v1553
      %v1765 = vpop.f32.mrb[0].mxu0
      %v1766 = vadd.f32 0.0, %v1765
      %v1767 = vpop.f32.mrb[0].mxu0
      %v1768 = vpop.f32.mrb[0].mxu0
      %v1769 = vadd.f32 0.0, %v1768
      %v1770 = vpop.f32.mrb[0].mxu0
      %1771 = vmatprep.mubr.bf16.mxu0 0
      %1772 = vmatmul.mubr.bf16.gmra.mrb[0].mxu0 %v1554
      %v1773 = vpop.f32.mrb[0].mxu0
      %v1774 = vadd.f32 0.0, %v1773
      %v1775 = vpop.f32.mrb[0].mxu0
      %v1776 = vpop.f32.mrb[0].mxu0
      %v1777 = vadd.f32 0.0, %v1776
      %v1778 = vpop.f32.mrb[0].mxu0
      %1779 = vdwg.mxu0
      %v1780 = vadd.f32 %v1201, %v1654
      %v1781 = vadd.f32 %v1204, %v1657
      %v1782 = vadd.f32 %v1209, %v1662
      %v1783 = vadd.f32 %v1212, %v1665
      %v1784 = vadd.f32 %v1217, %v1670
      %v1785 = vadd.f32 %v1220, %v1673
      %v1786 = vadd.f32 %v1225, %v1678
      %v1787 = vadd.f32 %v1228, %v1681
      %v1788 = vadd.f32 %v1233, %v1686
      %v1789 = vadd.f32 %v1236, %v1689
      %v1790 = vadd.f32 %v1241, %v1694
      %v1791 = vadd.f32 %v1244, %v1697
      %v1792 = vadd.f32 %v1249, %v1702
      %v1793 = vadd.f32 %v1252, %v1705
      %v1794 = vadd.f32 %v1257, %v1710
      %v1795 = vadd.f32 %v1260, %v1713
      %v1796 = vadd.f32 %v1265, %v1718
      %v1797 = vadd.f32 %v1268, %v1721
      %v1798 = vadd.f32 %v1273, %v1726
      %v1799 = vadd.f32 %v1276, %v1729
      %v1800 = vadd.f32 %v1281, %v1734
      %v1801 = vadd.f32 %v1284, %v1737
      %v1802 = vadd.f32 %v1289, %v1742
      %v1803 = vadd.f32 %v1292, %v1745
      %v1804 = vadd.f32 %v1297, %v1750
      %v1805 = vadd.f32 %v1300, %v1753
      %v1806 = vadd.f32 %v1305, %v1758
      %v1807 = vadd.f32 %v1308, %v1761
      %v1808 = vadd.f32 %v1313, %v1766
      %v1809 = vadd.f32 %v1316, %v1769
      %v1810 = vadd.f32 %v1321, %v1774
      %v1811 = vadd.f32 %v1324, %v1777
      %s1812 = scalar_lea.vmem %s256, 12
      %v1813 = vld [vmem:[%s1812] sm:$0xf]
      %v1814 = vld [vmem:[%s1812 + $0x4] sm:$0xf]
      %v1815 = vld [vmem:[%s1812 + $0xc] sm:$0xf]
      %v1816 = vld [vmem:[%s1812 + $0x10] sm:$0xf]
      %v1817 = vld [vmem:[%s1812 + $0x18] sm:$0xf]
      %v1818 = vld [vmem:[%s1812 + $0x1c] sm:$0xf]
      %v1819 = vld [vmem:[%s1812 + $0x24] sm:$0xf]
      %v1820 = vld [vmem:[%s1812 + $0x28] sm:$0xf]
      %v1821 = vld [vmem:[%s1812 + $0x30] sm:$0xf]
      %v1822 = vld [vmem:[%s1812 + $0x34] sm:$0xf]
      %v1823 = vld [vmem:[%s1812 + $0x3c] sm:$0xf]
      %v1824 = vld [vmem:[%s1812 + $0x40] sm:$0xf]
      %v1825 = vld [vmem:[%s1812 + $0x48] sm:$0xf]
      %v1826 = vld [vmem:[%s1812 + $0x4c] sm:$0xf]
      %v1827 = vld [vmem:[%s1812 + $0x54] sm:$0xf]
      %v1828 = vld [vmem:[%s1812 + $0x58] sm:$0xf]
      %v1829 = vld [vmem:[%s1812 + $0x60] sm:$0xf]
      %v1830 = vld [vmem:[%s1812 + $0x64] sm:$0xf]
      %v1831 = vld [vmem:[%s1812 + $0x6c] sm:$0xf]
      %v1832 = vld [vmem:[%s1812 + $0x70] sm:$0xf]
      %v1833 = vld [vmem:[%s1812 + $0x78] sm:$0xf]
      %v1834 = vld [vmem:[%s1812 + $0x7c] sm:$0xf]
      %v1835 = vld [vmem:[%s1812 + $0x84] sm:$0xf]
      %v1836 = vld [vmem:[%s1812 + $0x88] sm:$0xf]
      %v1837 = vld [vmem:[%s1812 + $0x90] sm:$0xf]
      %v1838 = vld [vmem:[%s1812 + $0x94] sm:$0xf]
      %v1839 = vld [vmem:[%s1812 + $0x9c] sm:$0xf]
      %v1840 = vld [vmem:[%s1812 + $0xa0] sm:$0xf]
      %v1841 = vld [vmem:[%s1812 + $0xa8] sm:$0xf]
      %v1842 = vld [vmem:[%s1812 + $0xac] sm:$0xf]
      %v1843 = vld [vmem:[%s1812 + $0xb4] sm:$0xf]
      %v1844 = vld [vmem:[%s1812 + $0xb8] sm:$0xf]
      %s1845 = scalar_lea.vmem %s260, 192
      %v1846 = vld [vmem:[%s1845] sm:$0xf]
      %v1847 = vld [vmem:[%s1845 + $0x4] sm:$0xf]
      %v1848 = vld [vmem:[%s1845 + $0x8] sm:$0xf]
      %v1849 = vld [vmem:[%s1845 + $0xc] sm:$0xf]
      %v1850 = vld [vmem:[%s1845 + $0x10] sm:$0xf]
      %v1851 = vld [vmem:[%s1845 + $0x14] sm:$0xf]
      %v1852 = vld [vmem:[%s1845 + $0x18] sm:$0xf]
      %v1853 = vld [vmem:[%s1845 + $0x1c] sm:$0xf]
      %v1854 = vld [vmem:[%s1845 + $0x20] sm:$0xf]
      %v1855 = vld [vmem:[%s1845 + $0x24] sm:$0xf]
      %v1856 = vld [vmem:[%s1845 + $0x28] sm:$0xf]
      %v1857 = vld [vmem:[%s1845 + $0x2c] sm:$0xf]
      %v1858 = vld [vmem:[%s1845 + $0x30] sm:$0xf]
      %v1859 = vld [vmem:[%s1845 + $0x34] sm:$0xf]
      %v1860 = vld [vmem:[%s1845 + $0x38] sm:$0xf]
      %v1861 = vld [vmem:[%s1845 + $0x3c] sm:$0xf]
      %v1894 = vunpack.c.l.b16 %v1813
      %v1895 = vunpack.c.l.b16 %v1814
      %v1896 = vunpack.c.l.b16 %v1815
      %v1897 = vunpack.c.l.b16 %v1816
      %v1898 = vunpack.c.l.b16 %v1817
      %v1899 = vunpack.c.l.b16 %v1818
      %v1900 = vunpack.c.l.b16 %v1819
      %v1901 = vunpack.c.l.b16 %v1820
      %v1902 = vunpack.c.l.b16 %v1821
      %v1903 = vunpack.c.l.b16 %v1822
      %v1904 = vunpack.c.l.b16 %v1823
      %v1905 = vunpack.c.l.b16 %v1824
      %v1906 = vunpack.c.l.b16 %v1825
      %v1907 = vunpack.c.l.b16 %v1826
      %v1908 = vunpack.c.l.b16 %v1827
      %v1909 = vunpack.c.l.b16 %v1828
      %v1910 = vunpack.c.l.b16 %v1829
      %v1911 = vunpack.c.l.b16 %v1830
      %v1912 = vunpack.c.l.b16 %v1831
      %v1913 = vunpack.c.l.b16 %v1832
      %v1914 = vunpack.c.l.b16 %v1833
      %v1915 = vunpack.c.l.b16 %v1834
      %v1916 = vunpack.c.l.b16 %v1835
      %v1917 = vunpack.c.l.b16 %v1836
      %v1918 = vunpack.c.l.b16 %v1837
      %v1919 = vunpack.c.l.b16 %v1838
      %v1920 = vunpack.c.l.b16 %v1839
      %v1921 = vunpack.c.l.b16 %v1840
      %v1922 = vunpack.c.l.b16 %v1841
      %v1923 = vunpack.c.l.b16 %v1842
      %v1924 = vunpack.c.l.b16 %v1843
      %v1925 = vunpack.c.l.b16 %v1844
      %v1926 = vpack.c.b16 %v1895, %v1894
      %v1927 = vpack.c.b16 %v1897, %v1896
      %v1928 = vpack.c.b16 %v1899, %v1898
      %v1929 = vpack.c.b16 %v1901, %v1900
      %v1930 = vpack.c.b16 %v1903, %v1902
      %v1931 = vpack.c.b16 %v1905, %v1904
      %v1932 = vpack.c.b16 %v1907, %v1906
      %v1933 = vpack.c.b16 %v1909, %v1908
      %v1934 = vpack.c.b16 %v1911, %v1910
      %v1935 = vpack.c.b16 %v1913, %v1912
      %v1936 = vpack.c.b16 %v1915, %v1914
      %v1937 = vpack.c.b16 %v1917, %v1916
      %v1938 = vpack.c.b16 %v1919, %v1918
      %v1939 = vpack.c.b16 %v1921, %v1920
      %v1940 = vpack.c.b16 %v1923, %v1922
      %v1941 = vpack.c.b16 %v1925, %v1924
      %v1974 = vunpack.c.l.b16 %v1846
      %v1975 = vunpack.c.l.b16 %v1847
      %v1976 = vunpack.c.l.b16 %v1848
      %v1977 = vunpack.c.l.b16 %v1849
      %v1978 = vunpack.c.l.b16 %v1850
      %v1979 = vunpack.c.l.b16 %v1851
      %v1980 = vunpack.c.l.b16 %v1852
      %v1981 = vunpack.c.l.b16 %v1853
      %v1982 = vunpack.c.l.b16 %v1854
      %v1983 = vunpack.c.l.b16 %v1855
      %v1984 = vunpack.c.l.b16 %v1856
      %v1985 = vunpack.c.l.b16 %v1857
      %v1986 = vunpack.c.l.b16 %v1858
      %v1987 = vunpack.c.l.b16 %v1859
      %v1988 = vunpack.c.l.b16 %v1860
      %v1989 = vunpack.c.l.b16 %v1861
      %v1990 = vpack.c.b16 %v1975, %v1974
      %v1991 = vpack.c.b16 %v1977, %v1976
      %v1992 = vpack.c.b16 %v1979, %v1978
      %v1993 = vpack.c.b16 %v1981, %v1980
      %v1994 = vpack.c.b16 %v1983, %v1982
      %v1995 = vpack.c.b16 %v1985, %v1984
      %v1996 = vpack.c.b16 %v1987, %v1986
      %v1997 = vpack.c.b16 %v1989, %v1988
      %2006 = vmatprep.subr.bf16.mxu0 0
      %2007 = vmatpush1.bf16.msra.mxu0 %v1990
      %2008 = vmatprep.subr.bf16.mxu0 0
      %2009 = vmatpush1.bf16.msra.mxu0 %v1991
      %2010 = vmatprep.subr.bf16.mxu0 0
      %2011 = vmatpush1.bf16.msra.mxu0 %v1992
      %2012 = vmatprep.subr.bf16.mxu0 0
      %2013 = vmatpush1.bf16.msra.mxu0 %v1993
      %2014 = vmatprep.subr.bf16.mxu0 0
      %2015 = vmatpush1.bf16.msra.mxu0 %v1994
      %2016 = vmatprep.subr.bf16.mxu0 0
      %2017 = vmatpush1.bf16.msra.mxu0 %v1995
      %2018 = vmatprep.subr.bf16.mxu0 0
      %2019 = vmatpush1.bf16.msra.mxu0 %v1996
      %2020 = vmatprep.subr.bf16.mxu0 0
      %2021 = vmatpush1.bf16.msra.mxu0 %v1997
      %2022 = vmatprep.subr.bf16.mxu0 0
      %2023 = vmatpush1.bf16.msra.mxu0 0
      %2024 = vmatprep.subr.bf16.mxu0 0
      %2025 = vmatpush1.bf16.msra.mxu0 0
      %2026 = vmatprep.subr.bf16.mxu0 0
      %2027 = vmatpush1.bf16.msra.mxu0 0
      %2028 = vmatprep.subr.bf16.mxu0 0
      %2029 = vmatpush1.bf16.msra.mxu0 0
      %2030 = vmatprep.subr.bf16.mxu0 0
      %2031 = vmatpush1.bf16.msra.mxu0 0
      %2032 = vmatprep.subr.bf16.mxu0 0
      %2033 = vmatpush1.bf16.msra.mxu0 0
      %2034 = vmatprep.subr.bf16.mxu0 0
      %2035 = vmatpush1.bf16.msra.mxu0 0
      %2036 = vmatprep.subr.bf16.mxu0 0
      %2037 = vmatpush1.bf16.msra.mxu0 0
      %2038 = vmatprep.mubr.bf16.mxu0 0
      %2039 = vmatmul.mubr.bf16.gmra.mrb[0].mxu0 %v1926
      %v2040 = vpop.f32.mrb[0].mxu0
      %v2041 = vadd.f32 0.0, %v2040
      %v2042 = vpop.f32.mrb[0].mxu0
      %v2043 = vpop.f32.mrb[0].mxu0
      %v2044 = vadd.f32 0.0, %v2043
      %v2045 = vpop.f32.mrb[0].mxu0
      %2046 = vmatprep.mubr.bf16.mxu0 0
      %2047 = vmatmul.mubr.bf16.gmra.mrb[0].mxu0 %v1927
      %v2048 = vpop.f32.mrb[0].mxu0
      %v2049 = vadd.f32 0.0, %v2048
      %v2050 = vpop.f32.mrb[0].mxu0
      %v2051 = vpop.f32.mrb[0].mxu0
      %v2052 = vadd.f32 0.0, %v2051
      %v2053 = vpop.f32.mrb[0].mxu0
      %2054 = vmatprep.mubr.bf16.mxu0 0
      %2055 = vmatmul.mubr.bf16.gmra.mrb[0].mxu0 %v1928
      %v2056 = vpop.f32.mrb[0].mxu0
      %v2057 = vadd.f32 0.0, %v2056
      %v2058 = vpop.f32.mrb[0].mxu0
      %v2059 = vpop.f32.mrb[0].mxu0
      %v2060 = vadd.f32 0.0, %v2059
      %v2061 = vpop.f32.mrb[0].mxu0
      %2062 = vmatprep.mubr.bf16.mxu0 0
      %2063 = vmatmul.mubr.bf16.gmra.mrb[0].mxu0 %v1929
      %v2064 = vpop.f32.mrb[0].mxu0
      %v2065 = vadd.f32 0.0, %v2064
      %v2066 = vpop.f32.mrb[0].mxu0
      %v2067 = vpop.f32.mrb[0].mxu0
      %v2068 = vadd.f32 0.0, %v2067
      %v2069 = vpop.f32.mrb[0].mxu0
      %2070 = vmatprep.mubr.bf16.mxu0 0
      %2071 = vmatmul.mubr.bf16.gmra.mrb[0].mxu0 %v1930
      %v2072 = vpop.f32.mrb[0].mxu0
      %v2073 = vadd.f32 0.0, %v2072
      %v2074 = vpop.f32.mrb[0].mxu0
      %v2075 = vpop.f32.mrb[0].mxu0
      %v2076 = vadd.f32 0.0, %v2075
      %v2077 = vpop.f32.mrb[0].mxu0
      %2078 = vmatprep.mubr.bf16.mxu0 0
      %2079 = vmatmul.mubr.bf16.gmra.mrb[0].mxu0 %v1931
      %v2080 = vpop.f32.mrb[0].mxu0
      %v2081 = vadd.f32 0.0, %v2080
      %v2082 = vpop.f32.mrb[0].mxu0
      %v2083 = vpop.f32.mrb[0].mxu0
      %v2084 = vadd.f32 0.0, %v2083
      %v2085 = vpop.f32.mrb[0].mxu0
      %2086 = vmatprep.mubr.bf16.mxu0 0
      %2087 = vmatmul.mubr.bf16.gmra.mrb[0].mxu0 %v1932
      %v2088 = vpop.f32.mrb[0].mxu0
      %v2089 = vadd.f32 0.0, %v2088
      %v2090 = vpop.f32.mrb[0].mxu0
      %v2091 = vpop.f32.mrb[0].mxu0
      %v2092 = vadd.f32 0.0, %v2091
      %v2093 = vpop.f32.mrb[0].mxu0
      %2094 = vmatprep.mubr.bf16.mxu0 0
      %2095 = vmatmul.mubr.bf16.gmra.mrb[0].mxu0 %v1933
      %v2096 = vpop.f32.mrb[0].mxu0
      %v2097 = vadd.f32 0.0, %v2096
      %v2098 = vpop.f32.mrb[0].mxu0
      %v2099 = vpop.f32.mrb[0].mxu0
      %v2100 = vadd.f32 0.0, %v2099
      %v2101 = vpop.f32.mrb[0].mxu0
      %2102 = vmatprep.mubr.bf16.mxu0 0
      %2103 = vmatmul.mubr.bf16.gmra.mrb[0].mxu0 %v1934
      %v2104 = vpop.f32.mrb[0].mxu0
      %v2105 = vadd.f32 0.0, %v2104
      %v2106 = vpop.f32.mrb[0].mxu0
      %v2107 = vpop.f32.mrb[0].mxu0
      %v2108 = vadd.f32 0.0, %v2107
      %v2109 = vpop.f32.mrb[0].mxu0
      %2110 = vmatprep.mubr.bf16.mxu0 0
      %2111 = vmatmul.mubr.bf16.gmra.mrb[0].mxu0 %v1935
      %v2112 = vpop.f32.mrb[0].mxu0
      %v2113 = vadd.f32 0.0, %v2112
      %v2114 = vpop.f32.mrb[0].mxu0
      %v2115 = vpop.f32.mrb[0].mxu0
      %v2116 = vadd.f32 0.0, %v2115
      %v2117 = vpop.f32.mrb[0].mxu0
      %2118 = vmatprep.mubr.bf16.mxu0 0
      %2119 = vmatmul.mubr.bf16.gmra.mrb[0].mxu0 %v1936
      %v2120 = vpop.f32.mrb[0].mxu0
      %v2121 = vadd.f32 0.0, %v2120
      %v2122 = vpop.f32.mrb[0].mxu0
      %v2123 = vpop.f32.mrb[0].mxu0
      %v2124 = vadd.f32 0.0, %v2123
      %v2125 = vpop.f32.mrb[0].mxu0
      %2126 = vmatprep.mubr.bf16.mxu0 0
      %2127 = vmatmul.mubr.bf16.gmra.mrb[0].mxu0 %v1937
      %v2128 = vpop.f32.mrb[0].mxu0
      %v2129 = vadd.f32 0.0, %v2128
      %v2130 = vpop.f32.mrb[0].mxu0
      %v2131 = vpop.f32.mrb[0].mxu0
      %v2132 = vadd.f32 0.0, %v2131
      %v2133 = vpop.f32.mrb[0].mxu0
      %2134 = vmatprep.mubr.bf16.mxu0 0
      %2135 = vmatmul.mubr.bf16.gmra.mrb[0].mxu0 %v1938
      %v2136 = vpop.f32.mrb[0].mxu0
      %v2137 = vadd.f32 0.0, %v2136
      %v2138 = vpop.f32.mrb[0].mxu0
      %v2139 = vpop.f32.mrb[0].mxu0
      %v2140 = vadd.f32 0.0, %v2139
      %v2141 = vpop.f32.mrb[0].mxu0
      %2142 = vmatprep.mubr.bf16.mxu0 0
      %2143 = vmatmul.mubr.bf16.gmra.mrb[0].mxu0 %v1939
      %v2144 = vpop.f32.mrb[0].mxu0
      %v2145 = vadd.f32 0.0, %v2144
      %v2146 = vpop.f32.mrb[0].mxu0
      %v2147 = vpop.f32.mrb[0].mxu0
      %v2148 = vadd.f32 0.0, %v2147
      %v2149 = vpop.f32.mrb[0].mxu0
      %2150 = vmatprep.mubr.bf16.mxu0 0
      %2151 = vmatmul.mubr.bf16.gmra.mrb[0].mxu0 %v1940
      %v2152 = vpop.f32.mrb[0].mxu0
      %v2153 = vadd.f32 0.0, %v2152
      %v2154 = vpop.f32.mrb[0].mxu0
      %v2155 = vpop.f32.mrb[0].mxu0
      %v2156 = vadd.f32 0.0, %v2155
      %v2157 = vpop.f32.mrb[0].mxu0
      %2158 = vmatprep.mubr.bf16.mxu0 0
      %2159 = vmatmul.mubr.bf16.gmra.mrb[0].mxu0 %v1941
      %v2160 = vpop.f32.mrb[0].mxu0
      %v2161 = vadd.f32 0.0, %v2160
      %v2162 = vpop.f32.mrb[0].mxu0
      %v2163 = vpop.f32.mrb[0].mxu0
      %v2164 = vadd.f32 0.0, %v2163
      %v2165 = vpop.f32.mrb[0].mxu0
      %2166 = vdwg.mxu0
      %v2167 = vadd.f32 %v1780, %v2041
      %v2168 = vadd.f32 %v1781, %v2044
      %v2169 = vadd.f32 %v1782, %v2049
      %v2170 = vadd.f32 %v1783, %v2052
      %v2171 = vadd.f32 %v1784, %v2057
      %v2172 = vadd.f32 %v1785, %v2060
      %v2173 = vadd.f32 %v1786, %v2065
      %v2174 = vadd.f32 %v1787, %v2068
      %v2175 = vadd.f32 %v1788, %v2073
      %v2176 = vadd.f32 %v1789, %v2076
      %v2177 = vadd.f32 %v1790, %v2081
      %v2178 = vadd.f32 %v1791, %v2084
      %v2179 = vadd.f32 %v1792, %v2089
      %v2180 = vadd.f32 %v1793, %v2092
      %v2181 = vadd.f32 %v1794, %v2097
      %v2182 = vadd.f32 %v1795, %v2100
      %v2183 = vadd.f32 %v1796, %v2105
      %v2184 = vadd.f32 %v1797, %v2108
      %v2185 = vadd.f32 %v1798, %v2113
      %v2186 = vadd.f32 %v1799, %v2116
      %v2187 = vadd.f32 %v1800, %v2121
      %v2188 = vadd.f32 %v1801, %v2124
      %v2189 = vadd.f32 %v1802, %v2129
      %v2190 = vadd.f32 %v1803, %v2132
      %v2191 = vadd.f32 %v1804, %v2137
      %v2192 = vadd.f32 %v1805, %v2140
      %v2193 = vadd.f32 %v1806, %v2145
      %v2194 = vadd.f32 %v1807, %v2148
      %v2195 = vadd.f32 %v1808, %v2153
      %v2196 = vadd.f32 %v1809, %v2156
      %v2197 = vadd.f32 %v1810, %v2161
      %v2198 = vadd.f32 %v1811, %v2164
      %v2199 = vld [vmem:[%s1812] sm:$0xf]
      %v2200 = vld [vmem:[%s1812 + $0x4] sm:$0xf]
      %v2201 = vld [vmem:[%s1812 + $0x8] sm:$0x1]
      %v2202 = vld [vmem:[%s1812 + $0xc] sm:$0xf]
      %v2203 = vld [vmem:[%s1812 + $0x10] sm:$0xf]
      %v2204 = vld [vmem:[%s1812 + $0x14] sm:$0x1]
      %v2205 = vld [vmem:[%s1812 + $0x18] sm:$0xf]
      %v2206 = vld [vmem:[%s1812 + $0x1c] sm:$0xf]
      %v2207 = vld [vmem:[%s1812 + $0x20] sm:$0x1]
      %v2208 = vld [vmem:[%s1812 + $0x24] sm:$0xf]
      %v2209 = vld [vmem:[%s1812 + $0x28] sm:$0xf]
      %v2210 = vld [vmem:[%s1812 + $0x2c] sm:$0x1]
      %v2211 = vld [vmem:[%s1812 + $0x30] sm:$0xf]
      %v2212 = vld [vmem:[%s1812 + $0x34] sm:$0xf]
      %v2213 = vld [vmem:[%s1812 + $0x38] sm:$0x1]
      %v2214 = vld [vmem:[%s1812 + $0x3c] sm:$0xf]
      %v2215 = vld [vmem:[%s1812 + $0x40] sm:$0xf]
      %v2216 = vld [vmem:[%s1812 + $0x44] sm:$0x1]
      %v2217 = vld [vmem:[%s1812 + $0x48] sm:$0xf]
      %v2218 = vld [vmem:[%s1812 + $0x4c] sm:$0xf]
      %v2219 = vld [vmem:[%s1812 + $0x50] sm:$0x1]
      %v2220 = vld [vmem:[%s1812 + $0x54] sm:$0xf]
      %v2221 = vld [vmem:[%s1812 + $0x58] sm:$0xf]
      %v2222 = vld [vmem:[%s1812 + $0x5c] sm:$0x1]
      %v2223 = vld [vmem:[%s1812 + $0x60] sm:$0xf]
      %v2224 = vld [vmem:[%s1812 + $0x64] sm:$0xf]
      %v2225 = vld [vmem:[%s1812 + $0x68] sm:$0x1]
      %v2226 = vld [vmem:[%s1812 + $0x6c] sm:$0xf]
      %v2227 = vld [vmem:[%s1812 + $0x70] sm:$0xf]
      %v2228 = vld [vmem:[%s1812 + $0x74] sm:$0x1]
      %v2229 = vld [vmem:[%s1812 + $0x78] sm:$0xf]
      %v2230 = vld [vmem:[%s1812 + $0x7c] sm:$0xf]
      %v2231 = vld [vmem:[%s1812 + $0x80] sm:$0x1]
      %v2232 = vld [vmem:[%s1812 + $0x84] sm:$0xf]
      %v2233 = vld [vmem:[%s1812 + $0x88] sm:$0xf]
      %v2234 = vld [vmem:[%s1812 + $0x8c] sm:$0x1]
      %v2235 = vld [vmem:[%s1812 + $0x90] sm:$0xf]
      %v2236 = vld [vmem:[%s1812 + $0x94] sm:$0xf]
      %v2237 = vld [vmem:[%s1812 + $0x98] sm:$0x1]
      %v2238 = vld [vmem:[%s1812 + $0x9c] sm:$0xf]
      %v2239 = vld [vmem:[%s1812 + $0xa0] sm:$0xf]
      %v2240 = vld [vmem:[%s1812 + $0xa4] sm:$0x1]
      %v2241 = vld [vmem:[%s1812 + $0xa8] sm:$0xf]
      %v2242 = vld [vmem:[%s1812 + $0xac] sm:$0xf]
      %v2243 = vld [vmem:[%s1812 + $0xb0] sm:$0x1]
      %v2244 = vld [vmem:[%s1812 + $0xb4] sm:$0xf]
      %v2245 = vld [vmem:[%s1812 + $0xb8] sm:$0xf]
      %v2246 = vld [vmem:[%s1812 + $0xbc] sm:$0x1]
      %v2248 = vshrl.u32 %v2199, 16
      %v2250 = vrot.slane %v2248, 4
      %v2251 = vshll.u32 %v2199, 16
      %v2253 = vrot.slane %v2251, 5
      %v2254 = vor.u32 %v2250, %v2253
      %v2255 = vrot.slane %v2254, 4
      %v2257 = vshll.u32 %v2200, 16
      %v2259 = vrot.slane %v2257, 5
      %v2260 = vsel %vm347, %v2255, %v2259
      %v2261 = vshrl.u32 %v2200, 16
      %v2263 = vrot.slane %v2261, 4
      %v2264 = vor.u32 %v2263, %v2259
      %v2265 = vrot.slane %v2264, 4
      %v2267 = vshll.u32 %v2201, 16
      %v2269 = vrot.slane %v2267, 5
      %v2270 = vsel %vm347, %v2265, %v2269
      %v2272 = vshrl.u32 %v2202, 16
      %v2274 = vrot.slane %v2272, 4
      %v2275 = vshll.u32 %v2202, 16
      %v2277 = vrot.slane %v2275, 5
      %v2278 = vor.u32 %v2274, %v2277
      %v2279 = vrot.slane %v2278, 4
      %v2281 = vshll.u32 %v2203, 16
      %v2283 = vrot.slane %v2281, 5
      %v2284 = vsel %vm347, %v2279, %v2283
      %v2285 = vshrl.u32 %v2203, 16
      %v2287 = vrot.slane %v2285, 4
      %v2288 = vor.u32 %v2287, %v2283
      %v2289 = vrot.slane %v2288, 4
      %v2291 = vshll.u32 %v2204, 16
      %v2293 = vrot.slane %v2291, 5
      %v2294 = vsel %vm347, %v2289, %v2293
      %v2296 = vshrl.u32 %v2205, 16
      %v2298 = vrot.slane %v2296, 4
      %v2299 = vshll.u32 %v2205, 16
      %v2301 = vrot.slane %v2299, 5
      %v2302 = vor.u32 %v2298, %v2301
      %v2303 = vrot.slane %v2302, 4
      %v2305 = vshll.u32 %v2206, 16
      %v2307 = vrot.slane %v2305, 5
      %v2308 = vsel %vm347, %v2303, %v2307
      %v2309 = vshrl.u32 %v2206, 16
      %v2311 = vrot.slane %v2309, 4
      %v2312 = vor.u32 %v2311, %v2307
      %v2313 = vrot.slane %v2312, 4
      %v2315 = vshll.u32 %v2207, 16
      %v2317 = vrot.slane %v2315, 5
      %v2318 = vsel %vm347, %v2313, %v2317
      %v2320 = vshrl.u32 %v2208, 16
      %v2322 = vrot.slane %v2320, 4
      %v2323 = vshll.u32 %v2208, 16
      %v2325 = vrot.slane %v2323, 5
      %v2326 = vor.u32 %v2322, %v2325
      %v2327 = vrot.slane %v2326, 4
      %v2329 = vshll.u32 %v2209, 16
      %v2331 = vrot.slane %v2329, 5
      %v2332 = vsel %vm347, %v2327, %v2331
      %v2333 = vshrl.u32 %v2209, 16
      %v2335 = vrot.slane %v2333, 4
      %v2336 = vor.u32 %v2335, %v2331
      %v2337 = vrot.slane %v2336, 4
      %v2339 = vshll.u32 %v2210, 16
      %v2341 = vrot.slane %v2339, 5
      %v2342 = vsel %vm347, %v2337, %v2341
      %v2344 = vshrl.u32 %v2211, 16
      %v2346 = vrot.slane %v2344, 4
      %v2347 = vshll.u32 %v2211, 16
      %v2349 = vrot.slane %v2347, 5
      %v2350 = vor.u32 %v2346, %v2349
      %v2351 = vrot.slane %v2350, 4
      %v2353 = vshll.u32 %v2212, 16
      %v2355 = vrot.slane %v2353, 5
      %v2356 = vsel %vm347, %v2351, %v2355
      %v2357 = vshrl.u32 %v2212, 16
      %v2359 = vrot.slane %v2357, 4
      %v2360 = vor.u32 %v2359, %v2355
      %v2361 = vrot.slane %v2360, 4
      %v2363 = vshll.u32 %v2213, 16
      %v2365 = vrot.slane %v2363, 5
      %v2366 = vsel %vm347, %v2361, %v2365
      %v2368 = vshrl.u32 %v2214, 16
      %v2370 = vrot.slane %v2368, 4
      %v2371 = vshll.u32 %v2214, 16
      %v2373 = vrot.slane %v2371, 5
      %v2374 = vor.u32 %v2370, %v2373
      %v2375 = vrot.slane %v2374, 4
      %v2377 = vshll.u32 %v2215, 16
      %v2379 = vrot.slane %v2377, 5
      %v2380 = vsel %vm347, %v2375, %v2379
      %v2381 = vshrl.u32 %v2215, 16
      %v2383 = vrot.slane %v2381, 4
      %v2384 = vor.u32 %v2383, %v2379
      %v2385 = vrot.slane %v2384, 4
      %v2387 = vshll.u32 %v2216, 16
      %v2389 = vrot.slane %v2387, 5
      %v2390 = vsel %vm347, %v2385, %v2389
      %v2392 = vshrl.u32 %v2217, 16
      %v2394 = vrot.slane %v2392, 4
      %v2395 = vshll.u32 %v2217, 16
      %v2397 = vrot.slane %v2395, 5
      %v2398 = vor.u32 %v2394, %v2397
      %v2399 = vrot.slane %v2398, 4
      %v2401 = vshll.u32 %v2218, 16
      %v2403 = vrot.slane %v2401, 5
      %v2404 = vsel %vm347, %v2399, %v2403
      %v2405 = vshrl.u32 %v2218, 16
      %v2407 = vrot.slane %v2405, 4
      %v2408 = vor.u32 %v2407, %v2403
      %v2409 = vrot.slane %v2408, 4
      %v2411 = vshll.u32 %v2219, 16
      %v2413 = vrot.slane %v2411, 5
      %v2414 = vsel %vm347, %v2409, %v2413
      %v2416 = vshrl.u32 %v2220, 16
      %v2418 = vrot.slane %v2416, 4
      %v2419 = vshll.u32 %v2220, 16
      %v2421 = vrot.slane %v2419, 5
      %v2422 = vor.u32 %v2418, %v2421
      %v2423 = vrot.slane %v2422, 4
      %v2425 = vshll.u32 %v2221, 16
      %v2427 = vrot.slane %v2425, 5
      %v2428 = vsel %vm347, %v2423, %v2427
      %v2429 = vshrl.u32 %v2221, 16
      %v2431 = vrot.slane %v2429, 4
      %v2432 = vor.u32 %v2431, %v2427
      %v2433 = vrot.slane %v2432, 4
      %v2435 = vshll.u32 %v2222, 16
      %v2437 = vrot.slane %v2435, 5
      %v2438 = vsel %vm347, %v2433, %v2437
      %v2440 = vshrl.u32 %v2223, 16
      %v2442 = vrot.slane %v2440, 4
      %v2443 = vshll.u32 %v2223, 16
      %v2445 = vrot.slane %v2443, 5
      %v2446 = vor.u32 %v2442, %v2445
      %v2447 = vrot.slane %v2446, 4
      %v2449 = vshll.u32 %v2224, 16
      %v2451 = vrot.slane %v2449, 5
      %v2452 = vsel %vm347, %v2447, %v2451
      %v2453 = vshrl.u32 %v2224, 16
      %v2455 = vrot.slane %v2453, 4
      %v2456 = vor.u32 %v2455, %v2451
      %v2457 = vrot.slane %v2456, 4
      %v2459 = vshll.u32 %v2225, 16
      %v2461 = vrot.slane %v2459, 5
      %v2462 = vsel %vm347, %v2457, %v2461
      %v2464 = vshrl.u32 %v2226, 16
      %v2466 = vrot.slane %v2464, 4
      %v2467 = vshll.u32 %v2226, 16
      %v2469 = vrot.slane %v2467, 5
      %v2470 = vor.u32 %v2466, %v2469
      %v2471 = vrot.slane %v2470, 4
      %v2473 = vshll.u32 %v2227, 16
      %v2475 = vrot.slane %v2473, 5
      %v2476 = vsel %vm347, %v2471, %v2475
      %v2477 = vshrl.u32 %v2227, 16
      %v2479 = vrot.slane %v2477, 4
      %v2480 = vor.u32 %v2479, %v2475
      %v2481 = vrot.slane %v2480, 4
      %v2483 = vshll.u32 %v2228, 16
      %v2485 = vrot.slane %v2483, 5
      %v2486 = vsel %vm347, %v2481, %v2485
      %v2488 = vshrl.u32 %v2229, 16
      %v2490 = vrot.slane %v2488, 4
      %v2491 = vshll.u32 %v2229, 16
      %v2493 = vrot.slane %v2491, 5
      %v2494 = vor.u32 %v2490, %v2493
      %v2495 = vrot.slane %v2494, 4
      %v2497 = vshll.u32 %v2230, 16
      %v2499 = vrot.slane %v2497, 5
      %v2500 = vsel %vm347, %v2495, %v2499
      %v2501 = vshrl.u32 %v2230, 16
      %v2503 = vrot.slane %v2501, 4
      %v2504 = vor.u32 %v2503, %v2499
      %v2505 = vrot.slane %v2504, 4
      %v2507 = vshll.u32 %v2231, 16
      %v2509 = vrot.slane %v2507, 5
      %v2510 = vsel %vm347, %v2505, %v2509
      %v2512 = vshrl.u32 %v2232, 16
      %v2514 = vrot.slane %v2512, 4
      %v2515 = vshll.u32 %v2232, 16
      %v2517 = vrot.slane %v2515, 5
      %v2518 = vor.u32 %v2514, %v2517
      %v2519 = vrot.slane %v2518, 4
      %v2521 = vshll.u32 %v2233, 16
      %v2523 = vrot.slane %v2521, 5
      %v2524 = vsel %vm347, %v2519, %v2523
      %v2525 = vshrl.u32 %v2233, 16
      %v2527 = vrot.slane %v2525, 4
      %v2528 = vor.u32 %v2527, %v2523
      %v2529 = vrot.slane %v2528, 4
      %v2531 = vshll.u32 %v2234, 16
      %v2533 = vrot.slane %v2531, 5
      %v2534 = vsel %vm347, %v2529, %v2533
      %v2536 = vshrl.u32 %v2235, 16
      %v2538 = vrot.slane %v2536, 4
      %v2539 = vshll.u32 %v2235, 16
      %v2541 = vrot.slane %v2539, 5
      %v2542 = vor.u32 %v2538, %v2541
      %v2543 = vrot.slane %v2542, 4
      %v2545 = vshll.u32 %v2236, 16
      %v2547 = vrot.slane %v2545, 5
      %v2548 = vsel %vm347, %v2543, %v2547
      %v2549 = vshrl.u32 %v2236, 16
      %v2551 = vrot.slane %v2549, 4
      %v2552 = vor.u32 %v2551, %v2547
      %v2553 = vrot.slane %v2552, 4
      %v2555 = vshll.u32 %v2237, 16
      %v2557 = vrot.slane %v2555, 5
      %v2558 = vsel %vm347, %v2553, %v2557
      %v2560 = vshrl.u32 %v2238, 16
      %v2562 = vrot.slane %v2560, 4
      %v2563 = vshll.u32 %v2238, 16
      %v2565 = vrot.slane %v2563, 5
      %v2566 = vor.u32 %v2562, %v2565
      %v2567 = vrot.slane %v2566, 4
      %v2569 = vshll.u32 %v2239, 16
      %v2571 = vrot.slane %v2569, 5
      %v2572 = vsel %vm347, %v2567, %v2571
      %v2573 = vshrl.u32 %v2239, 16
      %v2575 = vrot.slane %v2573, 4
      %v2576 = vor.u32 %v2575, %v2571
      %v2577 = vrot.slane %v2576, 4
      %v2579 = vshll.u32 %v2240, 16
      %v2581 = vrot.slane %v2579, 5
      %v2582 = vsel %vm347, %v2577, %v2581
      %v2584 = vshrl.u32 %v2241, 16
      %v2586 = vrot.slane %v2584, 4
      %v2587 = vshll.u32 %v2241, 16
      %v2589 = vrot.slane %v2587, 5
      %v2590 = vor.u32 %v2586, %v2589
      %v2591 = vrot.slane %v2590, 4
      %v2593 = vshll.u32 %v2242, 16
      %v2595 = vrot.slane %v2593, 5
      %v2596 = vsel %vm347, %v2591, %v2595
      %v2597 = vshrl.u32 %v2242, 16
      %v2599 = vrot.slane %v2597, 4
      %v2600 = vor.u32 %v2599, %v2595
      %v2601 = vrot.slane %v2600, 4
      %v2603 = vshll.u32 %v2243, 16
      %v2605 = vrot.slane %v2603, 5
      %v2606 = vsel %vm347, %v2601, %v2605
      %v2608 = vshrl.u32 %v2244, 16
      %v2610 = vrot.slane %v2608, 4
      %v2611 = vshll.u32 %v2244, 16
      %v2613 = vrot.slane %v2611, 5
      %v2614 = vor.u32 %v2610, %v2613
      %v2615 = vrot.slane %v2614, 4
      %v2617 = vshll.u32 %v2245, 16
      %v2619 = vrot.slane %v2617, 5
      %v2620 = vsel %vm347, %v2615, %v2619
      %v2621 = vshrl.u32 %v2245, 16
      %v2623 = vrot.slane %v2621, 4
      %v2624 = vor.u32 %v2623, %v2619
      %v2625 = vrot.slane %v2624, 4
      %v2627 = vshll.u32 %v2246, 16
      %v2629 = vrot.slane %v2627, 5
      %v2630 = vsel %vm347, %v2625, %v2629
      %s2631 = scalar_lea.vmem %s260, 256
      %v2632 = vld [vmem:[%s2631] sm:$0xf]
      %v2633 = vld [vmem:[%s2631 + $0x4] sm:$0xf]
      %v2634 = vld [vmem:[%s2631 + $0x8] sm:$0xf]
      %v2635 = vld [vmem:[%s2631 + $0xc] sm:$0xf]
      %v2636 = vld [vmem:[%s2631 + $0x10] sm:$0xf]
      %v2637 = vld [vmem:[%s2631 + $0x14] sm:$0xf]
      %v2638 = vld [vmem:[%s2631 + $0x18] sm:$0xf]
      %v2639 = vld [vmem:[%s2631 + $0x1c] sm:$0xf]
      %v2640 = vld [vmem:[%s2631 + $0x20] sm:$0xf]
      %v2641 = vld [vmem:[%s2631 + $0x24] sm:$0xf]
      %v2642 = vld [vmem:[%s2631 + $0x28] sm:$0xf]
      %v2643 = vld [vmem:[%s2631 + $0x2c] sm:$0xf]
      %v2644 = vld [vmem:[%s2631 + $0x30] sm:$0xf]
      %v2645 = vld [vmem:[%s2631 + $0x34] sm:$0xf]
      %v2646 = vld [vmem:[%s2631 + $0x38] sm:$0xf]
      %v2647 = vld [vmem:[%s2631 + $0x3c] sm:$0xf]
      %v2648 = vunpack.c.l.b16 %v2260
      %v2649 = vunpack.c.l.b16 %v2270
      %v2650 = vunpack.c.l.b16 %v2284
      %v2651 = vunpack.c.l.b16 %v2294
      %v2652 = vunpack.c.l.b16 %v2308
      %v2653 = vunpack.c.l.b16 %v2318
      %v2654 = vunpack.c.l.b16 %v2332
      %v2655 = vunpack.c.l.b16 %v2342
      %v2656 = vunpack.c.l.b16 %v2356
      %v2657 = vunpack.c.l.b16 %v2366
      %v2658 = vunpack.c.l.b16 %v2380
      %v2659 = vunpack.c.l.b16 %v2390
      %v2660 = vunpack.c.l.b16 %v2404
      %v2661 = vunpack.c.l.b16 %v2414
      %v2662 = vunpack.c.l.b16 %v2428
      %v2663 = vunpack.c.l.b16 %v2438
      %v2664 = vunpack.c.l.b16 %v2452
      %v2665 = vunpack.c.l.b16 %v2462
      %v2666 = vunpack.c.l.b16 %v2476
      %v2667 = vunpack.c.l.b16 %v2486
      %v2668 = vunpack.c.l.b16 %v2500
      %v2669 = vunpack.c.l.b16 %v2510
      %v2670 = vunpack.c.l.b16 %v2524
      %v2671 = vunpack.c.l.b16 %v2534
      %v2672 = vunpack.c.l.b16 %v2548
      %v2673 = vunpack.c.l.b16 %v2558
      %v2674 = vunpack.c.l.b16 %v2572
      %v2675 = vunpack.c.l.b16 %v2582
      %v2676 = vunpack.c.l.b16 %v2596
      %v2677 = vunpack.c.l.b16 %v2606
      %v2678 = vunpack.c.l.b16 %v2620
      %v2679 = vunpack.c.l.b16 %v2630
      %v2680 = vpack.c.b16 %v2649, %v2648
      %v2681 = vpack.c.b16 %v2651, %v2650
      %v2682 = vpack.c.b16 %v2653, %v2652
      %v2683 = vpack.c.b16 %v2655, %v2654
      %v2684 = vpack.c.b16 %v2657, %v2656
      %v2685 = vpack.c.b16 %v2659, %v2658
      %v2686 = vpack.c.b16 %v2661, %v2660
      %v2687 = vpack.c.b16 %v2663, %v2662
      %v2688 = vpack.c.b16 %v2665, %v2664
      %v2689 = vpack.c.b16 %v2667, %v2666
      %v2690 = vpack.c.b16 %v2669, %v2668
      %v2691 = vpack.c.b16 %v2671, %v2670
      %v2692 = vpack.c.b16 %v2673, %v2672
      %v2693 = vpack.c.b16 %v2675, %v2674
      %v2694 = vpack.c.b16 %v2677, %v2676
      %v2695 = vpack.c.b16 %v2679, %v2678
      %v2728 = vunpack.c.l.b16 %v2632
      %v2729 = vunpack.c.l.b16 %v2633
      %v2730 = vunpack.c.l.b16 %v2634
      %v2731 = vunpack.c.l.b16 %v2635
      %v2732 = vunpack.c.l.b16 %v2636
      %v2733 = vunpack.c.l.b16 %v2637
      %v2734 = vunpack.c.l.b16 %v2638
      %v2735 = vunpack.c.l.b16 %v2639
      %v2736 = vunpack.c.l.b16 %v2640
      %v2737 = vunpack.c.l.b16 %v2641
      %v2738 = vunpack.c.l.b16 %v2642
      %v2739 = vunpack.c.l.b16 %v2643
      %v2740 = vunpack.c.l.b16 %v2644
      %v2741 = vunpack.c.l.b16 %v2645
      %v2742 = vunpack.c.l.b16 %v2646
      %v2743 = vunpack.c.l.b16 %v2647
      %v2744 = vpack.c.b16 %v2729, %v2728
      %v2745 = vpack.c.b16 %v2731, %v2730
      %v2746 = vpack.c.b16 %v2733, %v2732
      %v2747 = vpack.c.b16 %v2735, %v2734
      %v2748 = vpack.c.b16 %v2737, %v2736
      %v2749 = vpack.c.b16 %v2739, %v2738
      %v2750 = vpack.c.b16 %v2741, %v2740
      %v2751 = vpack.c.b16 %v2743, %v2742
      %2760 = vmatprep.subr.bf16.mxu0 0
      %2761 = vmatpush1.bf16.msra.mxu0 %v2744
      %2762 = vmatprep.subr.bf16.mxu0 0
      %2763 = vmatpush1.bf16.msra.mxu0 %v2745
      %2764 = vmatprep.subr.bf16.mxu0 0
      %2765 = vmatpush1.bf16.msra.mxu0 %v2746
      %2766 = vmatprep.subr.bf16.mxu0 0
      %2767 = vmatpush1.bf16.msra.mxu0 %v2747
      %2768 = vmatprep.subr.bf16.mxu0 0
      %2769 = vmatpush1.bf16.msra.mxu0 %v2748
      %2770 = vmatprep.subr.bf16.mxu0 0
      %2771 = vmatpush1.bf16.msra.mxu0 %v2749
      %2772 = vmatprep.subr.bf16.mxu0 0
      %2773 = vmatpush1.bf16.msra.mxu0 %v2750
      %2774 = vmatprep.subr.bf16.mxu0 0
      %2775 = vmatpush1.bf16.msra.mxu0 %v2751
      %2776 = vmatprep.subr.bf16.mxu0 0
      %2777 = vmatpush1.bf16.msra.mxu0 0
      %2778 = vmatprep.subr.bf16.mxu0 0
      %2779 = vmatpush1.bf16.msra.mxu0 0
      %2780 = vmatprep.subr.bf16.mxu0 0
      %2781 = vmatpush1.bf16.msra.mxu0 0
      %2782 = vmatprep.subr.bf16.mxu0 0
      %2783 = vmatpush1.bf16.msra.mxu0 0
      %2784 = vmatprep.subr.bf16.mxu0 0
      %2785 = vmatpush1.bf16.msra.mxu0 0
      %2786 = vmatprep.subr.bf16.mxu0 0
      %2787 = vmatpush1.bf16.msra.mxu0 0
      %2788 = vmatprep.subr.bf16.mxu0 0
      %2789 = vmatpush1.bf16.msra.mxu0 0
      %2790 = vmatprep.subr.bf16.mxu0 0
      %2791 = vmatpush1.bf16.msra.mxu0 0
      %2792 = vmatprep.mubr.bf16.mxu0 0
      %2793 = vmatmul.mubr.bf16.gmra.mrb[0].mxu0 %v2680
      %v2794 = vpop.f32.mrb[0].mxu0
      %v2795 = vadd.f32 0.0, %v2794
      %v2796 = vpop.f32.mrb[0].mxu0
      %v2797 = vpop.f32.mrb[0].mxu0
      %v2798 = vadd.f32 0.0, %v2797
      %v2799 = vpop.f32.mrb[0].mxu0
      %2800 = vmatprep.mubr.bf16.mxu0 0
      %2801 = vmatmul.mubr.bf16.gmra.mrb[0].mxu0 %v2681
      %v2802 = vpop.f32.mrb[0].mxu0
      %v2803 = vadd.f32 0.0, %v2802
      %v2804 = vpop.f32.mrb[0].mxu0
      %v2805 = vpop.f32.mrb[0].mxu0
      %v2806 = vadd.f32 0.0, %v2805
      %v2807 = vpop.f32.mrb[0].mxu0
      %2808 = vmatprep.mubr.bf16.mxu0 0
      %2809 = vmatmul.mubr.bf16.gmra.mrb[0].mxu0 %v2682
      %v2810 = vpop.f32.mrb[0].mxu0
      %v2811 = vadd.f32 0.0, %v2810
      %v2812 = vpop.f32.mrb[0].mxu0
      %v2813 = vpop.f32.mrb[0].mxu0
      %v2814 = vadd.f32 0.0, %v2813
      %v2815 = vpop.f32.mrb[0].mxu0
      %2816 = vmatprep.mubr.bf16.mxu0 0
      %2817 = vmatmul.mubr.bf16.gmra.mrb[0].mxu0 %v2683
      %v2818 = vpop.f32.mrb[0].mxu0
      %v2819 = vadd.f32 0.0, %v2818
      %v2820 = vpop.f32.mrb[0].mxu0
      %v2821 = vpop.f32.mrb[0].mxu0
      %v2822 = vadd.f32 0.0, %v2821
      %v2823 = vpop.f32.mrb[0].mxu0
      %2824 = vmatprep.mubr.bf16.mxu0 0
      %2825 = vmatmul.mubr.bf16.gmra.mrb[0].mxu0 %v2684
      %v2826 = vpop.f32.mrb[0].mxu0
      %v2827 = vadd.f32 0.0, %v2826
      %v2828 = vpop.f32.mrb[0].mxu0
      %v2829 = vpop.f32.mrb[0].mxu0
      %v2830 = vadd.f32 0.0, %v2829
      %v2831 = vpop.f32.mrb[0].mxu0
      %2832 = vmatprep.mubr.bf16.mxu0 0
      %2833 = vmatmul.mubr.bf16.gmra.mrb[0].mxu0 %v2685
      %v2834 = vpop.f32.mrb[0].mxu0
      %v2835 = vadd.f32 0.0, %v2834
      %v2836 = vpop.f32.mrb[0].mxu0
      %v2837 = vpop.f32.mrb[0].mxu0
      %v2838 = vadd.f32 0.0, %v2837
      %v2839 = vpop.f32.mrb[0].mxu0
      %2840 = vmatprep.mubr.bf16.mxu0 0
      %2841 = vmatmul.mubr.bf16.gmra.mrb[0].mxu0 %v2686
      %v2842 = vpop.f32.mrb[0].mxu0
      %v2843 = vadd.f32 0.0, %v2842
      %v2844 = vpop.f32.mrb[0].mxu0
      %v2845 = vpop.f32.mrb[0].mxu0
      %v2846 = vadd.f32 0.0, %v2845
      %v2847 = vpop.f32.mrb[0].mxu0
      %2848 = vmatprep.mubr.bf16.mxu0 0
      %2849 = vmatmul.mubr.bf16.gmra.mrb[0].mxu0 %v2687
      %v2850 = vpop.f32.mrb[0].mxu0
      %v2851 = vadd.f32 0.0, %v2850
      %v2852 = vpop.f32.mrb[0].mxu0
      %v2853 = vpop.f32.mrb[0].mxu0
      %v2854 = vadd.f32 0.0, %v2853
      %v2855 = vpop.f32.mrb[0].mxu0
      %2856 = vmatprep.mubr.bf16.mxu0 0
      %2857 = vmatmul.mubr.bf16.gmra.mrb[0].mxu0 %v2688
      %v2858 = vpop.f32.mrb[0].mxu0
      %v2859 = vadd.f32 0.0, %v2858
      %v2860 = vpop.f32.mrb[0].mxu0
      %v2861 = vpop.f32.mrb[0].mxu0
      %v2862 = vadd.f32 0.0, %v2861
      %v2863 = vpop.f32.mrb[0].mxu0
      %2864 = vmatprep.mubr.bf16.mxu0 0
      %2865 = vmatmul.mubr.bf16.gmra.mrb[0].mxu0 %v2689
      %v2866 = vpop.f32.mrb[0].mxu0
      %v2867 = vadd.f32 0.0, %v2866
      %v2868 = vpop.f32.mrb[0].mxu0
      %v2869 = vpop.f32.mrb[0].mxu0
      %v2870 = vadd.f32 0.0, %v2869
      %v2871 = vpop.f32.mrb[0].mxu0
      %2872 = vmatprep.mubr.bf16.mxu0 0
      %2873 = vmatmul.mubr.bf16.gmra.mrb[0].mxu0 %v2690
      %v2874 = vpop.f32.mrb[0].mxu0
      %v2875 = vadd.f32 0.0, %v2874
      %v2876 = vpop.f32.mrb[0].mxu0
      %v2877 = vpop.f32.mrb[0].mxu0
      %v2878 = vadd.f32 0.0, %v2877
      %v2879 = vpop.f32.mrb[0].mxu0
      %2880 = vmatprep.mubr.bf16.mxu0 0
      %2881 = vmatmul.mubr.bf16.gmra.mrb[0].mxu0 %v2691
      %v2882 = vpop.f32.mrb[0].mxu0
      %v2883 = vadd.f32 0.0, %v2882
      %v2884 = vpop.f32.mrb[0].mxu0
      %v2885 = vpop.f32.mrb[0].mxu0
      %v2886 = vadd.f32 0.0, %v2885
      %v2887 = vpop.f32.mrb[0].mxu0
      %2888 = vmatprep.mubr.bf16.mxu0 0
      %2889 = vmatmul.mubr.bf16.gmra.mrb[0].mxu0 %v2692
      %v2890 = vpop.f32.mrb[0].mxu0
      %v2891 = vadd.f32 0.0, %v2890
      %v2892 = vpop.f32.mrb[0].mxu0
      %v2893 = vpop.f32.mrb[0].mxu0
      %v2894 = vadd.f32 0.0, %v2893
      %v2895 = vpop.f32.mrb[0].mxu0
      %2896 = vmatprep.mubr.bf16.mxu0 0
      %2897 = vmatmul.mubr.bf16.gmra.mrb[0].mxu0 %v2693
      %v2898 = vpop.f32.mrb[0].mxu0
      %v2899 = vadd.f32 0.0, %v2898
      %v2900 = vpop.f32.mrb[0].mxu0
      %v2901 = vpop.f32.mrb[0].mxu0
      %v2902 = vadd.f32 0.0, %v2901
      %v2903 = vpop.f32.mrb[0].mxu0
      %2904 = vmatprep.mubr.bf16.mxu0 0
      %2905 = vmatmul.mubr.bf16.gmra.mrb[0].mxu0 %v2694
      %v2906 = vpop.f32.mrb[0].mxu0
      %v2907 = vadd.f32 0.0, %v2906
      %v2908 = vpop.f32.mrb[0].mxu0
      %v2909 = vpop.f32.mrb[0].mxu0
      %v2910 = vadd.f32 0.0, %v2909
      %v2911 = vpop.f32.mrb[0].mxu0
      %2912 = vmatprep.mubr.bf16.mxu0 0
      %2913 = vmatmul.mubr.bf16.gmra.mrb[0].mxu0 %v2695
      %v2914 = vpop.f32.mrb[0].mxu0
      %v2915 = vadd.f32 0.0, %v2914
      %v2916 = vpop.f32.mrb[0].mxu0
      %v2917 = vpop.f32.mrb[0].mxu0
      %v2918 = vadd.f32 0.0, %v2917
      %v2919 = vpop.f32.mrb[0].mxu0
      %2920 = vdwg.mxu0
      %v2921 = vadd.f32 %v2167, %v2795
      %v2922 = vadd.f32 %v2168, %v2798
      %v2923 = vadd.f32 %v2169, %v2803
      %v2924 = vadd.f32 %v2170, %v2806
      %v2925 = vadd.f32 %v2171, %v2811
      %v2926 = vadd.f32 %v2172, %v2814
      %v2927 = vadd.f32 %v2173, %v2819
      %v2928 = vadd.f32 %v2174, %v2822
      %v2929 = vadd.f32 %v2175, %v2827
      %v2930 = vadd.f32 %v2176, %v2830
      %v2931 = vadd.f32 %v2177, %v2835
      %v2932 = vadd.f32 %v2178, %v2838
      %v2933 = vadd.f32 %v2179, %v2843
      %v2934 = vadd.f32 %v2180, %v2846
      %v2935 = vadd.f32 %v2181, %v2851
      %v2936 = vadd.f32 %v2182, %v2854
      %v2937 = vadd.f32 %v2183, %v2859
      %v2938 = vadd.f32 %v2184, %v2862
      %v2939 = vadd.f32 %v2185, %v2867
      %v2940 = vadd.f32 %v2186, %v2870
      %v2941 = vadd.f32 %v2187, %v2875
      %v2942 = vadd.f32 %v2188, %v2878
      %v2943 = vadd.f32 %v2189, %v2883
      %v2944 = vadd.f32 %v2190, %v2886
      %v2945 = vadd.f32 %v2191, %v2891
      %v2946 = vadd.f32 %v2192, %v2894
      %v2947 = vadd.f32 %v2193, %v2899
      %v2948 = vadd.f32 %v2194, %v2902
      %v2949 = vadd.f32 %v2195, %v2907
      %v2950 = vadd.f32 %v2196, %v2910
      %v2951 = vadd.f32 %v2197, %v2915
      %v2952 = vadd.f32 %v2198, %v2918
      %v2953 = vld [vmem:[%s1812] sm:$0xe]
      %v2954 = vld [vmem:[%s1812 + $0xc] sm:$0xe]
      %v2955 = vld [vmem:[%s1812 + $0x18] sm:$0xe]
      %v2956 = vld [vmem:[%s1812 + $0x24] sm:$0xe]
      %v2957 = vld [vmem:[%s1812 + $0x30] sm:$0xe]
      %v2958 = vld [vmem:[%s1812 + $0x3c] sm:$0xe]
      %v2959 = vld [vmem:[%s1812 + $0x48] sm:$0xe]
      %v2960 = vld [vmem:[%s1812 + $0x54] sm:$0xe]
      %v2961 = vld [vmem:[%s1812 + $0x60] sm:$0xe]
      %v2962 = vld [vmem:[%s1812 + $0x6c] sm:$0xe]
      %v2963 = vld [vmem:[%s1812 + $0x78] sm:$0xe]
      %v2964 = vld [vmem:[%s1812 + $0x84] sm:$0xe]
      %v2965 = vld [vmem:[%s1812 + $0x90] sm:$0xe]
      %v2966 = vld [vmem:[%s1812 + $0x9c] sm:$0xe]
      %v2967 = vld [vmem:[%s1812 + $0xa8] sm:$0xe]
      %v2968 = vld [vmem:[%s1812 + $0xb4] sm:$0xe]
      %v3017 = vrot.slane %v2953, 5
      %v3018 = vrot.slane %v3017, 4
      %v3019 = vrot.slane %v2200, 5
      %v3020 = vsel %vm1377, %v3018, %v3019
      %v3021 = vrot.slane %v3019, 4
      %v3022 = vrot.slane %v2201, 5
      %v3023 = vsel %vm1377, %v3021, %v3022
      %v3024 = vrot.slane %v2954, 5
      %v3025 = vrot.slane %v3024, 4
      %v3026 = vrot.slane %v2203, 5
      %v3027 = vsel %vm1377, %v3025, %v3026
      %v3028 = vrot.slane %v3026, 4
      %v3029 = vrot.slane %v2204, 5
      %v3030 = vsel %vm1377, %v3028, %v3029
      %v3031 = vrot.slane %v2955, 5
      %v3032 = vrot.slane %v3031, 4
      %v3033 = vrot.slane %v2206, 5
      %v3034 = vsel %vm1377, %v3032, %v3033
      %v3035 = vrot.slane %v3033, 4
      %v3036 = vrot.slane %v2207, 5
      %v3037 = vsel %vm1377, %v3035, %v3036
      %v3038 = vrot.slane %v2956, 5
      %v3039 = vrot.slane %v3038, 4
      %v3040 = vrot.slane %v2209, 5
      %v3041 = vsel %vm1377, %v3039, %v3040
      %v3042 = vrot.slane %v3040, 4
      %v3043 = vrot.slane %v2210, 5
      %v3044 = vsel %vm1377, %v3042, %v3043
      %v3045 = vrot.slane %v2957, 5
      %v3046 = vrot.slane %v3045, 4
      %v3047 = vrot.slane %v2212, 5
      %v3048 = vsel %vm1377, %v3046, %v3047
      %v3049 = vrot.slane %v3047, 4
      %v3050 = vrot.slane %v2213, 5
      %v3051 = vsel %vm1377, %v3049, %v3050
      %v3052 = vrot.slane %v2958, 5
      %v3053 = vrot.slane %v3052, 4
      %v3054 = vrot.slane %v2215, 5
      %v3055 = vsel %vm1377, %v3053, %v3054
      %v3056 = vrot.slane %v3054, 4
      %v3057 = vrot.slane %v2216, 5
      %v3058 = vsel %vm1377, %v3056, %v3057
      %v3059 = vrot.slane %v2959, 5
      %v3060 = vrot.slane %v3059, 4
      %v3061 = vrot.slane %v2218, 5
      %v3062 = vsel %vm1377, %v3060, %v3061
      %v3063 = vrot.slane %v3061, 4
      %v3064 = vrot.slane %v2219, 5
      %v3065 = vsel %vm1377, %v3063, %v3064
      %v3066 = vrot.slane %v2960, 5
      %v3067 = vrot.slane %v3066, 4
      %v3068 = vrot.slane %v2221, 5
      %v3069 = vsel %vm1377, %v3067, %v3068
      %v3070 = vrot.slane %v3068, 4
      %v3071 = vrot.slane %v2222, 5
      %v3072 = vsel %vm1377, %v3070, %v3071
      %v3073 = vrot.slane %v2961, 5
      %v3074 = vrot.slane %v3073, 4
      %v3075 = vrot.slane %v2224, 5
      %v3076 = vsel %vm1377, %v3074, %v3075
      %v3077 = vrot.slane %v3075, 4
      %v3078 = vrot.slane %v2225, 5
      %v3079 = vsel %vm1377, %v3077, %v3078
      %v3080 = vrot.slane %v2962, 5
      %v3081 = vrot.slane %v3080, 4
      %v3082 = vrot.slane %v2227, 5
      %v3083 = vsel %vm1377, %v3081, %v3082
      %v3084 = vrot.slane %v3082, 4
      %v3085 = vrot.slane %v2228, 5
      %v3086 = vsel %vm1377, %v3084, %v3085
      %v3087 = vrot.slane %v2963, 5
      %v3088 = vrot.slane %v3087, 4
      %v3089 = vrot.slane %v2230, 5
      %v3090 = vsel %vm1377, %v3088, %v3089
      %v3091 = vrot.slane %v3089, 4
      %v3092 = vrot.slane %v2231, 5
      %v3093 = vsel %vm1377, %v3091, %v3092
      %v3094 = vrot.slane %v2964, 5
      %v3095 = vrot.slane %v3094, 4
      %v3096 = vrot.slane %v2233, 5
      %v3097 = vsel %vm1377, %v3095, %v3096
      %v3098 = vrot.slane %v3096, 4
      %v3099 = vrot.slane %v2234, 5
      %v3100 = vsel %vm1377, %v3098, %v3099
      %v3101 = vrot.slane %v2965, 5
      %v3102 = vrot.slane %v3101, 4
      %v3103 = vrot.slane %v2236, 5
      %v3104 = vsel %vm1377, %v3102, %v3103
      %v3105 = vrot.slane %v3103, 4
      %v3106 = vrot.slane %v2237, 5
      %v3107 = vsel %vm1377, %v3105, %v3106
      %v3108 = vrot.slane %v2966, 5
      %v3109 = vrot.slane %v3108, 4
      %v3110 = vrot.slane %v2239, 5
      %v3111 = vsel %vm1377, %v3109, %v3110
      %v3112 = vrot.slane %v3110, 4
      %v3113 = vrot.slane %v2240, 5
      %v3114 = vsel %vm1377, %v3112, %v3113
      %v3115 = vrot.slane %v2967, 5
      %v3116 = vrot.slane %v3115, 4
      %v3117 = vrot.slane %v2242, 5
      %v3118 = vsel %vm1377, %v3116, %v3117
      %v3119 = vrot.slane %v3117, 4
      %v3120 = vrot.slane %v2243, 5
      %v3121 = vsel %vm1377, %v3119, %v3120
      %v3122 = vrot.slane %v2968, 5
      %v3123 = vrot.slane %v3122, 4
      %v3124 = vrot.slane %v2245, 5
      %v3125 = vsel %vm1377, %v3123, %v3124
      %v3126 = vrot.slane %v3124, 4
      %v3127 = vrot.slane %v2246, 5
      %v3128 = vsel %vm1377, %v3126, %v3127
      %s3129 = scalar_lea.vmem %s260, 320
      %v3130 = vld [vmem:[%s3129] sm:$0xf]
      %v3131 = vld [vmem:[%s3129 + $0x4] sm:$0xf]
      %v3132 = vld [vmem:[%s3129 + $0x8] sm:$0xf]
      %v3133 = vld [vmem:[%s3129 + $0xc] sm:$0xf]
      %v3134 = vld [vmem:[%s3129 + $0x10] sm:$0xf]
      %v3135 = vld [vmem:[%s3129 + $0x14] sm:$0xf]
      %v3136 = vld [vmem:[%s3129 + $0x18] sm:$0xf]
      %v3137 = vld [vmem:[%s3129 + $0x1c] sm:$0xf]
      %v3138 = vld [vmem:[%s3129 + $0x20] sm:$0xf]
      %v3139 = vld [vmem:[%s3129 + $0x24] sm:$0xf]
      %v3140 = vld [vmem:[%s3129 + $0x28] sm:$0xf]
      %v3141 = vld [vmem:[%s3129 + $0x2c] sm:$0xf]
      %v3142 = vld [vmem:[%s3129 + $0x30] sm:$0xf]
      %v3143 = vld [vmem:[%s3129 + $0x34] sm:$0xf]
      %v3144 = vld [vmem:[%s3129 + $0x38] sm:$0xf]
      %v3145 = vld [vmem:[%s3129 + $0x3c] sm:$0xf]
      %v3146 = vunpack.c.l.b16 %v3020
      %v3147 = vunpack.c.l.b16 %v3023
      %v3148 = vunpack.c.l.b16 %v3027
      %v3149 = vunpack.c.l.b16 %v3030
      %v3150 = vunpack.c.l.b16 %v3034
      %v3151 = vunpack.c.l.b16 %v3037
      %v3152 = vunpack.c.l.b16 %v3041
      %v3153 = vunpack.c.l.b16 %v3044
      %v3154 = vunpack.c.l.b16 %v3048
      %v3155 = vunpack.c.l.b16 %v3051
      %v3156 = vunpack.c.l.b16 %v3055
      %v3157 = vunpack.c.l.b16 %v3058
      %v3158 = vunpack.c.l.b16 %v3062
      %v3159 = vunpack.c.l.b16 %v3065
      %v3160 = vunpack.c.l.b16 %v3069
      %v3161 = vunpack.c.l.b16 %v3072
      %v3162 = vunpack.c.l.b16 %v3076
      %v3163 = vunpack.c.l.b16 %v3079
      %v3164 = vunpack.c.l.b16 %v3083
      %v3165 = vunpack.c.l.b16 %v3086
      %v3166 = vunpack.c.l.b16 %v3090
      %v3167 = vunpack.c.l.b16 %v3093
      %v3168 = vunpack.c.l.b16 %v3097
      %v3169 = vunpack.c.l.b16 %v3100
      %v3170 = vunpack.c.l.b16 %v3104
      %v3171 = vunpack.c.l.b16 %v3107
      %v3172 = vunpack.c.l.b16 %v3111
      %v3173 = vunpack.c.l.b16 %v3114
      %v3174 = vunpack.c.l.b16 %v3118
      %v3175 = vunpack.c.l.b16 %v3121
      %v3176 = vunpack.c.l.b16 %v3125
      %v3177 = vunpack.c.l.b16 %v3128
      %v3178 = vpack.c.b16 %v3147, %v3146
      %v3179 = vpack.c.b16 %v3149, %v3148
      %v3180 = vpack.c.b16 %v3151, %v3150
      %v3181 = vpack.c.b16 %v3153, %v3152
      %v3182 = vpack.c.b16 %v3155, %v3154
      %v3183 = vpack.c.b16 %v3157, %v3156
      %v3184 = vpack.c.b16 %v3159, %v3158
      %v3185 = vpack.c.b16 %v3161, %v3160
      %v3186 = vpack.c.b16 %v3163, %v3162
      %v3187 = vpack.c.b16 %v3165, %v3164
      %v3188 = vpack.c.b16 %v3167, %v3166
      %v3189 = vpack.c.b16 %v3169, %v3168
      %v3190 = vpack.c.b16 %v3171, %v3170
      %v3191 = vpack.c.b16 %v3173, %v3172
      %v3192 = vpack.c.b16 %v3175, %v3174
      %v3193 = vpack.c.b16 %v3177, %v3176
      %v3226 = vunpack.c.l.b16 %v3130
      %v3227 = vunpack.c.l.b16 %v3131
      %v3228 = vunpack.c.l.b16 %v3132
      %v3229 = vunpack.c.l.b16 %v3133
      %v3230 = vunpack.c.l.b16 %v3134
      %v3231 = vunpack.c.l.b16 %v3135
      %v3232 = vunpack.c.l.b16 %v3136
      %v3233 = vunpack.c.l.b16 %v3137
      %v3234 = vunpack.c.l.b16 %v3138
      %v3235 = vunpack.c.l.b16 %v3139
      %v3236 = vunpack.c.l.b16 %v3140
      %v3237 = vunpack.c.l.b16 %v3141
      %v3238 = vunpack.c.l.b16 %v3142
      %v3239 = vunpack.c.l.b16 %v3143
      %v3240 = vunpack.c.l.b16 %v3144
      %v3241 = vunpack.c.l.b16 %v3145
      %v3242 = vpack.c.b16 %v3227, %v3226
      %v3243 = vpack.c.b16 %v3229, %v3228
      %v3244 = vpack.c.b16 %v3231, %v3230
      %v3245 = vpack.c.b16 %v3233, %v3232
      %v3246 = vpack.c.b16 %v3235, %v3234
      %v3247 = vpack.c.b16 %v3237, %v3236
      %v3248 = vpack.c.b16 %v3239, %v3238
      %v3249 = vpack.c.b16 %v3241, %v3240
      %3258 = vmatprep.subr.bf16.mxu0 0
      %3259 = vmatpush1.bf16.msra.mxu0 %v3242
      %3260 = vmatprep.subr.bf16.mxu0 0
      %3261 = vmatpush1.bf16.msra.mxu0 %v3243
      %3262 = vmatprep.subr.bf16.mxu0 0
      %3263 = vmatpush1.bf16.msra.mxu0 %v3244
      %3264 = vmatprep.subr.bf16.mxu0 0
      %3265 = vmatpush1.bf16.msra.mxu0 %v3245
      %3266 = vmatprep.subr.bf16.mxu0 0
      %3267 = vmatpush1.bf16.msra.mxu0 %v3246
      %3268 = vmatprep.subr.bf16.mxu0 0
      %3269 = vmatpush1.bf16.msra.mxu0 %v3247
      %3270 = vmatprep.subr.bf16.mxu0 0
      %3271 = vmatpush1.bf16.msra.mxu0 %v3248
      %3272 = vmatprep.subr.bf16.mxu0 0
      %3273 = vmatpush1.bf16.msra.mxu0 %v3249
      %3274 = vmatprep.subr.bf16.mxu0 0
      %3275 = vmatpush1.bf16.msra.mxu0 0
      %3276 = vmatprep.subr.bf16.mxu0 0
      %3277 = vmatpush1.bf16.msra.mxu0 0
      %3278 = vmatprep.subr.bf16.mxu0 0
      %3279 = vmatpush1.bf16.msra.mxu0 0
      %3280 = vmatprep.subr.bf16.mxu0 0
      %3281 = vmatpush1.bf16.msra.mxu0 0
      %3282 = vmatprep.subr.bf16.mxu0 0
      %3283 = vmatpush1.bf16.msra.mxu0 0
      %3284 = vmatprep.subr.bf16.mxu0 0
      %3285 = vmatpush1.bf16.msra.mxu0 0
      %3286 = vmatprep.subr.bf16.mxu0 0
      %3287 = vmatpush1.bf16.msra.mxu0 0
      %3288 = vmatprep.subr.bf16.mxu0 0
      %3289 = vmatpush1.bf16.msra.mxu0 0
      %3290 = vmatprep.mubr.bf16.mxu0 0
      %3291 = vmatmul.mubr.bf16.gmra.mrb[0].mxu0 %v3178
      %v3292 = vpop.f32.mrb[0].mxu0
      %v3293 = vadd.f32 0.0, %v3292
      %v3294 = vpop.f32.mrb[0].mxu0
      %v3295 = vpop.f32.mrb[0].mxu0
      %v3296 = vadd.f32 0.0, %v3295
      %v3297 = vpop.f32.mrb[0].mxu0
      %3298 = vmatprep.mubr.bf16.mxu0 0
      %3299 = vmatmul.mubr.bf16.gmra.mrb[0].mxu0 %v3179
      %v3300 = vpop.f32.mrb[0].mxu0
      %v3301 = vadd.f32 0.0, %v3300
      %v3302 = vpop.f32.mrb[0].mxu0
      %v3303 = vpop.f32.mrb[0].mxu0
      %v3304 = vadd.f32 0.0, %v3303
      %v3305 = vpop.f32.mrb[0].mxu0
      %3306 = vmatprep.mubr.bf16.mxu0 0
      %3307 = vmatmul.mubr.bf16.gmra.mrb[0].mxu0 %v3180
      %v3308 = vpop.f32.mrb[0].mxu0
      %v3309 = vadd.f32 0.0, %v3308
      %v3310 = vpop.f32.mrb[0].mxu0
      %v3311 = vpop.f32.mrb[0].mxu0
      %v3312 = vadd.f32 0.0, %v3311
      %v3313 = vpop.f32.mrb[0].mxu0
      %3314 = vmatprep.mubr.bf16.mxu0 0
      %3315 = vmatmul.mubr.bf16.gmra.mrb[0].mxu0 %v3181
      %v3316 = vpop.f32.mrb[0].mxu0
      %v3317 = vadd.f32 0.0, %v3316
      %v3318 = vpop.f32.mrb[0].mxu0
      %v3319 = vpop.f32.mrb[0].mxu0
      %v3320 = vadd.f32 0.0, %v3319
      %v3321 = vpop.f32.mrb[0].mxu0
      %3322 = vmatprep.mubr.bf16.mxu0 0
      %3323 = vmatmul.mubr.bf16.gmra.mrb[0].mxu0 %v3182
      %v3324 = vpop.f32.mrb[0].mxu0
      %v3325 = vadd.f32 0.0, %v3324
      %v3326 = vpop.f32.mrb[0].mxu0
      %v3327 = vpop.f32.mrb[0].mxu0
      %v3328 = vadd.f32 0.0, %v3327
      %v3329 = vpop.f32.mrb[0].mxu0
      %3330 = vmatprep.mubr.bf16.mxu0 0
      %3331 = vmatmul.mubr.bf16.gmra.mrb[0].mxu0 %v3183
      %v3332 = vpop.f32.mrb[0].mxu0
      %v3333 = vadd.f32 0.0, %v3332
      %v3334 = vpop.f32.mrb[0].mxu0
      %v3335 = vpop.f32.mrb[0].mxu0
      %v3336 = vadd.f32 0.0, %v3335
      %v3337 = vpop.f32.mrb[0].mxu0
      %3338 = vmatprep.mubr.bf16.mxu0 0
      %3339 = vmatmul.mubr.bf16.gmra.mrb[0].mxu0 %v3184
      %v3340 = vpop.f32.mrb[0].mxu0
      %v3341 = vadd.f32 0.0, %v3340
      %v3342 = vpop.f32.mrb[0].mxu0
      %v3343 = vpop.f32.mrb[0].mxu0
      %v3344 = vadd.f32 0.0, %v3343
      %v3345 = vpop.f32.mrb[0].mxu0
      %3346 = vmatprep.mubr.bf16.mxu0 0
      %3347 = vmatmul.mubr.bf16.gmra.mrb[0].mxu0 %v3185
      %v3348 = vpop.f32.mrb[0].mxu0
      %v3349 = vadd.f32 0.0, %v3348
      %v3350 = vpop.f32.mrb[0].mxu0
      %v3351 = vpop.f32.mrb[0].mxu0
      %v3352 = vadd.f32 0.0, %v3351
      %v3353 = vpop.f32.mrb[0].mxu0
      %3354 = vmatprep.mubr.bf16.mxu0 0
      %3355 = vmatmul.mubr.bf16.gmra.mrb[0].mxu0 %v3186
      %v3356 = vpop.f32.mrb[0].mxu0
      %v3357 = vadd.f32 0.0, %v3356
      %v3358 = vpop.f32.mrb[0].mxu0
      %v3359 = vpop.f32.mrb[0].mxu0
      %v3360 = vadd.f32 0.0, %v3359
      %v3361 = vpop.f32.mrb[0].mxu0
      %3362 = vmatprep.mubr.bf16.mxu0 0
      %3363 = vmatmul.mubr.bf16.gmra.mrb[0].mxu0 %v3187
      %v3364 = vpop.f32.mrb[0].mxu0
      %v3365 = vadd.f32 0.0, %v3364
      %v3366 = vpop.f32.mrb[0].mxu0
      %v3367 = vpop.f32.mrb[0].mxu0
      %v3368 = vadd.f32 0.0, %v3367
      %v3369 = vpop.f32.mrb[0].mxu0
      %3370 = vmatprep.mubr.bf16.mxu0 0
      %3371 = vmatmul.mubr.bf16.gmra.mrb[0].mxu0 %v3188
      %v3372 = vpop.f32.mrb[0].mxu0
      %v3373 = vadd.f32 0.0, %v3372
      %v3374 = vpop.f32.mrb[0].mxu0
      %v3375 = vpop.f32.mrb[0].mxu0
      %v3376 = vadd.f32 0.0, %v3375
      %v3377 = vpop.f32.mrb[0].mxu0
      %3378 = vmatprep.mubr.bf16.mxu0 0
      %3379 = vmatmul.mubr.bf16.gmra.mrb[0].mxu0 %v3189
      %v3380 = vpop.f32.mrb[0].mxu0
      %v3381 = vadd.f32 0.0, %v3380
      %v3382 = vpop.f32.mrb[0].mxu0
      %v3383 = vpop.f32.mrb[0].mxu0
      %v3384 = vadd.f32 0.0, %v3383
      %v3385 = vpop.f32.mrb[0].mxu0
      %3386 = vmatprep.mubr.bf16.mxu0 0
      %3387 = vmatmul.mubr.bf16.gmra.mrb[0].mxu0 %v3190
      %v3388 = vpop.f32.mrb[0].mxu0
      %v3389 = vadd.f32 0.0, %v3388
      %v3390 = vpop.f32.mrb[0].mxu0
      %v3391 = vpop.f32.mrb[0].mxu0
      %v3392 = vadd.f32 0.0, %v3391
      %v3393 = vpop.f32.mrb[0].mxu0
      %3394 = vmatprep.mubr.bf16.mxu0 0
      %3395 = vmatmul.mubr.bf16.gmra.mrb[0].mxu0 %v3191
      %v3396 = vpop.f32.mrb[0].mxu0
      %v3397 = vadd.f32 0.0, %v3396
      %v3398 = vpop.f32.mrb[0].mxu0
      %v3399 = vpop.f32.mrb[0].mxu0
      %v3400 = vadd.f32 0.0, %v3399
      %v3401 = vpop.f32.mrb[0].mxu0
      %3402 = vmatprep.mubr.bf16.mxu0 0
      %3403 = vmatmul.mubr.bf16.gmra.mrb[0].mxu0 %v3192
      %v3404 = vpop.f32.mrb[0].mxu0
      %v3405 = vadd.f32 0.0, %v3404
      %v3406 = vpop.f32.mrb[0].mxu0
      %v3407 = vpop.f32.mrb[0].mxu0
      %v3408 = vadd.f32 0.0, %v3407
      %v3409 = vpop.f32.mrb[0].mxu0
      %3410 = vmatprep.mubr.bf16.mxu0 0
      %3411 = vmatmul.mubr.bf16.gmra.mrb[0].mxu0 %v3193
      %v3412 = vpop.f32.mrb[0].mxu0
      %v3413 = vadd.f32 0.0, %v3412
      %v3414 = vpop.f32.mrb[0].mxu0
      %v3415 = vpop.f32.mrb[0].mxu0
      %v3416 = vadd.f32 0.0, %v3415
      %v3417 = vpop.f32.mrb[0].mxu0
      %3418 = vdwg.mxu0
      %v3419 = vadd.f32 %v2921, %v3293
      %v3420 = vadd.f32 %v2922, %v3296
      %v3421 = vadd.f32 %v2923, %v3301
      %v3422 = vadd.f32 %v2924, %v3304
      %v3423 = vadd.f32 %v2925, %v3309
      %v3424 = vadd.f32 %v2926, %v3312
      %v3425 = vadd.f32 %v2927, %v3317
      %v3426 = vadd.f32 %v2928, %v3320
      %v3427 = vadd.f32 %v2929, %v3325
      %v3428 = vadd.f32 %v2930, %v3328
      %v3429 = vadd.f32 %v2931, %v3333
      %v3430 = vadd.f32 %v2932, %v3336
      %v3431 = vadd.f32 %v2933, %v3341
      %v3432 = vadd.f32 %v2934, %v3344
      %v3433 = vadd.f32 %v2935, %v3349
      %v3434 = vadd.f32 %v2936, %v3352
      %v3435 = vadd.f32 %v2937, %v3357
      %v3436 = vadd.f32 %v2938, %v3360
      %v3437 = vadd.f32 %v2939, %v3365
      %v3438 = vadd.f32 %v2940, %v3368
      %v3439 = vadd.f32 %v2941, %v3373
      %v3440 = vadd.f32 %v2942, %v3376
      %v3441 = vadd.f32 %v2943, %v3381
      %v3442 = vadd.f32 %v2944, %v3384
      %v3443 = vadd.f32 %v2945, %v3389
      %v3444 = vadd.f32 %v2946, %v3392
      %v3445 = vadd.f32 %v2947, %v3397
      %v3446 = vadd.f32 %v2948, %v3400
      %v3447 = vadd.f32 %v2949, %v3405
      %v3448 = vadd.f32 %v2950, %v3408
      %v3449 = vadd.f32 %v2951, %v3413
      %v3450 = vadd.f32 %v2952, %v3416
      %s3451 = scalar_lea.vmem %s256, 24
      %v3452 = vld [vmem:[%s3451] sm:$0xf]
      %v3453 = vld [vmem:[%s3451 + $0x4] sm:$0xf]
      %v3454 = vld [vmem:[%s3451 + $0xc] sm:$0xf]
      %v3455 = vld [vmem:[%s3451 + $0x10] sm:$0xf]
      %v3456 = vld [vmem:[%s3451 + $0x18] sm:$0xf]
      %v3457 = vld [vmem:[%s3451 + $0x1c] sm:$0xf]
      %v3458 = vld [vmem:[%s3451 + $0x24] sm:$0xf]
      %v3459 = vld [vmem:[%s3451 + $0x28] sm:$0xf]
      %v3460 = vld [vmem:[%s3451 + $0x30] sm:$0xf]
      %v3461 = vld [vmem:[%s3451 + $0x34] sm:$0xf]
      %v3462 = vld [vmem:[%s3451 + $0x3c] sm:$0xf]
      %v3463 = vld [vmem:[%s3451 + $0x40] sm:$0xf]
      %v3464 = vld [vmem:[%s3451 + $0x48] sm:$0xf]
      %v3465 = vld [vmem:[%s3451 + $0x4c] sm:$0xf]
      %v3466 = vld [vmem:[%s3451 + $0x54] sm:$0xf]
      %v3467 = vld [vmem:[%s3451 + $0x58] sm:$0xf]
      %v3468 = vld [vmem:[%s3451 + $0x60] sm:$0xf]
      %v3469 = vld [vmem:[%s3451 + $0x64] sm:$0xf]
      %v3470 = vld [vmem:[%s3451 + $0x6c] sm:$0xf]
      %v3471 = vld [vmem:[%s3451 + $0x70] sm:$0xf]
      %v3472 = vld [vmem:[%s3451 + $0x78] sm:$0xf]
      %v3473 = vld [vmem:[%s3451 + $0x7c] sm:$0xf]
      %v3474 = vld [vmem:[%s3451 + $0x84] sm:$0xf]
      %v3475 = vld [vmem:[%s3451 + $0x88] sm:$0xf]
      %v3476 = vld [vmem:[%s3451 + $0x90] sm:$0xf]
      %v3477 = vld [vmem:[%s3451 + $0x94] sm:$0xf]
      %v3478 = vld [vmem:[%s3451 + $0x9c] sm:$0xf]
      %v3479 = vld [vmem:[%s3451 + $0xa0] sm:$0xf]
      %v3480 = vld [vmem:[%s3451 + $0xa8] sm:$0xf]
      %v3481 = vld [vmem:[%s3451 + $0xac] sm:$0xf]
      %v3482 = vld [vmem:[%s3451 + $0xb4] sm:$0xf]
      %v3483 = vld [vmem:[%s3451 + $0xb8] sm:$0xf]
      %s3484 = scalar_lea.vmem %s260, 384
      %v3485 = vld [vmem:[%s3484] sm:$0xf]
      %v3486 = vld [vmem:[%s3484 + $0x4] sm:$0xf]
      %v3487 = vld [vmem:[%s3484 + $0x8] sm:$0xf]
      %v3488 = vld [vmem:[%s3484 + $0xc] sm:$0xf]
      %v3489 = vld [vmem:[%s3484 + $0x10] sm:$0xf]
      %v3490 = vld [vmem:[%s3484 + $0x14] sm:$0xf]
      %v3491 = vld [vmem:[%s3484 + $0x18] sm:$0xf]
      %v3492 = vld [vmem:[%s3484 + $0x1c] sm:$0xf]
      %v3493 = vld [vmem:[%s3484 + $0x20] sm:$0xf]
      %v3494 = vld [vmem:[%s3484 + $0x24] sm:$0xf]
      %v3495 = vld [vmem:[%s3484 + $0x28] sm:$0xf]
      %v3496 = vld [vmem:[%s3484 + $0x2c] sm:$0xf]
      %v3497 = vld [vmem:[%s3484 + $0x30] sm:$0xf]
      %v3498 = vld [vmem:[%s3484 + $0x34] sm:$0xf]
      %v3499 = vld [vmem:[%s3484 + $0x38] sm:$0xf]
      %v3500 = vld [vmem:[%s3484 + $0x3c] sm:$0xf]
      %v3533 = vunpack.c.l.b16 %v3452
      %v3534 = vunpack.c.l.b16 %v3453
      %v3535 = vunpack.c.l.b16 %v3454
      %v3536 = vunpack.c.l.b16 %v3455
      %v3537 = vunpack.c.l.b16 %v3456
      %v3538 = vunpack.c.l.b16 %v3457
      %v3539 = vunpack.c.l.b16 %v3458
      %v3540 = vunpack.c.l.b16 %v3459
      %v3541 = vunpack.c.l.b16 %v3460
      %v3542 = vunpack.c.l.b16 %v3461
      %v3543 = vunpack.c.l.b16 %v3462
      %v3544 = vunpack.c.l.b16 %v3463
      %v3545 = vunpack.c.l.b16 %v3464
      %v3546 = vunpack.c.l.b16 %v3465
      %v3547 = vunpack.c.l.b16 %v3466
      %v3548 = vunpack.c.l.b16 %v3467
      %v3549 = vunpack.c.l.b16 %v3468
      %v3550 = vunpack.c.l.b16 %v3469
      %v3551 = vunpack.c.l.b16 %v3470
      %v3552 = vunpack.c.l.b16 %v3471
      %v3553 = vunpack.c.l.b16 %v3472
      %v3554 = vunpack.c.l.b16 %v3473
      %v3555 = vunpack.c.l.b16 %v3474
      %v3556 = vunpack.c.l.b16 %v3475
      %v3557 = vunpack.c.l.b16 %v3476
      %v3558 = vunpack.c.l.b16 %v3477
      %v3559 = vunpack.c.l.b16 %v3478
      %v3560 = vunpack.c.l.b16 %v3479
      %v3561 = vunpack.c.l.b16 %v3480
      %v3562 = vunpack.c.l.b16 %v3481
      %v3563 = vunpack.c.l.b16 %v3482
      %v3564 = vunpack.c.l.b16 %v3483
      %v3565 = vpack.c.b16 %v3534, %v3533
      %v3566 = vpack.c.b16 %v3536, %v3535
      %v3567 = vpack.c.b16 %v3538, %v3537
      %v3568 = vpack.c.b16 %v3540, %v3539
      %v3569 = vpack.c.b16 %v3542, %v3541
      %v3570 = vpack.c.b16 %v3544, %v3543
      %v3571 = vpack.c.b16 %v3546, %v3545
      %v3572 = vpack.c.b16 %v3548, %v3547
      %v3573 = vpack.c.b16 %v3550, %v3549
      %v3574 = vpack.c.b16 %v3552, %v3551
      %v3575 = vpack.c.b16 %v3554, %v3553
      %v3576 = vpack.c.b16 %v3556, %v3555
      %v3577 = vpack.c.b16 %v3558, %v3557
      %v3578 = vpack.c.b16 %v3560, %v3559
      %v3579 = vpack.c.b16 %v3562, %v3561
      %v3580 = vpack.c.b16 %v3564, %v3563
      %v3613 = vunpack.c.l.b16 %v3485
      %v3614 = vunpack.c.l.b16 %v3486
      %v3615 = vunpack.c.l.b16 %v3487
      %v3616 = vunpack.c.l.b16 %v3488
      %v3617 = vunpack.c.l.b16 %v3489
      %v3618 = vunpack.c.l.b16 %v3490
      %v3619 = vunpack.c.l.b16 %v3491
      %v3620 = vunpack.c.l.b16 %v3492
      %v3621 = vunpack.c.l.b16 %v3493
      %v3622 = vunpack.c.l.b16 %v3494
      %v3623 = vunpack.c.l.b16 %v3495
      %v3624 = vunpack.c.l.b16 %v3496
      %v3625 = vunpack.c.l.b16 %v3497
      %v3626 = vunpack.c.l.b16 %v3498
      %v3627 = vunpack.c.l.b16 %v3499
      %v3628 = vunpack.c.l.b16 %v3500
      %v3629 = vpack.c.b16 %v3614, %v3613
      %v3630 = vpack.c.b16 %v3616, %v3615
      %v3631 = vpack.c.b16 %v3618, %v3617
      %v3632 = vpack.c.b16 %v3620, %v3619
      %v3633 = vpack.c.b16 %v3622, %v3621
      %v3634 = vpack.c.b16 %v3624, %v3623
      %v3635 = vpack.c.b16 %v3626, %v3625
      %v3636 = vpack.c.b16 %v3628, %v3627
      %3645 = vmatprep.subr.bf16.mxu0 0
      %3646 = vmatpush1.bf16.msra.mxu0 %v3629
      %3647 = vmatprep.subr.bf16.mxu0 0
      %3648 = vmatpush1.bf16.msra.mxu0 %v3630
      %3649 = vmatprep.subr.bf16.mxu0 0
      %3650 = vmatpush1.bf16.msra.mxu0 %v3631
      %3651 = vmatprep.subr.bf16.mxu0 0
      %3652 = vmatpush1.bf16.msra.mxu0 %v3632
      %3653 = vmatprep.subr.bf16.mxu0 0
      %3654 = vmatpush1.bf16.msra.mxu0 %v3633
      %3655 = vmatprep.subr.bf16.mxu0 0
      %3656 = vmatpush1.bf16.msra.mxu0 %v3634
      %3657 = vmatprep.subr.bf16.mxu0 0
      %3658 = vmatpush1.bf16.msra.mxu0 %v3635
      %3659 = vmatprep.subr.bf16.mxu0 0
      %3660 = vmatpush1.bf16.msra.mxu0 %v3636
      %3661 = vmatprep.subr.bf16.mxu0 0
      %3662 = vmatpush1.bf16.msra.mxu0 0
      %3663 = vmatprep.subr.bf16.mxu0 0
      %3664 = vmatpush1.bf16.msra.mxu0 0
      %3665 = vmatprep.subr.bf16.mxu0 0
      %3666 = vmatpush1.bf16.msra.mxu0 0
      %3667 = vmatprep.subr.bf16.mxu0 0
      %3668 = vmatpush1.bf16.msra.mxu0 0
      %3669 = vmatprep.subr.bf16.mxu0 0
      %3670 = vmatpush1.bf16.msra.mxu0 0
      %3671 = vmatprep.subr.bf16.mxu0 0
      %3672 = vmatpush1.bf16.msra.mxu0 0
      %3673 = vmatprep.subr.bf16.mxu0 0
      %3674 = vmatpush1.bf16.msra.mxu0 0
      %3675 = vmatprep.subr.bf16.mxu0 0
      %3676 = vmatpush1.bf16.msra.mxu0 0
      %3677 = vmatprep.mubr.bf16.mxu0 0
      %3678 = vmatmul.mubr.bf16.gmra.mrb[0].mxu0 %v3565
      %v3679 = vpop.f32.mrb[0].mxu0
      %v3680 = vadd.f32 0.0, %v3679
      %v3681 = vpop.f32.mrb[0].mxu0
      %v3682 = vpop.f32.mrb[0].mxu0
      %v3683 = vadd.f32 0.0, %v3682
      %v3684 = vpop.f32.mrb[0].mxu0
      %3685 = vmatprep.mubr.bf16.mxu0 0
      %3686 = vmatmul.mubr.bf16.gmra.mrb[0].mxu0 %v3566
      %v3687 = vpop.f32.mrb[0].mxu0
      %v3688 = vadd.f32 0.0, %v3687
      %v3689 = vpop.f32.mrb[0].mxu0
      %v3690 = vpop.f32.mrb[0].mxu0
      %v3691 = vadd.f32 0.0, %v3690
      %v3692 = vpop.f32.mrb[0].mxu0
      %3693 = vmatprep.mubr.bf16.mxu0 0
      %3694 = vmatmul.mubr.bf16.gmra.mrb[0].mxu0 %v3567
      %v3695 = vpop.f32.mrb[0].mxu0
      %v3696 = vadd.f32 0.0, %v3695
      %v3697 = vpop.f32.mrb[0].mxu0
      %v3698 = vpop.f32.mrb[0].mxu0
      %v3699 = vadd.f32 0.0, %v3698
      %v3700 = vpop.f32.mrb[0].mxu0
      %3701 = vmatprep.mubr.bf16.mxu0 0
      %3702 = vmatmul.mubr.bf16.gmra.mrb[0].mxu0 %v3568
      %v3703 = vpop.f32.mrb[0].mxu0
      %v3704 = vadd.f32 0.0, %v3703
      %v3705 = vpop.f32.mrb[0].mxu0
      %v3706 = vpop.f32.mrb[0].mxu0
      %v3707 = vadd.f32 0.0, %v3706
      %v3708 = vpop.f32.mrb[0].mxu0
      %3709 = vmatprep.mubr.bf16.mxu0 0
      %3710 = vmatmul.mubr.bf16.gmra.mrb[0].mxu0 %v3569
      %v3711 = vpop.f32.mrb[0].mxu0
      %v3712 = vadd.f32 0.0, %v3711
      %v3713 = vpop.f32.mrb[0].mxu0
      %v3714 = vpop.f32.mrb[0].mxu0
      %v3715 = vadd.f32 0.0, %v3714
      %v3716 = vpop.f32.mrb[0].mxu0
      %3717 = vmatprep.mubr.bf16.mxu0 0
      %3718 = vmatmul.mubr.bf16.gmra.mrb[0].mxu0 %v3570
      %v3719 = vpop.f32.mrb[0].mxu0
      %v3720 = vadd.f32 0.0, %v3719
      %v3721 = vpop.f32.mrb[0].mxu0
      %v3722 = vpop.f32.mrb[0].mxu0
      %v3723 = vadd.f32 0.0, %v3722
      %v3724 = vpop.f32.mrb[0].mxu0
      %3725 = vmatprep.mubr.bf16.mxu0 0
      %3726 = vmatmul.mubr.bf16.gmra.mrb[0].mxu0 %v3571
      %v3727 = vpop.f32.mrb[0].mxu0
      %v3728 = vadd.f32 0.0, %v3727
      %v3729 = vpop.f32.mrb[0].mxu0
      %v3730 = vpop.f32.mrb[0].mxu0
      %v3731 = vadd.f32 0.0, %v3730
      %v3732 = vpop.f32.mrb[0].mxu0
      %3733 = vmatprep.mubr.bf16.mxu0 0
      %3734 = vmatmul.mubr.bf16.gmra.mrb[0].mxu0 %v3572
      %v3735 = vpop.f32.mrb[0].mxu0
      %v3736 = vadd.f32 0.0, %v3735
      %v3737 = vpop.f32.mrb[0].mxu0
      %v3738 = vpop.f32.mrb[0].mxu0
      %v3739 = vadd.f32 0.0, %v3738
      %v3740 = vpop.f32.mrb[0].mxu0
      %3741 = vmatprep.mubr.bf16.mxu0 0
      %3742 = vmatmul.mubr.bf16.gmra.mrb[0].mxu0 %v3573
      %v3743 = vpop.f32.mrb[0].mxu0
      %v3744 = vadd.f32 0.0, %v3743
      %v3745 = vpop.f32.mrb[0].mxu0
      %v3746 = vpop.f32.mrb[0].mxu0
      %v3747 = vadd.f32 0.0, %v3746
      %v3748 = vpop.f32.mrb[0].mxu0
      %3749 = vmatprep.mubr.bf16.mxu0 0
      %3750 = vmatmul.mubr.bf16.gmra.mrb[0].mxu0 %v3574
      %v3751 = vpop.f32.mrb[0].mxu0
      %v3752 = vadd.f32 0.0, %v3751
      %v3753 = vpop.f32.mrb[0].mxu0
      %v3754 = vpop.f32.mrb[0].mxu0
      %v3755 = vadd.f32 0.0, %v3754
      %v3756 = vpop.f32.mrb[0].mxu0
      %3757 = vmatprep.mubr.bf16.mxu0 0
      %3758 = vmatmul.mubr.bf16.gmra.mrb[0].mxu0 %v3575
      %v3759 = vpop.f32.mrb[0].mxu0
      %v3760 = vadd.f32 0.0, %v3759
      %v3761 = vpop.f32.mrb[0].mxu0
      %v3762 = vpop.f32.mrb[0].mxu0
      %v3763 = vadd.f32 0.0, %v3762
      %v3764 = vpop.f32.mrb[0].mxu0
      %3765 = vmatprep.mubr.bf16.mxu0 0
      %3766 = vmatmul.mubr.bf16.gmra.mrb[0].mxu0 %v3576
      %v3767 = vpop.f32.mrb[0].mxu0
      %v3768 = vadd.f32 0.0, %v3767
      %v3769 = vpop.f32.mrb[0].mxu0
      %v3770 = vpop.f32.mrb[0].mxu0
      %v3771 = vadd.f32 0.0, %v3770
      %v3772 = vpop.f32.mrb[0].mxu0
      %3773 = vmatprep.mubr.bf16.mxu0 0
      %3774 = vmatmul.mubr.bf16.gmra.mrb[0].mxu0 %v3577
      %v3775 = vpop.f32.mrb[0].mxu0
      %v3776 = vadd.f32 0.0, %v3775
      %v3777 = vpop.f32.mrb[0].mxu0
      %v3778 = vpop.f32.mrb[0].mxu0
      %v3779 = vadd.f32 0.0, %v3778
      %v3780 = vpop.f32.mrb[0].mxu0
      %3781 = vmatprep.mubr.bf16.mxu0 0
      %3782 = vmatmul.mubr.bf16.gmra.mrb[0].mxu0 %v3578
      %v3783 = vpop.f32.mrb[0].mxu0
      %v3784 = vadd.f32 0.0, %v3783
      %v3785 = vpop.f32.mrb[0].mxu0
      %v3786 = vpop.f32.mrb[0].mxu0
      %v3787 = vadd.f32 0.0, %v3786
      %v3788 = vpop.f32.mrb[0].mxu0
      %3789 = vmatprep.mubr.bf16.mxu0 0
      %3790 = vmatmul.mubr.bf16.gmra.mrb[0].mxu0 %v3579
      %v3791 = vpop.f32.mrb[0].mxu0
      %v3792 = vadd.f32 0.0, %v3791
      %v3793 = vpop.f32.mrb[0].mxu0
      %v3794 = vpop.f32.mrb[0].mxu0
      %v3795 = vadd.f32 0.0, %v3794
      %v3796 = vpop.f32.mrb[0].mxu0
      %3797 = vmatprep.mubr.bf16.mxu0 0
      %3798 = vmatmul.mubr.bf16.gmra.mrb[0].mxu0 %v3580
      %v3799 = vpop.f32.mrb[0].mxu0
      %v3800 = vadd.f32 0.0, %v3799
      %v3801 = vpop.f32.mrb[0].mxu0
      %v3802 = vpop.f32.mrb[0].mxu0
      %v3803 = vadd.f32 0.0, %v3802
      %v3804 = vpop.f32.mrb[0].mxu0
      %3805 = vdwg.mxu0
      %v3806 = vadd.f32 %v3419, %v3680
      %v3807 = vadd.f32 %v3420, %v3683
      %v3808 = vadd.f32 %v3421, %v3688
      %v3809 = vadd.f32 %v3422, %v3691
      %v3810 = vadd.f32 %v3423, %v3696
      %v3811 = vadd.f32 %v3424, %v3699
      %v3812 = vadd.f32 %v3425, %v3704
      %v3813 = vadd.f32 %v3426, %v3707
      %v3814 = vadd.f32 %v3427, %v3712
      %v3815 = vadd.f32 %v3428, %v3715
      %v3816 = vadd.f32 %v3429, %v3720
      %v3817 = vadd.f32 %v3430, %v3723
      %v3818 = vadd.f32 %v3431, %v3728
      %v3819 = vadd.f32 %v3432, %v3731
      %v3820 = vadd.f32 %v3433, %v3736
      %v3821 = vadd.f32 %v3434, %v3739
      %v3822 = vadd.f32 %v3435, %v3744
      %v3823 = vadd.f32 %v3436, %v3747
      %v3824 = vadd.f32 %v3437, %v3752
      %v3825 = vadd.f32 %v3438, %v3755
      %v3826 = vadd.f32 %v3439, %v3760
      %v3827 = vadd.f32 %v3440, %v3763
      %v3828 = vadd.f32 %v3441, %v3768
      %v3829 = vadd.f32 %v3442, %v3771
      %v3830 = vadd.f32 %v3443, %v3776
      %v3831 = vadd.f32 %v3444, %v3779
      %v3832 = vadd.f32 %v3445, %v3784
      %v3833 = vadd.f32 %v3446, %v3787
      %v3834 = vadd.f32 %v3447, %v3792
      %v3835 = vadd.f32 %v3448, %v3795
      %v3836 = vadd.f32 %v3449, %v3800
      %v3837 = vadd.f32 %v3450, %v3803
      %v3838 = vld [vmem:[%s3451] sm:$0xf]
      %v3839 = vld [vmem:[%s3451 + $0x4] sm:$0xf]
      %v3840 = vld [vmem:[%s3451 + $0x8] sm:$0x1]
      %v3841 = vld [vmem:[%s3451 + $0xc] sm:$0xf]
      %v3842 = vld [vmem:[%s3451 + $0x10] sm:$0xf]
      %v3843 = vld [vmem:[%s3451 + $0x14] sm:$0x1]
      %v3844 = vld [vmem:[%s3451 + $0x18] sm:$0xf]
      %v3845 = vld [vmem:[%s3451 + $0x1c] sm:$0xf]
      %v3846 = vld [vmem:[%s3451 + $0x20] sm:$0x1]
      %v3847 = vld [vmem:[%s3451 + $0x24] sm:$0xf]
      %v3848 = vld [vmem:[%s3451 + $0x28] sm:$0xf]
      %v3849 = vld [vmem:[%s3451 + $0x2c] sm:$0x1]
      %v3850 = vld [vmem:[%s3451 + $0x30] sm:$0xf]
      %v3851 = vld [vmem:[%s3451 + $0x34] sm:$0xf]
      %v3852 = vld [vmem:[%s3451 + $0x38] sm:$0x1]
      %v3853 = vld [vmem:[%s3451 + $0x3c] sm:$0xf]
      %v3854 = vld [vmem:[%s3451 + $0x40] sm:$0xf]
      %v3855 = vld [vmem:[%s3451 + $0x44] sm:$0x1]
      %v3856 = vld [vmem:[%s3451 + $0x48] sm:$0xf]
      %v3857 = vld [vmem:[%s3451 + $0x4c] sm:$0xf]
      %v3858 = vld [vmem:[%s3451 + $0x50] sm:$0x1]
      %v3859 = vld [vmem:[%s3451 + $0x54] sm:$0xf]
      %v3860 = vld [vmem:[%s3451 + $0x58] sm:$0xf]
      %v3861 = vld [vmem:[%s3451 + $0x5c] sm:$0x1]
      %v3862 = vld [vmem:[%s3451 + $0x60] sm:$0xf]
      %v3863 = vld [vmem:[%s3451 + $0x64] sm:$0xf]
      %v3864 = vld [vmem:[%s3451 + $0x68] sm:$0x1]
      %v3865 = vld [vmem:[%s3451 + $0x6c] sm:$0xf]
      %v3866 = vld [vmem:[%s3451 + $0x70] sm:$0xf]
      %v3867 = vld [vmem:[%s3451 + $0x74] sm:$0x1]
      %v3868 = vld [vmem:[%s3451 + $0x78] sm:$0xf]
      %v3869 = vld [vmem:[%s3451 + $0x7c] sm:$0xf]
      %v3870 = vld [vmem:[%s3451 + $0x80] sm:$0x1]
      %v3871 = vld [vmem:[%s3451 + $0x84] sm:$0xf]
      %v3872 = vld [vmem:[%s3451 + $0x88] sm:$0xf]
      %v3873 = vld [vmem:[%s3451 + $0x8c] sm:$0x1]
      %v3874 = vld [vmem:[%s3451 + $0x90] sm:$0xf]
      %v3875 = vld [vmem:[%s3451 + $0x94] sm:$0xf]
      %v3876 = vld [vmem:[%s3451 + $0x98] sm:$0x1]
      %v3877 = vld [vmem:[%s3451 + $0x9c] sm:$0xf]
      %v3878 = vld [vmem:[%s3451 + $0xa0] sm:$0xf]
      %v3879 = vld [vmem:[%s3451 + $0xa4] sm:$0x1]
      %v3880 = vld [vmem:[%s3451 + $0xa8] sm:$0xf]
      %v3881 = vld [vmem:[%s3451 + $0xac] sm:$0xf]
      %v3882 = vld [vmem:[%s3451 + $0xb0] sm:$0x1]
      %v3883 = vld [vmem:[%s3451 + $0xb4] sm:$0xf]
      %v3884 = vld [vmem:[%s3451 + $0xb8] sm:$0xf]
      %v3885 = vld [vmem:[%s3451 + $0xbc] sm:$0x1]
      %v3887 = vshrl.u32 %v3838, 16
      %v3889 = vrot.slane %v3887, 4
      %v3890 = vshll.u32 %v3838, 16
      %v3892 = vrot.slane %v3890, 5
      %v3893 = vor.u32 %v3889, %v3892
      %v3894 = vrot.slane %v3893, 4
      %v3896 = vshll.u32 %v3839, 16
      %v3898 = vrot.slane %v3896, 5
      %v3899 = vsel %vm347, %v3894, %v3898
      %v3900 = vshrl.u32 %v3839, 16
      %v3902 = vrot.slane %v3900, 4
      %v3903 = vor.u32 %v3902, %v3898
      %v3904 = vrot.slane %v3903, 4
      %v3906 = vshll.u32 %v3840, 16
      %v3908 = vrot.slane %v3906, 5
      %v3909 = vsel %vm347, %v3904, %v3908
      %v3911 = vshrl.u32 %v3841, 16
      %v3913 = vrot.slane %v3911, 4
      %v3914 = vshll.u32 %v3841, 16
      %v3916 = vrot.slane %v3914, 5
      %v3917 = vor.u32 %v3913, %v3916
      %v3918 = vrot.slane %v3917, 4
      %v3920 = vshll.u32 %v3842, 16
      %v3922 = vrot.slane %v3920, 5
      %v3923 = vsel %vm347, %v3918, %v3922
      %v3924 = vshrl.u32 %v3842, 16
      %v3926 = vrot.slane %v3924, 4
      %v3927 = vor.u32 %v3926, %v3922
      %v3928 = vrot.slane %v3927, 4
      %v3930 = vshll.u32 %v3843, 16
      %v3932 = vrot.slane %v3930, 5
      %v3933 = vsel %vm347, %v3928, %v3932
      %v3935 = vshrl.u32 %v3844, 16
      %v3937 = vrot.slane %v3935, 4
      %v3938 = vshll.u32 %v3844, 16
      %v3940 = vrot.slane %v3938, 5
      %v3941 = vor.u32 %v3937, %v3940
      %v3942 = vrot.slane %v3941, 4
      %v3944 = vshll.u32 %v3845, 16
      %v3946 = vrot.slane %v3944, 5
      %v3947 = vsel %vm347, %v3942, %v3946
      %v3948 = vshrl.u32 %v3845, 16
      %v3950 = vrot.slane %v3948, 4
      %v3951 = vor.u32 %v3950, %v3946
      %v3952 = vrot.slane %v3951, 4
      %v3954 = vshll.u32 %v3846, 16
      %v3956 = vrot.slane %v3954, 5
      %v3957 = vsel %vm347, %v3952, %v3956
      %v3959 = vshrl.u32 %v3847, 16
      %v3961 = vrot.slane %v3959, 4
      %v3962 = vshll.u32 %v3847, 16
      %v3964 = vrot.slane %v3962, 5
      %v3965 = vor.u32 %v3961, %v3964
      %v3966 = vrot.slane %v3965, 4
      %v3968 = vshll.u32 %v3848, 16
      %v3970 = vrot.slane %v3968, 5
      %v3971 = vsel %vm347, %v3966, %v3970
      %v3972 = vshrl.u32 %v3848, 16
      %v3974 = vrot.slane %v3972, 4
      %v3975 = vor.u32 %v3974, %v3970
      %v3976 = vrot.slane %v3975, 4
      %v3978 = vshll.u32 %v3849, 16
      %v3980 = vrot.slane %v3978, 5
      %v3981 = vsel %vm347, %v3976, %v3980
      %v3983 = vshrl.u32 %v3850, 16
      %v3985 = vrot.slane %v3983, 4
      %v3986 = vshll.u32 %v3850, 16
      %v3988 = vrot.slane %v3986, 5
      %v3989 = vor.u32 %v3985, %v3988
      %v3990 = vrot.slane %v3989, 4
      %v3992 = vshll.u32 %v3851, 16
      %v3994 = vrot.slane %v3992, 5
      %v3995 = vsel %vm347, %v3990, %v3994
      %v3996 = vshrl.u32 %v3851, 16
      %v3998 = vrot.slane %v3996, 4
      %v3999 = vor.u32 %v3998, %v3994
      %v4000 = vrot.slane %v3999, 4
      %v4002 = vshll.u32 %v3852, 16
      %v4004 = vrot.slane %v4002, 5
      %v4005 = vsel %vm347, %v4000, %v4004
      %v4007 = vshrl.u32 %v3853, 16
      %v4009 = vrot.slane %v4007, 4
      %v4010 = vshll.u32 %v3853, 16
      %v4012 = vrot.slane %v4010, 5
      %v4013 = vor.u32 %v4009, %v4012
      %v4014 = vrot.slane %v4013, 4
      %v4016 = vshll.u32 %v3854, 16
      %v4018 = vrot.slane %v4016, 5
      %v4019 = vsel %vm347, %v4014, %v4018
      %v4020 = vshrl.u32 %v3854, 16
      %v4022 = vrot.slane %v4020, 4
      %v4023 = vor.u32 %v4022, %v4018
      %v4024 = vrot.slane %v4023, 4
      %v4026 = vshll.u32 %v3855, 16
      %v4028 = vrot.slane %v4026, 5
      %v4029 = vsel %vm347, %v4024, %v4028
      %v4031 = vshrl.u32 %v3856, 16
      %v4033 = vrot.slane %v4031, 4
      %v4034 = vshll.u32 %v3856, 16
      %v4036 = vrot.slane %v4034, 5
      %v4037 = vor.u32 %v4033, %v4036
      %v4038 = vrot.slane %v4037, 4
      %v4040 = vshll.u32 %v3857, 16
      %v4042 = vrot.slane %v4040, 5
      %v4043 = vsel %vm347, %v4038, %v4042
      %v4044 = vshrl.u32 %v3857, 16
      %v4046 = vrot.slane %v4044, 4
      %v4047 = vor.u32 %v4046, %v4042
      %v4048 = vrot.slane %v4047, 4
      %v4050 = vshll.u32 %v3858, 16
      %v4052 = vrot.slane %v4050, 5
      %v4053 = vsel %vm347, %v4048, %v4052
      %v4055 = vshrl.u32 %v3859, 16
      %v4057 = vrot.slane %v4055, 4
      %v4058 = vshll.u32 %v3859, 16
      %v4060 = vrot.slane %v4058, 5
      %v4061 = vor.u32 %v4057, %v4060
      %v4062 = vrot.slane %v4061, 4
      %v4064 = vshll.u32 %v3860, 16
      %v4066 = vrot.slane %v4064, 5
      %v4067 = vsel %vm347, %v4062, %v4066
      %v4068 = vshrl.u32 %v3860, 16
      %v4070 = vrot.slane %v4068, 4
      %v4071 = vor.u32 %v4070, %v4066
      %v4072 = vrot.slane %v4071, 4
      %v4074 = vshll.u32 %v3861, 16
      %v4076 = vrot.slane %v4074, 5
      %v4077 = vsel %vm347, %v4072, %v4076
      %v4079 = vshrl.u32 %v3862, 16
      %v4081 = vrot.slane %v4079, 4
      %v4082 = vshll.u32 %v3862, 16
      %v4084 = vrot.slane %v4082, 5
      %v4085 = vor.u32 %v4081, %v4084
      %v4086 = vrot.slane %v4085, 4
      %v4088 = vshll.u32 %v3863, 16
      %v4090 = vrot.slane %v4088, 5
      %v4091 = vsel %vm347, %v4086, %v4090
      %v4092 = vshrl.u32 %v3863, 16
      %v4094 = vrot.slane %v4092, 4
      %v4095 = vor.u32 %v4094, %v4090
      %v4096 = vrot.slane %v4095, 4
      %v4098 = vshll.u32 %v3864, 16
      %v4100 = vrot.slane %v4098, 5
      %v4101 = vsel %vm347, %v4096, %v4100
      %v4103 = vshrl.u32 %v3865, 16
      %v4105 = vrot.slane %v4103, 4
      %v4106 = vshll.u32 %v3865, 16
      %v4108 = vrot.slane %v4106, 5
      %v4109 = vor.u32 %v4105, %v4108
      %v4110 = vrot.slane %v4109, 4
      %v4112 = vshll.u32 %v3866, 16
      %v4114 = vrot.slane %v4112, 5
      %v4115 = vsel %vm347, %v4110, %v4114
      %v4116 = vshrl.u32 %v3866, 16
      %v4118 = vrot.slane %v4116, 4
      %v4119 = vor.u32 %v4118, %v4114
      %v4120 = vrot.slane %v4119, 4
      %v4122 = vshll.u32 %v3867, 16
      %v4124 = vrot.slane %v4122, 5
      %v4125 = vsel %vm347, %v4120, %v4124
      %v4127 = vshrl.u32 %v3868, 16
      %v4129 = vrot.slane %v4127, 4
      %v4130 = vshll.u32 %v3868, 16
      %v4132 = vrot.slane %v4130, 5
      %v4133 = vor.u32 %v4129, %v4132
      %v4134 = vrot.slane %v4133, 4
      %v4136 = vshll.u32 %v3869, 16
      %v4138 = vrot.slane %v4136, 5
      %v4139 = vsel %vm347, %v4134, %v4138
      %v4140 = vshrl.u32 %v3869, 16
      %v4142 = vrot.slane %v4140, 4
      %v4143 = vor.u32 %v4142, %v4138
      %v4144 = vrot.slane %v4143, 4
      %v4146 = vshll.u32 %v3870, 16
      %v4148 = vrot.slane %v4146, 5
      %v4149 = vsel %vm347, %v4144, %v4148
      %v4151 = vshrl.u32 %v3871, 16
      %v4153 = vrot.slane %v4151, 4
      %v4154 = vshll.u32 %v3871, 16
      %v4156 = vrot.slane %v4154, 5
      %v4157 = vor.u32 %v4153, %v4156
      %v4158 = vrot.slane %v4157, 4
      %v4160 = vshll.u32 %v3872, 16
      %v4162 = vrot.slane %v4160, 5
      %v4163 = vsel %vm347, %v4158, %v4162
      %v4164 = vshrl.u32 %v3872, 16
      %v4166 = vrot.slane %v4164, 4
      %v4167 = vor.u32 %v4166, %v4162
      %v4168 = vrot.slane %v4167, 4
      %v4170 = vshll.u32 %v3873, 16
      %v4172 = vrot.slane %v4170, 5
      %v4173 = vsel %vm347, %v4168, %v4172
      %v4175 = vshrl.u32 %v3874, 16
      %v4177 = vrot.slane %v4175, 4
      %v4178 = vshll.u32 %v3874, 16
      %v4180 = vrot.slane %v4178, 5
      %v4181 = vor.u32 %v4177, %v4180
      %v4182 = vrot.slane %v4181, 4
      %v4184 = vshll.u32 %v3875, 16
      %v4186 = vrot.slane %v4184, 5
      %v4187 = vsel %vm347, %v4182, %v4186
      %v4188 = vshrl.u32 %v3875, 16
      %v4190 = vrot.slane %v4188, 4
      %v4191 = vor.u32 %v4190, %v4186
      %v4192 = vrot.slane %v4191, 4
      %v4194 = vshll.u32 %v3876, 16
      %v4196 = vrot.slane %v4194, 5
      %v4197 = vsel %vm347, %v4192, %v4196
      %v4199 = vshrl.u32 %v3877, 16
      %v4201 = vrot.slane %v4199, 4
      %v4202 = vshll.u32 %v3877, 16
      %v4204 = vrot.slane %v4202, 5
      %v4205 = vor.u32 %v4201, %v4204
      %v4206 = vrot.slane %v4205, 4
      %v4208 = vshll.u32 %v3878, 16
      %v4210 = vrot.slane %v4208, 5
      %v4211 = vsel %vm347, %v4206, %v4210
      %v4212 = vshrl.u32 %v3878, 16
      %v4214 = vrot.slane %v4212, 4
      %v4215 = vor.u32 %v4214, %v4210
      %v4216 = vrot.slane %v4215, 4
      %v4218 = vshll.u32 %v3879, 16
      %v4220 = vrot.slane %v4218, 5
      %v4221 = vsel %vm347, %v4216, %v4220
      %v4223 = vshrl.u32 %v3880, 16
      %v4225 = vrot.slane %v4223, 4
      %v4226 = vshll.u32 %v3880, 16
      %v4228 = vrot.slane %v4226, 5
      %v4229 = vor.u32 %v4225, %v4228
      %v4230 = vrot.slane %v4229, 4
      %v4232 = vshll.u32 %v3881, 16
      %v4234 = vrot.slane %v4232, 5
      %v4235 = vsel %vm347, %v4230, %v4234
      %v4236 = vshrl.u32 %v3881, 16
      %v4238 = vrot.slane %v4236, 4
      %v4239 = vor.u32 %v4238, %v4234
      %v4240 = vrot.slane %v4239, 4
      %v4242 = vshll.u32 %v3882, 16
      %v4244 = vrot.slane %v4242, 5
      %v4245 = vsel %vm347, %v4240, %v4244
      %v4247 = vshrl.u32 %v3883, 16
      %v4249 = vrot.slane %v4247, 4
      %v4250 = vshll.u32 %v3883, 16
      %v4252 = vrot.slane %v4250, 5
      %v4253 = vor.u32 %v4249, %v4252
      %v4254 = vrot.slane %v4253, 4
      %v4256 = vshll.u32 %v3884, 16
      %v4258 = vrot.slane %v4256, 5
      %v4259 = vsel %vm347, %v4254, %v4258
      %v4260 = vshrl.u32 %v3884, 16
      %v4262 = vrot.slane %v4260, 4
      %v4263 = vor.u32 %v4262, %v4258
      %v4264 = vrot.slane %v4263, 4
      %v4266 = vshll.u32 %v3885, 16
      %v4268 = vrot.slane %v4266, 5
      %v4269 = vsel %vm347, %v4264, %v4268
      %s4270 = scalar_lea.vmem %s260, 448
      %v4271 = vld [vmem:[%s4270] sm:$0xf]
      %v4272 = vld [vmem:[%s4270 + $0x4] sm:$0xf]
      %v4273 = vld [vmem:[%s4270 + $0x8] sm:$0xf]
      %v4274 = vld [vmem:[%s4270 + $0xc] sm:$0xf]
      %v4275 = vld [vmem:[%s4270 + $0x10] sm:$0xf]
      %v4276 = vld [vmem:[%s4270 + $0x14] sm:$0xf]
      %v4277 = vld [vmem:[%s4270 + $0x18] sm:$0xf]
      %v4278 = vld [vmem:[%s4270 + $0x1c] sm:$0xf]
      %v4279 = vld [vmem:[%s4270 + $0x20] sm:$0xf]
      %v4280 = vld [vmem:[%s4270 + $0x24] sm:$0xf]
      %v4281 = vld [vmem:[%s4270 + $0x28] sm:$0xf]
      %v4282 = vld [vmem:[%s4270 + $0x2c] sm:$0xf]
      %v4283 = vld [vmem:[%s4270 + $0x30] sm:$0xf]
      %v4284 = vld [vmem:[%s4270 + $0x34] sm:$0xf]
      %v4285 = vld [vmem:[%s4270 + $0x38] sm:$0xf]
      %v4286 = vld [vmem:[%s4270 + $0x3c] sm:$0xf]
      %v4287 = vunpack.c.l.b16 %v3899
      %v4288 = vunpack.c.l.b16 %v3909
      %v4289 = vunpack.c.l.b16 %v3923
      %v4290 = vunpack.c.l.b16 %v3933
      %v4291 = vunpack.c.l.b16 %v3947
      %v4292 = vunpack.c.l.b16 %v3957
      %v4293 = vunpack.c.l.b16 %v3971
      %v4294 = vunpack.c.l.b16 %v3981
      %v4295 = vunpack.c.l.b16 %v3995
      %v4296 = vunpack.c.l.b16 %v4005
      %v4297 = vunpack.c.l.b16 %v4019
      %v4298 = vunpack.c.l.b16 %v4029
      %v4299 = vunpack.c.l.b16 %v4043
      %v4300 = vunpack.c.l.b16 %v4053
      %v4301 = vunpack.c.l.b16 %v4067
      %v4302 = vunpack.c.l.b16 %v4077
      %v4303 = vunpack.c.l.b16 %v4091
      %v4304 = vunpack.c.l.b16 %v4101
      %v4305 = vunpack.c.l.b16 %v4115
      %v4306 = vunpack.c.l.b16 %v4125
      %v4307 = vunpack.c.l.b16 %v4139
      %v4308 = vunpack.c.l.b16 %v4149
      %v4309 = vunpack.c.l.b16 %v4163
      %v4310 = vunpack.c.l.b16 %v4173
      %v4311 = vunpack.c.l.b16 %v4187
      %v4312 = vunpack.c.l.b16 %v4197
      %v4313 = vunpack.c.l.b16 %v4211
      %v4314 = vunpack.c.l.b16 %v4221
      %v4315 = vunpack.c.l.b16 %v4235
      %v4316 = vunpack.c.l.b16 %v4245
      %v4317 = vunpack.c.l.b16 %v4259
      %v4318 = vunpack.c.l.b16 %v4269
      %v4319 = vpack.c.b16 %v4288, %v4287
      %v4320 = vpack.c.b16 %v4290, %v4289
      %v4321 = vpack.c.b16 %v4292, %v4291
      %v4322 = vpack.c.b16 %v4294, %v4293
      %v4323 = vpack.c.b16 %v4296, %v4295
      %v4324 = vpack.c.b16 %v4298, %v4297
      %v4325 = vpack.c.b16 %v4300, %v4299
      %v4326 = vpack.c.b16 %v4302, %v4301
      %v4327 = vpack.c.b16 %v4304, %v4303
      %v4328 = vpack.c.b16 %v4306, %v4305
      %v4329 = vpack.c.b16 %v4308, %v4307
      %v4330 = vpack.c.b16 %v4310, %v4309
      %v4331 = vpack.c.b16 %v4312, %v4311
      %v4332 = vpack.c.b16 %v4314, %v4313
      %v4333 = vpack.c.b16 %v4316, %v4315
      %v4334 = vpack.c.b16 %v4318, %v4317
      %v4367 = vunpack.c.l.b16 %v4271
      %v4368 = vunpack.c.l.b16 %v4272
      %v4369 = vunpack.c.l.b16 %v4273
      %v4370 = vunpack.c.l.b16 %v4274
      %v4371 = vunpack.c.l.b16 %v4275
      %v4372 = vunpack.c.l.b16 %v4276
      %v4373 = vunpack.c.l.b16 %v4277
      %v4374 = vunpack.c.l.b16 %v4278
      %v4375 = vunpack.c.l.b16 %v4279
      %v4376 = vunpack.c.l.b16 %v4280
      %v4377 = vunpack.c.l.b16 %v4281
      %v4378 = vunpack.c.l.b16 %v4282
      %v4379 = vunpack.c.l.b16 %v4283
      %v4380 = vunpack.c.l.b16 %v4284
      %v4381 = vunpack.c.l.b16 %v4285
      %v4382 = vunpack.c.l.b16 %v4286
      %v4383 = vpack.c.b16 %v4368, %v4367
      %v4384 = vpack.c.b16 %v4370, %v4369
      %v4385 = vpack.c.b16 %v4372, %v4371
      %v4386 = vpack.c.b16 %v4374, %v4373
      %v4387 = vpack.c.b16 %v4376, %v4375
      %v4388 = vpack.c.b16 %v4378, %v4377
      %v4389 = vpack.c.b16 %v4380, %v4379
      %v4390 = vpack.c.b16 %v4382, %v4381
      %4399 = vmatprep.subr.bf16.mxu0 0
      %4400 = vmatpush1.bf16.msra.mxu0 %v4383
      %4401 = vmatprep.subr.bf16.mxu0 0
      %4402 = vmatpush1.bf16.msra.mxu0 %v4384
      %4403 = vmatprep.subr.bf16.mxu0 0
      %4404 = vmatpush1.bf16.msra.mxu0 %v4385
      %4405 = vmatprep.subr.bf16.mxu0 0
      %4406 = vmatpush1.bf16.msra.mxu0 %v4386
      %4407 = vmatprep.subr.bf16.mxu0 0
      %4408 = vmatpush1.bf16.msra.mxu0 %v4387
      %4409 = vmatprep.subr.bf16.mxu0 0
      %4410 = vmatpush1.bf16.msra.mxu0 %v4388
      %4411 = vmatprep.subr.bf16.mxu0 0
      %4412 = vmatpush1.bf16.msra.mxu0 %v4389
      %4413 = vmatprep.subr.bf16.mxu0 0
      %4414 = vmatpush1.bf16.msra.mxu0 %v4390
      %4415 = vmatprep.subr.bf16.mxu0 0
      %4416 = vmatpush1.bf16.msra.mxu0 0
      %4417 = vmatprep.subr.bf16.mxu0 0
      %4418 = vmatpush1.bf16.msra.mxu0 0
      %4419 = vmatprep.subr.bf16.mxu0 0
      %4420 = vmatpush1.bf16.msra.mxu0 0
      %4421 = vmatprep.subr.bf16.mxu0 0
      %4422 = vmatpush1.bf16.msra.mxu0 0
      %4423 = vmatprep.subr.bf16.mxu0 0
      %4424 = vmatpush1.bf16.msra.mxu0 0
      %4425 = vmatprep.subr.bf16.mxu0 0
      %4426 = vmatpush1.bf16.msra.mxu0 0
      %4427 = vmatprep.subr.bf16.mxu0 0
      %4428 = vmatpush1.bf16.msra.mxu0 0
      %4429 = vmatprep.subr.bf16.mxu0 0
      %4430 = vmatpush1.bf16.msra.mxu0 0
      %4431 = vmatprep.mubr.bf16.mxu0 0
      %4432 = vmatmul.mubr.bf16.gmra.mrb[0].mxu0 %v4319
      %v4433 = vpop.f32.mrb[0].mxu0
      %v4434 = vadd.f32 0.0, %v4433
      %v4435 = vpop.f32.mrb[0].mxu0
      %v4436 = vpop.f32.mrb[0].mxu0
      %v4437 = vadd.f32 0.0, %v4436
      %v4438 = vpop.f32.mrb[0].mxu0
      %4439 = vmatprep.mubr.bf16.mxu0 0
      %4440 = vmatmul.mubr.bf16.gmra.mrb[0].mxu0 %v4320
      %v4441 = vpop.f32.mrb[0].mxu0
      %v4442 = vadd.f32 0.0, %v4441
      %v4443 = vpop.f32.mrb[0].mxu0
      %v4444 = vpop.f32.mrb[0].mxu0
      %v4445 = vadd.f32 0.0, %v4444
      %v4446 = vpop.f32.mrb[0].mxu0
      %4447 = vmatprep.mubr.bf16.mxu0 0
      %4448 = vmatmul.mubr.bf16.gmra.mrb[0].mxu0 %v4321
      %v4449 = vpop.f32.mrb[0].mxu0
      %v4450 = vadd.f32 0.0, %v4449
      %v4451 = vpop.f32.mrb[0].mxu0
      %v4452 = vpop.f32.mrb[0].mxu0
      %v4453 = vadd.f32 0.0, %v4452
      %v4454 = vpop.f32.mrb[0].mxu0
      %4455 = vmatprep.mubr.bf16.mxu0 0
      %4456 = vmatmul.mubr.bf16.gmra.mrb[0].mxu0 %v4322
      %v4457 = vpop.f32.mrb[0].mxu0
      %v4458 = vadd.f32 0.0, %v4457
      %v4459 = vpop.f32.mrb[0].mxu0
      %v4460 = vpop.f32.mrb[0].mxu0
      %v4461 = vadd.f32 0.0, %v4460
      %v4462 = vpop.f32.mrb[0].mxu0
      %4463 = vmatprep.mubr.bf16.mxu0 0
      %4464 = vmatmul.mubr.bf16.gmra.mrb[0].mxu0 %v4323
      %v4465 = vpop.f32.mrb[0].mxu0
      %v4466 = vadd.f32 0.0, %v4465
      %v4467 = vpop.f32.mrb[0].mxu0
      %v4468 = vpop.f32.mrb[0].mxu0
      %v4469 = vadd.f32 0.0, %v4468
      %v4470 = vpop.f32.mrb[0].mxu0
      %4471 = vmatprep.mubr.bf16.mxu0 0
      %4472 = vmatmul.mubr.bf16.gmra.mrb[0].mxu0 %v4324
      %v4473 = vpop.f32.mrb[0].mxu0
      %v4474 = vadd.f32 0.0, %v4473
      %v4475 = vpop.f32.mrb[0].mxu0
      %v4476 = vpop.f32.mrb[0].mxu0
      %v4477 = vadd.f32 0.0, %v4476
      %v4478 = vpop.f32.mrb[0].mxu0
      %4479 = vmatprep.mubr.bf16.mxu0 0
      %4480 = vmatmul.mubr.bf16.gmra.mrb[0].mxu0 %v4325
      %v4481 = vpop.f32.mrb[0].mxu0
      %v4482 = vadd.f32 0.0, %v4481
      %v4483 = vpop.f32.mrb[0].mxu0
      %v4484 = vpop.f32.mrb[0].mxu0
      %v4485 = vadd.f32 0.0, %v4484
      %v4486 = vpop.f32.mrb[0].mxu0
      %4487 = vmatprep.mubr.bf16.mxu0 0
      %4488 = vmatmul.mubr.bf16.gmra.mrb[0].mxu0 %v4326
      %v4489 = vpop.f32.mrb[0].mxu0
      %v4490 = vadd.f32 0.0, %v4489
      %v4491 = vpop.f32.mrb[0].mxu0
      %v4492 = vpop.f32.mrb[0].mxu0
      %v4493 = vadd.f32 0.0, %v4492
      %v4494 = vpop.f32.mrb[0].mxu0
      %4495 = vmatprep.mubr.bf16.mxu0 0
      %4496 = vmatmul.mubr.bf16.gmra.mrb[0].mxu0 %v4327
      %v4497 = vpop.f32.mrb[0].mxu0
      %v4498 = vadd.f32 0.0, %v4497
      %v4499 = vpop.f32.mrb[0].mxu0
      %v4500 = vpop.f32.mrb[0].mxu0
      %v4501 = vadd.f32 0.0, %v4500
      %v4502 = vpop.f32.mrb[0].mxu0
      %4503 = vmatprep.mubr.bf16.mxu0 0
      %4504 = vmatmul.mubr.bf16.gmra.mrb[0].mxu0 %v4328
      %v4505 = vpop.f32.mrb[0].mxu0
      %v4506 = vadd.f32 0.0, %v4505
      %v4507 = vpop.f32.mrb[0].mxu0
      %v4508 = vpop.f32.mrb[0].mxu0
      %v4509 = vadd.f32 0.0, %v4508
      %v4510 = vpop.f32.mrb[0].mxu0
      %4511 = vmatprep.mubr.bf16.mxu0 0
      %4512 = vmatmul.mubr.bf16.gmra.mrb[0].mxu0 %v4329
      %v4513 = vpop.f32.mrb[0].mxu0
      %v4514 = vadd.f32 0.0, %v4513
      %v4515 = vpop.f32.mrb[0].mxu0
      %v4516 = vpop.f32.mrb[0].mxu0
      %v4517 = vadd.f32 0.0, %v4516
      %v4518 = vpop.f32.mrb[0].mxu0
      %4519 = vmatprep.mubr.bf16.mxu0 0
      %4520 = vmatmul.mubr.bf16.gmra.mrb[0].mxu0 %v4330
      %v4521 = vpop.f32.mrb[0].mxu0
      %v4522 = vadd.f32 0.0, %v4521
      %v4523 = vpop.f32.mrb[0].mxu0
      %v4524 = vpop.f32.mrb[0].mxu0
      %v4525 = vadd.f32 0.0, %v4524
      %v4526 = vpop.f32.mrb[0].mxu0
      %4527 = vmatprep.mubr.bf16.mxu0 0
      %4528 = vmatmul.mubr.bf16.gmra.mrb[0].mxu0 %v4331
      %v4529 = vpop.f32.mrb[0].mxu0
      %v4530 = vadd.f32 0.0, %v4529
      %v4531 = vpop.f32.mrb[0].mxu0
      %v4532 = vpop.f32.mrb[0].mxu0
      %v4533 = vadd.f32 0.0, %v4532
      %v4534 = vpop.f32.mrb[0].mxu0
      %4535 = vmatprep.mubr.bf16.mxu0 0
      %4536 = vmatmul.mubr.bf16.gmra.mrb[0].mxu0 %v4332
      %v4537 = vpop.f32.mrb[0].mxu0
      %v4538 = vadd.f32 0.0, %v4537
      %v4539 = vpop.f32.mrb[0].mxu0
      %v4540 = vpop.f32.mrb[0].mxu0
      %v4541 = vadd.f32 0.0, %v4540
      %v4542 = vpop.f32.mrb[0].mxu0
      %4543 = vmatprep.mubr.bf16.mxu0 0
      %4544 = vmatmul.mubr.bf16.gmra.mrb[0].mxu0 %v4333
      %v4545 = vpop.f32.mrb[0].mxu0
      %v4546 = vadd.f32 0.0, %v4545
      %v4547 = vpop.f32.mrb[0].mxu0
      %v4548 = vpop.f32.mrb[0].mxu0
      %v4549 = vadd.f32 0.0, %v4548
      %v4550 = vpop.f32.mrb[0].mxu0
      %4551 = vmatprep.mubr.bf16.mxu0 0
      %4552 = vmatmul.mubr.bf16.gmra.mrb[0].mxu0 %v4334
      %v4553 = vpop.f32.mrb[0].mxu0
      %v4554 = vadd.f32 0.0, %v4553
      %v4555 = vpop.f32.mrb[0].mxu0
      %v4556 = vpop.f32.mrb[0].mxu0
      %v4557 = vadd.f32 0.0, %v4556
      %v4558 = vpop.f32.mrb[0].mxu0
      %4559 = vdwg.mxu0
      %v4560 = vadd.f32 %v3806, %v4434
      %v4561 = vadd.f32 %v3807, %v4437
      %v4562 = vadd.f32 %v3808, %v4442
      %v4563 = vadd.f32 %v3809, %v4445
      %v4564 = vadd.f32 %v3810, %v4450
      %v4565 = vadd.f32 %v3811, %v4453
      %v4566 = vadd.f32 %v3812, %v4458
      %v4567 = vadd.f32 %v3813, %v4461
      %v4568 = vadd.f32 %v3814, %v4466
      %v4569 = vadd.f32 %v3815, %v4469
      %v4570 = vadd.f32 %v3816, %v4474
      %v4571 = vadd.f32 %v3817, %v4477
      %v4572 = vadd.f32 %v3818, %v4482
      %v4573 = vadd.f32 %v3819, %v4485
      %v4574 = vadd.f32 %v3820, %v4490
      %v4575 = vadd.f32 %v3821, %v4493
      %v4576 = vadd.f32 %v3822, %v4498
      %v4577 = vadd.f32 %v3823, %v4501
      %v4578 = vadd.f32 %v3824, %v4506
      %v4579 = vadd.f32 %v3825, %v4509
      %v4580 = vadd.f32 %v3826, %v4514
      %v4581 = vadd.f32 %v3827, %v4517
      %v4582 = vadd.f32 %v3828, %v4522
      %v4583 = vadd.f32 %v3829, %v4525
      %v4584 = vadd.f32 %v3830, %v4530
      %v4585 = vadd.f32 %v3831, %v4533
      %v4586 = vadd.f32 %v3832, %v4538
      %v4587 = vadd.f32 %v3833, %v4541
      %v4588 = vadd.f32 %v3834, %v4546
      %v4589 = vadd.f32 %v3835, %v4549
      %v4590 = vadd.f32 %v3836, %v4554
      %v4591 = vadd.f32 %v3837, %v4557
      %v4592 = vld [vmem:[%s3451] sm:$0xe]
      %v4593 = vld [vmem:[%s3451 + $0xc] sm:$0xe]
      %v4594 = vld [vmem:[%s3451 + $0x18] sm:$0xe]
      %v4595 = vld [vmem:[%s3451 + $0x24] sm:$0xe]
      %v4596 = vld [vmem:[%s3451 + $0x30] sm:$0xe]
      %v4597 = vld [vmem:[%s3451 + $0x3c] sm:$0xe]
      %v4598 = vld [vmem:[%s3451 + $0x48] sm:$0xe]
      %v4599 = vld [vmem:[%s3451 + $0x54] sm:$0xe]
      %v4600 = vld [vmem:[%s3451 + $0x60] sm:$0xe]
      %v4601 = vld [vmem:[%s3451 + $0x6c] sm:$0xe]
      %v4602 = vld [vmem:[%s3451 + $0x78] sm:$0xe]
      %v4603 = vld [vmem:[%s3451 + $0x84] sm:$0xe]
      %v4604 = vld [vmem:[%s3451 + $0x90] sm:$0xe]
      %v4605 = vld [vmem:[%s3451 + $0x9c] sm:$0xe]
      %v4606 = vld [vmem:[%s3451 + $0xa8] sm:$0xe]
      %v4607 = vld [vmem:[%s3451 + $0xb4] sm:$0xe]
      %v4656 = vrot.slane %v4592, 5
      %v4657 = vrot.slane %v4656, 4
      %v4658 = vrot.slane %v3839, 5
      %v4659 = vsel %vm1377, %v4657, %v4658
      %v4660 = vrot.slane %v4658, 4
      %v4661 = vrot.slane %v3840, 5
      %v4662 = vsel %vm1377, %v4660, %v4661
      %v4663 = vrot.slane %v4593, 5
      %v4664 = vrot.slane %v4663, 4
      %v4665 = vrot.slane %v3842, 5
      %v4666 = vsel %vm1377, %v4664, %v4665
      %v4667 = vrot.slane %v4665, 4
      %v4668 = vrot.slane %v3843, 5
      %v4669 = vsel %vm1377, %v4667, %v4668
      %v4670 = vrot.slane %v4594, 5
      %v4671 = vrot.slane %v4670, 4
      %v4672 = vrot.slane %v3845, 5
      %v4673 = vsel %vm1377, %v4671, %v4672
      %v4674 = vrot.slane %v4672, 4
      %v4675 = vrot.slane %v3846, 5
      %v4676 = vsel %vm1377, %v4674, %v4675
      %v4677 = vrot.slane %v4595, 5
      %v4678 = vrot.slane %v4677, 4
      %v4679 = vrot.slane %v3848, 5
      %v4680 = vsel %vm1377, %v4678, %v4679
      %v4681 = vrot.slane %v4679, 4
      %v4682 = vrot.slane %v3849, 5
      %v4683 = vsel %vm1377, %v4681, %v4682
      %v4684 = vrot.slane %v4596, 5
      %v4685 = vrot.slane %v4684, 4
      %v4686 = vrot.slane %v3851, 5
      %v4687 = vsel %vm1377, %v4685, %v4686
      %v4688 = vrot.slane %v4686, 4
      %v4689 = vrot.slane %v3852, 5
      %v4690 = vsel %vm1377, %v4688, %v4689
      %v4691 = vrot.slane %v4597, 5
      %v4692 = vrot.slane %v4691, 4
      %v4693 = vrot.slane %v3854, 5
      %v4694 = vsel %vm1377, %v4692, %v4693
      %v4695 = vrot.slane %v4693, 4
      %v4696 = vrot.slane %v3855, 5
      %v4697 = vsel %vm1377, %v4695, %v4696
      %v4698 = vrot.slane %v4598, 5
      %v4699 = vrot.slane %v4698, 4
      %v4700 = vrot.slane %v3857, 5
      %v4701 = vsel %vm1377, %v4699, %v4700
      %v4702 = vrot.slane %v4700, 4
      %v4703 = vrot.slane %v3858, 5
      %v4704 = vsel %vm1377, %v4702, %v4703
      %v4705 = vrot.slane %v4599, 5
      %v4706 = vrot.slane %v4705, 4
      %v4707 = vrot.slane %v3860, 5
      %v4708 = vsel %vm1377, %v4706, %v4707
      %v4709 = vrot.slane %v4707, 4
      %v4710 = vrot.slane %v3861, 5
      %v4711 = vsel %vm1377, %v4709, %v4710
      %v4712 = vrot.slane %v4600, 5
      %v4713 = vrot.slane %v4712, 4
      %v4714 = vrot.slane %v3863, 5
      %v4715 = vsel %vm1377, %v4713, %v4714
      %v4716 = vrot.slane %v4714, 4
      %v4717 = vrot.slane %v3864, 5
      %v4718 = vsel %vm1377, %v4716, %v4717
      %v4719 = vrot.slane %v4601, 5
      %v4720 = vrot.slane %v4719, 4
      %v4721 = vrot.slane %v3866, 5
      %v4722 = vsel %vm1377, %v4720, %v4721
      %v4723 = vrot.slane %v4721, 4
      %v4724 = vrot.slane %v3867, 5
      %v4725 = vsel %vm1377, %v4723, %v4724
      %v4726 = vrot.slane %v4602, 5
      %v4727 = vrot.slane %v4726, 4
      %v4728 = vrot.slane %v3869, 5
      %v4729 = vsel %vm1377, %v4727, %v4728
      %v4730 = vrot.slane %v4728, 4
      %v4731 = vrot.slane %v3870, 5
      %v4732 = vsel %vm1377, %v4730, %v4731
      %v4733 = vrot.slane %v4603, 5
      %v4734 = vrot.slane %v4733, 4
      %v4735 = vrot.slane %v3872, 5
      %v4736 = vsel %vm1377, %v4734, %v4735
      %v4737 = vrot.slane %v4735, 4
      %v4738 = vrot.slane %v3873, 5
      %v4739 = vsel %vm1377, %v4737, %v4738
      %v4740 = vrot.slane %v4604, 5
      %v4741 = vrot.slane %v4740, 4
      %v4742 = vrot.slane %v3875, 5
      %v4743 = vsel %vm1377, %v4741, %v4742
      %v4744 = vrot.slane %v4742, 4
      %v4745 = vrot.slane %v3876, 5
      %v4746 = vsel %vm1377, %v4744, %v4745
      %v4747 = vrot.slane %v4605, 5
      %v4748 = vrot.slane %v4747, 4
      %v4749 = vrot.slane %v3878, 5
      %v4750 = vsel %vm1377, %v4748, %v4749
      %v4751 = vrot.slane %v4749, 4
      %v4752 = vrot.slane %v3879, 5
      %v4753 = vsel %vm1377, %v4751, %v4752
      %v4754 = vrot.slane %v4606, 5
      %v4755 = vrot.slane %v4754, 4
      %v4756 = vrot.slane %v3881, 5
      %v4757 = vsel %vm1377, %v4755, %v4756
      %v4758 = vrot.slane %v4756, 4
      %v4759 = vrot.slane %v3882, 5
      %v4760 = vsel %vm1377, %v4758, %v4759
      %v4761 = vrot.slane %v4607, 5
      %v4762 = vrot.slane %v4761, 4
      %v4763 = vrot.slane %v3884, 5
      %v4764 = vsel %vm1377, %v4762, %v4763
      %v4765 = vrot.slane %v4763, 4
      %v4766 = vrot.slane %v3885, 5
      %v4767 = vsel %vm1377, %v4765, %v4766
      %s4768 = scalar_lea.vmem %s260, 512
      %v4769 = vld [vmem:[%s4768] sm:$0xf]
      %v4770 = vld [vmem:[%s4768 + $0x4] sm:$0xf]
      %v4771 = vld [vmem:[%s4768 + $0x8] sm:$0xf]
      %v4772 = vld [vmem:[%s4768 + $0xc] sm:$0xf]
      %v4773 = vld [vmem:[%s4768 + $0x10] sm:$0xf]
      %v4774 = vld [vmem:[%s4768 + $0x14] sm:$0xf]
      %v4775 = vld [vmem:[%s4768 + $0x18] sm:$0xf]
      %v4776 = vld [vmem:[%s4768 + $0x1c] sm:$0xf]
      %v4777 = vld [vmem:[%s4768 + $0x20] sm:$0xf]
      %v4778 = vld [vmem:[%s4768 + $0x24] sm:$0xf]
      %v4779 = vld [vmem:[%s4768 + $0x28] sm:$0xf]
      %v4780 = vld [vmem:[%s4768 + $0x2c] sm:$0xf]
      %v4781 = vld [vmem:[%s4768 + $0x30] sm:$0xf]
      %v4782 = vld [vmem:[%s4768 + $0x34] sm:$0xf]
      %v4783 = vld [vmem:[%s4768 + $0x38] sm:$0xf]
      %v4784 = vld [vmem:[%s4768 + $0x3c] sm:$0xf]
      %v4785 = vunpack.c.l.b16 %v4659
      %v4786 = vunpack.c.l.b16 %v4662
      %v4787 = vunpack.c.l.b16 %v4666
      %v4788 = vunpack.c.l.b16 %v4669
      %v4789 = vunpack.c.l.b16 %v4673
      %v4790 = vunpack.c.l.b16 %v4676
      %v4791 = vunpack.c.l.b16 %v4680
      %v4792 = vunpack.c.l.b16 %v4683
      %v4793 = vunpack.c.l.b16 %v4687
      %v4794 = vunpack.c.l.b16 %v4690
      %v4795 = vunpack.c.l.b16 %v4694
      %v4796 = vunpack.c.l.b16 %v4697
      %v4797 = vunpack.c.l.b16 %v4701
      %v4798 = vunpack.c.l.b16 %v4704
      %v4799 = vunpack.c.l.b16 %v4708
      %v4800 = vunpack.c.l.b16 %v4711
      %v4801 = vunpack.c.l.b16 %v4715
      %v4802 = vunpack.c.l.b16 %v4718
      %v4803 = vunpack.c.l.b16 %v4722
      %v4804 = vunpack.c.l.b16 %v4725
      %v4805 = vunpack.c.l.b16 %v4729
      %v4806 = vunpack.c.l.b16 %v4732
      %v4807 = vunpack.c.l.b16 %v4736
      %v4808 = vunpack.c.l.b16 %v4739
      %v4809 = vunpack.c.l.b16 %v4743
      %v4810 = vunpack.c.l.b16 %v4746
      %v4811 = vunpack.c.l.b16 %v4750
      %v4812 = vunpack.c.l.b16 %v4753
      %v4813 = vunpack.c.l.b16 %v4757
      %v4814 = vunpack.c.l.b16 %v4760
      %v4815 = vunpack.c.l.b16 %v4764
      %v4816 = vunpack.c.l.b16 %v4767
      %v4817 = vpack.c.b16 %v4786, %v4785
      %v4818 = vpack.c.b16 %v4788, %v4787
      %v4819 = vpack.c.b16 %v4790, %v4789
      %v4820 = vpack.c.b16 %v4792, %v4791
      %v4821 = vpack.c.b16 %v4794, %v4793
      %v4822 = vpack.c.b16 %v4796, %v4795
      %v4823 = vpack.c.b16 %v4798, %v4797
      %v4824 = vpack.c.b16 %v4800, %v4799
      %v4825 = vpack.c.b16 %v4802, %v4801
      %v4826 = vpack.c.b16 %v4804, %v4803
      %v4827 = vpack.c.b16 %v4806, %v4805
      %v4828 = vpack.c.b16 %v4808, %v4807
      %v4829 = vpack.c.b16 %v4810, %v4809
      %v4830 = vpack.c.b16 %v4812, %v4811
      %v4831 = vpack.c.b16 %v4814, %v4813
      %v4832 = vpack.c.b16 %v4816, %v4815
      %v4865 = vunpack.c.l.b16 %v4769
      %v4866 = vunpack.c.l.b16 %v4770
      %v4867 = vunpack.c.l.b16 %v4771
      %v4868 = vunpack.c.l.b16 %v4772
      %v4869 = vunpack.c.l.b16 %v4773
      %v4870 = vunpack.c.l.b16 %v4774
      %v4871 = vunpack.c.l.b16 %v4775
      %v4872 = vunpack.c.l.b16 %v4776
      %v4873 = vunpack.c.l.b16 %v4777
      %v4874 = vunpack.c.l.b16 %v4778
      %v4875 = vunpack.c.l.b16 %v4779
      %v4876 = vunpack.c.l.b16 %v4780
      %v4877 = vunpack.c.l.b16 %v4781
      %v4878 = vunpack.c.l.b16 %v4782
      %v4879 = vunpack.c.l.b16 %v4783
      %v4880 = vunpack.c.l.b16 %v4784
      %v4881 = vpack.c.b16 %v4866, %v4865
      %v4882 = vpack.c.b16 %v4868, %v4867
      %v4883 = vpack.c.b16 %v4870, %v4869
      %v4884 = vpack.c.b16 %v4872, %v4871
      %v4885 = vpack.c.b16 %v4874, %v4873
      %v4886 = vpack.c.b16 %v4876, %v4875
      %v4887 = vpack.c.b16 %v4878, %v4877
      %v4888 = vpack.c.b16 %v4880, %v4879
      %4897 = vmatprep.subr.bf16.mxu0 0
      %4898 = vmatpush1.bf16.msra.mxu0 %v4881
      %4899 = vmatprep.subr.bf16.mxu0 0
      %4900 = vmatpush1.bf16.msra.mxu0 %v4882
      %4901 = vmatprep.subr.bf16.mxu0 0
      %4902 = vmatpush1.bf16.msra.mxu0 %v4883
      %4903 = vmatprep.subr.bf16.mxu0 0
      %4904 = vmatpush1.bf16.msra.mxu0 %v4884
      %4905 = vmatprep.subr.bf16.mxu0 0
      %4906 = vmatpush1.bf16.msra.mxu0 %v4885
      %4907 = vmatprep.subr.bf16.mxu0 0
      %4908 = vmatpush1.bf16.msra.mxu0 %v4886
      %4909 = vmatprep.subr.bf16.mxu0 0
      %4910 = vmatpush1.bf16.msra.mxu0 %v4887
      %4911 = vmatprep.subr.bf16.mxu0 0
      %4912 = vmatpush1.bf16.msra.mxu0 %v4888
      %4913 = vmatprep.subr.bf16.mxu0 0
      %4914 = vmatpush1.bf16.msra.mxu0 0
      %4915 = vmatprep.subr.bf16.mxu0 0
      %4916 = vmatpush1.bf16.msra.mxu0 0
      %4917 = vmatprep.subr.bf16.mxu0 0
      %4918 = vmatpush1.bf16.msra.mxu0 0
      %4919 = vmatprep.subr.bf16.mxu0 0
      %4920 = vmatpush1.bf16.msra.mxu0 0
      %4921 = vmatprep.subr.bf16.mxu0 0
      %4922 = vmatpush1.bf16.msra.mxu0 0
      %4923 = vmatprep.subr.bf16.mxu0 0
      %4924 = vmatpush1.bf16.msra.mxu0 0
      %4925 = vmatprep.subr.bf16.mxu0 0
      %4926 = vmatpush1.bf16.msra.mxu0 0
      %4927 = vmatprep.subr.bf16.mxu0 0
      %4928 = vmatpush1.bf16.msra.mxu0 0
      %4929 = vmatprep.mubr.bf16.mxu0 0
      %4930 = vmatmul.mubr.bf16.gmra.mrb[0].mxu0 %v4817
      %v4931 = vpop.f32.mrb[0].mxu0
      %v4932 = vadd.f32 0.0, %v4931
      %v4933 = vpop.f32.mrb[0].mxu0
      %v4934 = vpop.f32.mrb[0].mxu0
      %v4935 = vadd.f32 0.0, %v4934
      %v4936 = vpop.f32.mrb[0].mxu0
      %4937 = vmatprep.mubr.bf16.mxu0 0
      %4938 = vmatmul.mubr.bf16.gmra.mrb[0].mxu0 %v4818
      %v4939 = vpop.f32.mrb[0].mxu0
      %v4940 = vadd.f32 0.0, %v4939
      %v4941 = vpop.f32.mrb[0].mxu0
      %v4942 = vpop.f32.mrb[0].mxu0
      %v4943 = vadd.f32 0.0, %v4942
      %v4944 = vpop.f32.mrb[0].mxu0
      %4945 = vmatprep.mubr.bf16.mxu0 0
      %4946 = vmatmul.mubr.bf16.gmra.mrb[0].mxu0 %v4819
      %v4947 = vpop.f32.mrb[0].mxu0
      %v4948 = vadd.f32 0.0, %v4947
      %v4949 = vpop.f32.mrb[0].mxu0
      %v4950 = vpop.f32.mrb[0].mxu0
      %v4951 = vadd.f32 0.0, %v4950
      %v4952 = vpop.f32.mrb[0].mxu0
      %4953 = vmatprep.mubr.bf16.mxu0 0
      %4954 = vmatmul.mubr.bf16.gmra.mrb[0].mxu0 %v4820
      %v4955 = vpop.f32.mrb[0].mxu0
      %v4956 = vadd.f32 0.0, %v4955
      %v4957 = vpop.f32.mrb[0].mxu0
      %v4958 = vpop.f32.mrb[0].mxu0
      %v4959 = vadd.f32 0.0, %v4958
      %v4960 = vpop.f32.mrb[0].mxu0
      %4961 = vmatprep.mubr.bf16.mxu0 0
      %4962 = vmatmul.mubr.bf16.gmra.mrb[0].mxu0 %v4821
      %v4963 = vpop.f32.mrb[0].mxu0
      %v4964 = vadd.f32 0.0, %v4963
      %v4965 = vpop.f32.mrb[0].mxu0
      %v4966 = vpop.f32.mrb[0].mxu0
      %v4967 = vadd.f32 0.0, %v4966
      %v4968 = vpop.f32.mrb[0].mxu0
      %4969 = vmatprep.mubr.bf16.mxu0 0
      %4970 = vmatmul.mubr.bf16.gmra.mrb[0].mxu0 %v4822
      %v4971 = vpop.f32.mrb[0].mxu0
      %v4972 = vadd.f32 0.0, %v4971
      %v4973 = vpop.f32.mrb[0].mxu0
      %v4974 = vpop.f32.mrb[0].mxu0
      %v4975 = vadd.f32 0.0, %v4974
      %v4976 = vpop.f32.mrb[0].mxu0
      %4977 = vmatprep.mubr.bf16.mxu0 0
      %4978 = vmatmul.mubr.bf16.gmra.mrb[0].mxu0 %v4823
      %v4979 = vpop.f32.mrb[0].mxu0
      %v4980 = vadd.f32 0.0, %v4979
      %v4981 = vpop.f32.mrb[0].mxu0
      %v4982 = vpop.f32.mrb[0].mxu0
      %v4983 = vadd.f32 0.0, %v4982
      %v4984 = vpop.f32.mrb[0].mxu0
      %4985 = vmatprep.mubr.bf16.mxu0 0
      %4986 = vmatmul.mubr.bf16.gmra.mrb[0].mxu0 %v4824
      %v4987 = vpop.f32.mrb[0].mxu0
      %v4988 = vadd.f32 0.0, %v4987
      %v4989 = vpop.f32.mrb[0].mxu0
      %v4990 = vpop.f32.mrb[0].mxu0
      %v4991 = vadd.f32 0.0, %v4990
      %v4992 = vpop.f32.mrb[0].mxu0
      %4993 = vmatprep.mubr.bf16.mxu0 0
      %4994 = vmatmul.mubr.bf16.gmra.mrb[0].mxu0 %v4825
      %v4995 = vpop.f32.mrb[0].mxu0
      %v4996 = vadd.f32 0.0, %v4995
      %v4997 = vpop.f32.mrb[0].mxu0
      %v4998 = vpop.f32.mrb[0].mxu0
      %v4999 = vadd.f32 0.0, %v4998
      %v5000 = vpop.f32.mrb[0].mxu0
      %5001 = vmatprep.mubr.bf16.mxu0 0
      %5002 = vmatmul.mubr.bf16.gmra.mrb[0].mxu0 %v4826
      %v5003 = vpop.f32.mrb[0].mxu0
      %v5004 = vadd.f32 0.0, %v5003
      %v5005 = vpop.f32.mrb[0].mxu0
      %v5006 = vpop.f32.mrb[0].mxu0
      %v5007 = vadd.f32 0.0, %v5006
      %v5008 = vpop.f32.mrb[0].mxu0
      %5009 = vmatprep.mubr.bf16.mxu0 0
      %5010 = vmatmul.mubr.bf16.gmra.mrb[0].mxu0 %v4827
      %v5011 = vpop.f32.mrb[0].mxu0
      %v5012 = vadd.f32 0.0, %v5011
      %v5013 = vpop.f32.mrb[0].mxu0
      %v5014 = vpop.f32.mrb[0].mxu0
      %v5015 = vadd.f32 0.0, %v5014
      %v5016 = vpop.f32.mrb[0].mxu0
      %5017 = vmatprep.mubr.bf16.mxu0 0
      %5018 = vmatmul.mubr.bf16.gmra.mrb[0].mxu0 %v4828
      %v5019 = vpop.f32.mrb[0].mxu0
      %v5020 = vadd.f32 0.0, %v5019
      %v5021 = vpop.f32.mrb[0].mxu0
      %v5022 = vpop.f32.mrb[0].mxu0
      %v5023 = vadd.f32 0.0, %v5022
      %v5024 = vpop.f32.mrb[0].mxu0
      %5025 = vmatprep.mubr.bf16.mxu0 0
      %5026 = vmatmul.mubr.bf16.gmra.mrb[0].mxu0 %v4829
      %v5027 = vpop.f32.mrb[0].mxu0
      %v5028 = vadd.f32 0.0, %v5027
      %v5029 = vpop.f32.mrb[0].mxu0
      %v5030 = vpop.f32.mrb[0].mxu0
      %v5031 = vadd.f32 0.0, %v5030
      %v5032 = vpop.f32.mrb[0].mxu0
      %5033 = vmatprep.mubr.bf16.mxu0 0
      %5034 = vmatmul.mubr.bf16.gmra.mrb[0].mxu0 %v4830
      %v5035 = vpop.f32.mrb[0].mxu0
      %v5036 = vadd.f32 0.0, %v5035
      %v5037 = vpop.f32.mrb[0].mxu0
      %v5038 = vpop.f32.mrb[0].mxu0
      %v5039 = vadd.f32 0.0, %v5038
      %v5040 = vpop.f32.mrb[0].mxu0
      %5041 = vmatprep.mubr.bf16.mxu0 0
      %5042 = vmatmul.mubr.bf16.gmra.mrb[0].mxu0 %v4831
      %v5043 = vpop.f32.mrb[0].mxu0
      %v5044 = vadd.f32 0.0, %v5043
      %v5045 = vpop.f32.mrb[0].mxu0
      %v5046 = vpop.f32.mrb[0].mxu0
      %v5047 = vadd.f32 0.0, %v5046
      %v5048 = vpop.f32.mrb[0].mxu0
      %5049 = vmatprep.mubr.bf16.mxu0 0
      %5050 = vmatmul.mubr.bf16.gmra.mrb[0].mxu0 %v4832
      %v5051 = vpop.f32.mrb[0].mxu0
      %v5052 = vadd.f32 0.0, %v5051
      %v5053 = vpop.f32.mrb[0].mxu0
      %v5054 = vpop.f32.mrb[0].mxu0
      %v5055 = vadd.f32 0.0, %v5054
      %v5056 = vpop.f32.mrb[0].mxu0
      %5057 = vdwg.mxu0
      %v5058 = vadd.f32 %v4560, %v4932
      %v5059 = vadd.f32 %v4561, %v4935
      %v5060 = vadd.f32 %v4562, %v4940
      %v5061 = vadd.f32 %v4563, %v4943
      %v5062 = vadd.f32 %v4564, %v4948
      %v5063 = vadd.f32 %v4565, %v4951
      %v5064 = vadd.f32 %v4566, %v4956
      %v5065 = vadd.f32 %v4567, %v4959
      %v5066 = vadd.f32 %v4568, %v4964
      %v5067 = vadd.f32 %v4569, %v4967
      %v5068 = vadd.f32 %v4570, %v4972
      %v5069 = vadd.f32 %v4571, %v4975
      %v5070 = vadd.f32 %v4572, %v4980
      %v5071 = vadd.f32 %v4573, %v4983
      %v5072 = vadd.f32 %v4574, %v4988
      %v5073 = vadd.f32 %v4575, %v4991
      %v5074 = vadd.f32 %v4576, %v4996
      %v5075 = vadd.f32 %v4577, %v4999
      %v5076 = vadd.f32 %v4578, %v5004
      %v5077 = vadd.f32 %v4579, %v5007
      %v5078 = vadd.f32 %v4580, %v5012
      %v5079 = vadd.f32 %v4581, %v5015
      %v5080 = vadd.f32 %v4582, %v5020
      %v5081 = vadd.f32 %v4583, %v5023
      %v5082 = vadd.f32 %v4584, %v5028
      %v5083 = vadd.f32 %v4585, %v5031
      %v5084 = vadd.f32 %v4586, %v5036
      %v5085 = vadd.f32 %v4587, %v5039
      %v5086 = vadd.f32 %v4588, %v5044
      %v5087 = vadd.f32 %v4589, %v5047
      %v5088 = vadd.f32 %v4590, %v5052
      %v5089 = vadd.f32 %v4591, %v5055
      %v5090 = vld [vmem:[%s263] sm:$0x1]
      %v5092 = vlaneseq
      %v5093 = vshrl.u32 %v5092, 7
      %v5094 = vsub.s32 0, %v5093
      %v5095 = vrot.slane %v5090, %v5094
      %v5097 = vadd.f32 %v5058, %v5095
      %v5098 = vadd.f32 %v5059, %v5095
      %v5099 = vadd.f32 %v5060, %v5095
      %v5100 = vadd.f32 %v5061, %v5095
      %v5101 = vadd.f32 %v5062, %v5095
      %v5102 = vadd.f32 %v5063, %v5095
      %v5103 = vadd.f32 %v5064, %v5095
      %v5104 = vadd.f32 %v5065, %v5095
      %v5105 = vadd.f32 %v5066, %v5095
      %v5106 = vadd.f32 %v5067, %v5095
      %v5107 = vadd.f32 %v5068, %v5095
      %v5108 = vadd.f32 %v5069, %v5095
      %v5109 = vadd.f32 %v5070, %v5095
      %v5110 = vadd.f32 %v5071, %v5095
      %v5111 = vadd.f32 %v5072, %v5095
      %v5112 = vadd.f32 %v5073, %v5095
      %v5113 = vadd.f32 %v5074, %v5095
      %v5114 = vadd.f32 %v5075, %v5095
      %v5115 = vadd.f32 %v5076, %v5095
      %v5116 = vadd.f32 %v5077, %v5095
      %v5117 = vadd.f32 %v5078, %v5095
      %v5118 = vadd.f32 %v5079, %v5095
      %v5119 = vadd.f32 %v5080, %v5095
      %v5120 = vadd.f32 %v5081, %v5095
      %v5121 = vadd.f32 %v5082, %v5095
      %v5122 = vadd.f32 %v5083, %v5095
      %v5123 = vadd.f32 %v5084, %v5095
      %v5124 = vadd.f32 %v5085, %v5095
      %v5125 = vadd.f32 %v5086, %v5095
      %v5126 = vadd.f32 %v5087, %v5095
      %v5127 = vadd.f32 %v5088, %v5095
      %v5128 = vadd.f32 %v5089, %v5095
      %v5129 = vld [vmem:[%s271] sm:$0xf]
      %v5130 = vld [vmem:[%s271 + $0x4] sm:$0xf]
      %v5131 = vld [vmem:[%s271 + $0x8] sm:$0xf]
      %v5132 = vld [vmem:[%s271 + $0xc] sm:$0xf]
      %v5133 = vld [vmem:[%s271 + $0x10] sm:$0xf]
      %v5134 = vld [vmem:[%s271 + $0x14] sm:$0xf]
      %v5135 = vld [vmem:[%s271 + $0x18] sm:$0xf]
      %v5136 = vld [vmem:[%s271 + $0x1c] sm:$0xf]
      %v5137 = vld [vmem:[%s271 + $0x20] sm:$0xf]
      %v5138 = vld [vmem:[%s271 + $0x24] sm:$0xf]
      %v5139 = vld [vmem:[%s271 + $0x28] sm:$0xf]
      %v5140 = vld [vmem:[%s271 + $0x2c] sm:$0xf]
      %v5141 = vld [vmem:[%s271 + $0x30] sm:$0xf]
      %v5142 = vld [vmem:[%s271 + $0x34] sm:$0xf]
      %v5143 = vld [vmem:[%s271 + $0x38] sm:$0xf]
      %v5144 = vld [vmem:[%s271 + $0x3c] sm:$0xf]
      %v5145 = vld [vmem:[%s271 + $0x40] sm:$0xf]
      %v5146 = vld [vmem:[%s271 + $0x44] sm:$0xf]
      %v5147 = vld [vmem:[%s271 + $0x48] sm:$0xf]
      %v5148 = vld [vmem:[%s271 + $0x4c] sm:$0xf]
      %v5149 = vld [vmem:[%s271 + $0x50] sm:$0xf]
      %v5150 = vld [vmem:[%s271 + $0x54] sm:$0xf]
      %v5151 = vld [vmem:[%s271 + $0x58] sm:$0xf]
      %v5152 = vld [vmem:[%s271 + $0x5c] sm:$0xf]
      %v5153 = vld [vmem:[%s271 + $0x60] sm:$0xf]
      %v5154 = vld [vmem:[%s271 + $0x64] sm:$0xf]
      %v5155 = vld [vmem:[%s271 + $0x68] sm:$0xf]
      %v5156 = vld [vmem:[%s271 + $0x6c] sm:$0xf]
      %v5157 = vld [vmem:[%s271 + $0x70] sm:$0xf]
      %v5158 = vld [vmem:[%s271 + $0x74] sm:$0xf]
      %v5159 = vld [vmem:[%s271 + $0x78] sm:$0xf]
      %v5160 = vld [vmem:[%s271 + $0x7c] sm:$0xf]
      %v5161 = vunpack.c.l.bf16 %v5129
      %v5162 = vunpack.c.l.bf16 %v5130
      %v5163 = vunpack.c.l.bf16 %v5131
      %v5164 = vunpack.c.l.bf16 %v5132
      %v5165 = vunpack.c.l.bf16 %v5133
      %v5166 = vunpack.c.l.bf16 %v5134
      %v5167 = vunpack.c.l.bf16 %v5135
      %v5168 = vunpack.c.l.bf16 %v5136
      %v5169 = vunpack.c.l.bf16 %v5137
      %v5170 = vunpack.c.l.bf16 %v5138
      %v5171 = vunpack.c.l.bf16 %v5139
      %v5172 = vunpack.c.l.bf16 %v5140
      %v5173 = vunpack.c.l.bf16 %v5141
      %v5174 = vunpack.c.l.bf16 %v5142
      %v5175 = vunpack.c.l.bf16 %v5143
      %v5176 = vunpack.c.l.bf16 %v5144
      %v5177 = vunpack.c.l.bf16 %v5145
      %v5178 = vunpack.c.l.bf16 %v5146
      %v5179 = vunpack.c.l.bf16 %v5147
      %v5180 = vunpack.c.l.bf16 %v5148
      %v5181 = vunpack.c.l.bf16 %v5149
      %v5182 = vunpack.c.l.bf16 %v5150
      %v5183 = vunpack.c.l.bf16 %v5151
      %v5184 = vunpack.c.l.bf16 %v5152
      %v5185 = vunpack.c.l.bf16 %v5153
      %v5186 = vunpack.c.l.bf16 %v5154
      %v5187 = vunpack.c.l.bf16 %v5155
      %v5188 = vunpack.c.l.bf16 %v5156
      %v5189 = vunpack.c.l.bf16 %v5157
      %v5190 = vunpack.c.l.bf16 %v5158
      %v5191 = vunpack.c.l.bf16 %v5159
      %v5192 = vunpack.c.l.bf16 %v5160
      %v5193 = vadd.f32 %v5097, %v5161
      %v5194 = vadd.f32 %v5098, %v5162
      %v5195 = vadd.f32 %v5099, %v5163
      %v5196 = vadd.f32 %v5100, %v5164
      %v5197 = vadd.f32 %v5101, %v5165
      %v5198 = vadd.f32 %v5102, %v5166
      %v5199 = vadd.f32 %v5103, %v5167
      %v5200 = vadd.f32 %v5104, %v5168
      %v5201 = vadd.f32 %v5105, %v5169
      %v5202 = vadd.f32 %v5106, %v5170
      %v5203 = vadd.f32 %v5107, %v5171
      %v5204 = vadd.f32 %v5108, %v5172
      %v5205 = vadd.f32 %v5109, %v5173
      %v5206 = vadd.f32 %v5110, %v5174
      %v5207 = vadd.f32 %v5111, %v5175
      %v5208 = vadd.f32 %v5112, %v5176
      %v5209 = vadd.f32 %v5113, %v5177
      %v5210 = vadd.f32 %v5114, %v5178
      %v5211 = vadd.f32 %v5115, %v5179
      %v5212 = vadd.f32 %v5116, %v5180
      %v5213 = vadd.f32 %v5117, %v5181
      %v5214 = vadd.f32 %v5118, %v5182
      %v5215 = vadd.f32 %v5119, %v5183
      %v5216 = vadd.f32 %v5120, %v5184
      %v5217 = vadd.f32 %v5121, %v5185
      %v5218 = vadd.f32 %v5122, %v5186
      %v5219 = vadd.f32 %v5123, %v5187
      %v5220 = vadd.f32 %v5124, %v5188
      %v5221 = vadd.f32 %v5125, %v5189
      %v5222 = vadd.f32 %v5126, %v5190
      %v5223 = vadd.f32 %v5127, %v5191
      %v5224 = vadd.f32 %v5128, %v5192
      %v5225 = vmax.f32 %v5193, 0.0
      %v5226 = vmax.f32 %v5194, 0.0
      %v5227 = vmax.f32 %v5195, 0.0
      %v5228 = vmax.f32 %v5196, 0.0
      %v5229 = vmax.f32 %v5197, 0.0
      %v5230 = vmax.f32 %v5198, 0.0
      %v5231 = vmax.f32 %v5199, 0.0
      %v5232 = vmax.f32 %v5200, 0.0
      %v5233 = vmax.f32 %v5201, 0.0
      %v5234 = vmax.f32 %v5202, 0.0
      %v5235 = vmax.f32 %v5203, 0.0
      %v5236 = vmax.f32 %v5204, 0.0
      %v5237 = vmax.f32 %v5205, 0.0
      %v5238 = vmax.f32 %v5206, 0.0
      %v5239 = vmax.f32 %v5207, 0.0
      %v5240 = vmax.f32 %v5208, 0.0
      %v5241 = vmax.f32 %v5209, 0.0
      %v5242 = vmax.f32 %v5210, 0.0
      %v5243 = vmax.f32 %v5211, 0.0
      %v5244 = vmax.f32 %v5212, 0.0
      %v5245 = vmax.f32 %v5213, 0.0
      %v5246 = vmax.f32 %v5214, 0.0
      %v5247 = vmax.f32 %v5215, 0.0
      %v5248 = vmax.f32 %v5216, 0.0
      %v5249 = vmax.f32 %v5217, 0.0
      %v5250 = vmax.f32 %v5218, 0.0
      %v5251 = vmax.f32 %v5219, 0.0
      %v5252 = vmax.f32 %v5220, 0.0
      %v5253 = vmax.f32 %v5221, 0.0
      %v5254 = vmax.f32 %v5222, 0.0
      %v5255 = vmax.f32 %v5223, 0.0
      %v5256 = vmax.f32 %v5224, 0.0
      %5257 = vst [vmem:[%s279] sm:$0xff] %v5225
      %5258 = vst [vmem:[%s279 + $0x8] sm:$0xff] %v5226
      %5259 = vst [vmem:[%s279 + $0x10] sm:$0xff] %v5227
      %5260 = vst [vmem:[%s279 + $0x18] sm:$0xff] %v5228
      %5261 = vst [vmem:[%s279 + $0x20] sm:$0xff] %v5229
      %5262 = vst [vmem:[%s279 + $0x28] sm:$0xff] %v5230
      %5263 = vst [vmem:[%s279 + $0x30] sm:$0xff] %v5231
      %5264 = vst [vmem:[%s279 + $0x38] sm:$0xff] %v5232
      %5265 = vst [vmem:[%s279 + $0x40] sm:$0xff] %v5233
      %5266 = vst [vmem:[%s279 + $0x48] sm:$0xff] %v5234
      %5267 = vst [vmem:[%s279 + $0x50] sm:$0xff] %v5235
      %5268 = vst [vmem:[%s279 + $0x58] sm:$0xff] %v5236
      %5269 = vst [vmem:[%s279 + $0x60] sm:$0xff] %v5237
      %5270 = vst [vmem:[%s279 + $0x68] sm:$0xff] %v5238
      %5271 = vst [vmem:[%s279 + $0x70] sm:$0xff] %v5239
      %5272 = vst [vmem:[%s279 + $0x78] sm:$0xff] %v5240
      %5273 = vst [vmem:[%s279 + $0x80] sm:$0xff] %v5241
      %5274 = vst [vmem:[%s279 + $0x88] sm:$0xff] %v5242
      %5275 = vst [vmem:[%s279 + $0x90] sm:$0xff] %v5243
      %5276 = vst [vmem:[%s279 + $0x98] sm:$0xff] %v5244
      %5277 = vst [vmem:[%s279 + $0xa0] sm:$0xff] %v5245
      %5278 = vst [vmem:[%s279 + $0xa8] sm:$0xff] %v5246
      %5279 = vst [vmem:[%s279 + $0xb0] sm:$0xff] %v5247
      %5280 = vst [vmem:[%s279 + $0xb8] sm:$0xff] %v5248
      %5281 = vst [vmem:[%s279 + $0xc0] sm:$0xff] %v5249
      %5282 = vst [vmem:[%s279 + $0xc8] sm:$0xff] %v5250
      %5283 = vst [vmem:[%s279 + $0xd0] sm:$0xff] %v5251
      %5284 = vst [vmem:[%s279 + $0xd8] sm:$0xff] %v5252
      %5285 = vst [vmem:[%s279 + $0xe0] sm:$0xff] %v5253
      %5286 = vst [vmem:[%s279 + $0xe8] sm:$0xff] %v5254
      %5287 = vst [vmem:[%s279 + $0xf0] sm:$0xff] %v5255
      %5288 = vst [vmem:[%s279 + $0xf8] sm:$0xff] %v5256
      %p5289 = scmp.lt.s32.totalorder %s19, 1
      %s5290 = scalar_select %p5289, %s19, 1
      %p5291 = scmp.lt.s32.totalorder %s20, 0
      %s5292 = scalar_select %p5291, %s20, 0
      %s5293 = smul.addr %s5290, 32
      %s5294 = sadd.s32 %s5292, %s5293
      %s5295 = smul.addr %s5294, 8
      %s5296 = scalar_lea.vmem %s4, %s5295
      // Predicated region
      $region37: #{basic_block_forward.3} parent=35 // pred_check
        %p5297 = pneg %p153
      $region38: #{basic_block_forward.3} parent=35 // pred_check_branch
        %5299 = sbr.rel (%p5297) target = $region40
      $region39: #{basic_block_forward.3} parent=35 // pred_region
        _
      $region40: #{basic_block_forward.3} parent=35 // pred_fallthru
        _
    $region36: #{basic_block_forward.3} parent=5 // pred_fallthru
      _
    %p5300 = scmp.le.s32.totalorder 2, %s10
    // Predicated region
    $region41: #{basic_block_forward.3} parent=5 // pred_check
      %p5301 = pneg %p5300
    $region42: #{basic_block_forward.3} parent=5 // pred_check_branch
      %5303 = sbr.rel (%p5301) target = $region44
    $region43: #{basic_block_forward.3} parent=5 // pred_region
      %s5304 = ssub.s32 %s10, 2
      // Predicated region
      $region45: #{basic_block_forward.3} parent=43 // pred_check
        %p5305 = pneg %p159
      $region46: #{basic_block_forward.3} parent=43 // pred_check_branch
        %5307 = sbr.rel (%p5305) target = $region48
      $region47: #{basic_block_forward.3} parent=43 // pred_region
        %p5308 = scmp.lt.s32.totalorder %s21, 1
        %s5309 = scalar_select %p5308, %s21, 1
        %p5310 = scmp.lt.s32.totalorder %s22, 0
        %s5311 = scalar_select %p5310, %s22, 0
        %s5312 = smul.addr %s5309, 32
        %s5313 = sadd.s32 %s5311, %s5312
        %s5314 = smul.addr %s5313, 8
        %s5315 = scalar_lea.vmem %s4, %s5314
      $region48: #{basic_block_forward.3} parent=43 // pred_fallthru
        _
    $region44: #{basic_block_forward.3} parent=5 // pred_fallthru
      _
  $region6: #{basic_block_forward.3} parent=0 // loop_footer
    %s14 = sadd.s32 1, %s10
  $region7: #{basic_block_forward.3} parent=0 // loop_footer_branch
    %9 = sbr.rel target = $region3
  $region8: #{basic_block_forward.3} parent=0 // loop_exit
    _

// kernel: basic_block_forward.2
$region0: #{basic_block_forward.2}
  #allocation0 [shape = 'u32[]', space=smem, size = 0x4, offset = 0x4, fixed_abs, tag = 'smem constant byte address 0x4 - core index']
  #allocation1 [shape = 'u32[144,128]{1,0:T(1,128)}', space=vmem, size = 0x12000, scoped, tag = 'internal scratch']
  %s0 = inlined_call_operand.vmem [shape: bf16[2,18,18,128], index: 0, kind: input, shape index: {}]
  %s1 = inlined_call_operand.vmem [shape: bf16[3,3,128,128], index: 1, kind: input, shape index: {}]
  %s2 = inlined_call_operand.vmem [shape: f32[1,128], index: 2, kind: input, shape index: {}]
  %s3 = inlined_call_operand.vmem [shape: bf16[2,16,16,128], index: 3, kind: output, shape index: {}]
  %s4 = sld [smem:[#allocation0]]
  $region45: #{basic_block_forward.2} parent=0
    _
  %s6 = ssub.s32 1, %s4
  %s7 = scalar_select 0, %s6, %s4
  loop: start=0, step=1, limit=4
  $region2: #{basic_block_forward.2} parent=0 // loop_pre_header
    _
  $region3: #{basic_block_forward.2} parent=0 // loop_header
    %s9 = sphi 0, %s13
    %p10 = scmp.ge.s32.totalorder %s9, 4
    %s16 = sphi 0, %s28
    %s17 = sphi 0, %s24
    %s18 = sphi 0, %s16
    %s19 = sphi 0, %s17
    %s20 = sphi 0, %s18
    %s21 = sphi 0, %s19
    %s31 = sphi 0, %s33
    %s34 = sphi 0, %s31
    %s35 = sphi 0, %s34
    %s51 = sphi 0, %s35
    %s57 = sphi 0, %s59
    %s60 = sphi 0, %s57
    %s61 = sphi 0, %s60
    %s77 = sphi 0, %s61
    %s83 = sphi 0, %s85
    %s86 = sphi 0, %s83
    %s87 = sphi 0, %s86
    %s103 = sphi 0, %s87
    %s111 = sphi 0, %s113
    %s114 = sphi 0, %s111
    %s115 = sphi 0, %s114
    %s131 = sphi 0, %s115
  $region4: #{basic_block_forward.2} parent=0 // loop_header_branch
    %12 = sbr.rel (%p10) target = $region8
  $region5: #{basic_block_forward.2} parent=0 // loop_body
    %s14 = ssub.s32 %s9, 1
    %s15 = ssub.s32 %s9, 2
    %s22 = sadd.s32 1, %s17
    %p23 = scmp.ge.s32.totalorder %s22, 1
    %s24 = scalar_select %p23, 0, %s22
    %s25 = sadd.s32 1, %s16
    %s26 = scalar_select %p23, %s25, %s16
    %p27 = scmp.ge.s32.totalorder %s26, 2
    %s28 = scalar_select %p27, 0, %s26
    %s29 = ssub.s32 %s16, %s28
    %p30 = scmp.eq.s32.totalorder %s29, 0
    %s32 = sadd.s32 %s31, 1
    %s33 = scalar_select %p30, %s31, %s32
    %p36 = pneg %p30
    %p37 = scmp.eq.s32.totalorder %s9, 1
    %p38 = por %p36, %p37
    %p39 = scmp.ne.s32.totalorder %s31, %s34
    %p40 = scmp.eq.s32.totalorder %s9, 0
    %p41 = por %p39, %p40
    %p42 = scmp.ne.s32.totalorder %s31, %s34
    %p43 = scmp.eq.s32.totalorder %s14, 1
    %p44 = por %p42, %p43
    %p45 = scmp.ne.s32.totalorder %s34, %s35
    %p46 = scmp.eq.s32.totalorder %s14, 0
    %p47 = por %p45, %p46
    %p48 = scmp.ne.s32.totalorder %s34, %s35
    %p49 = scmp.eq.s32.totalorder %s15, 1
    %p50 = por %p48, %p49
    %p52 = scmp.ne.s32.totalorder %s35, %s51
    %p53 = scmp.eq.s32.totalorder %s15, 0
    %p54 = por %p52, %p53
    %s55 = ssub.s32 %s17, %s24
    %p56 = scmp.eq.s32.totalorder %s55, 0
    %s58 = sadd.s32 %s57, 1
    %s59 = scalar_select %p56, %s57, %s58
    %p62 = pneg %p56
    %p63 = scmp.eq.s32.totalorder %s9, 1
    %p64 = por %p62, %p63
    %p65 = scmp.ne.s32.totalorder %s57, %s60
    %p66 = scmp.eq.s32.totalorder %s9, 0
    %p67 = por %p65, %p66
    %p68 = scmp.ne.s32.totalorder %s57, %s60
    %p69 = scmp.eq.s32.totalorder %s14, 1
    %p70 = por %p68, %p69
    %p71 = scmp.ne.s32.totalorder %s60, %s61
    %p72 = scmp.eq.s32.totalorder %s14, 0
    %p73 = por %p71, %p72
    %p74 = scmp.ne.s32.totalorder %s60, %s61
    %p75 = scmp.eq.s32.totalorder %s15, 1
    %p76 = por %p74, %p75
    %p78 = scmp.ne.s32.totalorder %s61, %s77
    %p79 = scmp.eq.s32.totalorder %s15, 0
    %p80 = por %p78, %p79
    %s81 = ssub.s32 %s17, %s24
    %p82 = scmp.eq.s32.totalorder %s81, 0
    %s84 = sadd.s32 %s83, 1
    %s85 = scalar_select %p82, %s83, %s84
    %p88 = pneg %p82
    %p89 = scmp.eq.s32.totalorder %s9, 1
    %p90 = por %p88, %p89
    %p91 = scmp.ne.s32.totalorder %s83, %s86
    %p92 = scmp.eq.s32.totalorder %s9, 0
    %p93 = por %p91, %p92
    %p94 = scmp.ne.s32.totalorder %s83, %s86
    %p95 = scmp.eq.s32.totalorder %s14, 1
    %p96 = por %p94, %p95
    %p97 = scmp.ne.s32.totalorder %s86, %s87
    %p98 = scmp.eq.s32.totalorder %s14, 0
    %p99 = por %p97, %p98
    %p100 = scmp.ne.s32.totalorder %s86, %s87
    %p101 = scmp.eq.s32.totalorder %s15, 1
    %p102 = por %p100, %p101
    %p104 = scmp.ne.s32.totalorder %s87, %s103
    %p105 = scmp.eq.s32.totalorder %s15, 0
    %p106 = por %p104, %p105
    %s107 = ssub.s32 %s16, %s28
    %s108 = ssub.s32 %s17, %s24
    %s109 = sor.u32 %s107, %s108
    %p110 = scmp.eq.s32.totalorder %s109, 0
    %s112 = sadd.s32 %s111, 1
    %s113 = scalar_select %p110, %s111, %s112
    %p116 = pneg %p110
    %p117 = scmp.eq.s32.totalorder %s9, 1
    %p118 = por %p116, %p117
    %p119 = scmp.ne.s32.totalorder %s111, %s114
    %p120 = scmp.eq.s32.totalorder %s9, 0
    %p121 = por %p119, %p120
    %p122 = scmp.ne.s32.totalorder %s111, %s114
    %p123 = scmp.eq.s32.totalorder %s14, 1
    %p124 = por %p122, %p123
    %p125 = scmp.ne.s32.totalorder %s114, %s115
    %p126 = scmp.eq.s32.totalorder %s14, 0
    %p127 = por %p125, %p126
    %p128 = scmp.ne.s32.totalorder %s114, %s115
    %p129 = scmp.eq.s32.totalorder %s15, 1
    %p130 = por %p128, %p129
    %p132 = scmp.ne.s32.totalorder %s115, %s131
    %p133 = scmp.eq.s32.totalorder %s15, 0
    %p134 = por %p132, %p133
    %p135 = scmp.le.s32.totalorder 1, %s9
    %p136 = scmp.lt.s32.totalorder %s9, 3
    %p137 = pnand %p135, %p136
    %p138 = pneg %p137
    // Predicated region
    $region9: #{basic_block_forward.2} parent=5 // pred_check
      _
    $region10: #{basic_block_forward.2} parent=5 // pred_check_branch
      %140 = sbr.rel (%p137) target = $region12
    $region11: #{basic_block_forward.2} parent=5 // pred_region
      %s141 = ssub.s32 %s9, 1
      // Predicated region
      $region13: #{basic_block_forward.2} parent=11 // pred_check
        %p142 = pneg %p73
      $region14: #{basic_block_forward.2} parent=11 // pred_check_branch
        %144 = sbr.rel (%p142) target = $region16
      $region15: #{basic_block_forward.2} parent=11 // pred_region
        %p145 = scmp.lt.s32.totalorder %s19, 0
        %s146 = scalar_select %p145, %s19, 0
        %s147 = smul.addr %s146, 4
        %s148 = scalar_lea.vmem %s1, %s147
      $region16: #{basic_block_forward.2} parent=11 // pred_fallthru
        _
      // Predicated region
      $region17: #{basic_block_forward.2} parent=11 // pred_check
        %p149 = pneg %p99
      $region18: #{basic_block_forward.2} parent=11 // pred_check_branch
        %151 = sbr.rel (%p149) target = $region20
      $region19: #{basic_block_forward.2} parent=11 // pred_region
        %p152 = scmp.lt.s32.totalorder %s19, 0
        %s153 = scalar_select %p152, %s19, 0
        %s154 = scalar_lea.vmem %s2, %s153
      $region20: #{basic_block_forward.2} parent=11 // pred_fallthru
        _
    $region12: #{basic_block_forward.2} parent=5 // pred_fallthru
      _
    %p155 = scmp.lt.s32.totalorder %s9, 2
    // Predicated region
    $region21: #{basic_block_forward.2} parent=5 // pred_check
      %p156 = pneg %p155
    $region22: #{basic_block_forward.2} parent=5 // pred_check_branch
      %158 = sbr.rel (%p156) target = $region24
    $region23: #{basic_block_forward.2} parent=5 // pred_region
      // Predicated region
      $region25: #{basic_block_forward.2} parent=23 // pred_check
        %p159 = pneg %p41
      $region26: #{basic_block_forward.2} parent=23 // pred_check_branch
        %161 = sbr.rel (%p159) target = $region28
      $region27: #{basic_block_forward.2} parent=23 // pred_region
        %p162 = scmp.lt.s32.totalorder %s16, 1
        %s163 = scalar_select %p162, %s16, 1
        %s164 = smul.addr %s163, 54
        %s165 = smul.addr %s164, 4
        %s166 = scalar_lea.vmem %s0, %s165
      $region28: #{basic_block_forward.2} parent=23 // pred_fallthru
        _
    $region24: #{basic_block_forward.2} parent=5 // pred_fallthru
      _
    %p167 = scmp.le.s32.totalorder 1, %s9
    %p168 = scmp.lt.s32.totalorder %s9, 3
    %p169 = pnand %p167, %p168
    %p170 = pneg %p169
    // Predicated region
    $region29: #{basic_block_forward.2} parent=5 // pred_check
      _
    $region30: #{basic_block_forward.2} parent=5 // pred_check_branch
      %172 = sbr.rel (%p169) target = $region32
    $region31: #{basic_block_forward.2} parent=5 // pred_region
      %s173 = ssub.s32 %s9, 1
      %p174 = scmp.lt.s32.totalorder %s18, 1
      %s175 = scalar_select %p174, %s18, 1
      %s176 = smul.addr %s175, 54
      %s177 = smul.addr %s176, 4
      %s178 = scalar_lea.vmem %s0, %s177
      %p179 = pneg %p47
      %p180 = pneg %p44
      %p181 = scmp.lt.s32.totalorder %s19, 0
      %s182 = scalar_select %p181, %s19, 0
      %s183 = smul.addr %s182, 4
      %s184 = scalar_lea.vmem %s1, %s183
      %p185 = pneg %p73
      %p186 = pneg %p70
      %p187 = scmp.lt.s32.totalorder %s19, 0
      %s188 = scalar_select %p187, %s19, 0
      %s189 = scalar_lea.vmem %s2, %s188
      %p190 = pneg %p99
      %p191 = pneg %p96
      %p192 = pneg %p127
      %p193 = pneg %p124
      %p194 = scmp.lt.s32.totalorder %s18, 1
      %s195 = scalar_select %p194, %s18, 1
      %p196 = scmp.lt.s32.totalorder %s19, 0
      %s197 = scalar_select %p196, %s19, 0
      %s198 = smul.addr %s195, 32
      %s199 = sadd.s32 %s197, %s198
      %s200 = smul.addr %s199, 4
      %s201 = scalar_lea.vmem %s3, %s200
      %p202 = scmp.lt.s32.totalorder %s18, 1
      %s203 = scalar_select %p202, %s18, 1
      %s204 = smul.addr %s203, 54
      %s205 = smul.addr %s204, 4
      %s206 = scalar_lea.vmem %s0, %s205
      %p207 = scmp.lt.s32.totalorder %s19, 0
      %s208 = scalar_select %p207, %s19, 0
      %s209 = smul.addr %s208, 4
      %s210 = scalar_lea.vmem %s1, %s209
      %p211 = scmp.lt.s32.totalorder %s19, 0
      %s212 = scalar_select %p211, %s19, 0
      %s213 = scalar_lea.vmem %s2, %s212
      %p214 = scmp.lt.s32.totalorder %s18, 1
      %s215 = scalar_select %p214, %s18, 1
      %p216 = scmp.lt.s32.totalorder %s19, 0
      %s217 = scalar_select %p216, %s19, 0
      %s218 = smul.addr %s215, 32
      %s219 = sadd.s32 %s217, %s218
      %s220 = smul.addr %s219, 4
      %s221 = scalar_lea.vmem %s3, %s220
      %v223 = vld [vmem:[%s206] sm:$0xf]
      %v224 = vld [vmem:[%s206 + $0x4] sm:$0xf]
      %v225 = vld [vmem:[%s206 + $0xc] sm:$0xf]
      %v226 = vld [vmem:[%s206 + $0x10] sm:$0xf]
      %v227 = vld [vmem:[%s206 + $0x18] sm:$0xf]
      %v228 = vld [vmem:[%s206 + $0x1c] sm:$0xf]
      %v229 = vld [vmem:[%s206 + $0x24] sm:$0xf]
      %v230 = vld [vmem:[%s206 + $0x28] sm:$0xf]
      %v231 = vld [vmem:[%s206 + $0x30] sm:$0xf]
      %v232 = vld [vmem:[%s206 + $0x34] sm:$0xf]
      %v233 = vld [vmem:[%s206 + $0x3c] sm:$0xf]
      %v234 = vld [vmem:[%s206 + $0x40] sm:$0xf]
      %v235 = vld [vmem:[%s206 + $0x48] sm:$0xf]
      %v236 = vld [vmem:[%s206 + $0x4c] sm:$0xf]
      %v237 = vld [vmem:[%s206 + $0x54] sm:$0xf]
      %v238 = vld [vmem:[%s206 + $0x58] sm:$0xf]
      %v239 = vld [vmem:[%s206 + $0x60] sm:$0xf]
      %v240 = vld [vmem:[%s206 + $0x64] sm:$0xf]
      %v241 = vld [vmem:[%s206 + $0x6c] sm:$0xf]
      %v242 = vld [vmem:[%s206 + $0x70] sm:$0xf]
      %v243 = vld [vmem:[%s206 + $0x78] sm:$0xf]
      %v244 = vld [vmem:[%s206 + $0x7c] sm:$0xf]
      %v245 = vld [vmem:[%s206 + $0x84] sm:$0xf]
      %v246 = vld [vmem:[%s206 + $0x88] sm:$0xf]
      %v247 = vld [vmem:[%s206 + $0x90] sm:$0xf]
      %v248 = vld [vmem:[%s206 + $0x94] sm:$0xf]
      %v249 = vld [vmem:[%s206 + $0x9c] sm:$0xf]
      %v250 = vld [vmem:[%s206 + $0xa0] sm:$0xf]
      %v251 = vld [vmem:[%s206 + $0xa8] sm:$0xf]
      %v252 = vld [vmem:[%s206 + $0xac] sm:$0xf]
      %v253 = vld [vmem:[%s206 + $0xb4] sm:$0xf]
      %v254 = vld [vmem:[%s206 + $0xb8] sm:$0xf]
      %v255 = vld [vmem:[%s210] sm:$0xf]
      %v256 = vld [vmem:[%s210 + $0x4] sm:$0xf]
      %v257 = vld [vmem:[%s210 + $0x8] sm:$0xf]
      %v258 = vld [vmem:[%s210 + $0xc] sm:$0xf]
      %v259 = vld [vmem:[%s210 + $0x10] sm:$0xf]
      %v260 = vld [vmem:[%s210 + $0x14] sm:$0xf]
      %v261 = vld [vmem:[%s210 + $0x18] sm:$0xf]
      %v262 = vld [vmem:[%s210 + $0x1c] sm:$0xf]
      %v263 = vld [vmem:[%s210 + $0x20] sm:$0xf]
      %v264 = vld [vmem:[%s210 + $0x24] sm:$0xf]
      %v265 = vld [vmem:[%s210 + $0x28] sm:$0xf]
      %v266 = vld [vmem:[%s210 + $0x2c] sm:$0xf]
      %v267 = vld [vmem:[%s210 + $0x30] sm:$0xf]
      %v268 = vld [vmem:[%s210 + $0x34] sm:$0xf]
      %v269 = vld [vmem:[%s210 + $0x38] sm:$0xf]
      %v270 = vld [vmem:[%s210 + $0x3c] sm:$0xf]
      %v271 = vld [vmem:[%s206 + $0x8] sm:$0x1]
      %v272 = vld [vmem:[%s206 + $0x14] sm:$0x1]
      %v273 = vld [vmem:[%s206 + $0x20] sm:$0x1]
      %v274 = vld [vmem:[%s206 + $0x2c] sm:$0x1]
      %v275 = vld [vmem:[%s206 + $0x38] sm:$0x1]
      %v276 = vld [vmem:[%s206 + $0x44] sm:$0x1]
      %v277 = vld [vmem:[%s206 + $0x50] sm:$0x1]
      %v278 = vld [vmem:[%s206 + $0x5c] sm:$0x1]
      %v279 = vld [vmem:[%s206 + $0x68] sm:$0x1]
      %v280 = vld [vmem:[%s206 + $0x74] sm:$0x1]
      %v281 = vld [vmem:[%s206 + $0x80] sm:$0x1]
      %v282 = vld [vmem:[%s206 + $0x8c] sm:$0x1]
      %v283 = vld [vmem:[%s206 + $0x98] sm:$0x1]
      %v284 = vld [vmem:[%s206 + $0xa4] sm:$0x1]
      %v285 = vld [vmem:[%s206 + $0xb0] sm:$0x1]
      %v286 = vld [vmem:[%s206 + $0xbc] sm:$0x1]
      %vm287 = vsmask.f32 3328
      %vm288 = vsmask.f32 7440
      %vm289 = vmor %vm287, %vm288
      %v291 = vshrl.u32 %v223, 16
      %v293 = vrot.slane %v291, 4
      %v294 = vshll.u32 %v223, 16
      %v296 = vrot.slane %v294, 5
      %v297 = vor.u32 %v293, %v296
      %v298 = vrot.slane %v297, 4
      %v300 = vshll.u32 %v224, 16
      %v302 = vrot.slane %v300, 5
      %v303 = vsel %vm289, %v298, %v302
      %v304 = vshrl.u32 %v224, 16
      %v306 = vrot.slane %v304, 4
      %v307 = vor.u32 %v306, %v302
      %v308 = vrot.slane %v307, 4
      %v310 = vshll.u32 %v271, 16
      %v312 = vrot.slane %v310, 5
      %v313 = vsel %vm289, %v308, %v312
      %v315 = vshrl.u32 %v225, 16
      %v317 = vrot.slane %v315, 4
      %v318 = vshll.u32 %v225, 16
      %v320 = vrot.slane %v318, 5
      %v321 = vor.u32 %v317, %v320
      %v322 = vrot.slane %v321, 4
      %v324 = vshll.u32 %v226, 16
      %v326 = vrot.slane %v324, 5
      %v327 = vsel %vm289, %v322, %v326
      %v328 = vshrl.u32 %v226, 16
      %v330 = vrot.slane %v328, 4
      %v331 = vor.u32 %v330, %v326
      %v332 = vrot.slane %v331, 4
      %v334 = vshll.u32 %v272, 16
      %v336 = vrot.slane %v334, 5
      %v337 = vsel %vm289, %v332, %v336
      %v339 = vshrl.u32 %v227, 16
      %v341 = vrot.slane %v339, 4
      %v342 = vshll.u32 %v227, 16
      %v344 = vrot.slane %v342, 5
      %v345 = vor.u32 %v341, %v344
      %v346 = vrot.slane %v345, 4
      %v348 = vshll.u32 %v228, 16
      %v350 = vrot.slane %v348, 5
      %v351 = vsel %vm289, %v346, %v350
      %v352 = vshrl.u32 %v228, 16
      %v354 = vrot.slane %v352, 4
      %v355 = vor.u32 %v354, %v350
      %v356 = vrot.slane %v355, 4
      %v358 = vshll.u32 %v273, 16
      %v360 = vrot.slane %v358, 5
      %v361 = vsel %vm289, %v356, %v360
      %v363 = vshrl.u32 %v229, 16
      %v365 = vrot.slane %v363, 4
      %v366 = vshll.u32 %v229, 16
      %v368 = vrot.slane %v366, 5
      %v369 = vor.u32 %v365, %v368
      %v370 = vrot.slane %v369, 4
      %v372 = vshll.u32 %v230, 16
      %v374 = vrot.slane %v372, 5
      %v375 = vsel %vm289, %v370, %v374
      %v376 = vshrl.u32 %v230, 16
      %v378 = vrot.slane %v376, 4
      %v379 = vor.u32 %v378, %v374
      %v380 = vrot.slane %v379, 4
      %v382 = vshll.u32 %v274, 16
      %v384 = vrot.slane %v382, 5
      %v385 = vsel %vm289, %v380, %v384
      %v387 = vshrl.u32 %v231, 16
      %v389 = vrot.slane %v387, 4
      %v390 = vshll.u32 %v231, 16
      %v392 = vrot.slane %v390, 5
      %v393 = vor.u32 %v389, %v392
      %v394 = vrot.slane %v393, 4
      %v396 = vshll.u32 %v232, 16
      %v398 = vrot.slane %v396, 5
      %v399 = vsel %vm289, %v394, %v398
      %v400 = vshrl.u32 %v232, 16
      %v402 = vrot.slane %v400, 4
      %v403 = vor.u32 %v402, %v398
      %v404 = vrot.slane %v403, 4
      %v406 = vshll.u32 %v275, 16
      %v408 = vrot.slane %v406, 5
      %v409 = vsel %vm289, %v404, %v408
      %v411 = vshrl.u32 %v233, 16
      %v413 = vrot.slane %v411, 4
      %v414 = vshll.u32 %v233, 16
      %v416 = vrot.slane %v414, 5
      %v417 = vor.u32 %v413, %v416
      %v418 = vrot.slane %v417, 4
      %v420 = vshll.u32 %v234, 16
      %v422 = vrot.slane %v420, 5
      %v423 = vsel %vm289, %v418, %v422
      %v424 = vshrl.u32 %v234, 16
      %v426 = vrot.slane %v424, 4
      %v427 = vor.u32 %v426, %v422
      %v428 = vrot.slane %v427, 4
      %v430 = vshll.u32 %v276, 16
      %v432 = vrot.slane %v430, 5
      %v433 = vsel %vm289, %v428, %v432
      %v435 = vshrl.u32 %v235, 16
      %v437 = vrot.slane %v435, 4
      %v438 = vshll.u32 %v235, 16
      %v440 = vrot.slane %v438, 5
      %v441 = vor.u32 %v437, %v440
      %v442 = vrot.slane %v441, 4
      %v444 = vshll.u32 %v236, 16
      %v446 = vrot.slane %v444, 5
      %v447 = vsel %vm289, %v442, %v446
      %v448 = vshrl.u32 %v236, 16
      %v450 = vrot.slane %v448, 4
      %v451 = vor.u32 %v450, %v446
      %v452 = vrot.slane %v451, 4
      %v454 = vshll.u32 %v277, 16
      %v456 = vrot.slane %v454, 5
      %v457 = vsel %vm289, %v452, %v456
      %v459 = vshrl.u32 %v237, 16
      %v461 = vrot.slane %v459, 4
      %v462 = vshll.u32 %v237, 16
      %v464 = vrot.slane %v462, 5
      %v465 = vor.u32 %v461, %v464
      %v466 = vrot.slane %v465, 4
      %v468 = vshll.u32 %v238, 16
      %v470 = vrot.slane %v468, 5
      %v471 = vsel %vm289, %v466, %v470
      %v472 = vshrl.u32 %v238, 16
      %v474 = vrot.slane %v472, 4
      %v475 = vor.u32 %v474, %v470
      %v476 = vrot.slane %v475, 4
      %v478 = vshll.u32 %v278, 16
      %v480 = vrot.slane %v478, 5
      %v481 = vsel %vm289, %v476, %v480
      %v483 = vshrl.u32 %v239, 16
      %v485 = vrot.slane %v483, 4
      %v486 = vshll.u32 %v239, 16
      %v488 = vrot.slane %v486, 5
      %v489 = vor.u32 %v485, %v488
      %v490 = vrot.slane %v489, 4
      %v492 = vshll.u32 %v240, 16
      %v494 = vrot.slane %v492, 5
      %v495 = vsel %vm289, %v490, %v494
      %v496 = vshrl.u32 %v240, 16
      %v498 = vrot.slane %v496, 4
      %v499 = vor.u32 %v498, %v494
      %v500 = vrot.slane %v499, 4
      %v502 = vshll.u32 %v279, 16
      %v504 = vrot.slane %v502, 5
      %v505 = vsel %vm289, %v500, %v504
      %v507 = vshrl.u32 %v241, 16
      %v509 = vrot.slane %v507, 4
      %v510 = vshll.u32 %v241, 16
      %v512 = vrot.slane %v510, 5
      %v513 = vor.u32 %v509, %v512
      %v514 = vrot.slane %v513, 4
      %v516 = vshll.u32 %v242, 16
      %v518 = vrot.slane %v516, 5
      %v519 = vsel %vm289, %v514, %v518
      %v520 = vshrl.u32 %v242, 16
      %v522 = vrot.slane %v520, 4
      %v523 = vor.u32 %v522, %v518
      %v524 = vrot.slane %v523, 4
      %v526 = vshll.u32 %v280, 16
      %v528 = vrot.slane %v526, 5
      %v529 = vsel %vm289, %v524, %v528
      %v531 = vshrl.u32 %v243, 16
      %v533 = vrot.slane %v531, 4
      %v534 = vshll.u32 %v243, 16
      %v536 = vrot.slane %v534, 5
      %v537 = vor.u32 %v533, %v536
      %v538 = vrot.slane %v537, 4
      %v540 = vshll.u32 %v244, 16
      %v542 = vrot.slane %v540, 5
      %v543 = vsel %vm289, %v538, %v542
      %v544 = vshrl.u32 %v244, 16
      %v546 = vrot.slane %v544, 4
      %v547 = vor.u32 %v546, %v542
      %v548 = vrot.slane %v547, 4
      %v550 = vshll.u32 %v281, 16
      %v552 = vrot.slane %v550, 5
      %v553 = vsel %vm289, %v548, %v552
      %v555 = vshrl.u32 %v245, 16
      %v557 = vrot.slane %v555, 4
      %v558 = vshll.u32 %v245, 16
      %v560 = vrot.slane %v558, 5
      %v561 = vor.u32 %v557, %v560
      %v562 = vrot.slane %v561, 4
      %v564 = vshll.u32 %v246, 16
      %v566 = vrot.slane %v564, 5
      %v567 = vsel %vm289, %v562, %v566
      %v568 = vshrl.u32 %v246, 16
      %v570 = vrot.slane %v568, 4
      %v571 = vor.u32 %v570, %v566
      %v572 = vrot.slane %v571, 4
      %v574 = vshll.u32 %v282, 16
      %v576 = vrot.slane %v574, 5
      %v577 = vsel %vm289, %v572, %v576
      %v579 = vshrl.u32 %v247, 16
      %v581 = vrot.slane %v579, 4
      %v582 = vshll.u32 %v247, 16
      %v584 = vrot.slane %v582, 5
      %v585 = vor.u32 %v581, %v584
      %v586 = vrot.slane %v585, 4
      %v588 = vshll.u32 %v248, 16
      %v590 = vrot.slane %v588, 5
      %v591 = vsel %vm289, %v586, %v590
      %v592 = vshrl.u32 %v248, 16
      %v594 = vrot.slane %v592, 4
      %v595 = vor.u32 %v594, %v590
      %v596 = vrot.slane %v595, 4
      %v598 = vshll.u32 %v283, 16
      %v600 = vrot.slane %v598, 5
      %v601 = vsel %vm289, %v596, %v600
      %v603 = vshrl.u32 %v249, 16
      %v605 = vrot.slane %v603, 4
      %v606 = vshll.u32 %v249, 16
      %v608 = vrot.slane %v606, 5
      %v609 = vor.u32 %v605, %v608
      %v610 = vrot.slane %v609, 4
      %v612 = vshll.u32 %v250, 16
      %v614 = vrot.slane %v612, 5
      %v615 = vsel %vm289, %v610, %v614
      %v616 = vshrl.u32 %v250, 16
      %v618 = vrot.slane %v616, 4
      %v619 = vor.u32 %v618, %v614
      %v620 = vrot.slane %v619, 4
      %v622 = vshll.u32 %v284, 16
      %v624 = vrot.slane %v622, 5
      %v625 = vsel %vm289, %v620, %v624
      %v627 = vshrl.u32 %v251, 16
      %v629 = vrot.slane %v627, 4
      %v630 = vshll.u32 %v251, 16
      %v632 = vrot.slane %v630, 5
      %v633 = vor.u32 %v629, %v632
      %v634 = vrot.slane %v633, 4
      %v636 = vshll.u32 %v252, 16
      %v638 = vrot.slane %v636, 5
      %v639 = vsel %vm289, %v634, %v638
      %v640 = vshrl.u32 %v252, 16
      %v642 = vrot.slane %v640, 4
      %v643 = vor.u32 %v642, %v638
      %v644 = vrot.slane %v643, 4
      %v646 = vshll.u32 %v285, 16
      %v648 = vrot.slane %v646, 5
      %v649 = vsel %vm289, %v644, %v648
      %v651 = vshrl.u32 %v253, 16
      %v653 = vrot.slane %v651, 4
      %v654 = vshll.u32 %v253, 16
      %v656 = vrot.slane %v654, 5
      %v657 = vor.u32 %v653, %v656
      %v658 = vrot.slane %v657, 4
      %v660 = vshll.u32 %v254, 16
      %v662 = vrot.slane %v660, 5
      %v663 = vsel %vm289, %v658, %v662
      %v664 = vshrl.u32 %v254, 16
      %v666 = vrot.slane %v664, 4
      %v667 = vor.u32 %v666, %v662
      %v668 = vrot.slane %v667, 4
      %v670 = vshll.u32 %v286, 16
      %v672 = vrot.slane %v670, 5
      %v673 = vsel %vm289, %v668, %v672
      %s674 = scalar_lea.vmem %s210, 64
      %v675 = vld [vmem:[%s674] sm:$0xf]
      %v676 = vld [vmem:[%s674 + $0x4] sm:$0xf]
      %v677 = vld [vmem:[%s674 + $0x8] sm:$0xf]
      %v678 = vld [vmem:[%s674 + $0xc] sm:$0xf]
      %v679 = vld [vmem:[%s674 + $0x10] sm:$0xf]
      %v680 = vld [vmem:[%s674 + $0x14] sm:$0xf]
      %v681 = vld [vmem:[%s674 + $0x18] sm:$0xf]
      %v682 = vld [vmem:[%s674 + $0x1c] sm:$0xf]
      %v683 = vld [vmem:[%s674 + $0x20] sm:$0xf]
      %v684 = vld [vmem:[%s674 + $0x24] sm:$0xf]
      %v685 = vld [vmem:[%s674 + $0x28] sm:$0xf]
      %v686 = vld [vmem:[%s674 + $0x2c] sm:$0xf]
      %v687 = vld [vmem:[%s674 + $0x30] sm:$0xf]
      %v688 = vld [vmem:[%s674 + $0x34] sm:$0xf]
      %v689 = vld [vmem:[%s674 + $0x38] sm:$0xf]
      %v690 = vld [vmem:[%s674 + $0x3c] sm:$0xf]
      %v691 = vunpack.c.l.b16 %v303
      %v692 = vunpack.c.l.b16 %v313
      %v693 = vunpack.c.l.b16 %v327
      %v694 = vunpack.c.l.b16 %v337
      %v695 = vunpack.c.l.b16 %v351
      %v696 = vunpack.c.l.b16 %v361
      %v697 = vunpack.c.l.b16 %v375
      %v698 = vunpack.c.l.b16 %v385
      %v699 = vunpack.c.l.b16 %v399
      %v700 = vunpack.c.l.b16 %v409
      %v701 = vunpack.c.l.b16 %v423
      %v702 = vunpack.c.l.b16 %v433
      %v703 = vunpack.c.l.b16 %v447
      %v704 = vunpack.c.l.b16 %v457
      %v705 = vunpack.c.l.b16 %v471
      %v706 = vunpack.c.l.b16 %v481
      %v707 = vunpack.c.l.b16 %v495
      %v708 = vunpack.c.l.b16 %v505
      %v709 = vunpack.c.l.b16 %v519
      %v710 = vunpack.c.l.b16 %v529
      %v711 = vunpack.c.l.b16 %v543
      %v712 = vunpack.c.l.b16 %v553
      %v713 = vunpack.c.l.b16 %v567
      %v714 = vunpack.c.l.b16 %v577
      %v715 = vunpack.c.l.b16 %v591
      %v716 = vunpack.c.l.b16 %v601
      %v717 = vunpack.c.l.b16 %v615
      %v718 = vunpack.c.l.b16 %v625
      %v719 = vunpack.c.l.b16 %v639
      %v720 = vunpack.c.l.b16 %v649
      %v721 = vunpack.c.l.b16 %v663
      %v722 = vunpack.c.l.b16 %v673
      %v723 = vpack.c.b16 %v692, %v691
      %v724 = vpack.c.b16 %v694, %v693
      %v725 = vpack.c.b16 %v696, %v695
      %v726 = vpack.c.b16 %v698, %v697
      %v727 = vpack.c.b16 %v700, %v699
      %v728 = vpack.c.b16 %v702, %v701
      %v729 = vpack.c.b16 %v704, %v703
      %v730 = vpack.c.b16 %v706, %v705
      %v731 = vpack.c.b16 %v708, %v707
      %v732 = vpack.c.b16 %v710, %v709
      %v733 = vpack.c.b16 %v712, %v711
      %v734 = vpack.c.b16 %v714, %v713
      %v735 = vpack.c.b16 %v716, %v715
      %v736 = vpack.c.b16 %v718, %v717
      %v737 = vpack.c.b16 %v720, %v719
      %v738 = vpack.c.b16 %v722, %v721
      %v771 = vunpack.c.l.b16 %v675
      %v772 = vunpack.c.l.b16 %v676
      %v773 = vunpack.c.l.b16 %v677
      %v774 = vunpack.c.l.b16 %v678
      %v775 = vunpack.c.l.b16 %v679
      %v776 = vunpack.c.l.b16 %v680
      %v777 = vunpack.c.l.b16 %v681
      %v778 = vunpack.c.l.b16 %v682
      %v779 = vunpack.c.l.b16 %v683
      %v780 = vunpack.c.l.b16 %v684
      %v781 = vunpack.c.l.b16 %v685
      %v782 = vunpack.c.l.b16 %v686
      %v783 = vunpack.c.l.b16 %v687
      %v784 = vunpack.c.l.b16 %v688
      %v785 = vunpack.c.l.b16 %v689
      %v786 = vunpack.c.l.b16 %v690
      %v787 = vpack.c.b16 %v772, %v771
      %v788 = vpack.c.b16 %v774, %v773
      %v789 = vpack.c.b16 %v776, %v775
      %v790 = vpack.c.b16 %v778, %v777
      %v791 = vpack.c.b16 %v780, %v779
      %v792 = vpack.c.b16 %v782, %v781
      %v793 = vpack.c.b16 %v784, %v783
      %v794 = vpack.c.b16 %v786, %v785
      %803 = vmatprep.subr.bf16.mxu0 0
      %804 = vmatpush1.bf16.msra.mxu0 %v787
      %805 = vmatprep.subr.bf16.mxu0 0
      %806 = vmatpush1.bf16.msra.mxu0 %v788
      %807 = vmatprep.subr.bf16.mxu0 0
      %808 = vmatpush1.bf16.msra.mxu0 %v789
      %809 = vmatprep.subr.bf16.mxu0 0
      %810 = vmatpush1.bf16.msra.mxu0 %v790
      %811 = vmatprep.subr.bf16.mxu0 0
      %812 = vmatpush1.bf16.msra.mxu0 %v791
      %813 = vmatprep.subr.bf16.mxu0 0
      %814 = vmatpush1.bf16.msra.mxu0 %v792
      %815 = vmatprep.subr.bf16.mxu0 0
      %816 = vmatpush1.bf16.msra.mxu0 %v793
      %817 = vmatprep.subr.bf16.mxu0 0
      %818 = vmatpush1.bf16.msra.mxu0 %v794
      %819 = vmatprep.subr.bf16.mxu0 0
      %820 = vmatpush1.bf16.msra.mxu0 0
      %821 = vmatprep.subr.bf16.mxu0 0
      %822 = vmatpush1.bf16.msra.mxu0 0
      %823 = vmatprep.subr.bf16.mxu0 0
      %824 = vmatpush1.bf16.msra.mxu0 0
      %825 = vmatprep.subr.bf16.mxu0 0
      %826 = vmatpush1.bf16.msra.mxu0 0
      %827 = vmatprep.subr.bf16.mxu0 0
      %828 = vmatpush1.bf16.msra.mxu0 0
      %829 = vmatprep.subr.bf16.mxu0 0
      %830 = vmatpush1.bf16.msra.mxu0 0
      %831 = vmatprep.subr.bf16.mxu0 0
      %832 = vmatpush1.bf16.msra.mxu0 0
      %833 = vmatprep.subr.bf16.mxu0 0
      %834 = vmatpush1.bf16.msra.mxu0 0
      %835 = vmatprep.mubr.bf16.mxu0 0
      %836 = vmatmul.mubr.bf16.gmra.mrb[0].mxu0 %v723
      %v837 = vpop.f32.mrb[0].mxu0
      %v838 = vadd.f32 0.0, %v837
      %v839 = vpop.f32.mrb[0].mxu0
      %v840 = vpop.f32.mrb[0].mxu0
      %v841 = vadd.f32 0.0, %v840
      %v842 = vpop.f32.mrb[0].mxu0
      %843 = vmatprep.mubr.bf16.mxu0 0
      %844 = vmatmul.mubr.bf16.gmra.mrb[0].mxu0 %v724
      %v845 = vpop.f32.mrb[0].mxu0
      %v846 = vadd.f32 0.0, %v845
      %v847 = vpop.f32.mrb[0].mxu0
      %v848 = vpop.f32.mrb[0].mxu0
      %v849 = vadd.f32 0.0, %v848
      %v850 = vpop.f32.mrb[0].mxu0
      %851 = vmatprep.mubr.bf16.mxu0 0
      %852 = vmatmul.mubr.bf16.gmra.mrb[0].mxu0 %v725
      %v853 = vpop.f32.mrb[0].mxu0
      %v854 = vadd.f32 0.0, %v853
      %v855 = vpop.f32.mrb[0].mxu0
      %v856 = vpop.f32.mrb[0].mxu0
      %v857 = vadd.f32 0.0, %v856
      %v858 = vpop.f32.mrb[0].mxu0
      %859 = vmatprep.mubr.bf16.mxu0 0
      %860 = vmatmul.mubr.bf16.gmra.mrb[0].mxu0 %v726
      %v861 = vpop.f32.mrb[0].mxu0
      %v862 = vadd.f32 0.0, %v861
      %v863 = vpop.f32.mrb[0].mxu0
      %v864 = vpop.f32.mrb[0].mxu0
      %v865 = vadd.f32 0.0, %v864
      %v866 = vpop.f32.mrb[0].mxu0
      %867 = vmatprep.mubr.bf16.mxu0 0
      %868 = vmatmul.mubr.bf16.gmra.mrb[0].mxu0 %v727
      %v869 = vpop.f32.mrb[0].mxu0
      %v870 = vadd.f32 0.0, %v869
      %v871 = vpop.f32.mrb[0].mxu0
      %v872 = vpop.f32.mrb[0].mxu0
      %v873 = vadd.f32 0.0, %v872
      %v874 = vpop.f32.mrb[0].mxu0
      %875 = vmatprep.mubr.bf16.mxu0 0
      %876 = vmatmul.mubr.bf16.gmra.mrb[0].mxu0 %v728
      %v877 = vpop.f32.mrb[0].mxu0
      %v878 = vadd.f32 0.0, %v877
      %v879 = vpop.f32.mrb[0].mxu0
      %v880 = vpop.f32.mrb[0].mxu0
      %v881 = vadd.f32 0.0, %v880
      %v882 = vpop.f32.mrb[0].mxu0
      %883 = vmatprep.mubr.bf16.mxu0 0
      %884 = vmatmul.mubr.bf16.gmra.mrb[0].mxu0 %v729
      %v885 = vpop.f32.mrb[0].mxu0
      %v886 = vadd.f32 0.0, %v885
      %v887 = vpop.f32.mrb[0].mxu0
      %v888 = vpop.f32.mrb[0].mxu0
      %v889 = vadd.f32 0.0, %v888
      %v890 = vpop.f32.mrb[0].mxu0
      %891 = vmatprep.mubr.bf16.mxu0 0
      %892 = vmatmul.mubr.bf16.gmra.mrb[0].mxu0 %v730
      %v893 = vpop.f32.mrb[0].mxu0
      %v894 = vadd.f32 0.0, %v893
      %v895 = vpop.f32.mrb[0].mxu0
      %v896 = vpop.f32.mrb[0].mxu0
      %v897 = vadd.f32 0.0, %v896
      %v898 = vpop.f32.mrb[0].mxu0
      %899 = vmatprep.mubr.bf16.mxu0 0
      %900 = vmatmul.mubr.bf16.gmra.mrb[0].mxu0 %v731
      %v901 = vpop.f32.mrb[0].mxu0
      %v902 = vadd.f32 0.0, %v901
      %v903 = vpop.f32.mrb[0].mxu0
      %v904 = vpop.f32.mrb[0].mxu0
      %v905 = vadd.f32 0.0, %v904
      %v906 = vpop.f32.mrb[0].mxu0
      %907 = vmatprep.mubr.bf16.mxu0 0
      %908 = vmatmul.mubr.bf16.gmra.mrb[0].mxu0 %v732
      %v909 = vpop.f32.mrb[0].mxu0
      %v910 = vadd.f32 0.0, %v909
      %v911 = vpop.f32.mrb[0].mxu0
      %v912 = vpop.f32.mrb[0].mxu0
      %v913 = vadd.f32 0.0, %v912
      %v914 = vpop.f32.mrb[0].mxu0
      %915 = vmatprep.mubr.bf16.mxu0 0
      %916 = vmatmul.mubr.bf16.gmra.mrb[0].mxu0 %v733
      %v917 = vpop.f32.mrb[0].mxu0
      %v918 = vadd.f32 0.0, %v917
      %v919 = vpop.f32.mrb[0].mxu0
      %v920 = vpop.f32.mrb[0].mxu0
      %v921 = vadd.f32 0.0, %v920
      %v922 = vpop.f32.mrb[0].mxu0
      %923 = vmatprep.mubr.bf16.mxu0 0
      %924 = vmatmul.mubr.bf16.gmra.mrb[0].mxu0 %v734
      %v925 = vpop.f32.mrb[0].mxu0
      %v926 = vadd.f32 0.0, %v925
      %v927 = vpop.f32.mrb[0].mxu0
      %v928 = vpop.f32.mrb[0].mxu0
      %v929 = vadd.f32 0.0, %v928
      %v930 = vpop.f32.mrb[0].mxu0
      %931 = vmatprep.mubr.bf16.mxu0 0
      %932 = vmatmul.mubr.bf16.gmra.mrb[0].mxu0 %v735
      %v933 = vpop.f32.mrb[0].mxu0
      %v934 = vadd.f32 0.0, %v933
      %v935 = vpop.f32.mrb[0].mxu0
      %v936 = vpop.f32.mrb[0].mxu0
      %v937 = vadd.f32 0.0, %v936
      %v938 = vpop.f32.mrb[0].mxu0
      %939 = vmatprep.mubr.bf16.mxu0 0
      %940 = vmatmul.mubr.bf16.gmra.mrb[0].mxu0 %v736
      %v941 = vpop.f32.mrb[0].mxu0
      %v942 = vadd.f32 0.0, %v941
      %v943 = vpop.f32.mrb[0].mxu0
      %v944 = vpop.f32.mrb[0].mxu0
      %v945 = vadd.f32 0.0, %v944
      %v946 = vpop.f32.mrb[0].mxu0
      %947 = vmatprep.mubr.bf16.mxu0 0
      %948 = vmatmul.mubr.bf16.gmra.mrb[0].mxu0 %v737
      %v949 = vpop.f32.mrb[0].mxu0
      %v950 = vadd.f32 0.0, %v949
      %v951 = vpop.f32.mrb[0].mxu0
      %v952 = vpop.f32.mrb[0].mxu0
      %v953 = vadd.f32 0.0, %v952
      %v954 = vpop.f32.mrb[0].mxu0
      %955 = vmatprep.mubr.bf16.mxu0 0
      %956 = vmatmul.mubr.bf16.gmra.mrb[0].mxu0 %v738
      %v957 = vpop.f32.mrb[0].mxu0
      %v958 = vadd.f32 0.0, %v957
      %v959 = vpop.f32.mrb[0].mxu0
      %v960 = vpop.f32.mrb[0].mxu0
      %v961 = vadd.f32 0.0, %v960
      %v962 = vpop.f32.mrb[0].mxu0
      %963 = vdwg.mxu0
      %v996 = vunpack.c.l.b16 %v223
      %v997 = vunpack.c.l.b16 %v224
      %v998 = vunpack.c.l.b16 %v225
      %v999 = vunpack.c.l.b16 %v226
      %v1000 = vunpack.c.l.b16 %v227
      %v1001 = vunpack.c.l.b16 %v228
      %v1002 = vunpack.c.l.b16 %v229
      %v1003 = vunpack.c.l.b16 %v230
      %v1004 = vunpack.c.l.b16 %v231
      %v1005 = vunpack.c.l.b16 %v232
      %v1006 = vunpack.c.l.b16 %v233
      %v1007 = vunpack.c.l.b16 %v234
      %v1008 = vunpack.c.l.b16 %v235
      %v1009 = vunpack.c.l.b16 %v236
      %v1010 = vunpack.c.l.b16 %v237
      %v1011 = vunpack.c.l.b16 %v238
      %v1012 = vunpack.c.l.b16 %v239
      %v1013 = vunpack.c.l.b16 %v240
      %v1014 = vunpack.c.l.b16 %v241
      %v1015 = vunpack.c.l.b16 %v242
      %v1016 = vunpack.c.l.b16 %v243
      %v1017 = vunpack.c.l.b16 %v244
      %v1018 = vunpack.c.l.b16 %v245
      %v1019 = vunpack.c.l.b16 %v246
      %v1020 = vunpack.c.l.b16 %v247
      %v1021 = vunpack.c.l.b16 %v248
      %v1022 = vunpack.c.l.b16 %v249
      %v1023 = vunpack.c.l.b16 %v250
      %v1024 = vunpack.c.l.b16 %v251
      %v1025 = vunpack.c.l.b16 %v252
      %v1026 = vunpack.c.l.b16 %v253
      %v1027 = vunpack.c.l.b16 %v254
      %v1028 = vpack.c.b16 %v997, %v996
      %v1029 = vpack.c.b16 %v999, %v998
      %v1030 = vpack.c.b16 %v1001, %v1000
      %v1031 = vpack.c.b16 %v1003, %v1002
      %v1032 = vpack.c.b16 %v1005, %v1004
      %v1033 = vpack.c.b16 %v1007, %v1006
      %v1034 = vpack.c.b16 %v1009, %v1008
      %v1035 = vpack.c.b16 %v1011, %v1010
      %v1036 = vpack.c.b16 %v1013, %v1012
      %v1037 = vpack.c.b16 %v1015, %v1014
      %v1038 = vpack.c.b16 %v1017, %v1016
      %v1039 = vpack.c.b16 %v1019, %v1018
      %v1040 = vpack.c.b16 %v1021, %v1020
      %v1041 = vpack.c.b16 %v1023, %v1022
      %v1042 = vpack.c.b16 %v1025, %v1024
      %v1043 = vpack.c.b16 %v1027, %v1026
      %v1076 = vunpack.c.l.b16 %v255
      %v1077 = vunpack.c.l.b16 %v256
      %v1078 = vunpack.c.l.b16 %v257
      %v1079 = vunpack.c.l.b16 %v258
      %v1080 = vunpack.c.l.b16 %v259
      %v1081 = vunpack.c.l.b16 %v260
      %v1082 = vunpack.c.l.b16 %v261
      %v1083 = vunpack.c.l.b16 %v262
      %v1084 = vunpack.c.l.b16 %v263
      %v1085 = vunpack.c.l.b16 %v264
      %v1086 = vunpack.c.l.b16 %v265
      %v1087 = vunpack.c.l.b16 %v266
      %v1088 = vunpack.c.l.b16 %v267
      %v1089 = vunpack.c.l.b16 %v268
      %v1090 = vunpack.c.l.b16 %v269
      %v1091 = vunpack.c.l.b16 %v270
      %v1092 = vpack.c.b16 %v1077, %v1076
      %v1093 = vpack.c.b16 %v1079, %v1078
      %v1094 = vpack.c.b16 %v1081, %v1080
      %v1095 = vpack.c.b16 %v1083, %v1082
      %v1096 = vpack.c.b16 %v1085, %v1084
      %v1097 = vpack.c.b16 %v1087, %v1086
      %v1098 = vpack.c.b16 %v1089, %v1088
      %v1099 = vpack.c.b16 %v1091, %v1090
      %1108 = vmatprep.subr.bf16.mxu0 0
      %1109 = vmatpush1.bf16.msra.mxu0 %v1092
      %1110 = vmatprep.subr.bf16.mxu0 0
      %1111 = vmatpush1.bf16.msra.mxu0 %v1093
      %1112 = vmatprep.subr.bf16.mxu0 0
      %1113 = vmatpush1.bf16.msra.mxu0 %v1094
      %1114 = vmatprep.subr.bf16.mxu0 0
      %1115 = vmatpush1.bf16.msra.mxu0 %v1095
      %1116 = vmatprep.subr.bf16.mxu0 0
      %1117 = vmatpush1.bf16.msra.mxu0 %v1096
      %1118 = vmatprep.subr.bf16.mxu0 0
      %1119 = vmatpush1.bf16.msra.mxu0 %v1097
      %1120 = vmatprep.subr.bf16.mxu0 0
      %1121 = vmatpush1.bf16.msra.mxu0 %v1098
      %1122 = vmatprep.subr.bf16.mxu0 0
      %1123 = vmatpush1.bf16.msra.mxu0 %v1099
      %1124 = vmatprep.subr.bf16.mxu0 0
      %1125 = vmatpush1.bf16.msra.mxu0 0
      %1126 = vmatprep.subr.bf16.mxu0 0
      %1127 = vmatpush1.bf16.msra.mxu0 0
      %1128 = vmatprep.subr.bf16.mxu0 0
      %1129 = vmatpush1.bf16.msra.mxu0 0
      %1130 = vmatprep.subr.bf16.mxu0 0
      %1131 = vmatpush1.bf16.msra.mxu0 0
      %1132 = vmatprep.subr.bf16.mxu0 0
      %1133 = vmatpush1.bf16.msra.mxu0 0
      %1134 = vmatprep.subr.bf16.mxu0 0
      %1135 = vmatpush1.bf16.msra.mxu0 0
      %1136 = vmatprep.subr.bf16.mxu0 0
      %1137 = vmatpush1.bf16.msra.mxu0 0
      %1138 = vmatprep.subr.bf16.mxu0 0
      %1139 = vmatpush1.bf16.msra.mxu0 0
      %1140 = vmatprep.mubr.bf16.mxu0 0
      %1141 = vmatmul.mubr.bf16.gmra.mrb[0].mxu0 %v1028
      %v1142 = vpop.f32.mrb[0].mxu0
      %v1143 = vadd.f32 %v838, %v1142
      %v1144 = vpop.f32.mrb[0].mxu0
      %v1145 = vpop.f32.mrb[0].mxu0
      %v1146 = vadd.f32 %v841, %v1145
      %v1147 = vpop.f32.mrb[0].mxu0
      %1148 = vmatprep.mubr.bf16.mxu0 0
      %1149 = vmatmul.mubr.bf16.gmra.mrb[0].mxu0 %v1029
      %v1150 = vpop.f32.mrb[0].mxu0
      %v1151 = vadd.f32 %v846, %v1150
      %v1152 = vpop.f32.mrb[0].mxu0
      %v1153 = vpop.f32.mrb[0].mxu0
      %v1154 = vadd.f32 %v849, %v1153
      %v1155 = vpop.f32.mrb[0].mxu0
      %1156 = vmatprep.mubr.bf16.mxu0 0
      %1157 = vmatmul.mubr.bf16.gmra.mrb[0].mxu0 %v1030
      %v1158 = vpop.f32.mrb[0].mxu0
      %v1159 = vadd.f32 %v854, %v1158
      %v1160 = vpop.f32.mrb[0].mxu0
      %v1161 = vpop.f32.mrb[0].mxu0
      %v1162 = vadd.f32 %v857, %v1161
      %v1163 = vpop.f32.mrb[0].mxu0
      %1164 = vmatprep.mubr.bf16.mxu0 0
      %1165 = vmatmul.mubr.bf16.gmra.mrb[0].mxu0 %v1031
      %v1166 = vpop.f32.mrb[0].mxu0
      %v1167 = vadd.f32 %v862, %v1166
      %v1168 = vpop.f32.mrb[0].mxu0
      %v1169 = vpop.f32.mrb[0].mxu0
      %v1170 = vadd.f32 %v865, %v1169
      %v1171 = vpop.f32.mrb[0].mxu0
      %1172 = vmatprep.mubr.bf16.mxu0 0
      %1173 = vmatmul.mubr.bf16.gmra.mrb[0].mxu0 %v1032
      %v1174 = vpop.f32.mrb[0].mxu0
      %v1175 = vadd.f32 %v870, %v1174
      %v1176 = vpop.f32.mrb[0].mxu0
      %v1177 = vpop.f32.mrb[0].mxu0
      %v1178 = vadd.f32 %v873, %v1177
      %v1179 = vpop.f32.mrb[0].mxu0
      %1180 = vmatprep.mubr.bf16.mxu0 0
      %1181 = vmatmul.mubr.bf16.gmra.mrb[0].mxu0 %v1033
      %v1182 = vpop.f32.mrb[0].mxu0
      %v1183 = vadd.f32 %v878, %v1182
      %v1184 = vpop.f32.mrb[0].mxu0
      %v1185 = vpop.f32.mrb[0].mxu0
      %v1186 = vadd.f32 %v881, %v1185
      %v1187 = vpop.f32.mrb[0].mxu0
      %1188 = vmatprep.mubr.bf16.mxu0 0
      %1189 = vmatmul.mubr.bf16.gmra.mrb[0].mxu0 %v1034
      %v1190 = vpop.f32.mrb[0].mxu0
      %v1191 = vadd.f32 %v886, %v1190
      %v1192 = vpop.f32.mrb[0].mxu0
      %v1193 = vpop.f32.mrb[0].mxu0
      %v1194 = vadd.f32 %v889, %v1193
      %v1195 = vpop.f32.mrb[0].mxu0
      %1196 = vmatprep.mubr.bf16.mxu0 0
      %1197 = vmatmul.mubr.bf16.gmra.mrb[0].mxu0 %v1035
      %v1198 = vpop.f32.mrb[0].mxu0
      %v1199 = vadd.f32 %v894, %v1198
      %v1200 = vpop.f32.mrb[0].mxu0
      %v1201 = vpop.f32.mrb[0].mxu0
      %v1202 = vadd.f32 %v897, %v1201
      %v1203 = vpop.f32.mrb[0].mxu0
      %1204 = vmatprep.mubr.bf16.mxu0 0
      %1205 = vmatmul.mubr.bf16.gmra.mrb[0].mxu0 %v1036
      %v1206 = vpop.f32.mrb[0].mxu0
      %v1207 = vadd.f32 %v902, %v1206
      %v1208 = vpop.f32.mrb[0].mxu0
      %v1209 = vpop.f32.mrb[0].mxu0
      %v1210 = vadd.f32 %v905, %v1209
      %v1211 = vpop.f32.mrb[0].mxu0
      %1212 = vmatprep.mubr.bf16.mxu0 0
      %1213 = vmatmul.mubr.bf16.gmra.mrb[0].mxu0 %v1037
      %v1214 = vpop.f32.mrb[0].mxu0
      %v1215 = vadd.f32 %v910, %v1214
      %v1216 = vpop.f32.mrb[0].mxu0
      %v1217 = vpop.f32.mrb[0].mxu0
      %v1218 = vadd.f32 %v913, %v1217
      %v1219 = vpop.f32.mrb[0].mxu0
      %1220 = vmatprep.mubr.bf16.mxu0 0
      %1221 = vmatmul.mubr.bf16.gmra.mrb[0].mxu0 %v1038
      %v1222 = vpop.f32.mrb[0].mxu0
      %v1223 = vadd.f32 %v918, %v1222
      %v1224 = vpop.f32.mrb[0].mxu0
      %v1225 = vpop.f32.mrb[0].mxu0
      %v1226 = vadd.f32 %v921, %v1225
      %v1227 = vpop.f32.mrb[0].mxu0
      %1228 = vmatprep.mubr.bf16.mxu0 0
      %1229 = vmatmul.mubr.bf16.gmra.mrb[0].mxu0 %v1039
      %v1230 = vpop.f32.mrb[0].mxu0
      %v1231 = vadd.f32 %v926, %v1230
      %v1232 = vpop.f32.mrb[0].mxu0
      %v1233 = vpop.f32.mrb[0].mxu0
      %v1234 = vadd.f32 %v929, %v1233
      %v1235 = vpop.f32.mrb[0].mxu0
      %1236 = vmatprep.mubr.bf16.mxu0 0
      %1237 = vmatmul.mubr.bf16.gmra.mrb[0].mxu0 %v1040
      %v1238 = vpop.f32.mrb[0].mxu0
      %v1239 = vadd.f32 %v934, %v1238
      %v1240 = vpop.f32.mrb[0].mxu0
      %v1241 = vpop.f32.mrb[0].mxu0
      %v1242 = vadd.f32 %v937, %v1241
      %v1243 = vpop.f32.mrb[0].mxu0
      %1244 = vmatprep.mubr.bf16.mxu0 0
      %1245 = vmatmul.mubr.bf16.gmra.mrb[0].mxu0 %v1041
      %v1246 = vpop.f32.mrb[0].mxu0
      %v1247 = vadd.f32 %v942, %v1246
      %v1248 = vpop.f32.mrb[0].mxu0
      %v1249 = vpop.f32.mrb[0].mxu0
      %v1250 = vadd.f32 %v945, %v1249
      %v1251 = vpop.f32.mrb[0].mxu0
      %1252 = vmatprep.mubr.bf16.mxu0 0
      %1253 = vmatmul.mubr.bf16.gmra.mrb[0].mxu0 %v1042
      %v1254 = vpop.f32.mrb[0].mxu0
      %v1255 = vadd.f32 %v950, %v1254
      %v1256 = vpop.f32.mrb[0].mxu0
      %v1257 = vpop.f32.mrb[0].mxu0
      %v1258 = vadd.f32 %v953, %v1257
      %v1259 = vpop.f32.mrb[0].mxu0
      %1260 = vmatprep.mubr.bf16.mxu0 0
      %1261 = vmatmul.mubr.bf16.gmra.mrb[0].mxu0 %v1043
      %v1262 = vpop.f32.mrb[0].mxu0
      %v1263 = vadd.f32 %v958, %v1262
      %v1264 = vpop.f32.mrb[0].mxu0
      %v1265 = vpop.f32.mrb[0].mxu0
      %v1266 = vadd.f32 %v961, %v1265
      %v1267 = vpop.f32.mrb[0].mxu0
      %1268 = vdwg.mxu0
      %v1269 = vld [vmem:[%s206] sm:$0xe]
      %v1270 = vld [vmem:[%s206 + $0xc] sm:$0xe]
      %v1271 = vld [vmem:[%s206 + $0x18] sm:$0xe]
      %v1272 = vld [vmem:[%s206 + $0x24] sm:$0xe]
      %v1273 = vld [vmem:[%s206 + $0x30] sm:$0xe]
      %v1274 = vld [vmem:[%s206 + $0x3c] sm:$0xe]
      %v1275 = vld [vmem:[%s206 + $0x48] sm:$0xe]
      %v1276 = vld [vmem:[%s206 + $0x54] sm:$0xe]
      %v1277 = vld [vmem:[%s206 + $0x60] sm:$0xe]
      %v1278 = vld [vmem:[%s206 + $0x6c] sm:$0xe]
      %v1279 = vld [vmem:[%s206 + $0x78] sm:$0xe]
      %v1280 = vld [vmem:[%s206 + $0x84] sm:$0xe]
      %v1281 = vld [vmem:[%s206 + $0x90] sm:$0xe]
      %v1282 = vld [vmem:[%s206 + $0x9c] sm:$0xe]
      %v1283 = vld [vmem:[%s206 + $0xa8] sm:$0xe]
      %v1284 = vld [vmem:[%s206 + $0xb4] sm:$0xe]
      %vm1317 = vcmask 1042432
      %vm1318 = vcmask 1046532
      %vm1319 = vmor %vm1317, %vm1318
      %v1320 = vrot.slane %v1269, 5
      %v1321 = vrot.slane %v1320, 4
      %v1322 = vrot.slane %v224, 5
      %v1323 = vsel %vm1319, %v1321, %v1322
      %v1324 = vrot.slane %v1322, 4
      %v1325 = vrot.slane %v271, 5
      %v1326 = vsel %vm1319, %v1324, %v1325
      %v1327 = vrot.slane %v1270, 5
      %v1328 = vrot.slane %v1327, 4
      %v1329 = vrot.slane %v226, 5
      %v1330 = vsel %vm1319, %v1328, %v1329
      %v1331 = vrot.slane %v1329, 4
      %v1332 = vrot.slane %v272, 5
      %v1333 = vsel %vm1319, %v1331, %v1332
      %v1334 = vrot.slane %v1271, 5
      %v1335 = vrot.slane %v1334, 4
      %v1336 = vrot.slane %v228, 5
      %v1337 = vsel %vm1319, %v1335, %v1336
      %v1338 = vrot.slane %v1336, 4
      %v1339 = vrot.slane %v273, 5
      %v1340 = vsel %vm1319, %v1338, %v1339
      %v1341 = vrot.slane %v1272, 5
      %v1342 = vrot.slane %v1341, 4
      %v1343 = vrot.slane %v230, 5
      %v1344 = vsel %vm1319, %v1342, %v1343
      %v1345 = vrot.slane %v1343, 4
      %v1346 = vrot.slane %v274, 5
      %v1347 = vsel %vm1319, %v1345, %v1346
      %v1348 = vrot.slane %v1273, 5
      %v1349 = vrot.slane %v1348, 4
      %v1350 = vrot.slane %v232, 5
      %v1351 = vsel %vm1319, %v1349, %v1350
      %v1352 = vrot.slane %v1350, 4
      %v1353 = vrot.slane %v275, 5
      %v1354 = vsel %vm1319, %v1352, %v1353
      %v1355 = vrot.slane %v1274, 5
      %v1356 = vrot.slane %v1355, 4
      %v1357 = vrot.slane %v234, 5
      %v1358 = vsel %vm1319, %v1356, %v1357
      %v1359 = vrot.slane %v1357, 4
      %v1360 = vrot.slane %v276, 5
      %v1361 = vsel %vm1319, %v1359, %v1360
      %v1362 = vrot.slane %v1275, 5
      %v1363 = vrot.slane %v1362, 4
      %v1364 = vrot.slane %v236, 5
      %v1365 = vsel %vm1319, %v1363, %v1364
      %v1366 = vrot.slane %v1364, 4
      %v1367 = vrot.slane %v277, 5
      %v1368 = vsel %vm1319, %v1366, %v1367
      %v1369 = vrot.slane %v1276, 5
      %v1370 = vrot.slane %v1369, 4
      %v1371 = vrot.slane %v238, 5
      %v1372 = vsel %vm1319, %v1370, %v1371
      %v1373 = vrot.slane %v1371, 4
      %v1374 = vrot.slane %v278, 5
      %v1375 = vsel %vm1319, %v1373, %v1374
      %v1376 = vrot.slane %v1277, 5
      %v1377 = vrot.slane %v1376, 4
      %v1378 = vrot.slane %v240, 5
      %v1379 = vsel %vm1319, %v1377, %v1378
      %v1380 = vrot.slane %v1378, 4
      %v1381 = vrot.slane %v279, 5
      %v1382 = vsel %vm1319, %v1380, %v1381
      %v1383 = vrot.slane %v1278, 5
      %v1384 = vrot.slane %v1383, 4
      %v1385 = vrot.slane %v242, 5
      %v1386 = vsel %vm1319, %v1384, %v1385
      %v1387 = vrot.slane %v1385, 4
      %v1388 = vrot.slane %v280, 5
      %v1389 = vsel %vm1319, %v1387, %v1388
      %v1390 = vrot.slane %v1279, 5
      %v1391 = vrot.slane %v1390, 4
      %v1392 = vrot.slane %v244, 5
      %v1393 = vsel %vm1319, %v1391, %v1392
      %v1394 = vrot.slane %v1392, 4
      %v1395 = vrot.slane %v281, 5
      %v1396 = vsel %vm1319, %v1394, %v1395
      %v1397 = vrot.slane %v1280, 5
      %v1398 = vrot.slane %v1397, 4
      %v1399 = vrot.slane %v246, 5
      %v1400 = vsel %vm1319, %v1398, %v1399
      %v1401 = vrot.slane %v1399, 4
      %v1402 = vrot.slane %v282, 5
      %v1403 = vsel %vm1319, %v1401, %v1402
      %v1404 = vrot.slane %v1281, 5
      %v1405 = vrot.slane %v1404, 4
      %v1406 = vrot.slane %v248, 5
      %v1407 = vsel %vm1319, %v1405, %v1406
      %v1408 = vrot.slane %v1406, 4
      %v1409 = vrot.slane %v283, 5
      %v1410 = vsel %vm1319, %v1408, %v1409
      %v1411 = vrot.slane %v1282, 5
      %v1412 = vrot.slane %v1411, 4
      %v1413 = vrot.slane %v250, 5
      %v1414 = vsel %vm1319, %v1412, %v1413
      %v1415 = vrot.slane %v1413, 4
      %v1416 = vrot.slane %v284, 5
      %v1417 = vsel %vm1319, %v1415, %v1416
      %v1418 = vrot.slane %v1283, 5
      %v1419 = vrot.slane %v1418, 4
      %v1420 = vrot.slane %v252, 5
      %v1421 = vsel %vm1319, %v1419, %v1420
      %v1422 = vrot.slane %v1420, 4
      %v1423 = vrot.slane %v285, 5
      %v1424 = vsel %vm1319, %v1422, %v1423
      %v1425 = vrot.slane %v1284, 5
      %v1426 = vrot.slane %v1425, 4
      %v1427 = vrot.slane %v254, 5
      %v1428 = vsel %vm1319, %v1426, %v1427
      %v1429 = vrot.slane %v1427, 4
      %v1430 = vrot.slane %v286, 5
      %v1431 = vsel %vm1319, %v1429, %v1430
      %s1432 = scalar_lea.vmem %s210, 128
      %v1433 = vld [vmem:[%s1432] sm:$0xf]
      %v1434 = vld [vmem:[%s1432 + $0x4] sm:$0xf]
      %v1435 = vld [vmem:[%s1432 + $0x8] sm:$0xf]
      %v1436 = vld [vmem:[%s1432 + $0xc] sm:$0xf]
      %v1437 = vld [vmem:[%s1432 + $0x10] sm:$0xf]
      %v1438 = vld [vmem:[%s1432 + $0x14] sm:$0xf]
      %v1439 = vld [vmem:[%s1432 + $0x18] sm:$0xf]
      %v1440 = vld [vmem:[%s1432 + $0x1c] sm:$0xf]
      %v1441 = vld [vmem:[%s1432 + $0x20] sm:$0xf]
      %v1442 = vld [vmem:[%s1432 + $0x24] sm:$0xf]
      %v1443 = vld [vmem:[%s1432 + $0x28] sm:$0xf]
      %v1444 = vld [vmem:[%s1432 + $0x2c] sm:$0xf]
      %v1445 = vld [vmem:[%s1432 + $0x30] sm:$0xf]
      %v1446 = vld [vmem:[%s1432 + $0x34] sm:$0xf]
      %v1447 = vld [vmem:[%s1432 + $0x38] sm:$0xf]
      %v1448 = vld [vmem:[%s1432 + $0x3c] sm:$0xf]
      %v1449 = vunpack.c.l.b16 %v1323
      %v1450 = vunpack.c.l.b16 %v1326
      %v1451 = vunpack.c.l.b16 %v1330
      %v1452 = vunpack.c.l.b16 %v1333
      %v1453 = vunpack.c.l.b16 %v1337
      %v1454 = vunpack.c.l.b16 %v1340
      %v1455 = vunpack.c.l.b16 %v1344
      %v1456 = vunpack.c.l.b16 %v1347
      %v1457 = vunpack.c.l.b16 %v1351
      %v1458 = vunpack.c.l.b16 %v1354
      %v1459 = vunpack.c.l.b16 %v1358
      %v1460 = vunpack.c.l.b16 %v1361
      %v1461 = vunpack.c.l.b16 %v1365
      %v1462 = vunpack.c.l.b16 %v1368
      %v1463 = vunpack.c.l.b16 %v1372
      %v1464 = vunpack.c.l.b16 %v1375
      %v1465 = vunpack.c.l.b16 %v1379
      %v1466 = vunpack.c.l.b16 %v1382
      %v1467 = vunpack.c.l.b16 %v1386
      %v1468 = vunpack.c.l.b16 %v1389
      %v1469 = vunpack.c.l.b16 %v1393
      %v1470 = vunpack.c.l.b16 %v1396
      %v1471 = vunpack.c.l.b16 %v1400
      %v1472 = vunpack.c.l.b16 %v1403
      %v1473 = vunpack.c.l.b16 %v1407
      %v1474 = vunpack.c.l.b16 %v1410
      %v1475 = vunpack.c.l.b16 %v1414
      %v1476 = vunpack.c.l.b16 %v1417
      %v1477 = vunpack.c.l.b16 %v1421
      %v1478 = vunpack.c.l.b16 %v1424
      %v1479 = vunpack.c.l.b16 %v1428
      %v1480 = vunpack.c.l.b16 %v1431
      %v1481 = vpack.c.b16 %v1450, %v1449
      %v1482 = vpack.c.b16 %v1452, %v1451
      %v1483 = vpack.c.b16 %v1454, %v1453
      %v1484 = vpack.c.b16 %v1456, %v1455
      %v1485 = vpack.c.b16 %v1458, %v1457
      %v1486 = vpack.c.b16 %v1460, %v1459
      %v1487 = vpack.c.b16 %v1462, %v1461
      %v1488 = vpack.c.b16 %v1464, %v1463
      %v1489 = vpack.c.b16 %v1466, %v1465
      %v1490 = vpack.c.b16 %v1468, %v1467
      %v1491 = vpack.c.b16 %v1470, %v1469
      %v1492 = vpack.c.b16 %v1472, %v1471
      %v1493 = vpack.c.b16 %v1474, %v1473
      %v1494 = vpack.c.b16 %v1476, %v1475
      %v1495 = vpack.c.b16 %v1478, %v1477
      %v1496 = vpack.c.b16 %v1480, %v1479
      %v1529 = vunpack.c.l.b16 %v1433
      %v1530 = vunpack.c.l.b16 %v1434
      %v1531 = vunpack.c.l.b16 %v1435
      %v1532 = vunpack.c.l.b16 %v1436
      %v1533 = vunpack.c.l.b16 %v1437
      %v1534 = vunpack.c.l.b16 %v1438
      %v1535 = vunpack.c.l.b16 %v1439
      %v1536 = vunpack.c.l.b16 %v1440
      %v1537 = vunpack.c.l.b16 %v1441
      %v1538 = vunpack.c.l.b16 %v1442
      %v1539 = vunpack.c.l.b16 %v1443
      %v1540 = vunpack.c.l.b16 %v1444
      %v1541 = vunpack.c.l.b16 %v1445
      %v1542 = vunpack.c.l.b16 %v1446
      %v1543 = vunpack.c.l.b16 %v1447
      %v1544 = vunpack.c.l.b16 %v1448
      %v1545 = vpack.c.b16 %v1530, %v1529
      %v1546 = vpack.c.b16 %v1532, %v1531
      %v1547 = vpack.c.b16 %v1534, %v1533
      %v1548 = vpack.c.b16 %v1536, %v1535
      %v1549 = vpack.c.b16 %v1538, %v1537
      %v1550 = vpack.c.b16 %v1540, %v1539
      %v1551 = vpack.c.b16 %v1542, %v1541
      %v1552 = vpack.c.b16 %v1544, %v1543
      %1561 = vmatprep.subr.bf16.mxu0 0
      %1562 = vmatpush1.bf16.msra.mxu0 %v1545
      %1563 = vmatprep.subr.bf16.mxu0 0
      %1564 = vmatpush1.bf16.msra.mxu0 %v1546
      %1565 = vmatprep.subr.bf16.mxu0 0
      %1566 = vmatpush1.bf16.msra.mxu0 %v1547
      %1567 = vmatprep.subr.bf16.mxu0 0
      %1568 = vmatpush1.bf16.msra.mxu0 %v1548
      %1569 = vmatprep.subr.bf16.mxu0 0
      %1570 = vmatpush1.bf16.msra.mxu0 %v1549
      %1571 = vmatprep.subr.bf16.mxu0 0
      %1572 = vmatpush1.bf16.msra.mxu0 %v1550
      %1573 = vmatprep.subr.bf16.mxu0 0
      %1574 = vmatpush1.bf16.msra.mxu0 %v1551
      %1575 = vmatprep.subr.bf16.mxu0 0
      %1576 = vmatpush1.bf16.msra.mxu0 %v1552
      %1577 = vmatprep.subr.bf16.mxu0 0
      %1578 = vmatpush1.bf16.msra.mxu0 0
      %1579 = vmatprep.subr.bf16.mxu0 0
      %1580 = vmatpush1.bf16.msra.mxu0 0
      %1581 = vmatprep.subr.bf16.mxu0 0
      %1582 = vmatpush1.bf16.msra.mxu0 0
      %1583 = vmatprep.subr.bf16.mxu0 0
      %1584 = vmatpush1.bf16.msra.mxu0 0
      %1585 = vmatprep.subr.bf16.mxu0 0
      %1586 = vmatpush1.bf16.msra.mxu0 0
      %1587 = vmatprep.subr.bf16.mxu0 0
      %1588 = vmatpush1.bf16.msra.mxu0 0
      %1589 = vmatprep.subr.bf16.mxu0 0
      %1590 = vmatpush1.bf16.msra.mxu0 0
      %1591 = vmatprep.subr.bf16.mxu0 0
      %1592 = vmatpush1.bf16.msra.mxu0 0
      %1593 = vmatprep.mubr.bf16.mxu0 0
      %1594 = vmatmul.mubr.bf16.gmra.mrb[0].mxu0 %v1481
      %v1595 = vpop.f32.mrb[0].mxu0
      %v1596 = vadd.f32 0.0, %v1595
      %v1597 = vpop.f32.mrb[0].mxu0
      %v1598 = vpop.f32.mrb[0].mxu0
      %v1599 = vadd.f32 0.0, %v1598
      %v1600 = vpop.f32.mrb[0].mxu0
      %1601 = vmatprep.mubr.bf16.mxu0 0
      %1602 = vmatmul.mubr.bf16.gmra.mrb[0].mxu0 %v1482
      %v1603 = vpop.f32.mrb[0].mxu0
      %v1604 = vadd.f32 0.0, %v1603
      %v1605 = vpop.f32.mrb[0].mxu0
      %v1606 = vpop.f32.mrb[0].mxu0
      %v1607 = vadd.f32 0.0, %v1606
      %v1608 = vpop.f32.mrb[0].mxu0
      %1609 = vmatprep.mubr.bf16.mxu0 0
      %1610 = vmatmul.mubr.bf16.gmra.mrb[0].mxu0 %v1483
      %v1611 = vpop.f32.mrb[0].mxu0
      %v1612 = vadd.f32 0.0, %v1611
      %v1613 = vpop.f32.mrb[0].mxu0
      %v1614 = vpop.f32.mrb[0].mxu0
      %v1615 = vadd.f32 0.0, %v1614
      %v1616 = vpop.f32.mrb[0].mxu0
      %1617 = vmatprep.mubr.bf16.mxu0 0
      %1618 = vmatmul.mubr.bf16.gmra.mrb[0].mxu0 %v1484
      %v1619 = vpop.f32.mrb[0].mxu0
      %v1620 = vadd.f32 0.0, %v1619
      %v1621 = vpop.f32.mrb[0].mxu0
      %v1622 = vpop.f32.mrb[0].mxu0
      %v1623 = vadd.f32 0.0, %v1622
      %v1624 = vpop.f32.mrb[0].mxu0
      %1625 = vmatprep.mubr.bf16.mxu0 0
      %1626 = vmatmul.mubr.bf16.gmra.mrb[0].mxu0 %v1485
      %v1627 = vpop.f32.mrb[0].mxu0
      %v1628 = vadd.f32 0.0, %v1627
      %v1629 = vpop.f32.mrb[0].mxu0
      %v1630 = vpop.f32.mrb[0].mxu0
      %v1631 = vadd.f32 0.0, %v1630
      %v1632 = vpop.f32.mrb[0].mxu0
      %1633 = vmatprep.mubr.bf16.mxu0 0
      %1634 = vmatmul.mubr.bf16.gmra.mrb[0].mxu0 %v1486
      %v1635 = vpop.f32.mrb[0].mxu0
      %v1636 = vadd.f32 0.0, %v1635
      %v1637 = vpop.f32.mrb[0].mxu0
      %v1638 = vpop.f32.mrb[0].mxu0
      %v1639 = vadd.f32 0.0, %v1638
      %v1640 = vpop.f32.mrb[0].mxu0
      %1641 = vmatprep.mubr.bf16.mxu0 0
      %1642 = vmatmul.mubr.bf16.gmra.mrb[0].mxu0 %v1487
      %v1643 = vpop.f32.mrb[0].mxu0
      %v1644 = vadd.f32 0.0, %v1643
      %v1645 = vpop.f32.mrb[0].mxu0
      %v1646 = vpop.f32.mrb[0].mxu0
      %v1647 = vadd.f32 0.0, %v1646
      %v1648 = vpop.f32.mrb[0].mxu0
      %1649 = vmatprep.mubr.bf16.mxu0 0
      %1650 = vmatmul.mubr.bf16.gmra.mrb[0].mxu0 %v1488
      %v1651 = vpop.f32.mrb[0].mxu0
      %v1652 = vadd.f32 0.0, %v1651
      %v1653 = vpop.f32.mrb[0].mxu0
      %v1654 = vpop.f32.mrb[0].mxu0
      %v1655 = vadd.f32 0.0, %v1654
      %v1656 = vpop.f32.mrb[0].mxu0
      %1657 = vmatprep.mubr.bf16.mxu0 0
      %1658 = vmatmul.mubr.bf16.gmra.mrb[0].mxu0 %v1489
      %v1659 = vpop.f32.mrb[0].mxu0
      %v1660 = vadd.f32 0.0, %v1659
      %v1661 = vpop.f32.mrb[0].mxu0
      %v1662 = vpop.f32.mrb[0].mxu0
      %v1663 = vadd.f32 0.0, %v1662
      %v1664 = vpop.f32.mrb[0].mxu0
      %1665 = vmatprep.mubr.bf16.mxu0 0
      %1666 = vmatmul.mubr.bf16.gmra.mrb[0].mxu0 %v1490
      %v1667 = vpop.f32.mrb[0].mxu0
      %v1668 = vadd.f32 0.0, %v1667
      %v1669 = vpop.f32.mrb[0].mxu0
      %v1670 = vpop.f32.mrb[0].mxu0
      %v1671 = vadd.f32 0.0, %v1670
      %v1672 = vpop.f32.mrb[0].mxu0
      %1673 = vmatprep.mubr.bf16.mxu0 0
      %1674 = vmatmul.mubr.bf16.gmra.mrb[0].mxu0 %v1491
      %v1675 = vpop.f32.mrb[0].mxu0
      %v1676 = vadd.f32 0.0, %v1675
      %v1677 = vpop.f32.mrb[0].mxu0
      %v1678 = vpop.f32.mrb[0].mxu0
      %v1679 = vadd.f32 0.0, %v1678
      %v1680 = vpop.f32.mrb[0].mxu0
      %1681 = vmatprep.mubr.bf16.mxu0 0
      %1682 = vmatmul.mubr.bf16.gmra.mrb[0].mxu0 %v1492
      %v1683 = vpop.f32.mrb[0].mxu0
      %v1684 = vadd.f32 0.0, %v1683
      %v1685 = vpop.f32.mrb[0].mxu0
      %v1686 = vpop.f32.mrb[0].mxu0
      %v1687 = vadd.f32 0.0, %v1686
      %v1688 = vpop.f32.mrb[0].mxu0
      %1689 = vmatprep.mubr.bf16.mxu0 0
      %1690 = vmatmul.mubr.bf16.gmra.mrb[0].mxu0 %v1493
      %v1691 = vpop.f32.mrb[0].mxu0
      %v1692 = vadd.f32 0.0, %v1691
      %v1693 = vpop.f32.mrb[0].mxu0
      %v1694 = vpop.f32.mrb[0].mxu0
      %v1695 = vadd.f32 0.0, %v1694
      %v1696 = vpop.f32.mrb[0].mxu0
      %1697 = vmatprep.mubr.bf16.mxu0 0
      %1698 = vmatmul.mubr.bf16.gmra.mrb[0].mxu0 %v1494
      %v1699 = vpop.f32.mrb[0].mxu0
      %v1700 = vadd.f32 0.0, %v1699
      %v1701 = vpop.f32.mrb[0].mxu0
      %v1702 = vpop.f32.mrb[0].mxu0
      %v1703 = vadd.f32 0.0, %v1702
      %v1704 = vpop.f32.mrb[0].mxu0
      %1705 = vmatprep.mubr.bf16.mxu0 0
      %1706 = vmatmul.mubr.bf16.gmra.mrb[0].mxu0 %v1495
      %v1707 = vpop.f32.mrb[0].mxu0
      %v1708 = vadd.f32 0.0, %v1707
      %v1709 = vpop.f32.mrb[0].mxu0
      %v1710 = vpop.f32.mrb[0].mxu0
      %v1711 = vadd.f32 0.0, %v1710
      %v1712 = vpop.f32.mrb[0].mxu0
      %1713 = vmatprep.mubr.bf16.mxu0 0
      %1714 = vmatmul.mubr.bf16.gmra.mrb[0].mxu0 %v1496
      %v1715 = vpop.f32.mrb[0].mxu0
      %v1716 = vadd.f32 0.0, %v1715
      %v1717 = vpop.f32.mrb[0].mxu0
      %v1718 = vpop.f32.mrb[0].mxu0
      %v1719 = vadd.f32 0.0, %v1718
      %v1720 = vpop.f32.mrb[0].mxu0
      %1721 = vdwg.mxu0
      %v1722 = vadd.f32 %v1143, %v1596
      %v1723 = vadd.f32 %v1146, %v1599
      %v1724 = vadd.f32 %v1151, %v1604
      %v1725 = vadd.f32 %v1154, %v1607
      %v1726 = vadd.f32 %v1159, %v1612
      %v1727 = vadd.f32 %v1162, %v1615
      %v1728 = vadd.f32 %v1167, %v1620
      %v1729 = vadd.f32 %v1170, %v1623
      %v1730 = vadd.f32 %v1175, %v1628
      %v1731 = vadd.f32 %v1178, %v1631
      %v1732 = vadd.f32 %v1183, %v1636
      %v1733 = vadd.f32 %v1186, %v1639
      %v1734 = vadd.f32 %v1191, %v1644
      %v1735 = vadd.f32 %v1194, %v1647
      %v1736 = vadd.f32 %v1199, %v1652
      %v1737 = vadd.f32 %v1202, %v1655
      %v1738 = vadd.f32 %v1207, %v1660
      %v1739 = vadd.f32 %v1210, %v1663
      %v1740 = vadd.f32 %v1215, %v1668
      %v1741 = vadd.f32 %v1218, %v1671
      %v1742 = vadd.f32 %v1223, %v1676
      %v1743 = vadd.f32 %v1226, %v1679
      %v1744 = vadd.f32 %v1231, %v1684
      %v1745 = vadd.f32 %v1234, %v1687
      %v1746 = vadd.f32 %v1239, %v1692
      %v1747 = vadd.f32 %v1242, %v1695
      %v1748 = vadd.f32 %v1247, %v1700
      %v1749 = vadd.f32 %v1250, %v1703
      %v1750 = vadd.f32 %v1255, %v1708
      %v1751 = vadd.f32 %v1258, %v1711
      %v1752 = vadd.f32 %v1263, %v1716
      %v1753 = vadd.f32 %v1266, %v1719
      %s1754 = scalar_lea.vmem %s206, 12
      %v1755 = vld [vmem:[%s1754] sm:$0xf]
      %v1756 = vld [vmem:[%s1754 + $0x4] sm:$0xf]
      %v1757 = vld [vmem:[%s1754 + $0xc] sm:$0xf]
      %v1758 = vld [vmem:[%s1754 + $0x10] sm:$0xf]
      %v1759 = vld [vmem:[%s1754 + $0x18] sm:$0xf]
      %v1760 = vld [vmem:[%s1754 + $0x1c] sm:$0xf]
      %v1761 = vld [vmem:[%s1754 + $0x24] sm:$0xf]
      %v1762 = vld [vmem:[%s1754 + $0x28] sm:$0xf]
      %v1763 = vld [vmem:[%s1754 + $0x30] sm:$0xf]
      %v1764 = vld [vmem:[%s1754 + $0x34] sm:$0xf]
      %v1765 = vld [vmem:[%s1754 + $0x3c] sm:$0xf]
      %v1766 = vld [vmem:[%s1754 + $0x40] sm:$0xf]
      %v1767 = vld [vmem:[%s1754 + $0x48] sm:$0xf]
      %v1768 = vld [vmem:[%s1754 + $0x4c] sm:$0xf]
      %v1769 = vld [vmem:[%s1754 + $0x54] sm:$0xf]
      %v1770 = vld [vmem:[%s1754 + $0x58] sm:$0xf]
      %v1771 = vld [vmem:[%s1754 + $0x60] sm:$0xf]
      %v1772 = vld [vmem:[%s1754 + $0x64] sm:$0xf]
      %v1773 = vld [vmem:[%s1754 + $0x6c] sm:$0xf]
      %v1774 = vld [vmem:[%s1754 + $0x70] sm:$0xf]
      %v1775 = vld [vmem:[%s1754 + $0x78] sm:$0xf]
      %v1776 = vld [vmem:[%s1754 + $0x7c] sm:$0xf]
      %v1777 = vld [vmem:[%s1754 + $0x84] sm:$0xf]
      %v1778 = vld [vmem:[%s1754 + $0x88] sm:$0xf]
      %v1779 = vld [vmem:[%s1754 + $0x90] sm:$0xf]
      %v1780 = vld [vmem:[%s1754 + $0x94] sm:$0xf]
      %v1781 = vld [vmem:[%s1754 + $0x9c] sm:$0xf]
      %v1782 = vld [vmem:[%s1754 + $0xa0] sm:$0xf]
      %v1783 = vld [vmem:[%s1754 + $0xa8] sm:$0xf]
      %v1784 = vld [vmem:[%s1754 + $0xac] sm:$0xf]
      %v1785 = vld [vmem:[%s1754 + $0xb4] sm:$0xf]
      %v1786 = vld [vmem:[%s1754 + $0xb8] sm:$0xf]
      %s1787 = scalar_lea.vmem %s210, 192
      %v1788 = vld [vmem:[%s1787] sm:$0xf]
      %v1789 = vld [vmem:[%s1787 + $0x4] sm:$0xf]
      %v1790 = vld [vmem:[%s1787 + $0x8] sm:$0xf]
      %v1791 = vld [vmem:[%s1787 + $0xc] sm:$0xf]
      %v1792 = vld [vmem:[%s1787 + $0x10] sm:$0xf]
      %v1793 = vld [vmem:[%s1787 + $0x14] sm:$0xf]
      %v1794 = vld [vmem:[%s1787 + $0x18] sm:$0xf]
      %v1795 = vld [vmem:[%s1787 + $0x1c] sm:$0xf]
      %v1796 = vld [vmem:[%s1787 + $0x20] sm:$0xf]
      %v1797 = vld [vmem:[%s1787 + $0x24] sm:$0xf]
      %v1798 = vld [vmem:[%s1787 + $0x28] sm:$0xf]
      %v1799 = vld [vmem:[%s1787 + $0x2c] sm:$0xf]
      %v1800 = vld [vmem:[%s1787 + $0x30] sm:$0xf]
      %v1801 = vld [vmem:[%s1787 + $0x34] sm:$0xf]
      %v1802 = vld [vmem:[%s1787 + $0x38] sm:$0xf]
      %v1803 = vld [vmem:[%s1787 + $0x3c] sm:$0xf]
      %v1836 = vunpack.c.l.b16 %v1755
      %v1837 = vunpack.c.l.b16 %v1756
      %v1838 = vunpack.c.l.b16 %v1757
      %v1839 = vunpack.c.l.b16 %v1758
      %v1840 = vunpack.c.l.b16 %v1759
      %v1841 = vunpack.c.l.b16 %v1760
      %v1842 = vunpack.c.l.b16 %v1761
      %v1843 = vunpack.c.l.b16 %v1762
      %v1844 = vunpack.c.l.b16 %v1763
      %v1845 = vunpack.c.l.b16 %v1764
      %v1846 = vunpack.c.l.b16 %v1765
      %v1847 = vunpack.c.l.b16 %v1766
      %v1848 = vunpack.c.l.b16 %v1767
      %v1849 = vunpack.c.l.b16 %v1768
      %v1850 = vunpack.c.l.b16 %v1769
      %v1851 = vunpack.c.l.b16 %v1770
      %v1852 = vunpack.c.l.b16 %v1771
      %v1853 = vunpack.c.l.b16 %v1772
      %v1854 = vunpack.c.l.b16 %v1773
      %v1855 = vunpack.c.l.b16 %v1774
      %v1856 = vunpack.c.l.b16 %v1775
      %v1857 = vunpack.c.l.b16 %v1776
      %v1858 = vunpack.c.l.b16 %v1777
      %v1859 = vunpack.c.l.b16 %v1778
      %v1860 = vunpack.c.l.b16 %v1779
      %v1861 = vunpack.c.l.b16 %v1780
      %v1862 = vunpack.c.l.b16 %v1781
      %v1863 = vunpack.c.l.b16 %v1782
      %v1864 = vunpack.c.l.b16 %v1783
      %v1865 = vunpack.c.l.b16 %v1784
      %v1866 = vunpack.c.l.b16 %v1785
      %v1867 = vunpack.c.l.b16 %v1786
      %v1868 = vpack.c.b16 %v1837, %v1836
      %v1869 = vpack.c.b16 %v1839, %v1838
      %v1870 = vpack.c.b16 %v1841, %v1840
      %v1871 = vpack.c.b16 %v1843, %v1842
      %v1872 = vpack.c.b16 %v1845, %v1844
      %v1873 = vpack.c.b16 %v1847, %v1846
      %v1874 = vpack.c.b16 %v1849, %v1848
      %v1875 = vpack.c.b16 %v1851, %v1850
      %v1876 = vpack.c.b16 %v1853, %v1852
      %v1877 = vpack.c.b16 %v1855, %v1854
      %v1878 = vpack.c.b16 %v1857, %v1856
      %v1879 = vpack.c.b16 %v1859, %v1858
      %v1880 = vpack.c.b16 %v1861, %v1860
      %v1881 = vpack.c.b16 %v1863, %v1862
      %v1882 = vpack.c.b16 %v1865, %v1864
      %v1883 = vpack.c.b16 %v1867, %v1866
      %v1916 = vunpack.c.l.b16 %v1788
      %v1917 = vunpack.c.l.b16 %v1789
      %v1918 = vunpack.c.l.b16 %v1790
      %v1919 = vunpack.c.l.b16 %v1791
      %v1920 = vunpack.c.l.b16 %v1792
      %v1921 = vunpack.c.l.b16 %v1793
      %v1922 = vunpack.c.l.b16 %v1794
      %v1923 = vunpack.c.l.b16 %v1795
      %v1924 = vunpack.c.l.b16 %v1796
      %v1925 = vunpack.c.l.b16 %v1797
      %v1926 = vunpack.c.l.b16 %v1798
      %v1927 = vunpack.c.l.b16 %v1799
      %v1928 = vunpack.c.l.b16 %v1800
      %v1929 = vunpack.c.l.b16 %v1801
      %v1930 = vunpack.c.l.b16 %v1802
      %v1931 = vunpack.c.l.b16 %v1803
      %v1932 = vpack.c.b16 %v1917, %v1916
      %v1933 = vpack.c.b16 %v1919, %v1918
      %v1934 = vpack.c.b16 %v1921, %v1920
      %v1935 = vpack.c.b16 %v1923, %v1922
      %v1936 = vpack.c.b16 %v1925, %v1924
      %v1937 = vpack.c.b16 %v1927, %v1926
      %v1938 = vpack.c.b16 %v1929, %v1928
      %v1939 = vpack.c.b16 %v1931, %v1930
      %1948 = vmatprep.subr.bf16.mxu0 0
      %1949 = vmatpush1.bf16.msra.mxu0 %v1932
      %1950 = vmatprep.subr.bf16.mxu0 0
      %1951 = vmatpush1.bf16.msra.mxu0 %v1933
      %1952 = vmatprep.subr.bf16.mxu0 0
      %1953 = vmatpush1.bf16.msra.mxu0 %v1934
      %1954 = vmatprep.subr.bf16.mxu0 0
      %1955 = vmatpush1.bf16.msra.mxu0 %v1935
      %1956 = vmatprep.subr.bf16.mxu0 0
      %1957 = vmatpush1.bf16.msra.mxu0 %v1936
      %1958 = vmatprep.subr.bf16.mxu0 0
      %1959 = vmatpush1.bf16.msra.mxu0 %v1937
      %1960 = vmatprep.subr.bf16.mxu0 0
      %1961 = vmatpush1.bf16.msra.mxu0 %v1938
      %1962 = vmatprep.subr.bf16.mxu0 0
      %1963 = vmatpush1.bf16.msra.mxu0 %v1939
      %1964 = vmatprep.subr.bf16.mxu0 0
      %1965 = vmatpush1.bf16.msra.mxu0 0
      %1966 = vmatprep.subr.bf16.mxu0 0
      %1967 = vmatpush1.bf16.msra.mxu0 0
      %1968 = vmatprep.subr.bf16.mxu0 0
      %1969 = vmatpush1.bf16.msra.mxu0 0
      %1970 = vmatprep.subr.bf16.mxu0 0
      %1971 = vmatpush1.bf16.msra.mxu0 0
      %1972 = vmatprep.subr.bf16.mxu0 0
      %1973 = vmatpush1.bf16.msra.mxu0 0
      %1974 = vmatprep.subr.bf16.mxu0 0
      %1975 = vmatpush1.bf16.msra.mxu0 0
      %1976 = vmatprep.subr.bf16.mxu0 0
      %1977 = vmatpush1.bf16.msra.mxu0 0
      %1978 = vmatprep.subr.bf16.mxu0 0
      %1979 = vmatpush1.bf16.msra.mxu0 0
      %1980 = vmatprep.mubr.bf16.mxu0 0
      %1981 = vmatmul.mubr.bf16.gmra.mrb[0].mxu0 %v1868
      %v1982 = vpop.f32.mrb[0].mxu0
      %v1983 = vadd.f32 0.0, %v1982
      %v1984 = vpop.f32.mrb[0].mxu0
      %v1985 = vpop.f32.mrb[0].mxu0
      %v1986 = vadd.f32 0.0, %v1985
      %v1987 = vpop.f32.mrb[0].mxu0
      %1988 = vmatprep.mubr.bf16.mxu0 0
      %1989 = vmatmul.mubr.bf16.gmra.mrb[0].mxu0 %v1869
      %v1990 = vpop.f32.mrb[0].mxu0
      %v1991 = vadd.f32 0.0, %v1990
      %v1992 = vpop.f32.mrb[0].mxu0
      %v1993 = vpop.f32.mrb[0].mxu0
      %v1994 = vadd.f32 0.0, %v1993
      %v1995 = vpop.f32.mrb[0].mxu0
      %1996 = vmatprep.mubr.bf16.mxu0 0
      %1997 = vmatmul.mubr.bf16.gmra.mrb[0].mxu0 %v1870
      %v1998 = vpop.f32.mrb[0].mxu0
      %v1999 = vadd.f32 0.0, %v1998
      %v2000 = vpop.f32.mrb[0].mxu0
      %v2001 = vpop.f32.mrb[0].mxu0
      %v2002 = vadd.f32 0.0, %v2001
      %v2003 = vpop.f32.mrb[0].mxu0
      %2004 = vmatprep.mubr.bf16.mxu0 0
      %2005 = vmatmul.mubr.bf16.gmra.mrb[0].mxu0 %v1871
      %v2006 = vpop.f32.mrb[0].mxu0
      %v2007 = vadd.f32 0.0, %v2006
      %v2008 = vpop.f32.mrb[0].mxu0
      %v2009 = vpop.f32.mrb[0].mxu0
      %v2010 = vadd.f32 0.0, %v2009
      %v2011 = vpop.f32.mrb[0].mxu0
      %2012 = vmatprep.mubr.bf16.mxu0 0
      %2013 = vmatmul.mubr.bf16.gmra.mrb[0].mxu0 %v1872
      %v2014 = vpop.f32.mrb[0].mxu0
      %v2015 = vadd.f32 0.0, %v2014
      %v2016 = vpop.f32.mrb[0].mxu0
      %v2017 = vpop.f32.mrb[0].mxu0
      %v2018 = vadd.f32 0.0, %v2017
      %v2019 = vpop.f32.mrb[0].mxu0
      %2020 = vmatprep.mubr.bf16.mxu0 0
      %2021 = vmatmul.mubr.bf16.gmra.mrb[0].mxu0 %v1873
      %v2022 = vpop.f32.mrb[0].mxu0
      %v2023 = vadd.f32 0.0, %v2022
      %v2024 = vpop.f32.mrb[0].mxu0
      %v2025 = vpop.f32.mrb[0].mxu0
      %v2026 = vadd.f32 0.0, %v2025
      %v2027 = vpop.f32.mrb[0].mxu0
      %2028 = vmatprep.mubr.bf16.mxu0 0
      %2029 = vmatmul.mubr.bf16.gmra.mrb[0].mxu0 %v1874
      %v2030 = vpop.f32.mrb[0].mxu0
      %v2031 = vadd.f32 0.0, %v2030
      %v2032 = vpop.f32.mrb[0].mxu0
      %v2033 = vpop.f32.mrb[0].mxu0
      %v2034 = vadd.f32 0.0, %v2033
      %v2035 = vpop.f32.mrb[0].mxu0
      %2036 = vmatprep.mubr.bf16.mxu0 0
      %2037 = vmatmul.mubr.bf16.gmra.mrb[0].mxu0 %v1875
      %v2038 = vpop.f32.mrb[0].mxu0
      %v2039 = vadd.f32 0.0, %v2038
      %v2040 = vpop.f32.mrb[0].mxu0
      %v2041 = vpop.f32.mrb[0].mxu0
      %v2042 = vadd.f32 0.0, %v2041
      %v2043 = vpop.f32.mrb[0].mxu0
      %2044 = vmatprep.mubr.bf16.mxu0 0
      %2045 = vmatmul.mubr.bf16.gmra.mrb[0].mxu0 %v1876
      %v2046 = vpop.f32.mrb[0].mxu0
      %v2047 = vadd.f32 0.0, %v2046
      %v2048 = vpop.f32.mrb[0].mxu0
      %v2049 = vpop.f32.mrb[0].mxu0
      %v2050 = vadd.f32 0.0, %v2049
      %v2051 = vpop.f32.mrb[0].mxu0
      %2052 = vmatprep.mubr.bf16.mxu0 0
      %2053 = vmatmul.mubr.bf16.gmra.mrb[0].mxu0 %v1877
      %v2054 = vpop.f32.mrb[0].mxu0
      %v2055 = vadd.f32 0.0, %v2054
      %v2056 = vpop.f32.mrb[0].mxu0
      %v2057 = vpop.f32.mrb[0].mxu0
      %v2058 = vadd.f32 0.0, %v2057
      %v2059 = vpop.f32.mrb[0].mxu0
      %2060 = vmatprep.mubr.bf16.mxu0 0
      %2061 = vmatmul.mubr.bf16.gmra.mrb[0].mxu0 %v1878
      %v2062 = vpop.f32.mrb[0].mxu0
      %v2063 = vadd.f32 0.0, %v2062
      %v2064 = vpop.f32.mrb[0].mxu0
      %v2065 = vpop.f32.mrb[0].mxu0
      %v2066 = vadd.f32 0.0, %v2065
      %v2067 = vpop.f32.mrb[0].mxu0
      %2068 = vmatprep.mubr.bf16.mxu0 0
      %2069 = vmatmul.mubr.bf16.gmra.mrb[0].mxu0 %v1879
      %v2070 = vpop.f32.mrb[0].mxu0
      %v2071 = vadd.f32 0.0, %v2070
      %v2072 = vpop.f32.mrb[0].mxu0
      %v2073 = vpop.f32.mrb[0].mxu0
      %v2074 = vadd.f32 0.0, %v2073
      %v2075 = vpop.f32.mrb[0].mxu0
      %2076 = vmatprep.mubr.bf16.mxu0 0
      %2077 = vmatmul.mubr.bf16.gmra.mrb[0].mxu0 %v1880
      %v2078 = vpop.f32.mrb[0].mxu0
      %v2079 = vadd.f32 0.0, %v2078
      %v2080 = vpop.f32.mrb[0].mxu0
      %v2081 = vpop.f32.mrb[0].mxu0
      %v2082 = vadd.f32 0.0, %v2081
      %v2083 = vpop.f32.mrb[0].mxu0
      %2084 = vmatprep.mubr.bf16.mxu0 0
      %2085 = vmatmul.mubr.bf16.gmra.mrb[0].mxu0 %v1881
      %v2086 = vpop.f32.mrb[0].mxu0
      %v2087 = vadd.f32 0.0, %v2086
      %v2088 = vpop.f32.mrb[0].mxu0
      %v2089 = vpop.f32.mrb[0].mxu0
      %v2090 = vadd.f32 0.0, %v2089
      %v2091 = vpop.f32.mrb[0].mxu0
      %2092 = vmatprep.mubr.bf16.mxu0 0
      %2093 = vmatmul.mubr.bf16.gmra.mrb[0].mxu0 %v1882
      %v2094 = vpop.f32.mrb[0].mxu0
      %v2095 = vadd.f32 0.0, %v2094
      %v2096 = vpop.f32.mrb[0].mxu0
      %v2097 = vpop.f32.mrb[0].mxu0
      %v2098 = vadd.f32 0.0, %v2097
      %v2099 = vpop.f32.mrb[0].mxu0
      %2100 = vmatprep.mubr.bf16.mxu0 0
      %2101 = vmatmul.mubr.bf16.gmra.mrb[0].mxu0 %v1883
      %v2102 = vpop.f32.mrb[0].mxu0
      %v2103 = vadd.f32 0.0, %v2102
      %v2104 = vpop.f32.mrb[0].mxu0
      %v2105 = vpop.f32.mrb[0].mxu0
      %v2106 = vadd.f32 0.0, %v2105
      %v2107 = vpop.f32.mrb[0].mxu0
      %2108 = vdwg.mxu0
      %v2109 = vadd.f32 %v1722, %v1983
      %v2110 = vadd.f32 %v1723, %v1986
      %v2111 = vadd.f32 %v1724, %v1991
      %v2112 = vadd.f32 %v1725, %v1994
      %v2113 = vadd.f32 %v1726, %v1999
      %v2114 = vadd.f32 %v1727, %v2002
      %v2115 = vadd.f32 %v1728, %v2007
      %v2116 = vadd.f32 %v1729, %v2010
      %v2117 = vadd.f32 %v1730, %v2015
      %v2118 = vadd.f32 %v1731, %v2018
      %v2119 = vadd.f32 %v1732, %v2023
      %v2120 = vadd.f32 %v1733, %v2026
      %v2121 = vadd.f32 %v1734, %v2031
      %v2122 = vadd.f32 %v1735, %v2034
      %v2123 = vadd.f32 %v1736, %v2039
      %v2124 = vadd.f32 %v1737, %v2042
      %v2125 = vadd.f32 %v1738, %v2047
      %v2126 = vadd.f32 %v1739, %v2050
      %v2127 = vadd.f32 %v1740, %v2055
      %v2128 = vadd.f32 %v1741, %v2058
      %v2129 = vadd.f32 %v1742, %v2063
      %v2130 = vadd.f32 %v1743, %v2066
      %v2131 = vadd.f32 %v1744, %v2071
      %v2132 = vadd.f32 %v1745, %v2074
      %v2133 = vadd.f32 %v1746, %v2079
      %v2134 = vadd.f32 %v1747, %v2082
      %v2135 = vadd.f32 %v1748, %v2087
      %v2136 = vadd.f32 %v1749, %v2090
      %v2137 = vadd.f32 %v1750, %v2095
      %v2138 = vadd.f32 %v1751, %v2098
      %v2139 = vadd.f32 %v1752, %v2103
      %v2140 = vadd.f32 %v1753, %v2106
      %v2141 = vld [vmem:[%s1754] sm:$0xf]
      %v2142 = vld [vmem:[%s1754 + $0x4] sm:$0xf]
      %v2143 = vld [vmem:[%s1754 + $0x8] sm:$0x1]
      %v2144 = vld [vmem:[%s1754 + $0xc] sm:$0xf]
      %v2145 = vld [vmem:[%s1754 + $0x10] sm:$0xf]
      %v2146 = vld [vmem:[%s1754 + $0x14] sm:$0x1]
      %v2147 = vld [vmem:[%s1754 + $0x18] sm:$0xf]
      %v2148 = vld [vmem:[%s1754 + $0x1c] sm:$0xf]
      %v2149 = vld [vmem:[%s1754 + $0x20] sm:$0x1]
      %v2150 = vld [vmem:[%s1754 + $0x24] sm:$0xf]
      %v2151 = vld [vmem:[%s1754 + $0x28] sm:$0xf]
      %v2152 = vld [vmem:[%s1754 + $0x2c] sm:$0x1]
      %v2153 = vld [vmem:[%s1754 + $0x30] sm:$0xf]
      %v2154 = vld [vmem:[%s1754 + $0x34] sm:$0xf]
      %v2155 = vld [vmem:[%s1754 + $0x38] sm:$0x1]
      %v2156 = vld [vmem:[%s1754 + $0x3c] sm:$0xf]
      %v2157 = vld [vmem:[%s1754 + $0x40] sm:$0xf]
      %v2158 = vld [vmem:[%s1754 + $0x44] sm:$0x1]
      %v2159 = vld [vmem:[%s1754 + $0x48] sm:$0xf]
      %v2160 = vld [vmem:[%s1754 + $0x4c] sm:$0xf]
      %v2161 = vld [vmem:[%s1754 + $0x50] sm:$0x1]
      %v2162 = vld [vmem:[%s1754 + $0x54] sm:$0xf]
      %v2163 = vld [vmem:[%s1754 + $0x58] sm:$0xf]
      %v2164 = vld [vmem:[%s1754 + $0x5c] sm:$0x1]
      %v2165 = vld [vmem:[%s1754 + $0x60] sm:$0xf]
      %v2166 = vld [vmem:[%s1754 + $0x64] sm:$0xf]
      %v2167 = vld [vmem:[%s1754 + $0x68] sm:$0x1]
      %v2168 = vld [vmem:[%s1754 + $0x6c] sm:$0xf]
      %v2169 = vld [vmem:[%s1754 + $0x70] sm:$0xf]
      %v2170 = vld [vmem:[%s1754 + $0x74] sm:$0x1]
      %v2171 = vld [vmem:[%s1754 + $0x78] sm:$0xf]
      %v2172 = vld [vmem:[%s1754 + $0x7c] sm:$0xf]
      %v2173 = vld [vmem:[%s1754 + $0x80] sm:$0x1]
      %v2174 = vld [vmem:[%s1754 + $0x84] sm:$0xf]
      %v2175 = vld [vmem:[%s1754 + $0x88] sm:$0xf]
      %v2176 = vld [vmem:[%s1754 + $0x8c] sm:$0x1]
      %v2177 = vld [vmem:[%s1754 + $0x90] sm:$0xf]
      %v2178 = vld [vmem:[%s1754 + $0x94] sm:$0xf]
      %v2179 = vld [vmem:[%s1754 + $0x98] sm:$0x1]
      %v2180 = vld [vmem:[%s1754 + $0x9c] sm:$0xf]
      %v2181 = vld [vmem:[%s1754 + $0xa0] sm:$0xf]
      %v2182 = vld [vmem:[%s1754 + $0xa4] sm:$0x1]
      %v2183 = vld [vmem:[%s1754 + $0xa8] sm:$0xf]
      %v2184 = vld [vmem:[%s1754 + $0xac] sm:$0xf]
      %v2185 = vld [vmem:[%s1754 + $0xb0] sm:$0x1]
      %v2186 = vld [vmem:[%s1754 + $0xb4] sm:$0xf]
      %v2187 = vld [vmem:[%s1754 + $0xb8] sm:$0xf]
      %v2188 = vld [vmem:[%s1754 + $0xbc] sm:$0x1]
      %v2190 = vshrl.u32 %v2141, 16
      %v2192 = vrot.slane %v2190, 4
      %v2193 = vshll.u32 %v2141, 16
      %v2195 = vrot.slane %v2193, 5
      %v2196 = vor.u32 %v2192, %v2195
      %v2197 = vrot.slane %v2196, 4
      %v2199 = vshll.u32 %v2142, 16
      %v2201 = vrot.slane %v2199, 5
      %v2202 = vsel %vm289, %v2197, %v2201
      %v2203 = vshrl.u32 %v2142, 16
      %v2205 = vrot.slane %v2203, 4
      %v2206 = vor.u32 %v2205, %v2201
      %v2207 = vrot.slane %v2206, 4
      %v2209 = vshll.u32 %v2143, 16
      %v2211 = vrot.slane %v2209, 5
      %v2212 = vsel %vm289, %v2207, %v2211
      %v2214 = vshrl.u32 %v2144, 16
      %v2216 = vrot.slane %v2214, 4
      %v2217 = vshll.u32 %v2144, 16
      %v2219 = vrot.slane %v2217, 5
      %v2220 = vor.u32 %v2216, %v2219
      %v2221 = vrot.slane %v2220, 4
      %v2223 = vshll.u32 %v2145, 16
      %v2225 = vrot.slane %v2223, 5
      %v2226 = vsel %vm289, %v2221, %v2225
      %v2227 = vshrl.u32 %v2145, 16
      %v2229 = vrot.slane %v2227, 4
      %v2230 = vor.u32 %v2229, %v2225
      %v2231 = vrot.slane %v2230, 4
      %v2233 = vshll.u32 %v2146, 16
      %v2235 = vrot.slane %v2233, 5
      %v2236 = vsel %vm289, %v2231, %v2235
      %v2238 = vshrl.u32 %v2147, 16
      %v2240 = vrot.slane %v2238, 4
      %v2241 = vshll.u32 %v2147, 16
      %v2243 = vrot.slane %v2241, 5
      %v2244 = vor.u32 %v2240, %v2243
      %v2245 = vrot.slane %v2244, 4
      %v2247 = vshll.u32 %v2148, 16
      %v2249 = vrot.slane %v2247, 5
      %v2250 = vsel %vm289, %v2245, %v2249
      %v2251 = vshrl.u32 %v2148, 16
      %v2253 = vrot.slane %v2251, 4
      %v2254 = vor.u32 %v2253, %v2249
      %v2255 = vrot.slane %v2254, 4
      %v2257 = vshll.u32 %v2149, 16
      %v2259 = vrot.slane %v2257, 5
      %v2260 = vsel %vm289, %v2255, %v2259
      %v2262 = vshrl.u32 %v2150, 16
      %v2264 = vrot.slane %v2262, 4
      %v2265 = vshll.u32 %v2150, 16
      %v2267 = vrot.slane %v2265, 5
      %v2268 = vor.u32 %v2264, %v2267
      %v2269 = vrot.slane %v2268, 4
      %v2271 = vshll.u32 %v2151, 16
      %v2273 = vrot.slane %v2271, 5
      %v2274 = vsel %vm289, %v2269, %v2273
      %v2275 = vshrl.u32 %v2151, 16
      %v2277 = vrot.slane %v2275, 4
      %v2278 = vor.u32 %v2277, %v2273
      %v2279 = vrot.slane %v2278, 4
      %v2281 = vshll.u32 %v2152, 16
      %v2283 = vrot.slane %v2281, 5
      %v2284 = vsel %vm289, %v2279, %v2283
      %v2286 = vshrl.u32 %v2153, 16
      %v2288 = vrot.slane %v2286, 4
      %v2289 = vshll.u32 %v2153, 16
      %v2291 = vrot.slane %v2289, 5
      %v2292 = vor.u32 %v2288, %v2291
      %v2293 = vrot.slane %v2292, 4
      %v2295 = vshll.u32 %v2154, 16
      %v2297 = vrot.slane %v2295, 5
      %v2298 = vsel %vm289, %v2293, %v2297
      %v2299 = vshrl.u32 %v2154, 16
      %v2301 = vrot.slane %v2299, 4
      %v2302 = vor.u32 %v2301, %v2297
      %v2303 = vrot.slane %v2302, 4
      %v2305 = vshll.u32 %v2155, 16
      %v2307 = vrot.slane %v2305, 5
      %v2308 = vsel %vm289, %v2303, %v2307
      %v2310 = vshrl.u32 %v2156, 16
      %v2312 = vrot.slane %v2310, 4
      %v2313 = vshll.u32 %v2156, 16
      %v2315 = vrot.slane %v2313, 5
      %v2316 = vor.u32 %v2312, %v2315
      %v2317 = vrot.slane %v2316, 4
      %v2319 = vshll.u32 %v2157, 16
      %v2321 = vrot.slane %v2319, 5
      %v2322 = vsel %vm289, %v2317, %v2321
      %v2323 = vshrl.u32 %v2157, 16
      %v2325 = vrot.slane %v2323, 4
      %v2326 = vor.u32 %v2325, %v2321
      %v2327 = vrot.slane %v2326, 4
      %v2329 = vshll.u32 %v2158, 16
      %v2331 = vrot.slane %v2329, 5
      %v2332 = vsel %vm289, %v2327, %v2331
      %v2334 = vshrl.u32 %v2159, 16
      %v2336 = vrot.slane %v2334, 4
      %v2337 = vshll.u32 %v2159, 16
      %v2339 = vrot.slane %v2337, 5
      %v2340 = vor.u32 %v2336, %v2339
      %v2341 = vrot.slane %v2340, 4
      %v2343 = vshll.u32 %v2160, 16
      %v2345 = vrot.slane %v2343, 5
      %v2346 = vsel %vm289, %v2341, %v2345
      %v2347 = vshrl.u32 %v2160, 16
      %v2349 = vrot.slane %v2347, 4
      %v2350 = vor.u32 %v2349, %v2345
      %v2351 = vrot.slane %v2350, 4
      %v2353 = vshll.u32 %v2161, 16
      %v2355 = vrot.slane %v2353, 5
      %v2356 = vsel %vm289, %v2351, %v2355
      %v2358 = vshrl.u32 %v2162, 16
      %v2360 = vrot.slane %v2358, 4
      %v2361 = vshll.u32 %v2162, 16
      %v2363 = vrot.slane %v2361, 5
      %v2364 = vor.u32 %v2360, %v2363
      %v2365 = vrot.slane %v2364, 4
      %v2367 = vshll.u32 %v2163, 16
      %v2369 = vrot.slane %v2367, 5
      %v2370 = vsel %vm289, %v2365, %v2369
      %v2371 = vshrl.u32 %v2163, 16
      %v2373 = vrot.slane %v2371, 4
      %v2374 = vor.u32 %v2373, %v2369
      %v2375 = vrot.slane %v2374, 4
      %v2377 = vshll.u32 %v2164, 16
      %v2379 = vrot.slane %v2377, 5
      %v2380 = vsel %vm289, %v2375, %v2379
      %v2382 = vshrl.u32 %v2165, 16
      %v2384 = vrot.slane %v2382, 4
      %v2385 = vshll.u32 %v2165, 16
      %v2387 = vrot.slane %v2385, 5
      %v2388 = vor.u32 %v2384, %v2387
      %v2389 = vrot.slane %v2388, 4
      %v2391 = vshll.u32 %v2166, 16
      %v2393 = vrot.slane %v2391, 5
      %v2394 = vsel %vm289, %v2389, %v2393
      %v2395 = vshrl.u32 %v2166, 16
      %v2397 = vrot.slane %v2395, 4
      %v2398 = vor.u32 %v2397, %v2393
      %v2399 = vrot.slane %v2398, 4
      %v2401 = vshll.u32 %v2167, 16
      %v2403 = vrot.slane %v2401, 5
      %v2404 = vsel %vm289, %v2399, %v2403
      %v2406 = vshrl.u32 %v2168, 16
      %v2408 = vrot.slane %v2406, 4
      %v2409 = vshll.u32 %v2168, 16
      %v2411 = vrot.slane %v2409, 5
      %v2412 = vor.u32 %v2408, %v2411
      %v2413 = vrot.slane %v2412, 4
      %v2415 = vshll.u32 %v2169, 16
      %v2417 = vrot.slane %v2415, 5
      %v2418 = vsel %vm289, %v2413, %v2417
      %v2419 = vshrl.u32 %v2169, 16
      %v2421 = vrot.slane %v2419, 4
      %v2422 = vor.u32 %v2421, %v2417
      %v2423 = vrot.slane %v2422, 4
      %v2425 = vshll.u32 %v2170, 16
      %v2427 = vrot.slane %v2425, 5
      %v2428 = vsel %vm289, %v2423, %v2427
      %v2430 = vshrl.u32 %v2171, 16
      %v2432 = vrot.slane %v2430, 4
      %v2433 = vshll.u32 %v2171, 16
      %v2435 = vrot.slane %v2433, 5
      %v2436 = vor.u32 %v2432, %v2435
      %v2437 = vrot.slane %v2436, 4
      %v2439 = vshll.u32 %v2172, 16
      %v2441 = vrot.slane %v2439, 5
      %v2442 = vsel %vm289, %v2437, %v2441
      %v2443 = vshrl.u32 %v2172, 16
      %v2445 = vrot.slane %v2443, 4
      %v2446 = vor.u32 %v2445, %v2441
      %v2447 = vrot.slane %v2446, 4
      %v2449 = vshll.u32 %v2173, 16
      %v2451 = vrot.slane %v2449, 5
      %v2452 = vsel %vm289, %v2447, %v2451
      %v2454 = vshrl.u32 %v2174, 16
      %v2456 = vrot.slane %v2454, 4
      %v2457 = vshll.u32 %v2174, 16
      %v2459 = vrot.slane %v2457, 5
      %v2460 = vor.u32 %v2456, %v2459
      %v2461 = vrot.slane %v2460, 4
      %v2463 = vshll.u32 %v2175, 16
      %v2465 = vrot.slane %v2463, 5
      %v2466 = vsel %vm289, %v2461, %v2465
      %v2467 = vshrl.u32 %v2175, 16
      %v2469 = vrot.slane %v2467, 4
      %v2470 = vor.u32 %v2469, %v2465
      %v2471 = vrot.slane %v2470, 4
      %v2473 = vshll.u32 %v2176, 16
      %v2475 = vrot.slane %v2473, 5
      %v2476 = vsel %vm289, %v2471, %v2475
      %v2478 = vshrl.u32 %v2177, 16
      %v2480 = vrot.slane %v2478, 4
      %v2481 = vshll.u32 %v2177, 16
      %v2483 = vrot.slane %v2481, 5
      %v2484 = vor.u32 %v2480, %v2483
      %v2485 = vrot.slane %v2484, 4
      %v2487 = vshll.u32 %v2178, 16
      %v2489 = vrot.slane %v2487, 5
      %v2490 = vsel %vm289, %v2485, %v2489
      %v2491 = vshrl.u32 %v2178, 16
      %v2493 = vrot.slane %v2491, 4
      %v2494 = vor.u32 %v2493, %v2489
      %v2495 = vrot.slane %v2494, 4
      %v2497 = vshll.u32 %v2179, 16
      %v2499 = vrot.slane %v2497, 5
      %v2500 = vsel %vm289, %v2495, %v2499
      %v2502 = vshrl.u32 %v2180, 16
      %v2504 = vrot.slane %v2502, 4
      %v2505 = vshll.u32 %v2180, 16
      %v2507 = vrot.slane %v2505, 5
      %v2508 = vor.u32 %v2504, %v2507
      %v2509 = vrot.slane %v2508, 4
      %v2511 = vshll.u32 %v2181, 16
      %v2513 = vrot.slane %v2511, 5
      %v2514 = vsel %vm289, %v2509, %v2513
      %v2515 = vshrl.u32 %v2181, 16
      %v2517 = vrot.slane %v2515, 4
      %v2518 = vor.u32 %v2517, %v2513
      %v2519 = vrot.slane %v2518, 4
      %v2521 = vshll.u32 %v2182, 16
      %v2523 = vrot.slane %v2521, 5
      %v2524 = vsel %vm289, %v2519, %v2523
      %v2526 = vshrl.u32 %v2183, 16
      %v2528 = vrot.slane %v2526, 4
      %v2529 = vshll.u32 %v2183, 16
      %v2531 = vrot.slane %v2529, 5
      %v2532 = vor.u32 %v2528, %v2531
      %v2533 = vrot.slane %v2532, 4
      %v2535 = vshll.u32 %v2184, 16
      %v2537 = vrot.slane %v2535, 5
      %v2538 = vsel %vm289, %v2533, %v2537
      %v2539 = vshrl.u32 %v2184, 16
      %v2541 = vrot.slane %v2539, 4
      %v2542 = vor.u32 %v2541, %v2537
      %v2543 = vrot.slane %v2542, 4
      %v2545 = vshll.u32 %v2185, 16
      %v2547 = vrot.slane %v2545, 5
      %v2548 = vsel %vm289, %v2543, %v2547
      %v2550 = vshrl.u32 %v2186, 16
      %v2552 = vrot.slane %v2550, 4
      %v2553 = vshll.u32 %v2186, 16
      %v2555 = vrot.slane %v2553, 5
      %v2556 = vor.u32 %v2552, %v2555
      %v2557 = vrot.slane %v2556, 4
      %v2559 = vshll.u32 %v2187, 16
      %v2561 = vrot.slane %v2559, 5
      %v2562 = vsel %vm289, %v2557, %v2561
      %v2563 = vshrl.u32 %v2187, 16
      %v2565 = vrot.slane %v2563, 4
      %v2566 = vor.u32 %v2565, %v2561
      %v2567 = vrot.slane %v2566, 4
      %v2569 = vshll.u32 %v2188, 16
      %v2571 = vrot.slane %v2569, 5
      %v2572 = vsel %vm289, %v2567, %v2571
      %s2573 = scalar_lea.vmem %s210, 256
      %v2574 = vld [vmem:[%s2573] sm:$0xf]
      %v2575 = vld [vmem:[%s2573 + $0x4] sm:$0xf]
      %v2576 = vld [vmem:[%s2573 + $0x8] sm:$0xf]
      %v2577 = vld [vmem:[%s2573 + $0xc] sm:$0xf]
      %v2578 = vld [vmem:[%s2573 + $0x10] sm:$0xf]
      %v2579 = vld [vmem:[%s2573 + $0x14] sm:$0xf]
      %v2580 = vld [vmem:[%s2573 + $0x18] sm:$0xf]
      %v2581 = vld [vmem:[%s2573 + $0x1c] sm:$0xf]
      %v2582 = vld [vmem:[%s2573 + $0x20] sm:$0xf]
      %v2583 = vld [vmem:[%s2573 + $0x24] sm:$0xf]
      %v2584 = vld [vmem:[%s2573 + $0x28] sm:$0xf]
      %v2585 = vld [vmem:[%s2573 + $0x2c] sm:$0xf]
      %v2586 = vld [vmem:[%s2573 + $0x30] sm:$0xf]
      %v2587 = vld [vmem:[%s2573 + $0x34] sm:$0xf]
      %v2588 = vld [vmem:[%s2573 + $0x38] sm:$0xf]
      %v2589 = vld [vmem:[%s2573 + $0x3c] sm:$0xf]
      %v2590 = vunpack.c.l.b16 %v2202
      %v2591 = vunpack.c.l.b16 %v2212
      %v2592 = vunpack.c.l.b16 %v2226
      %v2593 = vunpack.c.l.b16 %v2236
      %v2594 = vunpack.c.l.b16 %v2250
      %v2595 = vunpack.c.l.b16 %v2260
      %v2596 = vunpack.c.l.b16 %v2274
      %v2597 = vunpack.c.l.b16 %v2284
      %v2598 = vunpack.c.l.b16 %v2298
      %v2599 = vunpack.c.l.b16 %v2308
      %v2600 = vunpack.c.l.b16 %v2322
      %v2601 = vunpack.c.l.b16 %v2332
      %v2602 = vunpack.c.l.b16 %v2346
      %v2603 = vunpack.c.l.b16 %v2356
      %v2604 = vunpack.c.l.b16 %v2370
      %v2605 = vunpack.c.l.b16 %v2380
      %v2606 = vunpack.c.l.b16 %v2394
      %v2607 = vunpack.c.l.b16 %v2404
      %v2608 = vunpack.c.l.b16 %v2418
      %v2609 = vunpack.c.l.b16 %v2428
      %v2610 = vunpack.c.l.b16 %v2442
      %v2611 = vunpack.c.l.b16 %v2452
      %v2612 = vunpack.c.l.b16 %v2466
      %v2613 = vunpack.c.l.b16 %v2476
      %v2614 = vunpack.c.l.b16 %v2490
      %v2615 = vunpack.c.l.b16 %v2500
      %v2616 = vunpack.c.l.b16 %v2514
      %v2617 = vunpack.c.l.b16 %v2524
      %v2618 = vunpack.c.l.b16 %v2538
      %v2619 = vunpack.c.l.b16 %v2548
      %v2620 = vunpack.c.l.b16 %v2562
      %v2621 = vunpack.c.l.b16 %v2572
      %v2622 = vpack.c.b16 %v2591, %v2590
      %v2623 = vpack.c.b16 %v2593, %v2592
      %v2624 = vpack.c.b16 %v2595, %v2594
      %v2625 = vpack.c.b16 %v2597, %v2596
      %v2626 = vpack.c.b16 %v2599, %v2598
      %v2627 = vpack.c.b16 %v2601, %v2600
      %v2628 = vpack.c.b16 %v2603, %v2602
      %v2629 = vpack.c.b16 %v2605, %v2604
      %v2630 = vpack.c.b16 %v2607, %v2606
      %v2631 = vpack.c.b16 %v2609, %v2608
      %v2632 = vpack.c.b16 %v2611, %v2610
      %v2633 = vpack.c.b16 %v2613, %v2612
      %v2634 = vpack.c.b16 %v2615, %v2614
      %v2635 = vpack.c.b16 %v2617, %v2616
      %v2636 = vpack.c.b16 %v2619, %v2618
      %v2637 = vpack.c.b16 %v2621, %v2620
      %v2670 = vunpack.c.l.b16 %v2574
      %v2671 = vunpack.c.l.b16 %v2575
      %v2672 = vunpack.c.l.b16 %v2576
      %v2673 = vunpack.c.l.b16 %v2577
      %v2674 = vunpack.c.l.b16 %v2578
      %v2675 = vunpack.c.l.b16 %v2579
      %v2676 = vunpack.c.l.b16 %v2580
      %v2677 = vunpack.c.l.b16 %v2581
      %v2678 = vunpack.c.l.b16 %v2582
      %v2679 = vunpack.c.l.b16 %v2583
      %v2680 = vunpack.c.l.b16 %v2584
      %v2681 = vunpack.c.l.b16 %v2585
      %v2682 = vunpack.c.l.b16 %v2586
      %v2683 = vunpack.c.l.b16 %v2587
      %v2684 = vunpack.c.l.b16 %v2588
      %v2685 = vunpack.c.l.b16 %v2589
      %v2686 = vpack.c.b16 %v2671, %v2670
      %v2687 = vpack.c.b16 %v2673, %v2672
      %v2688 = vpack.c.b16 %v2675, %v2674
      %v2689 = vpack.c.b16 %v2677, %v2676
      %v2690 = vpack.c.b16 %v2679, %v2678
      %v2691 = vpack.c.b16 %v2681, %v2680
      %v2692 = vpack.c.b16 %v2683, %v2682
      %v2693 = vpack.c.b16 %v2685, %v2684
      %2702 = vmatprep.subr.bf16.mxu0 0
      %2703 = vmatpush1.bf16.msra.mxu0 %v2686
      %2704 = vmatprep.subr.bf16.mxu0 0
      %2705 = vmatpush1.bf16.msra.mxu0 %v2687
      %2706 = vmatprep.subr.bf16.mxu0 0
      %2707 = vmatpush1.bf16.msra.mxu0 %v2688
      %2708 = vmatprep.subr.bf16.mxu0 0
      %2709 = vmatpush1.bf16.msra.mxu0 %v2689
      %2710 = vmatprep.subr.bf16.mxu0 0
      %2711 = vmatpush1.bf16.msra.mxu0 %v2690
      %2712 = vmatprep.subr.bf16.mxu0 0
      %2713 = vmatpush1.bf16.msra.mxu0 %v2691
      %2714 = vmatprep.subr.bf16.mxu0 0
      %2715 = vmatpush1.bf16.msra.mxu0 %v2692
      %2716 = vmatprep.subr.bf16.mxu0 0
      %2717 = vmatpush1.bf16.msra.mxu0 %v2693
      %2718 = vmatprep.subr.bf16.mxu0 0
      %2719 = vmatpush1.bf16.msra.mxu0 0
      %2720 = vmatprep.subr.bf16.mxu0 0
      %2721 = vmatpush1.bf16.msra.mxu0 0
      %2722 = vmatprep.subr.bf16.mxu0 0
      %2723 = vmatpush1.bf16.msra.mxu0 0
      %2724 = vmatprep.subr.bf16.mxu0 0
      %2725 = vmatpush1.bf16.msra.mxu0 0
      %2726 = vmatprep.subr.bf16.mxu0 0
      %2727 = vmatpush1.bf16.msra.mxu0 0
      %2728 = vmatprep.subr.bf16.mxu0 0
      %2729 = vmatpush1.bf16.msra.mxu0 0
      %2730 = vmatprep.subr.bf16.mxu0 0
      %2731 = vmatpush1.bf16.msra.mxu0 0
      %2732 = vmatprep.subr.bf16.mxu0 0
      %2733 = vmatpush1.bf16.msra.mxu0 0
      %2734 = vmatprep.mubr.bf16.mxu0 0
      %2735 = vmatmul.mubr.bf16.gmra.mrb[0].mxu0 %v2622
      %v2736 = vpop.f32.mrb[0].mxu0
      %v2737 = vadd.f32 0.0, %v2736
      %v2738 = vpop.f32.mrb[0].mxu0
      %v2739 = vpop.f32.mrb[0].mxu0
      %v2740 = vadd.f32 0.0, %v2739
      %v2741 = vpop.f32.mrb[0].mxu0
      %2742 = vmatprep.mubr.bf16.mxu0 0
      %2743 = vmatmul.mubr.bf16.gmra.mrb[0].mxu0 %v2623
      %v2744 = vpop.f32.mrb[0].mxu0
      %v2745 = vadd.f32 0.0, %v2744
      %v2746 = vpop.f32.mrb[0].mxu0
      %v2747 = vpop.f32.mrb[0].mxu0
      %v2748 = vadd.f32 0.0, %v2747
      %v2749 = vpop.f32.mrb[0].mxu0
      %2750 = vmatprep.mubr.bf16.mxu0 0
      %2751 = vmatmul.mubr.bf16.gmra.mrb[0].mxu0 %v2624
      %v2752 = vpop.f32.mrb[0].mxu0
      %v2753 = vadd.f32 0.0, %v2752
      %v2754 = vpop.f32.mrb[0].mxu0
      %v2755 = vpop.f32.mrb[0].mxu0
      %v2756 = vadd.f32 0.0, %v2755
      %v2757 = vpop.f32.mrb[0].mxu0
      %2758 = vmatprep.mubr.bf16.mxu0 0
      %2759 = vmatmul.mubr.bf16.gmra.mrb[0].mxu0 %v2625
      %v2760 = vpop.f32.mrb[0].mxu0
      %v2761 = vadd.f32 0.0, %v2760
      %v2762 = vpop.f32.mrb[0].mxu0
      %v2763 = vpop.f32.mrb[0].mxu0
      %v2764 = vadd.f32 0.0, %v2763
      %v2765 = vpop.f32.mrb[0].mxu0
      %2766 = vmatprep.mubr.bf16.mxu0 0
      %2767 = vmatmul.mubr.bf16.gmra.mrb[0].mxu0 %v2626
      %v2768 = vpop.f32.mrb[0].mxu0
      %v2769 = vadd.f32 0.0, %v2768
      %v2770 = vpop.f32.mrb[0].mxu0
      %v2771 = vpop.f32.mrb[0].mxu0
      %v2772 = vadd.f32 0.0, %v2771
      %v2773 = vpop.f32.mrb[0].mxu0
      %2774 = vmatprep.mubr.bf16.mxu0 0
      %2775 = vmatmul.mubr.bf16.gmra.mrb[0].mxu0 %v2627
      %v2776 = vpop.f32.mrb[0].mxu0
      %v2777 = vadd.f32 0.0, %v2776
      %v2778 = vpop.f32.mrb[0].mxu0
      %v2779 = vpop.f32.mrb[0].mxu0
      %v2780 = vadd.f32 0.0, %v2779
      %v2781 = vpop.f32.mrb[0].mxu0
      %2782 = vmatprep.mubr.bf16.mxu0 0
      %2783 = vmatmul.mubr.bf16.gmra.mrb[0].mxu0 %v2628
      %v2784 = vpop.f32.mrb[0].mxu0
      %v2785 = vadd.f32 0.0, %v2784
      %v2786 = vpop.f32.mrb[0].mxu0
      %v2787 = vpop.f32.mrb[0].mxu0
      %v2788 = vadd.f32 0.0, %v2787
      %v2789 = vpop.f32.mrb[0].mxu0
      %2790 = vmatprep.mubr.bf16.mxu0 0
      %2791 = vmatmul.mubr.bf16.gmra.mrb[0].mxu0 %v2629
      %v2792 = vpop.f32.mrb[0].mxu0
      %v2793 = vadd.f32 0.0, %v2792
      %v2794 = vpop.f32.mrb[0].mxu0
      %v2795 = vpop.f32.mrb[0].mxu0
      %v2796 = vadd.f32 0.0, %v2795
      %v2797 = vpop.f32.mrb[0].mxu0
      %2798 = vmatprep.mubr.bf16.mxu0 0
      %2799 = vmatmul.mubr.bf16.gmra.mrb[0].mxu0 %v2630
      %v2800 = vpop.f32.mrb[0].mxu0
      %v2801 = vadd.f32 0.0, %v2800
      %v2802 = vpop.f32.mrb[0].mxu0
      %v2803 = vpop.f32.mrb[0].mxu0
      %v2804 = vadd.f32 0.0, %v2803
      %v2805 = vpop.f32.mrb[0].mxu0
      %2806 = vmatprep.mubr.bf16.mxu0 0
      %2807 = vmatmul.mubr.bf16.gmra.mrb[0].mxu0 %v2631
      %v2808 = vpop.f32.mrb[0].mxu0
      %v2809 = vadd.f32 0.0, %v2808
      %v2810 = vpop.f32.mrb[0].mxu0
      %v2811 = vpop.f32.mrb[0].mxu0
      %v2812 = vadd.f32 0.0, %v2811
      %v2813 = vpop.f32.mrb[0].mxu0
      %2814 = vmatprep.mubr.bf16.mxu0 0
      %2815 = vmatmul.mubr.bf16.gmra.mrb[0].mxu0 %v2632
      %v2816 = vpop.f32.mrb[0].mxu0
      %v2817 = vadd.f32 0.0, %v2816
      %v2818 = vpop.f32.mrb[0].mxu0
      %v2819 = vpop.f32.mrb[0].mxu0
      %v2820 = vadd.f32 0.0, %v2819
      %v2821 = vpop.f32.mrb[0].mxu0
      %2822 = vmatprep.mubr.bf16.mxu0 0
      %2823 = vmatmul.mubr.bf16.gmra.mrb[0].mxu0 %v2633
      %v2824 = vpop.f32.mrb[0].mxu0
      %v2825 = vadd.f32 0.0, %v2824
      %v2826 = vpop.f32.mrb[0].mxu0
      %v2827 = vpop.f32.mrb[0].mxu0
      %v2828 = vadd.f32 0.0, %v2827
      %v2829 = vpop.f32.mrb[0].mxu0
      %2830 = vmatprep.mubr.bf16.mxu0 0
      %2831 = vmatmul.mubr.bf16.gmra.mrb[0].mxu0 %v2634
      %v2832 = vpop.f32.mrb[0].mxu0
      %v2833 = vadd.f32 0.0, %v2832
      %v2834 = vpop.f32.mrb[0].mxu0
      %v2835 = vpop.f32.mrb[0].mxu0
      %v2836 = vadd.f32 0.0, %v2835
      %v2837 = vpop.f32.mrb[0].mxu0
      %2838 = vmatprep.mubr.bf16.mxu0 0
      %2839 = vmatmul.mubr.bf16.gmra.mrb[0].mxu0 %v2635
      %v2840 = vpop.f32.mrb[0].mxu0
      %v2841 = vadd.f32 0.0, %v2840
      %v2842 = vpop.f32.mrb[0].mxu0
      %v2843 = vpop.f32.mrb[0].mxu0
      %v2844 = vadd.f32 0.0, %v2843
      %v2845 = vpop.f32.mrb[0].mxu0
      %2846 = vmatprep.mubr.bf16.mxu0 0
      %2847 = vmatmul.mubr.bf16.gmra.mrb[0].mxu0 %v2636
      %v2848 = vpop.f32.mrb[0].mxu0
      %v2849 = vadd.f32 0.0, %v2848
      %v2850 = vpop.f32.mrb[0].mxu0
      %v2851 = vpop.f32.mrb[0].mxu0
      %v2852 = vadd.f32 0.0, %v2851
      %v2853 = vpop.f32.mrb[0].mxu0
      %2854 = vmatprep.mubr.bf16.mxu0 0
      %2855 = vmatmul.mubr.bf16.gmra.mrb[0].mxu0 %v2637
      %v2856 = vpop.f32.mrb[0].mxu0
      %v2857 = vadd.f32 0.0, %v2856
      %v2858 = vpop.f32.mrb[0].mxu0
      %v2859 = vpop.f32.mrb[0].mxu0
      %v2860 = vadd.f32 0.0, %v2859
      %v2861 = vpop.f32.mrb[0].mxu0
      %2862 = vdwg.mxu0
      %v2863 = vadd.f32 %v2109, %v2737
      %v2864 = vadd.f32 %v2110, %v2740
      %v2865 = vadd.f32 %v2111, %v2745
      %v2866 = vadd.f32 %v2112, %v2748
      %v2867 = vadd.f32 %v2113, %v2753
      %v2868 = vadd.f32 %v2114, %v2756
      %v2869 = vadd.f32 %v2115, %v2761
      %v2870 = vadd.f32 %v2116, %v2764
      %v2871 = vadd.f32 %v2117, %v2769
      %v2872 = vadd.f32 %v2118, %v2772
      %v2873 = vadd.f32 %v2119, %v2777
      %v2874 = vadd.f32 %v2120, %v2780
      %v2875 = vadd.f32 %v2121, %v2785
      %v2876 = vadd.f32 %v2122, %v2788
      %v2877 = vadd.f32 %v2123, %v2793
      %v2878 = vadd.f32 %v2124, %v2796
      %v2879 = vadd.f32 %v2125, %v2801
      %v2880 = vadd.f32 %v2126, %v2804
      %v2881 = vadd.f32 %v2127, %v2809
      %v2882 = vadd.f32 %v2128, %v2812
      %v2883 = vadd.f32 %v2129, %v2817
      %v2884 = vadd.f32 %v2130, %v2820
      %v2885 = vadd.f32 %v2131, %v2825
      %v2886 = vadd.f32 %v2132, %v2828
      %v2887 = vadd.f32 %v2133, %v2833
      %v2888 = vadd.f32 %v2134, %v2836
      %v2889 = vadd.f32 %v2135, %v2841
      %v2890 = vadd.f32 %v2136, %v2844
      %v2891 = vadd.f32 %v2137, %v2849
      %v2892 = vadd.f32 %v2138, %v2852
      %v2893 = vadd.f32 %v2139, %v2857
      %v2894 = vadd.f32 %v2140, %v2860
      %v2895 = vld [vmem:[%s1754] sm:$0xe]
      %v2896 = vld [vmem:[%s1754 + $0xc] sm:$0xe]
      %v2897 = vld [vmem:[%s1754 + $0x18] sm:$0xe]
      %v2898 = vld [vmem:[%s1754 + $0x24] sm:$0xe]
      %v2899 = vld [vmem:[%s1754 + $0x30] sm:$0xe]
      %v2900 = vld [vmem:[%s1754 + $0x3c] sm:$0xe]
      %v2901 = vld [vmem:[%s1754 + $0x48] sm:$0xe]
      %v2902 = vld [vmem:[%s1754 + $0x54] sm:$0xe]
      %v2903 = vld [vmem:[%s1754 + $0x60] sm:$0xe]
      %v2904 = vld [vmem:[%s1754 + $0x6c] sm:$0xe]
      %v2905 = vld [vmem:[%s1754 + $0x78] sm:$0xe]
      %v2906 = vld [vmem:[%s1754 + $0x84] sm:$0xe]
      %v2907 = vld [vmem:[%s1754 + $0x90] sm:$0xe]
      %v2908 = vld [vmem:[%s1754 + $0x9c] sm:$0xe]
      %v2909 = vld [vmem:[%s1754 + $0xa8] sm:$0xe]
      %v2910 = vld [vmem:[%s1754 + $0xb4] sm:$0xe]
      %v2959 = vrot.slane %v2895, 5
      %v2960 = vrot.slane %v2959, 4
      %v2961 = vrot.slane %v2142, 5
      %v2962 = vsel %vm1319, %v2960, %v2961
      %v2963 = vrot.slane %v2961, 4
      %v2964 = vrot.slane %v2143, 5
      %v2965 = vsel %vm1319, %v2963, %v2964
      %v2966 = vrot.slane %v2896, 5
      %v2967 = vrot.slane %v2966, 4
      %v2968 = vrot.slane %v2145, 5
      %v2969 = vsel %vm1319, %v2967, %v2968
      %v2970 = vrot.slane %v2968, 4
      %v2971 = vrot.slane %v2146, 5
      %v2972 = vsel %vm1319, %v2970, %v2971
      %v2973 = vrot.slane %v2897, 5
      %v2974 = vrot.slane %v2973, 4
      %v2975 = vrot.slane %v2148, 5
      %v2976 = vsel %vm1319, %v2974, %v2975
      %v2977 = vrot.slane %v2975, 4
      %v2978 = vrot.slane %v2149, 5
      %v2979 = vsel %vm1319, %v2977, %v2978
      %v2980 = vrot.slane %v2898, 5
      %v2981 = vrot.slane %v2980, 4
      %v2982 = vrot.slane %v2151, 5
      %v2983 = vsel %vm1319, %v2981, %v2982
      %v2984 = vrot.slane %v2982, 4
      %v2985 = vrot.slane %v2152, 5
      %v2986 = vsel %vm1319, %v2984, %v2985
      %v2987 = vrot.slane %v2899, 5
      %v2988 = vrot.slane %v2987, 4
      %v2989 = vrot.slane %v2154, 5
      %v2990 = vsel %vm1319, %v2988, %v2989
      %v2991 = vrot.slane %v2989, 4
      %v2992 = vrot.slane %v2155, 5
      %v2993 = vsel %vm1319, %v2991, %v2992
      %v2994 = vrot.slane %v2900, 5
      %v2995 = vrot.slane %v2994, 4
      %v2996 = vrot.slane %v2157, 5
      %v2997 = vsel %vm1319, %v2995, %v2996
      %v2998 = vrot.slane %v2996, 4
      %v2999 = vrot.slane %v2158, 5
      %v3000 = vsel %vm1319, %v2998, %v2999
      %v3001 = vrot.slane %v2901, 5
      %v3002 = vrot.slane %v3001, 4
      %v3003 = vrot.slane %v2160, 5
      %v3004 = vsel %vm1319, %v3002, %v3003
      %v3005 = vrot.slane %v3003, 4
      %v3006 = vrot.slane %v2161, 5
      %v3007 = vsel %vm1319, %v3005, %v3006
      %v3008 = vrot.slane %v2902, 5
      %v3009 = vrot.slane %v3008, 4
      %v3010 = vrot.slane %v2163, 5
      %v3011 = vsel %vm1319, %v3009, %v3010
      %v3012 = vrot.slane %v3010, 4
      %v3013 = vrot.slane %v2164, 5
      %v3014 = vsel %vm1319, %v3012, %v3013
      %v3015 = vrot.slane %v2903, 5
      %v3016 = vrot.slane %v3015, 4
      %v3017 = vrot.slane %v2166, 5
      %v3018 = vsel %vm1319, %v3016, %v3017
      %v3019 = vrot.slane %v3017, 4
      %v3020 = vrot.slane %v2167, 5
      %v3021 = vsel %vm1319, %v3019, %v3020
      %v3022 = vrot.slane %v2904, 5
      %v3023 = vrot.slane %v3022, 4
      %v3024 = vrot.slane %v2169, 5
      %v3025 = vsel %vm1319, %v3023, %v3024
      %v3026 = vrot.slane %v3024, 4
      %v3027 = vrot.slane %v2170, 5
      %v3028 = vsel %vm1319, %v3026, %v3027
      %v3029 = vrot.slane %v2905, 5
      %v3030 = vrot.slane %v3029, 4
      %v3031 = vrot.slane %v2172, 5
      %v3032 = vsel %vm1319, %v3030, %v3031
      %v3033 = vrot.slane %v3031, 4
      %v3034 = vrot.slane %v2173, 5
      %v3035 = vsel %vm1319, %v3033, %v3034
      %v3036 = vrot.slane %v2906, 5
      %v3037 = vrot.slane %v3036, 4
      %v3038 = vrot.slane %v2175, 5
      %v3039 = vsel %vm1319, %v3037, %v3038
      %v3040 = vrot.slane %v3038, 4
      %v3041 = vrot.slane %v2176, 5
      %v3042 = vsel %vm1319, %v3040, %v3041
      %v3043 = vrot.slane %v2907, 5
      %v3044 = vrot.slane %v3043, 4
      %v3045 = vrot.slane %v2178, 5
      %v3046 = vsel %vm1319, %v3044, %v3045
      %v3047 = vrot.slane %v3045, 4
      %v3048 = vrot.slane %v2179, 5
      %v3049 = vsel %vm1319, %v3047, %v3048
      %v3050 = vrot.slane %v2908, 5
      %v3051 = vrot.slane %v3050, 4
      %v3052 = vrot.slane %v2181, 5
      %v3053 = vsel %vm1319, %v3051, %v3052
      %v3054 = vrot.slane %v3052, 4
      %v3055 = vrot.slane %v2182, 5
      %v3056 = vsel %vm1319, %v3054, %v3055
      %v3057 = vrot.slane %v2909, 5
      %v3058 = vrot.slane %v3057, 4
      %v3059 = vrot.slane %v2184, 5
      %v3060 = vsel %vm1319, %v3058, %v3059
      %v3061 = vrot.slane %v3059, 4
      %v3062 = vrot.slane %v2185, 5
      %v3063 = vsel %vm1319, %v3061, %v3062
      %v3064 = vrot.slane %v2910, 5
      %v3065 = vrot.slane %v3064, 4
      %v3066 = vrot.slane %v2187, 5
      %v3067 = vsel %vm1319, %v3065, %v3066
      %v3068 = vrot.slane %v3066, 4
      %v3069 = vrot.slane %v2188, 5
      %v3070 = vsel %vm1319, %v3068, %v3069
      %s3071 = scalar_lea.vmem %s210, 320
      %v3072 = vld [vmem:[%s3071] sm:$0xf]
      %v3073 = vld [vmem:[%s3071 + $0x4] sm:$0xf]
      %v3074 = vld [vmem:[%s3071 + $0x8] sm:$0xf]
      %v3075 = vld [vmem:[%s3071 + $0xc] sm:$0xf]
      %v3076 = vld [vmem:[%s3071 + $0x10] sm:$0xf]
      %v3077 = vld [vmem:[%s3071 + $0x14] sm:$0xf]
      %v3078 = vld [vmem:[%s3071 + $0x18] sm:$0xf]
      %v3079 = vld [vmem:[%s3071 + $0x1c] sm:$0xf]
      %v3080 = vld [vmem:[%s3071 + $0x20] sm:$0xf]
      %v3081 = vld [vmem:[%s3071 + $0x24] sm:$0xf]
      %v3082 = vld [vmem:[%s3071 + $0x28] sm:$0xf]
      %v3083 = vld [vmem:[%s3071 + $0x2c] sm:$0xf]
      %v3084 = vld [vmem:[%s3071 + $0x30] sm:$0xf]
      %v3085 = vld [vmem:[%s3071 + $0x34] sm:$0xf]
      %v3086 = vld [vmem:[%s3071 + $0x38] sm:$0xf]
      %v3087 = vld [vmem:[%s3071 + $0x3c] sm:$0xf]
      %v3088 = vunpack.c.l.b16 %v2962
      %v3089 = vunpack.c.l.b16 %v2965
      %v3090 = vunpack.c.l.b16 %v2969
      %v3091 = vunpack.c.l.b16 %v2972
      %v3092 = vunpack.c.l.b16 %v2976
      %v3093 = vunpack.c.l.b16 %v2979
      %v3094 = vunpack.c.l.b16 %v2983
      %v3095 = vunpack.c.l.b16 %v2986
      %v3096 = vunpack.c.l.b16 %v2990
      %v3097 = vunpack.c.l.b16 %v2993
      %v3098 = vunpack.c.l.b16 %v2997
      %v3099 = vunpack.c.l.b16 %v3000
      %v3100 = vunpack.c.l.b16 %v3004
      %v3101 = vunpack.c.l.b16 %v3007
      %v3102 = vunpack.c.l.b16 %v3011
      %v3103 = vunpack.c.l.b16 %v3014
      %v3104 = vunpack.c.l.b16 %v3018
      %v3105 = vunpack.c.l.b16 %v3021
      %v3106 = vunpack.c.l.b16 %v3025
      %v3107 = vunpack.c.l.b16 %v3028
      %v3108 = vunpack.c.l.b16 %v3032
      %v3109 = vunpack.c.l.b16 %v3035
      %v3110 = vunpack.c.l.b16 %v3039
      %v3111 = vunpack.c.l.b16 %v3042
      %v3112 = vunpack.c.l.b16 %v3046
      %v3113 = vunpack.c.l.b16 %v3049
      %v3114 = vunpack.c.l.b16 %v3053
      %v3115 = vunpack.c.l.b16 %v3056
      %v3116 = vunpack.c.l.b16 %v3060
      %v3117 = vunpack.c.l.b16 %v3063
      %v3118 = vunpack.c.l.b16 %v3067
      %v3119 = vunpack.c.l.b16 %v3070
      %v3120 = vpack.c.b16 %v3089, %v3088
      %v3121 = vpack.c.b16 %v3091, %v3090
      %v3122 = vpack.c.b16 %v3093, %v3092
      %v3123 = vpack.c.b16 %v3095, %v3094
      %v3124 = vpack.c.b16 %v3097, %v3096
      %v3125 = vpack.c.b16 %v3099, %v3098
      %v3126 = vpack.c.b16 %v3101, %v3100
      %v3127 = vpack.c.b16 %v3103, %v3102
      %v3128 = vpack.c.b16 %v3105, %v3104
      %v3129 = vpack.c.b16 %v3107, %v3106
      %v3130 = vpack.c.b16 %v3109, %v3108
      %v3131 = vpack.c.b16 %v3111, %v3110
      %v3132 = vpack.c.b16 %v3113, %v3112
      %v3133 = vpack.c.b16 %v3115, %v3114
      %v3134 = vpack.c.b16 %v3117, %v3116
      %v3135 = vpack.c.b16 %v3119, %v3118
      %v3168 = vunpack.c.l.b16 %v3072
      %v3169 = vunpack.c.l.b16 %v3073
      %v3170 = vunpack.c.l.b16 %v3074
      %v3171 = vunpack.c.l.b16 %v3075
      %v3172 = vunpack.c.l.b16 %v3076
      %v3173 = vunpack.c.l.b16 %v3077
      %v3174 = vunpack.c.l.b16 %v3078
      %v3175 = vunpack.c.l.b16 %v3079
      %v3176 = vunpack.c.l.b16 %v3080
      %v3177 = vunpack.c.l.b16 %v3081
      %v3178 = vunpack.c.l.b16 %v3082
      %v3179 = vunpack.c.l.b16 %v3083
      %v3180 = vunpack.c.l.b16 %v3084
      %v3181 = vunpack.c.l.b16 %v3085
      %v3182 = vunpack.c.l.b16 %v3086
      %v3183 = vunpack.c.l.b16 %v3087
      %v3184 = vpack.c.b16 %v3169, %v3168
      %v3185 = vpack.c.b16 %v3171, %v3170
      %v3186 = vpack.c.b16 %v3173, %v3172
      %v3187 = vpack.c.b16 %v3175, %v3174
      %v3188 = vpack.c.b16 %v3177, %v3176
      %v3189 = vpack.c.b16 %v3179, %v3178
      %v3190 = vpack.c.b16 %v3181, %v3180
      %v3191 = vpack.c.b16 %v3183, %v3182
      %3200 = vmatprep.subr.bf16.mxu0 0
      %3201 = vmatpush1.bf16.msra.mxu0 %v3184
      %3202 = vmatprep.subr.bf16.mxu0 0
      %3203 = vmatpush1.bf16.msra.mxu0 %v3185
      %3204 = vmatprep.subr.bf16.mxu0 0
      %3205 = vmatpush1.bf16.msra.mxu0 %v3186
      %3206 = vmatprep.subr.bf16.mxu0 0
      %3207 = vmatpush1.bf16.msra.mxu0 %v3187
      %3208 = vmatprep.subr.bf16.mxu0 0
      %3209 = vmatpush1.bf16.msra.mxu0 %v3188
      %3210 = vmatprep.subr.bf16.mxu0 0
      %3211 = vmatpush1.bf16.msra.mxu0 %v3189
      %3212 = vmatprep.subr.bf16.mxu0 0
      %3213 = vmatpush1.bf16.msra.mxu0 %v3190
      %3214 = vmatprep.subr.bf16.mxu0 0
      %3215 = vmatpush1.bf16.msra.mxu0 %v3191
      %3216 = vmatprep.subr.bf16.mxu0 0
      %3217 = vmatpush1.bf16.msra.mxu0 0
      %3218 = vmatprep.subr.bf16.mxu0 0
      %3219 = vmatpush1.bf16.msra.mxu0 0
      %3220 = vmatprep.subr.bf16.mxu0 0
      %3221 = vmatpush1.bf16.msra.mxu0 0
      %3222 = vmatprep.subr.bf16.mxu0 0
      %3223 = vmatpush1.bf16.msra.mxu0 0
      %3224 = vmatprep.subr.bf16.mxu0 0
      %3225 = vmatpush1.bf16.msra.mxu0 0
      %3226 = vmatprep.subr.bf16.mxu0 0
      %3227 = vmatpush1.bf16.msra.mxu0 0
      %3228 = vmatprep.subr.bf16.mxu0 0
      %3229 = vmatpush1.bf16.msra.mxu0 0
      %3230 = vmatprep.subr.bf16.mxu0 0
      %3231 = vmatpush1.bf16.msra.mxu0 0
      %3232 = vmatprep.mubr.bf16.mxu0 0
      %3233 = vmatmul.mubr.bf16.gmra.mrb[0].mxu0 %v3120
      %v3234 = vpop.f32.mrb[0].mxu0
      %v3235 = vadd.f32 0.0, %v3234
      %v3236 = vpop.f32.mrb[0].mxu0
      %v3237 = vpop.f32.mrb[0].mxu0
      %v3238 = vadd.f32 0.0, %v3237
      %v3239 = vpop.f32.mrb[0].mxu0
      %3240 = vmatprep.mubr.bf16.mxu0 0
      %3241 = vmatmul.mubr.bf16.gmra.mrb[0].mxu0 %v3121
      %v3242 = vpop.f32.mrb[0].mxu0
      %v3243 = vadd.f32 0.0, %v3242
      %v3244 = vpop.f32.mrb[0].mxu0
      %v3245 = vpop.f32.mrb[0].mxu0
      %v3246 = vadd.f32 0.0, %v3245
      %v3247 = vpop.f32.mrb[0].mxu0
      %3248 = vmatprep.mubr.bf16.mxu0 0
      %3249 = vmatmul.mubr.bf16.gmra.mrb[0].mxu0 %v3122
      %v3250 = vpop.f32.mrb[0].mxu0
      %v3251 = vadd.f32 0.0, %v3250
      %v3252 = vpop.f32.mrb[0].mxu0
      %v3253 = vpop.f32.mrb[0].mxu0
      %v3254 = vadd.f32 0.0, %v3253
      %v3255 = vpop.f32.mrb[0].mxu0
      %3256 = vmatprep.mubr.bf16.mxu0 0
      %3257 = vmatmul.mubr.bf16.gmra.mrb[0].mxu0 %v3123
      %v3258 = vpop.f32.mrb[0].mxu0
      %v3259 = vadd.f32 0.0, %v3258
      %v3260 = vpop.f32.mrb[0].mxu0
      %v3261 = vpop.f32.mrb[0].mxu0
      %v3262 = vadd.f32 0.0, %v3261
      %v3263 = vpop.f32.mrb[0].mxu0
      %3264 = vmatprep.mubr.bf16.mxu0 0
      %3265 = vmatmul.mubr.bf16.gmra.mrb[0].mxu0 %v3124
      %v3266 = vpop.f32.mrb[0].mxu0
      %v3267 = vadd.f32 0.0, %v3266
      %v3268 = vpop.f32.mrb[0].mxu0
      %v3269 = vpop.f32.mrb[0].mxu0
      %v3270 = vadd.f32 0.0, %v3269
      %v3271 = vpop.f32.mrb[0].mxu0
      %3272 = vmatprep.mubr.bf16.mxu0 0
      %3273 = vmatmul.mubr.bf16.gmra.mrb[0].mxu0 %v3125
      %v3274 = vpop.f32.mrb[0].mxu0
      %v3275 = vadd.f32 0.0, %v3274
      %v3276 = vpop.f32.mrb[0].mxu0
      %v3277 = vpop.f32.mrb[0].mxu0
      %v3278 = vadd.f32 0.0, %v3277
      %v3279 = vpop.f32.mrb[0].mxu0
      %3280 = vmatprep.mubr.bf16.mxu0 0
      %3281 = vmatmul.mubr.bf16.gmra.mrb[0].mxu0 %v3126
      %v3282 = vpop.f32.mrb[0].mxu0
      %v3283 = vadd.f32 0.0, %v3282
      %v3284 = vpop.f32.mrb[0].mxu0
      %v3285 = vpop.f32.mrb[0].mxu0
      %v3286 = vadd.f32 0.0, %v3285
      %v3287 = vpop.f32.mrb[0].mxu0
      %3288 = vmatprep.mubr.bf16.mxu0 0
      %3289 = vmatmul.mubr.bf16.gmra.mrb[0].mxu0 %v3127
      %v3290 = vpop.f32.mrb[0].mxu0
      %v3291 = vadd.f32 0.0, %v3290
      %v3292 = vpop.f32.mrb[0].mxu0
      %v3293 = vpop.f32.mrb[0].mxu0
      %v3294 = vadd.f32 0.0, %v3293
      %v3295 = vpop.f32.mrb[0].mxu0
      %3296 = vmatprep.mubr.bf16.mxu0 0
      %3297 = vmatmul.mubr.bf16.gmra.mrb[0].mxu0 %v3128
      %v3298 = vpop.f32.mrb[0].mxu0
      %v3299 = vadd.f32 0.0, %v3298
      %v3300 = vpop.f32.mrb[0].mxu0
      %v3301 = vpop.f32.mrb[0].mxu0
      %v3302 = vadd.f32 0.0, %v3301
      %v3303 = vpop.f32.mrb[0].mxu0
      %3304 = vmatprep.mubr.bf16.mxu0 0
      %3305 = vmatmul.mubr.bf16.gmra.mrb[0].mxu0 %v3129
      %v3306 = vpop.f32.mrb[0].mxu0
      %v3307 = vadd.f32 0.0, %v3306
      %v3308 = vpop.f32.mrb[0].mxu0
      %v3309 = vpop.f32.mrb[0].mxu0
      %v3310 = vadd.f32 0.0, %v3309
      %v3311 = vpop.f32.mrb[0].mxu0
      %3312 = vmatprep.mubr.bf16.mxu0 0
      %3313 = vmatmul.mubr.bf16.gmra.mrb[0].mxu0 %v3130
      %v3314 = vpop.f32.mrb[0].mxu0
      %v3315 = vadd.f32 0.0, %v3314
      %v3316 = vpop.f32.mrb[0].mxu0
      %v3317 = vpop.f32.mrb[0].mxu0
      %v3318 = vadd.f32 0.0, %v3317
      %v3319 = vpop.f32.mrb[0].mxu0
      %3320 = vmatprep.mubr.bf16.mxu0 0
      %3321 = vmatmul.mubr.bf16.gmra.mrb[0].mxu0 %v3131
      %v3322 = vpop.f32.mrb[0].mxu0
      %v3323 = vadd.f32 0.0, %v3322
      %v3324 = vpop.f32.mrb[0].mxu0
      %v3325 = vpop.f32.mrb[0].mxu0
      %v3326 = vadd.f32 0.0, %v3325
      %v3327 = vpop.f32.mrb[0].mxu0
      %3328 = vmatprep.mubr.bf16.mxu0 0
      %3329 = vmatmul.mubr.bf16.gmra.mrb[0].mxu0 %v3132
      %v3330 = vpop.f32.mrb[0].mxu0
      %v3331 = vadd.f32 0.0, %v3330
      %v3332 = vpop.f32.mrb[0].mxu0
      %v3333 = vpop.f32.mrb[0].mxu0
      %v3334 = vadd.f32 0.0, %v3333
      %v3335 = vpop.f32.mrb[0].mxu0
      %3336 = vmatprep.mubr.bf16.mxu0 0
      %3337 = vmatmul.mubr.bf16.gmra.mrb[0].mxu0 %v3133
      %v3338 = vpop.f32.mrb[0].mxu0
      %v3339 = vadd.f32 0.0, %v3338
      %v3340 = vpop.f32.mrb[0].mxu0
      %v3341 = vpop.f32.mrb[0].mxu0
      %v3342 = vadd.f32 0.0, %v3341
      %v3343 = vpop.f32.mrb[0].mxu0
      %3344 = vmatprep.mubr.bf16.mxu0 0
      %3345 = vmatmul.mubr.bf16.gmra.mrb[0].mxu0 %v3134
      %v3346 = vpop.f32.mrb[0].mxu0
      %v3347 = vadd.f32 0.0, %v3346
      %v3348 = vpop.f32.mrb[0].mxu0
      %v3349 = vpop.f32.mrb[0].mxu0
      %v3350 = vadd.f32 0.0, %v3349
      %v3351 = vpop.f32.mrb[0].mxu0
      %3352 = vmatprep.mubr.bf16.mxu0 0
      %3353 = vmatmul.mubr.bf16.gmra.mrb[0].mxu0 %v3135
      %v3354 = vpop.f32.mrb[0].mxu0
      %v3355 = vadd.f32 0.0, %v3354
      %v3356 = vpop.f32.mrb[0].mxu0
      %v3357 = vpop.f32.mrb[0].mxu0
      %v3358 = vadd.f32 0.0, %v3357
      %v3359 = vpop.f32.mrb[0].mxu0
      %3360 = vdwg.mxu0
      %v3361 = vadd.f32 %v2863, %v3235
      %v3362 = vadd.f32 %v2864, %v3238
      %v3363 = vadd.f32 %v2865, %v3243
      %v3364 = vadd.f32 %v2866, %v3246
      %v3365 = vadd.f32 %v2867, %v3251
      %v3366 = vadd.f32 %v2868, %v3254
      %v3367 = vadd.f32 %v2869, %v3259
      %v3368 = vadd.f32 %v2870, %v3262
      %v3369 = vadd.f32 %v2871, %v3267
      %v3370 = vadd.f32 %v2872, %v3270
      %v3371 = vadd.f32 %v2873, %v3275
      %v3372 = vadd.f32 %v2874, %v3278
      %v3373 = vadd.f32 %v2875, %v3283
      %v3374 = vadd.f32 %v2876, %v3286
      %v3375 = vadd.f32 %v2877, %v3291
      %v3376 = vadd.f32 %v2878, %v3294
      %v3377 = vadd.f32 %v2879, %v3299
      %v3378 = vadd.f32 %v2880, %v3302
      %v3379 = vadd.f32 %v2881, %v3307
      %v3380 = vadd.f32 %v2882, %v3310
      %v3381 = vadd.f32 %v2883, %v3315
      %v3382 = vadd.f32 %v2884, %v3318
      %v3383 = vadd.f32 %v2885, %v3323
      %v3384 = vadd.f32 %v2886, %v3326
      %v3385 = vadd.f32 %v2887, %v3331
      %v3386 = vadd.f32 %v2888, %v3334
      %v3387 = vadd.f32 %v2889, %v3339
      %v3388 = vadd.f32 %v2890, %v3342
      %v3389 = vadd.f32 %v2891, %v3347
      %v3390 = vadd.f32 %v2892, %v3350
      %v3391 = vadd.f32 %v2893, %v3355
      %v3392 = vadd.f32 %v2894, %v3358
      %s3393 = scalar_lea.vmem %s206, 24
      %v3394 = vld [vmem:[%s3393] sm:$0xf]
      %v3395 = vld [vmem:[%s3393 + $0x4] sm:$0xf]
      %v3396 = vld [vmem:[%s3393 + $0xc] sm:$0xf]
      %v3397 = vld [vmem:[%s3393 + $0x10] sm:$0xf]
      %v3398 = vld [vmem:[%s3393 + $0x18] sm:$0xf]
      %v3399 = vld [vmem:[%s3393 + $0x1c] sm:$0xf]
      %v3400 = vld [vmem:[%s3393 + $0x24] sm:$0xf]
      %v3401 = vld [vmem:[%s3393 + $0x28] sm:$0xf]
      %v3402 = vld [vmem:[%s3393 + $0x30] sm:$0xf]
      %v3403 = vld [vmem:[%s3393 + $0x34] sm:$0xf]
      %v3404 = vld [vmem:[%s3393 + $0x3c] sm:$0xf]
      %v3405 = vld [vmem:[%s3393 + $0x40] sm:$0xf]
      %v3406 = vld [vmem:[%s3393 + $0x48] sm:$0xf]
      %v3407 = vld [vmem:[%s3393 + $0x4c] sm:$0xf]
      %v3408 = vld [vmem:[%s3393 + $0x54] sm:$0xf]
      %v3409 = vld [vmem:[%s3393 + $0x58] sm:$0xf]
      %v3410 = vld [vmem:[%s3393 + $0x60] sm:$0xf]
      %v3411 = vld [vmem:[%s3393 + $0x64] sm:$0xf]
      %v3412 = vld [vmem:[%s3393 + $0x6c] sm:$0xf]
      %v3413 = vld [vmem:[%s3393 + $0x70] sm:$0xf]
      %v3414 = vld [vmem:[%s3393 + $0x78] sm:$0xf]
      %v3415 = vld [vmem:[%s3393 + $0x7c] sm:$0xf]
      %v3416 = vld [vmem:[%s3393 + $0x84] sm:$0xf]
      %v3417 = vld [vmem:[%s3393 + $0x88] sm:$0xf]
      %v3418 = vld [vmem:[%s3393 + $0x90] sm:$0xf]
      %v3419 = vld [vmem:[%s3393 + $0x94] sm:$0xf]
      %v3420 = vld [vmem:[%s3393 + $0x9c] sm:$0xf]
      %v3421 = vld [vmem:[%s3393 + $0xa0] sm:$0xf]
      %v3422 = vld [vmem:[%s3393 + $0xa8] sm:$0xf]
      %v3423 = vld [vmem:[%s3393 + $0xac] sm:$0xf]
      %v3424 = vld [vmem:[%s3393 + $0xb4] sm:$0xf]
      %v3425 = vld [vmem:[%s3393 + $0xb8] sm:$0xf]
      %s3426 = scalar_lea.vmem %s210, 384
      %v3427 = vld [vmem:[%s3426] sm:$0xf]
      %v3428 = vld [vmem:[%s3426 + $0x4] sm:$0xf]
      %v3429 = vld [vmem:[%s3426 + $0x8] sm:$0xf]
      %v3430 = vld [vmem:[%s3426 + $0xc] sm:$0xf]
      %v3431 = vld [vmem:[%s3426 + $0x10] sm:$0xf]
      %v3432 = vld [vmem:[%s3426 + $0x14] sm:$0xf]
      %v3433 = vld [vmem:[%s3426 + $0x18] sm:$0xf]
      %v3434 = vld [vmem:[%s3426 + $0x1c] sm:$0xf]
      %v3435 = vld [vmem:[%s3426 + $0x20] sm:$0xf]
      %v3436 = vld [vmem:[%s3426 + $0x24] sm:$0xf]
      %v3437 = vld [vmem:[%s3426 + $0x28] sm:$0xf]
      %v3438 = vld [vmem:[%s3426 + $0x2c] sm:$0xf]
      %v3439 = vld [vmem:[%s3426 + $0x30] sm:$0xf]
      %v3440 = vld [vmem:[%s3426 + $0x34] sm:$0xf]
      %v3441 = vld [vmem:[%s3426 + $0x38] sm:$0xf]
      %v3442 = vld [vmem:[%s3426 + $0x3c] sm:$0xf]
      %v3475 = vunpack.c.l.b16 %v3394
      %v3476 = vunpack.c.l.b16 %v3395
      %v3477 = vunpack.c.l.b16 %v3396
      %v3478 = vunpack.c.l.b16 %v3397
      %v3479 = vunpack.c.l.b16 %v3398
      %v3480 = vunpack.c.l.b16 %v3399
      %v3481 = vunpack.c.l.b16 %v3400
      %v3482 = vunpack.c.l.b16 %v3401
      %v3483 = vunpack.c.l.b16 %v3402
      %v3484 = vunpack.c.l.b16 %v3403
      %v3485 = vunpack.c.l.b16 %v3404
      %v3486 = vunpack.c.l.b16 %v3405
      %v3487 = vunpack.c.l.b16 %v3406
      %v3488 = vunpack.c.l.b16 %v3407
      %v3489 = vunpack.c.l.b16 %v3408
      %v3490 = vunpack.c.l.b16 %v3409
      %v3491 = vunpack.c.l.b16 %v3410
      %v3492 = vunpack.c.l.b16 %v3411
      %v3493 = vunpack.c.l.b16 %v3412
      %v3494 = vunpack.c.l.b16 %v3413
      %v3495 = vunpack.c.l.b16 %v3414
      %v3496 = vunpack.c.l.b16 %v3415
      %v3497 = vunpack.c.l.b16 %v3416
      %v3498 = vunpack.c.l.b16 %v3417
      %v3499 = vunpack.c.l.b16 %v3418
      %v3500 = vunpack.c.l.b16 %v3419
      %v3501 = vunpack.c.l.b16 %v3420
      %v3502 = vunpack.c.l.b16 %v3421
      %v3503 = vunpack.c.l.b16 %v3422
      %v3504 = vunpack.c.l.b16 %v3423
      %v3505 = vunpack.c.l.b16 %v3424
      %v3506 = vunpack.c.l.b16 %v3425
      %v3507 = vpack.c.b16 %v3476, %v3475
      %v3508 = vpack.c.b16 %v3478, %v3477
      %v3509 = vpack.c.b16 %v3480, %v3479
      %v3510 = vpack.c.b16 %v3482, %v3481
      %v3511 = vpack.c.b16 %v3484, %v3483
      %v3512 = vpack.c.b16 %v3486, %v3485
      %v3513 = vpack.c.b16 %v3488, %v3487
      %v3514 = vpack.c.b16 %v3490, %v3489
      %v3515 = vpack.c.b16 %v3492, %v3491
      %v3516 = vpack.c.b16 %v3494, %v3493
      %v3517 = vpack.c.b16 %v3496, %v3495
      %v3518 = vpack.c.b16 %v3498, %v3497
      %v3519 = vpack.c.b16 %v3500, %v3499
      %v3520 = vpack.c.b16 %v3502, %v3501
      %v3521 = vpack.c.b16 %v3504, %v3503
      %v3522 = vpack.c.b16 %v3506, %v3505
      %v3555 = vunpack.c.l.b16 %v3427
      %v3556 = vunpack.c.l.b16 %v3428
      %v3557 = vunpack.c.l.b16 %v3429
      %v3558 = vunpack.c.l.b16 %v3430
      %v3559 = vunpack.c.l.b16 %v3431
      %v3560 = vunpack.c.l.b16 %v3432
      %v3561 = vunpack.c.l.b16 %v3433
      %v3562 = vunpack.c.l.b16 %v3434
      %v3563 = vunpack.c.l.b16 %v3435
      %v3564 = vunpack.c.l.b16 %v3436
      %v3565 = vunpack.c.l.b16 %v3437
      %v3566 = vunpack.c.l.b16 %v3438
      %v3567 = vunpack.c.l.b16 %v3439
      %v3568 = vunpack.c.l.b16 %v3440
      %v3569 = vunpack.c.l.b16 %v3441
      %v3570 = vunpack.c.l.b16 %v3442
      %v3571 = vpack.c.b16 %v3556, %v3555
      %v3572 = vpack.c.b16 %v3558, %v3557
      %v3573 = vpack.c.b16 %v3560, %v3559
      %v3574 = vpack.c.b16 %v3562, %v3561
      %v3575 = vpack.c.b16 %v3564, %v3563
      %v3576 = vpack.c.b16 %v3566, %v3565
      %v3577 = vpack.c.b16 %v3568, %v3567
      %v3578 = vpack.c.b16 %v3570, %v3569
      %3587 = vmatprep.subr.bf16.mxu0 0
      %3588 = vmatpush1.bf16.msra.mxu0 %v3571
      %3589 = vmatprep.subr.bf16.mxu0 0
      %3590 = vmatpush1.bf16.msra.mxu0 %v3572
      %3591 = vmatprep.subr.bf16.mxu0 0
      %3592 = vmatpush1.bf16.msra.mxu0 %v3573
      %3593 = vmatprep.subr.bf16.mxu0 0
      %3594 = vmatpush1.bf16.msra.mxu0 %v3574
      %3595 = vmatprep.subr.bf16.mxu0 0
      %3596 = vmatpush1.bf16.msra.mxu0 %v3575
      %3597 = vmatprep.subr.bf16.mxu0 0
      %3598 = vmatpush1.bf16.msra.mxu0 %v3576
      %3599 = vmatprep.subr.bf16.mxu0 0
      %3600 = vmatpush1.bf16.msra.mxu0 %v3577
      %3601 = vmatprep.subr.bf16.mxu0 0
      %3602 = vmatpush1.bf16.msra.mxu0 %v3578
      %3603 = vmatprep.subr.bf16.mxu0 0
      %3604 = vmatpush1.bf16.msra.mxu0 0
      %3605 = vmatprep.subr.bf16.mxu0 0
      %3606 = vmatpush1.bf16.msra.mxu0 0
      %3607 = vmatprep.subr.bf16.mxu0 0
      %3608 = vmatpush1.bf16.msra.mxu0 0
      %3609 = vmatprep.subr.bf16.mxu0 0
      %3610 = vmatpush1.bf16.msra.mxu0 0
      %3611 = vmatprep.subr.bf16.mxu0 0
      %3612 = vmatpush1.bf16.msra.mxu0 0
      %3613 = vmatprep.subr.bf16.mxu0 0
      %3614 = vmatpush1.bf16.msra.mxu0 0
      %3615 = vmatprep.subr.bf16.mxu0 0
      %3616 = vmatpush1.bf16.msra.mxu0 0
      %3617 = vmatprep.subr.bf16.mxu0 0
      %3618 = vmatpush1.bf16.msra.mxu0 0
      %3619 = vmatprep.mubr.bf16.mxu0 0
      %3620 = vmatmul.mubr.bf16.gmra.mrb[0].mxu0 %v3507
      %v3621 = vpop.f32.mrb[0].mxu0
      %v3622 = vadd.f32 0.0, %v3621
      %v3623 = vpop.f32.mrb[0].mxu0
      %v3624 = vpop.f32.mrb[0].mxu0
      %v3625 = vadd.f32 0.0, %v3624
      %v3626 = vpop.f32.mrb[0].mxu0
      %3627 = vmatprep.mubr.bf16.mxu0 0
      %3628 = vmatmul.mubr.bf16.gmra.mrb[0].mxu0 %v3508
      %v3629 = vpop.f32.mrb[0].mxu0
      %v3630 = vadd.f32 0.0, %v3629
      %v3631 = vpop.f32.mrb[0].mxu0
      %v3632 = vpop.f32.mrb[0].mxu0
      %v3633 = vadd.f32 0.0, %v3632
      %v3634 = vpop.f32.mrb[0].mxu0
      %3635 = vmatprep.mubr.bf16.mxu0 0
      %3636 = vmatmul.mubr.bf16.gmra.mrb[0].mxu0 %v3509
      %v3637 = vpop.f32.mrb[0].mxu0
      %v3638 = vadd.f32 0.0, %v3637
      %v3639 = vpop.f32.mrb[0].mxu0
      %v3640 = vpop.f32.mrb[0].mxu0
      %v3641 = vadd.f32 0.0, %v3640
      %v3642 = vpop.f32.mrb[0].mxu0
      %3643 = vmatprep.mubr.bf16.mxu0 0
      %3644 = vmatmul.mubr.bf16.gmra.mrb[0].mxu0 %v3510
      %v3645 = vpop.f32.mrb[0].mxu0
      %v3646 = vadd.f32 0.0, %v3645
      %v3647 = vpop.f32.mrb[0].mxu0
      %v3648 = vpop.f32.mrb[0].mxu0
      %v3649 = vadd.f32 0.0, %v3648
      %v3650 = vpop.f32.mrb[0].mxu0
      %3651 = vmatprep.mubr.bf16.mxu0 0
      %3652 = vmatmul.mubr.bf16.gmra.mrb[0].mxu0 %v3511
      %v3653 = vpop.f32.mrb[0].mxu0
      %v3654 = vadd.f32 0.0, %v3653
      %v3655 = vpop.f32.mrb[0].mxu0
      %v3656 = vpop.f32.mrb[0].mxu0
      %v3657 = vadd.f32 0.0, %v3656
      %v3658 = vpop.f32.mrb[0].mxu0
      %3659 = vmatprep.mubr.bf16.mxu0 0
      %3660 = vmatmul.mubr.bf16.gmra.mrb[0].mxu0 %v3512
      %v3661 = vpop.f32.mrb[0].mxu0
      %v3662 = vadd.f32 0.0, %v3661
      %v3663 = vpop.f32.mrb[0].mxu0
      %v3664 = vpop.f32.mrb[0].mxu0
      %v3665 = vadd.f32 0.0, %v3664
      %v3666 = vpop.f32.mrb[0].mxu0
      %3667 = vmatprep.mubr.bf16.mxu0 0
      %3668 = vmatmul.mubr.bf16.gmra.mrb[0].mxu0 %v3513
      %v3669 = vpop.f32.mrb[0].mxu0
      %v3670 = vadd.f32 0.0, %v3669
      %v3671 = vpop.f32.mrb[0].mxu0
      %v3672 = vpop.f32.mrb[0].mxu0
      %v3673 = vadd.f32 0.0, %v3672
      %v3674 = vpop.f32.mrb[0].mxu0
      %3675 = vmatprep.mubr.bf16.mxu0 0
      %3676 = vmatmul.mubr.bf16.gmra.mrb[0].mxu0 %v3514
      %v3677 = vpop.f32.mrb[0].mxu0
      %v3678 = vadd.f32 0.0, %v3677
      %v3679 = vpop.f32.mrb[0].mxu0
      %v3680 = vpop.f32.mrb[0].mxu0
      %v3681 = vadd.f32 0.0, %v3680
      %v3682 = vpop.f32.mrb[0].mxu0
      %3683 = vmatprep.mubr.bf16.mxu0 0
      %3684 = vmatmul.mubr.bf16.gmra.mrb[0].mxu0 %v3515
      %v3685 = vpop.f32.mrb[0].mxu0
      %v3686 = vadd.f32 0.0, %v3685
      %v3687 = vpop.f32.mrb[0].mxu0
      %v3688 = vpop.f32.mrb[0].mxu0
      %v3689 = vadd.f32 0.0, %v3688
      %v3690 = vpop.f32.mrb[0].mxu0
      %3691 = vmatprep.mubr.bf16.mxu0 0
      %3692 = vmatmul.mubr.bf16.gmra.mrb[0].mxu0 %v3516
      %v3693 = vpop.f32.mrb[0].mxu0
      %v3694 = vadd.f32 0.0, %v3693
      %v3695 = vpop.f32.mrb[0].mxu0
      %v3696 = vpop.f32.mrb[0].mxu0
      %v3697 = vadd.f32 0.0, %v3696
      %v3698 = vpop.f32.mrb[0].mxu0
      %3699 = vmatprep.mubr.bf16.mxu0 0
      %3700 = vmatmul.mubr.bf16.gmra.mrb[0].mxu0 %v3517
      %v3701 = vpop.f32.mrb[0].mxu0
      %v3702 = vadd.f32 0.0, %v3701
      %v3703 = vpop.f32.mrb[0].mxu0
      %v3704 = vpop.f32.mrb[0].mxu0
      %v3705 = vadd.f32 0.0, %v3704
      %v3706 = vpop.f32.mrb[0].mxu0
      %3707 = vmatprep.mubr.bf16.mxu0 0
      %3708 = vmatmul.mubr.bf16.gmra.mrb[0].mxu0 %v3518
      %v3709 = vpop.f32.mrb[0].mxu0
      %v3710 = vadd.f32 0.0, %v3709
      %v3711 = vpop.f32.mrb[0].mxu0
      %v3712 = vpop.f32.mrb[0].mxu0
      %v3713 = vadd.f32 0.0, %v3712
      %v3714 = vpop.f32.mrb[0].mxu0
      %3715 = vmatprep.mubr.bf16.mxu0 0
      %3716 = vmatmul.mubr.bf16.gmra.mrb[0].mxu0 %v3519
      %v3717 = vpop.f32.mrb[0].mxu0
      %v3718 = vadd.f32 0.0, %v3717
      %v3719 = vpop.f32.mrb[0].mxu0
      %v3720 = vpop.f32.mrb[0].mxu0
      %v3721 = vadd.f32 0.0, %v3720
      %v3722 = vpop.f32.mrb[0].mxu0
      %3723 = vmatprep.mubr.bf16.mxu0 0
      %3724 = vmatmul.mubr.bf16.gmra.mrb[0].mxu0 %v3520
      %v3725 = vpop.f32.mrb[0].mxu0
      %v3726 = vadd.f32 0.0, %v3725
      %v3727 = vpop.f32.mrb[0].mxu0
      %v3728 = vpop.f32.mrb[0].mxu0
      %v3729 = vadd.f32 0.0, %v3728
      %v3730 = vpop.f32.mrb[0].mxu0
      %3731 = vmatprep.mubr.bf16.mxu0 0
      %3732 = vmatmul.mubr.bf16.gmra.mrb[0].mxu0 %v3521
      %v3733 = vpop.f32.mrb[0].mxu0
      %v3734 = vadd.f32 0.0, %v3733
      %v3735 = vpop.f32.mrb[0].mxu0
      %v3736 = vpop.f32.mrb[0].mxu0
      %v3737 = vadd.f32 0.0, %v3736
      %v3738 = vpop.f32.mrb[0].mxu0
      %3739 = vmatprep.mubr.bf16.mxu0 0
      %3740 = vmatmul.mubr.bf16.gmra.mrb[0].mxu0 %v3522
      %v3741 = vpop.f32.mrb[0].mxu0
      %v3742 = vadd.f32 0.0, %v3741
      %v3743 = vpop.f32.mrb[0].mxu0
      %v3744 = vpop.f32.mrb[0].mxu0
      %v3745 = vadd.f32 0.0, %v3744
      %v3746 = vpop.f32.mrb[0].mxu0
      %3747 = vdwg.mxu0
      %v3748 = vadd.f32 %v3361, %v3622
      %v3749 = vadd.f32 %v3362, %v3625
      %v3750 = vadd.f32 %v3363, %v3630
      %v3751 = vadd.f32 %v3364, %v3633
      %v3752 = vadd.f32 %v3365, %v3638
      %v3753 = vadd.f32 %v3366, %v3641
      %v3754 = vadd.f32 %v3367, %v3646
      %v3755 = vadd.f32 %v3368, %v3649
      %v3756 = vadd.f32 %v3369, %v3654
      %v3757 = vadd.f32 %v3370, %v3657
      %v3758 = vadd.f32 %v3371, %v3662
      %v3759 = vadd.f32 %v3372, %v3665
      %v3760 = vadd.f32 %v3373, %v3670
      %v3761 = vadd.f32 %v3374, %v3673
      %v3762 = vadd.f32 %v3375, %v3678
      %v3763 = vadd.f32 %v3376, %v3681
      %v3764 = vadd.f32 %v3377, %v3686
      %v3765 = vadd.f32 %v3378, %v3689
      %v3766 = vadd.f32 %v3379, %v3694
      %v3767 = vadd.f32 %v3380, %v3697
      %v3768 = vadd.f32 %v3381, %v3702
      %v3769 = vadd.f32 %v3382, %v3705
      %v3770 = vadd.f32 %v3383, %v3710
      %v3771 = vadd.f32 %v3384, %v3713
      %v3772 = vadd.f32 %v3385, %v3718
      %v3773 = vadd.f32 %v3386, %v3721
      %v3774 = vadd.f32 %v3387, %v3726
      %v3775 = vadd.f32 %v3388, %v3729
      %v3776 = vadd.f32 %v3389, %v3734
      %v3777 = vadd.f32 %v3390, %v3737
      %v3778 = vadd.f32 %v3391, %v3742
      %v3779 = vadd.f32 %v3392, %v3745
      %v3780 = vld [vmem:[%s3393] sm:$0xf]
      %v3781 = vld [vmem:[%s3393 + $0x4] sm:$0xf]
      %v3782 = vld [vmem:[%s3393 + $0x8] sm:$0x1]
      %v3783 = vld [vmem:[%s3393 + $0xc] sm:$0xf]
      %v3784 = vld [vmem:[%s3393 + $0x10] sm:$0xf]
      %v3785 = vld [vmem:[%s3393 + $0x14] sm:$0x1]
      %v3786 = vld [vmem:[%s3393 + $0x18] sm:$0xf]
      %v3787 = vld [vmem:[%s3393 + $0x1c] sm:$0xf]
      %v3788 = vld [vmem:[%s3393 + $0x20] sm:$0x1]
      %v3789 = vld [vmem:[%s3393 + $0x24] sm:$0xf]
      %v3790 = vld [vmem:[%s3393 + $0x28] sm:$0xf]
      %v3791 = vld [vmem:[%s3393 + $0x2c] sm:$0x1]
      %v3792 = vld [vmem:[%s3393 + $0x30] sm:$0xf]
      %v3793 = vld [vmem:[%s3393 + $0x34] sm:$0xf]
      %v3794 = vld [vmem:[%s3393 + $0x38] sm:$0x1]
      %v3795 = vld [vmem:[%s3393 + $0x3c] sm:$0xf]
      %v3796 = vld [vmem:[%s3393 + $0x40] sm:$0xf]
      %v3797 = vld [vmem:[%s3393 + $0x44] sm:$0x1]
      %v3798 = vld [vmem:[%s3393 + $0x48] sm:$0xf]
      %v3799 = vld [vmem:[%s3393 + $0x4c] sm:$0xf]
      %v3800 = vld [vmem:[%s3393 + $0x50] sm:$0x1]
      %v3801 = vld [vmem:[%s3393 + $0x54] sm:$0xf]
      %v3802 = vld [vmem:[%s3393 + $0x58] sm:$0xf]
      %v3803 = vld [vmem:[%s3393 + $0x5c] sm:$0x1]
      %v3804 = vld [vmem:[%s3393 + $0x60] sm:$0xf]
      %v3805 = vld [vmem:[%s3393 + $0x64] sm:$0xf]
      %v3806 = vld [vmem:[%s3393 + $0x68] sm:$0x1]
      %v3807 = vld [vmem:[%s3393 + $0x6c] sm:$0xf]
      %v3808 = vld [vmem:[%s3393 + $0x70] sm:$0xf]
      %v3809 = vld [vmem:[%s3393 + $0x74] sm:$0x1]
      %v3810 = vld [vmem:[%s3393 + $0x78] sm:$0xf]
      %v3811 = vld [vmem:[%s3393 + $0x7c] sm:$0xf]
      %v3812 = vld [vmem:[%s3393 + $0x80] sm:$0x1]
      %v3813 = vld [vmem:[%s3393 + $0x84] sm:$0xf]
      %v3814 = vld [vmem:[%s3393 + $0x88] sm:$0xf]
      %v3815 = vld [vmem:[%s3393 + $0x8c] sm:$0x1]
      %v3816 = vld [vmem:[%s3393 + $0x90] sm:$0xf]
      %v3817 = vld [vmem:[%s3393 + $0x94] sm:$0xf]
      %v3818 = vld [vmem:[%s3393 + $0x98] sm:$0x1]
      %v3819 = vld [vmem:[%s3393 + $0x9c] sm:$0xf]
      %v3820 = vld [vmem:[%s3393 + $0xa0] sm:$0xf]
      %v3821 = vld [vmem:[%s3393 + $0xa4] sm:$0x1]
      %v3822 = vld [vmem:[%s3393 + $0xa8] sm:$0xf]
      %v3823 = vld [vmem:[%s3393 + $0xac] sm:$0xf]
      %v3824 = vld [vmem:[%s3393 + $0xb0] sm:$0x1]
      %v3825 = vld [vmem:[%s3393 + $0xb4] sm:$0xf]
      %v3826 = vld [vmem:[%s3393 + $0xb8] sm:$0xf]
      %v3827 = vld [vmem:[%s3393 + $0xbc] sm:$0x1]
      %v3829 = vshrl.u32 %v3780, 16
      %v3831 = vrot.slane %v3829, 4
      %v3832 = vshll.u32 %v3780, 16
      %v3834 = vrot.slane %v3832, 5
      %v3835 = vor.u32 %v3831, %v3834
      %v3836 = vrot.slane %v3835, 4
      %v3838 = vshll.u32 %v3781, 16
      %v3840 = vrot.slane %v3838, 5
      %v3841 = vsel %vm289, %v3836, %v3840
      %v3842 = vshrl.u32 %v3781, 16
      %v3844 = vrot.slane %v3842, 4
      %v3845 = vor.u32 %v3844, %v3840
      %v3846 = vrot.slane %v3845, 4
      %v3848 = vshll.u32 %v3782, 16
      %v3850 = vrot.slane %v3848, 5
      %v3851 = vsel %vm289, %v3846, %v3850
      %v3853 = vshrl.u32 %v3783, 16
      %v3855 = vrot.slane %v3853, 4
      %v3856 = vshll.u32 %v3783, 16
      %v3858 = vrot.slane %v3856, 5
      %v3859 = vor.u32 %v3855, %v3858
      %v3860 = vrot.slane %v3859, 4
      %v3862 = vshll.u32 %v3784, 16
      %v3864 = vrot.slane %v3862, 5
      %v3865 = vsel %vm289, %v3860, %v3864
      %v3866 = vshrl.u32 %v3784, 16
      %v3868 = vrot.slane %v3866, 4
      %v3869 = vor.u32 %v3868, %v3864
      %v3870 = vrot.slane %v3869, 4
      %v3872 = vshll.u32 %v3785, 16
      %v3874 = vrot.slane %v3872, 5
      %v3875 = vsel %vm289, %v3870, %v3874
      %v3877 = vshrl.u32 %v3786, 16
      %v3879 = vrot.slane %v3877, 4
      %v3880 = vshll.u32 %v3786, 16
      %v3882 = vrot.slane %v3880, 5
      %v3883 = vor.u32 %v3879, %v3882
      %v3884 = vrot.slane %v3883, 4
      %v3886 = vshll.u32 %v3787, 16
      %v3888 = vrot.slane %v3886, 5
      %v3889 = vsel %vm289, %v3884, %v3888
      %v3890 = vshrl.u32 %v3787, 16
      %v3892 = vrot.slane %v3890, 4
      %v3893 = vor.u32 %v3892, %v3888
      %v3894 = vrot.slane %v3893, 4
      %v3896 = vshll.u32 %v3788, 16
      %v3898 = vrot.slane %v3896, 5
      %v3899 = vsel %vm289, %v3894, %v3898
      %v3901 = vshrl.u32 %v3789, 16
      %v3903 = vrot.slane %v3901, 4
      %v3904 = vshll.u32 %v3789, 16
      %v3906 = vrot.slane %v3904, 5
      %v3907 = vor.u32 %v3903, %v3906
      %v3908 = vrot.slane %v3907, 4
      %v3910 = vshll.u32 %v3790, 16
      %v3912 = vrot.slane %v3910, 5
      %v3913 = vsel %vm289, %v3908, %v3912
      %v3914 = vshrl.u32 %v3790, 16
      %v3916 = vrot.slane %v3914, 4
      %v3917 = vor.u32 %v3916, %v3912
      %v3918 = vrot.slane %v3917, 4
      %v3920 = vshll.u32 %v3791, 16
      %v3922 = vrot.slane %v3920, 5
      %v3923 = vsel %vm289, %v3918, %v3922
      %v3925 = vshrl.u32 %v3792, 16
      %v3927 = vrot.slane %v3925, 4
      %v3928 = vshll.u32 %v3792, 16
      %v3930 = vrot.slane %v3928, 5
      %v3931 = vor.u32 %v3927, %v3930
      %v3932 = vrot.slane %v3931, 4
      %v3934 = vshll.u32 %v3793, 16
      %v3936 = vrot.slane %v3934, 5
      %v3937 = vsel %vm289, %v3932, %v3936
      %v3938 = vshrl.u32 %v3793, 16
      %v3940 = vrot.slane %v3938, 4
      %v3941 = vor.u32 %v3940, %v3936
      %v3942 = vrot.slane %v3941, 4
      %v3944 = vshll.u32 %v3794, 16
      %v3946 = vrot.slane %v3944, 5
      %v3947 = vsel %vm289, %v3942, %v3946
      %v3949 = vshrl.u32 %v3795, 16
      %v3951 = vrot.slane %v3949, 4
      %v3952 = vshll.u32 %v3795, 16
      %v3954 = vrot.slane %v3952, 5
      %v3955 = vor.u32 %v3951, %v3954
      %v3956 = vrot.slane %v3955, 4
      %v3958 = vshll.u32 %v3796, 16
      %v3960 = vrot.slane %v3958, 5
      %v3961 = vsel %vm289, %v3956, %v3960
      %v3962 = vshrl.u32 %v3796, 16
      %v3964 = vrot.slane %v3962, 4
      %v3965 = vor.u32 %v3964, %v3960
      %v3966 = vrot.slane %v3965, 4
      %v3968 = vshll.u32 %v3797, 16
      %v3970 = vrot.slane %v3968, 5
      %v3971 = vsel %vm289, %v3966, %v3970
      %v3973 = vshrl.u32 %v3798, 16
      %v3975 = vrot.slane %v3973, 4
      %v3976 = vshll.u32 %v3798, 16
      %v3978 = vrot.slane %v3976, 5
      %v3979 = vor.u32 %v3975, %v3978
      %v3980 = vrot.slane %v3979, 4
      %v3982 = vshll.u32 %v3799, 16
      %v3984 = vrot.slane %v3982, 5
      %v3985 = vsel %vm289, %v3980, %v3984
      %v3986 = vshrl.u32 %v3799, 16
      %v3988 = vrot.slane %v3986, 4
      %v3989 = vor.u32 %v3988, %v3984
      %v3990 = vrot.slane %v3989, 4
      %v3992 = vshll.u32 %v3800, 16
      %v3994 = vrot.slane %v3992, 5
      %v3995 = vsel %vm289, %v3990, %v3994
      %v3997 = vshrl.u32 %v3801, 16
      %v3999 = vrot.slane %v3997, 4
      %v4000 = vshll.u32 %v3801, 16
      %v4002 = vrot.slane %v4000, 5
      %v4003 = vor.u32 %v3999, %v4002
      %v4004 = vrot.slane %v4003, 4
      %v4006 = vshll.u32 %v3802, 16
      %v4008 = vrot.slane %v4006, 5
      %v4009 = vsel %vm289, %v4004, %v4008
      %v4010 = vshrl.u32 %v3802, 16
      %v4012 = vrot.slane %v4010, 4
      %v4013 = vor.u32 %v4012, %v4008
      %v4014 = vrot.slane %v4013, 4
      %v4016 = vshll.u32 %v3803, 16
      %v4018 = vrot.slane %v4016, 5
      %v4019 = vsel %vm289, %v4014, %v4018
      %v4021 = vshrl.u32 %v3804, 16
      %v4023 = vrot.slane %v4021, 4
      %v4024 = vshll.u32 %v3804, 16
      %v4026 = vrot.slane %v4024, 5
      %v4027 = vor.u32 %v4023, %v4026
      %v4028 = vrot.slane %v4027, 4
      %v4030 = vshll.u32 %v3805, 16
      %v4032 = vrot.slane %v4030, 5
      %v4033 = vsel %vm289, %v4028, %v4032
      %v4034 = vshrl.u32 %v3805, 16
      %v4036 = vrot.slane %v4034, 4
      %v4037 = vor.u32 %v4036, %v4032
      %v4038 = vrot.slane %v4037, 4
      %v4040 = vshll.u32 %v3806, 16
      %v4042 = vrot.slane %v4040, 5
      %v4043 = vsel %vm289, %v4038, %v4042
      %v4045 = vshrl.u32 %v3807, 16
      %v4047 = vrot.slane %v4045, 4
      %v4048 = vshll.u32 %v3807, 16
      %v4050 = vrot.slane %v4048, 5
      %v4051 = vor.u32 %v4047, %v4050
      %v4052 = vrot.slane %v4051, 4
      %v4054 = vshll.u32 %v3808, 16
      %v4056 = vrot.slane %v4054, 5
      %v4057 = vsel %vm289, %v4052, %v4056
      %v4058 = vshrl.u32 %v3808, 16
      %v4060 = vrot.slane %v4058, 4
      %v4061 = vor.u32 %v4060, %v4056
      %v4062 = vrot.slane %v4061, 4
      %v4064 = vshll.u32 %v3809, 16
      %v4066 = vrot.slane %v4064, 5
      %v4067 = vsel %vm289, %v4062, %v4066
      %v4069 = vshrl.u32 %v3810, 16
      %v4071 = vrot.slane %v4069, 4
      %v4072 = vshll.u32 %v3810, 16
      %v4074 = vrot.slane %v4072, 5
      %v4075 = vor.u32 %v4071, %v4074
      %v4076 = vrot.slane %v4075, 4
      %v4078 = vshll.u32 %v3811, 16
      %v4080 = vrot.slane %v4078, 5
      %v4081 = vsel %vm289, %v4076, %v4080
      %v4082 = vshrl.u32 %v3811, 16
      %v4084 = vrot.slane %v4082, 4
      %v4085 = vor.u32 %v4084, %v4080
      %v4086 = vrot.slane %v4085, 4
      %v4088 = vshll.u32 %v3812, 16
      %v4090 = vrot.slane %v4088, 5
      %v4091 = vsel %vm289, %v4086, %v4090
      %v4093 = vshrl.u32 %v3813, 16
      %v4095 = vrot.slane %v4093, 4
      %v4096 = vshll.u32 %v3813, 16
      %v4098 = vrot.slane %v4096, 5
      %v4099 = vor.u32 %v4095, %v4098
      %v4100 = vrot.slane %v4099, 4
      %v4102 = vshll.u32 %v3814, 16
      %v4104 = vrot.slane %v4102, 5
      %v4105 = vsel %vm289, %v4100, %v4104
      %v4106 = vshrl.u32 %v3814, 16
      %v4108 = vrot.slane %v4106, 4
      %v4109 = vor.u32 %v4108, %v4104
      %v4110 = vrot.slane %v4109, 4
      %v4112 = vshll.u32 %v3815, 16
      %v4114 = vrot.slane %v4112, 5
      %v4115 = vsel %vm289, %v4110, %v4114
      %v4117 = vshrl.u32 %v3816, 16
      %v4119 = vrot.slane %v4117, 4
      %v4120 = vshll.u32 %v3816, 16
      %v4122 = vrot.slane %v4120, 5
      %v4123 = vor.u32 %v4119, %v4122
      %v4124 = vrot.slane %v4123, 4
      %v4126 = vshll.u32 %v3817, 16
      %v4128 = vrot.slane %v4126, 5
      %v4129 = vsel %vm289, %v4124, %v4128
      %v4130 = vshrl.u32 %v3817, 16
      %v4132 = vrot.slane %v4130, 4
      %v4133 = vor.u32 %v4132, %v4128
      %v4134 = vrot.slane %v4133, 4
      %v4136 = vshll.u32 %v3818, 16
      %v4138 = vrot.slane %v4136, 5
      %v4139 = vsel %vm289, %v4134, %v4138
      %v4141 = vshrl.u32 %v3819, 16
      %v4143 = vrot.slane %v4141, 4
      %v4144 = vshll.u32 %v3819, 16
      %v4146 = vrot.slane %v4144, 5
      %v4147 = vor.u32 %v4143, %v4146
      %v4148 = vrot.slane %v4147, 4
      %v4150 = vshll.u32 %v3820, 16
      %v4152 = vrot.slane %v4150, 5
      %v4153 = vsel %vm289, %v4148, %v4152
      %v4154 = vshrl.u32 %v3820, 16
      %v4156 = vrot.slane %v4154, 4
      %v4157 = vor.u32 %v4156, %v4152
      %v4158 = vrot.slane %v4157, 4
      %v4160 = vshll.u32 %v3821, 16
      %v4162 = vrot.slane %v4160, 5
      %v4163 = vsel %vm289, %v4158, %v4162
      %v4165 = vshrl.u32 %v3822, 16
      %v4167 = vrot.slane %v4165, 4
      %v4168 = vshll.u32 %v3822, 16
      %v4170 = vrot.slane %v4168, 5
      %v4171 = vor.u32 %v4167, %v4170
      %v4172 = vrot.slane %v4171, 4
      %v4174 = vshll.u32 %v3823, 16
      %v4176 = vrot.slane %v4174, 5
      %v4177 = vsel %vm289, %v4172, %v4176
      %v4178 = vshrl.u32 %v3823, 16
      %v4180 = vrot.slane %v4178, 4
      %v4181 = vor.u32 %v4180, %v4176
      %v4182 = vrot.slane %v4181, 4
      %v4184 = vshll.u32 %v3824, 16
      %v4186 = vrot.slane %v4184, 5
      %v4187 = vsel %vm289, %v4182, %v4186
      %v4189 = vshrl.u32 %v3825, 16
      %v4191 = vrot.slane %v4189, 4
      %v4192 = vshll.u32 %v3825, 16
      %v4194 = vrot.slane %v4192, 5
      %v4195 = vor.u32 %v4191, %v4194
      %v4196 = vrot.slane %v4195, 4
      %v4198 = vshll.u32 %v3826, 16
      %v4200 = vrot.slane %v4198, 5
      %v4201 = vsel %vm289, %v4196, %v4200
      %v4202 = vshrl.u32 %v3826, 16
      %v4204 = vrot.slane %v4202, 4
      %v4205 = vor.u32 %v4204, %v4200
      %v4206 = vrot.slane %v4205, 4
      %v4208 = vshll.u32 %v3827, 16
      %v4210 = vrot.slane %v4208, 5
      %v4211 = vsel %vm289, %v4206, %v4210
      %s4212 = scalar_lea.vmem %s210, 448
      %v4213 = vld [vmem:[%s4212] sm:$0xf]
      %v4214 = vld [vmem:[%s4212 + $0x4] sm:$0xf]
      %v4215 = vld [vmem:[%s4212 + $0x8] sm:$0xf]
      %v4216 = vld [vmem:[%s4212 + $0xc] sm:$0xf]
      %v4217 = vld [vmem:[%s4212 + $0x10] sm:$0xf]
      %v4218 = vld [vmem:[%s4212 + $0x14] sm:$0xf]
      %v4219 = vld [vmem:[%s4212 + $0x18] sm:$0xf]
      %v4220 = vld [vmem:[%s4212 + $0x1c] sm:$0xf]
      %v4221 = vld [vmem:[%s4212 + $0x20] sm:$0xf]
      %v4222 = vld [vmem:[%s4212 + $0x24] sm:$0xf]
      %v4223 = vld [vmem:[%s4212 + $0x28] sm:$0xf]
      %v4224 = vld [vmem:[%s4212 + $0x2c] sm:$0xf]
      %v4225 = vld [vmem:[%s4212 + $0x30] sm:$0xf]
      %v4226 = vld [vmem:[%s4212 + $0x34] sm:$0xf]
      %v4227 = vld [vmem:[%s4212 + $0x38] sm:$0xf]
      %v4228 = vld [vmem:[%s4212 + $0x3c] sm:$0xf]
      %v4229 = vunpack.c.l.b16 %v3841
      %v4230 = vunpack.c.l.b16 %v3851
      %v4231 = vunpack.c.l.b16 %v3865
      %v4232 = vunpack.c.l.b16 %v3875
      %v4233 = vunpack.c.l.b16 %v3889
      %v4234 = vunpack.c.l.b16 %v3899
      %v4235 = vunpack.c.l.b16 %v3913
      %v4236 = vunpack.c.l.b16 %v3923
      %v4237 = vunpack.c.l.b16 %v3937
      %v4238 = vunpack.c.l.b16 %v3947
      %v4239 = vunpack.c.l.b16 %v3961
      %v4240 = vunpack.c.l.b16 %v3971
      %v4241 = vunpack.c.l.b16 %v3985
      %v4242 = vunpack.c.l.b16 %v3995
      %v4243 = vunpack.c.l.b16 %v4009
      %v4244 = vunpack.c.l.b16 %v4019
      %v4245 = vunpack.c.l.b16 %v4033
      %v4246 = vunpack.c.l.b16 %v4043
      %v4247 = vunpack.c.l.b16 %v4057
      %v4248 = vunpack.c.l.b16 %v4067
      %v4249 = vunpack.c.l.b16 %v4081
      %v4250 = vunpack.c.l.b16 %v4091
      %v4251 = vunpack.c.l.b16 %v4105
      %v4252 = vunpack.c.l.b16 %v4115
      %v4253 = vunpack.c.l.b16 %v4129
      %v4254 = vunpack.c.l.b16 %v4139
      %v4255 = vunpack.c.l.b16 %v4153
      %v4256 = vunpack.c.l.b16 %v4163
      %v4257 = vunpack.c.l.b16 %v4177
      %v4258 = vunpack.c.l.b16 %v4187
      %v4259 = vunpack.c.l.b16 %v4201
      %v4260 = vunpack.c.l.b16 %v4211
      %v4261 = vpack.c.b16 %v4230, %v4229
      %v4262 = vpack.c.b16 %v4232, %v4231
      %v4263 = vpack.c.b16 %v4234, %v4233
      %v4264 = vpack.c.b16 %v4236, %v4235
      %v4265 = vpack.c.b16 %v4238, %v4237
      %v4266 = vpack.c.b16 %v4240, %v4239
      %v4267 = vpack.c.b16 %v4242, %v4241
      %v4268 = vpack.c.b16 %v4244, %v4243
      %v4269 = vpack.c.b16 %v4246, %v4245
      %v4270 = vpack.c.b16 %v4248, %v4247
      %v4271 = vpack.c.b16 %v4250, %v4249
      %v4272 = vpack.c.b16 %v4252, %v4251
      %v4273 = vpack.c.b16 %v4254, %v4253
      %v4274 = vpack.c.b16 %v4256, %v4255
      %v4275 = vpack.c.b16 %v4258, %v4257
      %v4276 = vpack.c.b16 %v4260, %v4259
      %v4309 = vunpack.c.l.b16 %v4213
      %v4310 = vunpack.c.l.b16 %v4214
      %v4311 = vunpack.c.l.b16 %v4215
      %v4312 = vunpack.c.l.b16 %v4216
      %v4313 = vunpack.c.l.b16 %v4217
      %v4314 = vunpack.c.l.b16 %v4218
      %v4315 = vunpack.c.l.b16 %v4219
      %v4316 = vunpack.c.l.b16 %v4220
      %v4317 = vunpack.c.l.b16 %v4221
      %v4318 = vunpack.c.l.b16 %v4222
      %v4319 = vunpack.c.l.b16 %v4223
      %v4320 = vunpack.c.l.b16 %v4224
      %v4321 = vunpack.c.l.b16 %v4225
      %v4322 = vunpack.c.l.b16 %v4226
      %v4323 = vunpack.c.l.b16 %v4227
      %v4324 = vunpack.c.l.b16 %v4228
      %v4325 = vpack.c.b16 %v4310, %v4309
      %v4326 = vpack.c.b16 %v4312, %v4311
      %v4327 = vpack.c.b16 %v4314, %v4313
      %v4328 = vpack.c.b16 %v4316, %v4315
      %v4329 = vpack.c.b16 %v4318, %v4317
      %v4330 = vpack.c.b16 %v4320, %v4319
      %v4331 = vpack.c.b16 %v4322, %v4321
      %v4332 = vpack.c.b16 %v4324, %v4323
      %4341 = vmatprep.subr.bf16.mxu0 0
      %4342 = vmatpush1.bf16.msra.mxu0 %v4325
      %4343 = vmatprep.subr.bf16.mxu0 0
      %4344 = vmatpush1.bf16.msra.mxu0 %v4326
      %4345 = vmatprep.subr.bf16.mxu0 0
      %4346 = vmatpush1.bf16.msra.mxu0 %v4327
      %4347 = vmatprep.subr.bf16.mxu0 0
      %4348 = vmatpush1.bf16.msra.mxu0 %v4328
      %4349 = vmatprep.subr.bf16.mxu0 0
      %4350 = vmatpush1.bf16.msra.mxu0 %v4329
      %4351 = vmatprep.subr.bf16.mxu0 0
      %4352 = vmatpush1.bf16.msra.mxu0 %v4330
      %4353 = vmatprep.subr.bf16.mxu0 0
      %4354 = vmatpush1.bf16.msra.mxu0 %v4331
      %4355 = vmatprep.subr.bf16.mxu0 0
      %4356 = vmatpush1.bf16.msra.mxu0 %v4332
      %4357 = vmatprep.subr.bf16.mxu0 0
      %4358 = vmatpush1.bf16.msra.mxu0 0
      %4359 = vmatprep.subr.bf16.mxu0 0
      %4360 = vmatpush1.bf16.msra.mxu0 0
      %4361 = vmatprep.subr.bf16.mxu0 0
      %4362 = vmatpush1.bf16.msra.mxu0 0
      %4363 = vmatprep.subr.bf16.mxu0 0
      %4364 = vmatpush1.bf16.msra.mxu0 0
      %4365 = vmatprep.subr.bf16.mxu0 0
      %4366 = vmatpush1.bf16.msra.mxu0 0
      %4367 = vmatprep.subr.bf16.mxu0 0
      %4368 = vmatpush1.bf16.msra.mxu0 0
      %4369 = vmatprep.subr.bf16.mxu0 0
      %4370 = vmatpush1.bf16.msra.mxu0 0
      %4371 = vmatprep.subr.bf16.mxu0 0
      %4372 = vmatpush1.bf16.msra.mxu0 0
      %4373 = vmatprep.mubr.bf16.mxu0 0
      %4374 = vmatmul.mubr.bf16.gmra.mrb[0].mxu0 %v4261
      %v4375 = vpop.f32.mrb[0].mxu0
      %v4376 = vadd.f32 0.0, %v4375
      %v4377 = vpop.f32.mrb[0].mxu0
      %v4378 = vpop.f32.mrb[0].mxu0
      %v4379 = vadd.f32 0.0, %v4378
      %v4380 = vpop.f32.mrb[0].mxu0
      %4381 = vmatprep.mubr.bf16.mxu0 0
      %4382 = vmatmul.mubr.bf16.gmra.mrb[0].mxu0 %v4262
      %v4383 = vpop.f32.mrb[0].mxu0
      %v4384 = vadd.f32 0.0, %v4383
      %v4385 = vpop.f32.mrb[0].mxu0
      %v4386 = vpop.f32.mrb[0].mxu0
      %v4387 = vadd.f32 0.0, %v4386
      %v4388 = vpop.f32.mrb[0].mxu0
      %4389 = vmatprep.mubr.bf16.mxu0 0
      %4390 = vmatmul.mubr.bf16.gmra.mrb[0].mxu0 %v4263
      %v4391 = vpop.f32.mrb[0].mxu0
      %v4392 = vadd.f32 0.0, %v4391
      %v4393 = vpop.f32.mrb[0].mxu0
      %v4394 = vpop.f32.mrb[0].mxu0
      %v4395 = vadd.f32 0.0, %v4394
      %v4396 = vpop.f32.mrb[0].mxu0
      %4397 = vmatprep.mubr.bf16.mxu0 0
      %4398 = vmatmul.mubr.bf16.gmra.mrb[0].mxu0 %v4264
      %v4399 = vpop.f32.mrb[0].mxu0
      %v4400 = vadd.f32 0.0, %v4399
      %v4401 = vpop.f32.mrb[0].mxu0
      %v4402 = vpop.f32.mrb[0].mxu0
      %v4403 = vadd.f32 0.0, %v4402
      %v4404 = vpop.f32.mrb[0].mxu0
      %4405 = vmatprep.mubr.bf16.mxu0 0
      %4406 = vmatmul.mubr.bf16.gmra.mrb[0].mxu0 %v4265
      %v4407 = vpop.f32.mrb[0].mxu0
      %v4408 = vadd.f32 0.0, %v4407
      %v4409 = vpop.f32.mrb[0].mxu0
      %v4410 = vpop.f32.mrb[0].mxu0
      %v4411 = vadd.f32 0.0, %v4410
      %v4412 = vpop.f32.mrb[0].mxu0
      %4413 = vmatprep.mubr.bf16.mxu0 0
      %4414 = vmatmul.mubr.bf16.gmra.mrb[0].mxu0 %v4266
      %v4415 = vpop.f32.mrb[0].mxu0
      %v4416 = vadd.f32 0.0, %v4415
      %v4417 = vpop.f32.mrb[0].mxu0
      %v4418 = vpop.f32.mrb[0].mxu0
      %v4419 = vadd.f32 0.0, %v4418
      %v4420 = vpop.f32.mrb[0].mxu0
      %4421 = vmatprep.mubr.bf16.mxu0 0
      %4422 = vmatmul.mubr.bf16.gmra.mrb[0].mxu0 %v4267
      %v4423 = vpop.f32.mrb[0].mxu0
      %v4424 = vadd.f32 0.0, %v4423
      %v4425 = vpop.f32.mrb[0].mxu0
      %v4426 = vpop.f32.mrb[0].mxu0
      %v4427 = vadd.f32 0.0, %v4426
      %v4428 = vpop.f32.mrb[0].mxu0
      %4429 = vmatprep.mubr.bf16.mxu0 0
      %4430 = vmatmul.mubr.bf16.gmra.mrb[0].mxu0 %v4268
      %v4431 = vpop.f32.mrb[0].mxu0
      %v4432 = vadd.f32 0.0, %v4431
      %v4433 = vpop.f32.mrb[0].mxu0
      %v4434 = vpop.f32.mrb[0].mxu0
      %v4435 = vadd.f32 0.0, %v4434
      %v4436 = vpop.f32.mrb[0].mxu0
      %4437 = vmatprep.mubr.bf16.mxu0 0
      %4438 = vmatmul.mubr.bf16.gmra.mrb[0].mxu0 %v4269
      %v4439 = vpop.f32.mrb[0].mxu0
      %v4440 = vadd.f32 0.0, %v4439
      %v4441 = vpop.f32.mrb[0].mxu0
      %v4442 = vpop.f32.mrb[0].mxu0
      %v4443 = vadd.f32 0.0, %v4442
      %v4444 = vpop.f32.mrb[0].mxu0
      %4445 = vmatprep.mubr.bf16.mxu0 0
      %4446 = vmatmul.mubr.bf16.gmra.mrb[0].mxu0 %v4270
      %v4447 = vpop.f32.mrb[0].mxu0
      %v4448 = vadd.f32 0.0, %v4447
      %v4449 = vpop.f32.mrb[0].mxu0
      %v4450 = vpop.f32.mrb[0].mxu0
      %v4451 = vadd.f32 0.0, %v4450
      %v4452 = vpop.f32.mrb[0].mxu0
      %4453 = vmatprep.mubr.bf16.mxu0 0
      %4454 = vmatmul.mubr.bf16.gmra.mrb[0].mxu0 %v4271
      %v4455 = vpop.f32.mrb[0].mxu0
      %v4456 = vadd.f32 0.0, %v4455
      %v4457 = vpop.f32.mrb[0].mxu0
      %v4458 = vpop.f32.mrb[0].mxu0
      %v4459 = vadd.f32 0.0, %v4458
      %v4460 = vpop.f32.mrb[0].mxu0
      %4461 = vmatprep.mubr.bf16.mxu0 0
      %4462 = vmatmul.mubr.bf16.gmra.mrb[0].mxu0 %v4272
      %v4463 = vpop.f32.mrb[0].mxu0
      %v4464 = vadd.f32 0.0, %v4463
      %v4465 = vpop.f32.mrb[0].mxu0
      %v4466 = vpop.f32.mrb[0].mxu0
      %v4467 = vadd.f32 0.0, %v4466
      %v4468 = vpop.f32.mrb[0].mxu0
      %4469 = vmatprep.mubr.bf16.mxu0 0
      %4470 = vmatmul.mubr.bf16.gmra.mrb[0].mxu0 %v4273
      %v4471 = vpop.f32.mrb[0].mxu0
      %v4472 = vadd.f32 0.0, %v4471
      %v4473 = vpop.f32.mrb[0].mxu0
      %v4474 = vpop.f32.mrb[0].mxu0
      %v4475 = vadd.f32 0.0, %v4474
      %v4476 = vpop.f32.mrb[0].mxu0
      %4477 = vmatprep.mubr.bf16.mxu0 0
      %4478 = vmatmul.mubr.bf16.gmra.mrb[0].mxu0 %v4274
      %v4479 = vpop.f32.mrb[0].mxu0
      %v4480 = vadd.f32 0.0, %v4479
      %v4481 = vpop.f32.mrb[0].mxu0
      %v4482 = vpop.f32.mrb[0].mxu0
      %v4483 = vadd.f32 0.0, %v4482
      %v4484 = vpop.f32.mrb[0].mxu0
      %4485 = vmatprep.mubr.bf16.mxu0 0
      %4486 = vmatmul.mubr.bf16.gmra.mrb[0].mxu0 %v4275
      %v4487 = vpop.f32.mrb[0].mxu0
      %v4488 = vadd.f32 0.0, %v4487
      %v4489 = vpop.f32.mrb[0].mxu0
      %v4490 = vpop.f32.mrb[0].mxu0
      %v4491 = vadd.f32 0.0, %v4490
      %v4492 = vpop.f32.mrb[0].mxu0
      %4493 = vmatprep.mubr.bf16.mxu0 0
      %4494 = vmatmul.mubr.bf16.gmra.mrb[0].mxu0 %v4276
      %v4495 = vpop.f32.mrb[0].mxu0
      %v4496 = vadd.f32 0.0, %v4495
      %v4497 = vpop.f32.mrb[0].mxu0
      %v4498 = vpop.f32.mrb[0].mxu0
      %v4499 = vadd.f32 0.0, %v4498
      %v4500 = vpop.f32.mrb[0].mxu0
      %4501 = vdwg.mxu0
      %v4502 = vadd.f32 %v3748, %v4376
      %v4503 = vadd.f32 %v3749, %v4379
      %v4504 = vadd.f32 %v3750, %v4384
      %v4505 = vadd.f32 %v3751, %v4387
      %v4506 = vadd.f32 %v3752, %v4392
      %v4507 = vadd.f32 %v3753, %v4395
      %v4508 = vadd.f32 %v3754, %v4400
      %v4509 = vadd.f32 %v3755, %v4403
      %v4510 = vadd.f32 %v3756, %v4408
      %v4511 = vadd.f32 %v3757, %v4411
      %v4512 = vadd.f32 %v3758, %v4416
      %v4513 = vadd.f32 %v3759, %v4419
      %v4514 = vadd.f32 %v3760, %v4424
      %v4515 = vadd.f32 %v3761, %v4427
      %v4516 = vadd.f32 %v3762, %v4432
      %v4517 = vadd.f32 %v3763, %v4435
      %v4518 = vadd.f32 %v3764, %v4440
      %v4519 = vadd.f32 %v3765, %v4443
      %v4520 = vadd.f32 %v3766, %v4448
      %v4521 = vadd.f32 %v3767, %v4451
      %v4522 = vadd.f32 %v3768, %v4456
      %v4523 = vadd.f32 %v3769, %v4459
      %v4524 = vadd.f32 %v3770, %v4464
      %v4525 = vadd.f32 %v3771, %v4467
      %v4526 = vadd.f32 %v3772, %v4472
      %v4527 = vadd.f32 %v3773, %v4475
      %v4528 = vadd.f32 %v3774, %v4480
      %v4529 = vadd.f32 %v3775, %v4483
      %v4530 = vadd.f32 %v3776, %v4488
      %v4531 = vadd.f32 %v3777, %v4491
      %v4532 = vadd.f32 %v3778, %v4496
      %v4533 = vadd.f32 %v3779, %v4499
      %v4534 = vld [vmem:[%s3393] sm:$0xe]
      %v4535 = vld [vmem:[%s3393 + $0xc] sm:$0xe]
      %v4536 = vld [vmem:[%s3393 + $0x18] sm:$0xe]
      %v4537 = vld [vmem:[%s3393 + $0x24] sm:$0xe]
      %v4538 = vld [vmem:[%s3393 + $0x30] sm:$0xe]
      %v4539 = vld [vmem:[%s3393 + $0x3c] sm:$0xe]
      %v4540 = vld [vmem:[%s3393 + $0x48] sm:$0xe]
      %v4541 = vld [vmem:[%s3393 + $0x54] sm:$0xe]
      %v4542 = vld [vmem:[%s3393 + $0x60] sm:$0xe]
      %v4543 = vld [vmem:[%s3393 + $0x6c] sm:$0xe]
      %v4544 = vld [vmem:[%s3393 + $0x78] sm:$0xe]
      %v4545 = vld [vmem:[%s3393 + $0x84] sm:$0xe]
      %v4546 = vld [vmem:[%s3393 + $0x90] sm:$0xe]
      %v4547 = vld [vmem:[%s3393 + $0x9c] sm:$0xe]
      %v4548 = vld [vmem:[%s3393 + $0xa8] sm:$0xe]
      %v4549 = vld [vmem:[%s3393 + $0xb4] sm:$0xe]
      %v4598 = vrot.slane %v4534, 5
      %v4599 = vrot.slane %v4598, 4
      %v4600 = vrot.slane %v3781, 5
      %v4601 = vsel %vm1319, %v4599, %v4600
      %v4602 = vrot.slane %v4600, 4
      %v4603 = vrot.slane %v3782, 5
      %v4604 = vsel %vm1319, %v4602, %v4603
      %v4605 = vrot.slane %v4535, 5
      %v4606 = vrot.slane %v4605, 4
      %v4607 = vrot.slane %v3784, 5
      %v4608 = vsel %vm1319, %v4606, %v4607
      %v4609 = vrot.slane %v4607, 4
      %v4610 = vrot.slane %v3785, 5
      %v4611 = vsel %vm1319, %v4609, %v4610
      %v4612 = vrot.slane %v4536, 5
      %v4613 = vrot.slane %v4612, 4
      %v4614 = vrot.slane %v3787, 5
      %v4615 = vsel %vm1319, %v4613, %v4614
      %v4616 = vrot.slane %v4614, 4
      %v4617 = vrot.slane %v3788, 5
      %v4618 = vsel %vm1319, %v4616, %v4617
      %v4619 = vrot.slane %v4537, 5
      %v4620 = vrot.slane %v4619, 4
      %v4621 = vrot.slane %v3790, 5
      %v4622 = vsel %vm1319, %v4620, %v4621
      %v4623 = vrot.slane %v4621, 4
      %v4624 = vrot.slane %v3791, 5
      %v4625 = vsel %vm1319, %v4623, %v4624
      %v4626 = vrot.slane %v4538, 5
      %v4627 = vrot.slane %v4626, 4
      %v4628 = vrot.slane %v3793, 5
      %v4629 = vsel %vm1319, %v4627, %v4628
      %v4630 = vrot.slane %v4628, 4
      %v4631 = vrot.slane %v3794, 5
      %v4632 = vsel %vm1319, %v4630, %v4631
      %v4633 = vrot.slane %v4539, 5
      %v4634 = vrot.slane %v4633, 4
      %v4635 = vrot.slane %v3796, 5
      %v4636 = vsel %vm1319, %v4634, %v4635
      %v4637 = vrot.slane %v4635, 4
      %v4638 = vrot.slane %v3797, 5
      %v4639 = vsel %vm1319, %v4637, %v4638
      %v4640 = vrot.slane %v4540, 5
      %v4641 = vrot.slane %v4640, 4
      %v4642 = vrot.slane %v3799, 5
      %v4643 = vsel %vm1319, %v4641, %v4642
      %v4644 = vrot.slane %v4642, 4
      %v4645 = vrot.slane %v3800, 5
      %v4646 = vsel %vm1319, %v4644, %v4645
      %v4647 = vrot.slane %v4541, 5
      %v4648 = vrot.slane %v4647, 4
      %v4649 = vrot.slane %v3802, 5
      %v4650 = vsel %vm1319, %v4648, %v4649
      %v4651 = vrot.slane %v4649, 4
      %v4652 = vrot.slane %v3803, 5
      %v4653 = vsel %vm1319, %v4651, %v4652
      %v4654 = vrot.slane %v4542, 5
      %v4655 = vrot.slane %v4654, 4
      %v4656 = vrot.slane %v3805, 5
      %v4657 = vsel %vm1319, %v4655, %v4656
      %v4658 = vrot.slane %v4656, 4
      %v4659 = vrot.slane %v3806, 5
      %v4660 = vsel %vm1319, %v4658, %v4659
      %v4661 = vrot.slane %v4543, 5
      %v4662 = vrot.slane %v4661, 4
      %v4663 = vrot.slane %v3808, 5
      %v4664 = vsel %vm1319, %v4662, %v4663
      %v4665 = vrot.slane %v4663, 4
      %v4666 = vrot.slane %v3809, 5
      %v4667 = vsel %vm1319, %v4665, %v4666
      %v4668 = vrot.slane %v4544, 5
      %v4669 = vrot.slane %v4668, 4
      %v4670 = vrot.slane %v3811, 5
      %v4671 = vsel %vm1319, %v4669, %v4670
      %v4672 = vrot.slane %v4670, 4
      %v4673 = vrot.slane %v3812, 5
      %v4674 = vsel %vm1319, %v4672, %v4673
      %v4675 = vrot.slane %v4545, 5
      %v4676 = vrot.slane %v4675, 4
      %v4677 = vrot.slane %v3814, 5
      %v4678 = vsel %vm1319, %v4676, %v4677
      %v4679 = vrot.slane %v4677, 4
      %v4680 = vrot.slane %v3815, 5
      %v4681 = vsel %vm1319, %v4679, %v4680
      %v4682 = vrot.slane %v4546, 5
      %v4683 = vrot.slane %v4682, 4
      %v4684 = vrot.slane %v3817, 5
      %v4685 = vsel %vm1319, %v4683, %v4684
      %v4686 = vrot.slane %v4684, 4
      %v4687 = vrot.slane %v3818, 5
      %v4688 = vsel %vm1319, %v4686, %v4687
      %v4689 = vrot.slane %v4547, 5
      %v4690 = vrot.slane %v4689, 4
      %v4691 = vrot.slane %v3820, 5
      %v4692 = vsel %vm1319, %v4690, %v4691
      %v4693 = vrot.slane %v4691, 4
      %v4694 = vrot.slane %v3821, 5
      %v4695 = vsel %vm1319, %v4693, %v4694
      %v4696 = vrot.slane %v4548, 5
      %v4697 = vrot.slane %v4696, 4
      %v4698 = vrot.slane %v3823, 5
      %v4699 = vsel %vm1319, %v4697, %v4698
      %v4700 = vrot.slane %v4698, 4
      %v4701 = vrot.slane %v3824, 5
      %v4702 = vsel %vm1319, %v4700, %v4701
      %v4703 = vrot.slane %v4549, 5
      %v4704 = vrot.slane %v4703, 4
      %v4705 = vrot.slane %v3826, 5
      %v4706 = vsel %vm1319, %v4704, %v4705
      %v4707 = vrot.slane %v4705, 4
      %v4708 = vrot.slane %v3827, 5
      %v4709 = vsel %vm1319, %v4707, %v4708
      %s4710 = scalar_lea.vmem %s210, 512
      %v4711 = vld [vmem:[%s4710] sm:$0xf]
      %v4712 = vld [vmem:[%s4710 + $0x4] sm:$0xf]
      %v4713 = vld [vmem:[%s4710 + $0x8] sm:$0xf]
      %v4714 = vld [vmem:[%s4710 + $0xc] sm:$0xf]
      %v4715 = vld [vmem:[%s4710 + $0x10] sm:$0xf]
      %v4716 = vld [vmem:[%s4710 + $0x14] sm:$0xf]
      %v4717 = vld [vmem:[%s4710 + $0x18] sm:$0xf]
      %v4718 = vld [vmem:[%s4710 + $0x1c] sm:$0xf]
      %v4719 = vld [vmem:[%s4710 + $0x20] sm:$0xf]
      %v4720 = vld [vmem:[%s4710 + $0x24] sm:$0xf]
      %v4721 = vld [vmem:[%s4710 + $0x28] sm:$0xf]
      %v4722 = vld [vmem:[%s4710 + $0x2c] sm:$0xf]
      %v4723 = vld [vmem:[%s4710 + $0x30] sm:$0xf]
      %v4724 = vld [vmem:[%s4710 + $0x34] sm:$0xf]
      %v4725 = vld [vmem:[%s4710 + $0x38] sm:$0xf]
      %v4726 = vld [vmem:[%s4710 + $0x3c] sm:$0xf]
      %v4727 = vunpack.c.l.b16 %v4601
      %v4728 = vunpack.c.l.b16 %v4604
      %v4729 = vunpack.c.l.b16 %v4608
      %v4730 = vunpack.c.l.b16 %v4611
      %v4731 = vunpack.c.l.b16 %v4615
      %v4732 = vunpack.c.l.b16 %v4618
      %v4733 = vunpack.c.l.b16 %v4622
      %v4734 = vunpack.c.l.b16 %v4625
      %v4735 = vunpack.c.l.b16 %v4629
      %v4736 = vunpack.c.l.b16 %v4632
      %v4737 = vunpack.c.l.b16 %v4636
      %v4738 = vunpack.c.l.b16 %v4639
      %v4739 = vunpack.c.l.b16 %v4643
      %v4740 = vunpack.c.l.b16 %v4646
      %v4741 = vunpack.c.l.b16 %v4650
      %v4742 = vunpack.c.l.b16 %v4653
      %v4743 = vunpack.c.l.b16 %v4657
      %v4744 = vunpack.c.l.b16 %v4660
      %v4745 = vunpack.c.l.b16 %v4664
      %v4746 = vunpack.c.l.b16 %v4667
      %v4747 = vunpack.c.l.b16 %v4671
      %v4748 = vunpack.c.l.b16 %v4674
      %v4749 = vunpack.c.l.b16 %v4678
      %v4750 = vunpack.c.l.b16 %v4681
      %v4751 = vunpack.c.l.b16 %v4685
      %v4752 = vunpack.c.l.b16 %v4688
      %v4753 = vunpack.c.l.b16 %v4692
      %v4754 = vunpack.c.l.b16 %v4695
      %v4755 = vunpack.c.l.b16 %v4699
      %v4756 = vunpack.c.l.b16 %v4702
      %v4757 = vunpack.c.l.b16 %v4706
      %v4758 = vunpack.c.l.b16 %v4709
      %v4759 = vpack.c.b16 %v4728, %v4727
      %v4760 = vpack.c.b16 %v4730, %v4729
      %v4761 = vpack.c.b16 %v4732, %v4731
      %v4762 = vpack.c.b16 %v4734, %v4733
      %v4763 = vpack.c.b16 %v4736, %v4735
      %v4764 = vpack.c.b16 %v4738, %v4737
      %v4765 = vpack.c.b16 %v4740, %v4739
      %v4766 = vpack.c.b16 %v4742, %v4741
      %v4767 = vpack.c.b16 %v4744, %v4743
      %v4768 = vpack.c.b16 %v4746, %v4745
      %v4769 = vpack.c.b16 %v4748, %v4747
      %v4770 = vpack.c.b16 %v4750, %v4749
      %v4771 = vpack.c.b16 %v4752, %v4751
      %v4772 = vpack.c.b16 %v4754, %v4753
      %v4773 = vpack.c.b16 %v4756, %v4755
      %v4774 = vpack.c.b16 %v4758, %v4757
      %v4807 = vunpack.c.l.b16 %v4711
      %v4808 = vunpack.c.l.b16 %v4712
      %v4809 = vunpack.c.l.b16 %v4713
      %v4810 = vunpack.c.l.b16 %v4714
      %v4811 = vunpack.c.l.b16 %v4715
      %v4812 = vunpack.c.l.b16 %v4716
      %v4813 = vunpack.c.l.b16 %v4717
      %v4814 = vunpack.c.l.b16 %v4718
      %v4815 = vunpack.c.l.b16 %v4719
      %v4816 = vunpack.c.l.b16 %v4720
      %v4817 = vunpack.c.l.b16 %v4721
      %v4818 = vunpack.c.l.b16 %v4722
      %v4819 = vunpack.c.l.b16 %v4723
      %v4820 = vunpack.c.l.b16 %v4724
      %v4821 = vunpack.c.l.b16 %v4725
      %v4822 = vunpack.c.l.b16 %v4726
      %v4823 = vpack.c.b16 %v4808, %v4807
      %v4824 = vpack.c.b16 %v4810, %v4809
      %v4825 = vpack.c.b16 %v4812, %v4811
      %v4826 = vpack.c.b16 %v4814, %v4813
      %v4827 = vpack.c.b16 %v4816, %v4815
      %v4828 = vpack.c.b16 %v4818, %v4817
      %v4829 = vpack.c.b16 %v4820, %v4819
      %v4830 = vpack.c.b16 %v4822, %v4821
      %4839 = vmatprep.subr.bf16.mxu0 0
      %4840 = vmatpush1.bf16.msra.mxu0 %v4823
      %4841 = vmatprep.subr.bf16.mxu0 0
      %4842 = vmatpush1.bf16.msra.mxu0 %v4824
      %4843 = vmatprep.subr.bf16.mxu0 0
      %4844 = vmatpush1.bf16.msra.mxu0 %v4825
      %4845 = vmatprep.subr.bf16.mxu0 0
      %4846 = vmatpush1.bf16.msra.mxu0 %v4826
      %4847 = vmatprep.subr.bf16.mxu0 0
      %4848 = vmatpush1.bf16.msra.mxu0 %v4827
      %4849 = vmatprep.subr.bf16.mxu0 0
      %4850 = vmatpush1.bf16.msra.mxu0 %v4828
      %4851 = vmatprep.subr.bf16.mxu0 0
      %4852 = vmatpush1.bf16.msra.mxu0 %v4829
      %4853 = vmatprep.subr.bf16.mxu0 0
      %4854 = vmatpush1.bf16.msra.mxu0 %v4830
      %4855 = vmatprep.subr.bf16.mxu0 0
      %4856 = vmatpush1.bf16.msra.mxu0 0
      %4857 = vmatprep.subr.bf16.mxu0 0
      %4858 = vmatpush1.bf16.msra.mxu0 0
      %4859 = vmatprep.subr.bf16.mxu0 0
      %4860 = vmatpush1.bf16.msra.mxu0 0
      %4861 = vmatprep.subr.bf16.mxu0 0
      %4862 = vmatpush1.bf16.msra.mxu0 0
      %4863 = vmatprep.subr.bf16.mxu0 0
      %4864 = vmatpush1.bf16.msra.mxu0 0
      %4865 = vmatprep.subr.bf16.mxu0 0
      %4866 = vmatpush1.bf16.msra.mxu0 0
      %4867 = vmatprep.subr.bf16.mxu0 0
      %4868 = vmatpush1.bf16.msra.mxu0 0
      %4869 = vmatprep.subr.bf16.mxu0 0
      %4870 = vmatpush1.bf16.msra.mxu0 0
      %4871 = vmatprep.mubr.bf16.mxu0 0
      %4872 = vmatmul.mubr.bf16.gmra.mrb[0].mxu0 %v4759
      %v4873 = vpop.f32.mrb[0].mxu0
      %v4874 = vadd.f32 0.0, %v4873
      %v4875 = vpop.f32.mrb[0].mxu0
      %v4876 = vpop.f32.mrb[0].mxu0
      %v4877 = vadd.f32 0.0, %v4876
      %v4878 = vpop.f32.mrb[0].mxu0
      %4879 = vmatprep.mubr.bf16.mxu0 0
      %4880 = vmatmul.mubr.bf16.gmra.mrb[0].mxu0 %v4760
      %v4881 = vpop.f32.mrb[0].mxu0
      %v4882 = vadd.f32 0.0, %v4881
      %v4883 = vpop.f32.mrb[0].mxu0
      %v4884 = vpop.f32.mrb[0].mxu0
      %v4885 = vadd.f32 0.0, %v4884
      %v4886 = vpop.f32.mrb[0].mxu0
      %4887 = vmatprep.mubr.bf16.mxu0 0
      %4888 = vmatmul.mubr.bf16.gmra.mrb[0].mxu0 %v4761
      %v4889 = vpop.f32.mrb[0].mxu0
      %v4890 = vadd.f32 0.0, %v4889
      %v4891 = vpop.f32.mrb[0].mxu0
      %v4892 = vpop.f32.mrb[0].mxu0
      %v4893 = vadd.f32 0.0, %v4892
      %v4894 = vpop.f32.mrb[0].mxu0
      %4895 = vmatprep.mubr.bf16.mxu0 0
      %4896 = vmatmul.mubr.bf16.gmra.mrb[0].mxu0 %v4762
      %v4897 = vpop.f32.mrb[0].mxu0
      %v4898 = vadd.f32 0.0, %v4897
      %v4899 = vpop.f32.mrb[0].mxu0
      %v4900 = vpop.f32.mrb[0].mxu0
      %v4901 = vadd.f32 0.0, %v4900
      %v4902 = vpop.f32.mrb[0].mxu0
      %4903 = vmatprep.mubr.bf16.mxu0 0
      %4904 = vmatmul.mubr.bf16.gmra.mrb[0].mxu0 %v4763
      %v4905 = vpop.f32.mrb[0].mxu0
      %v4906 = vadd.f32 0.0, %v4905
      %v4907 = vpop.f32.mrb[0].mxu0
      %v4908 = vpop.f32.mrb[0].mxu0
      %v4909 = vadd.f32 0.0, %v4908
      %v4910 = vpop.f32.mrb[0].mxu0
      %4911 = vmatprep.mubr.bf16.mxu0 0
      %4912 = vmatmul.mubr.bf16.gmra.mrb[0].mxu0 %v4764
      %v4913 = vpop.f32.mrb[0].mxu0
      %v4914 = vadd.f32 0.0, %v4913
      %v4915 = vpop.f32.mrb[0].mxu0
      %v4916 = vpop.f32.mrb[0].mxu0
      %v4917 = vadd.f32 0.0, %v4916
      %v4918 = vpop.f32.mrb[0].mxu0
      %4919 = vmatprep.mubr.bf16.mxu0 0
      %4920 = vmatmul.mubr.bf16.gmra.mrb[0].mxu0 %v4765
      %v4921 = vpop.f32.mrb[0].mxu0
      %v4922 = vadd.f32 0.0, %v4921
      %v4923 = vpop.f32.mrb[0].mxu0
      %v4924 = vpop.f32.mrb[0].mxu0
      %v4925 = vadd.f32 0.0, %v4924
      %v4926 = vpop.f32.mrb[0].mxu0
      %4927 = vmatprep.mubr.bf16.mxu0 0
      %4928 = vmatmul.mubr.bf16.gmra.mrb[0].mxu0 %v4766
      %v4929 = vpop.f32.mrb[0].mxu0
      %v4930 = vadd.f32 0.0, %v4929
      %v4931 = vpop.f32.mrb[0].mxu0
      %v4932 = vpop.f32.mrb[0].mxu0
      %v4933 = vadd.f32 0.0, %v4932
      %v4934 = vpop.f32.mrb[0].mxu0
      %4935 = vmatprep.mubr.bf16.mxu0 0
      %4936 = vmatmul.mubr.bf16.gmra.mrb[0].mxu0 %v4767
      %v4937 = vpop.f32.mrb[0].mxu0
      %v4938 = vadd.f32 0.0, %v4937
      %v4939 = vpop.f32.mrb[0].mxu0
      %v4940 = vpop.f32.mrb[0].mxu0
      %v4941 = vadd.f32 0.0, %v4940
      %v4942 = vpop.f32.mrb[0].mxu0
      %4943 = vmatprep.mubr.bf16.mxu0 0
      %4944 = vmatmul.mubr.bf16.gmra.mrb[0].mxu0 %v4768
      %v4945 = vpop.f32.mrb[0].mxu0
      %v4946 = vadd.f32 0.0, %v4945
      %v4947 = vpop.f32.mrb[0].mxu0
      %v4948 = vpop.f32.mrb[0].mxu0
      %v4949 = vadd.f32 0.0, %v4948
      %v4950 = vpop.f32.mrb[0].mxu0
      %4951 = vmatprep.mubr.bf16.mxu0 0
      %4952 = vmatmul.mubr.bf16.gmra.mrb[0].mxu0 %v4769
      %v4953 = vpop.f32.mrb[0].mxu0
      %v4954 = vadd.f32 0.0, %v4953
      %v4955 = vpop.f32.mrb[0].mxu0
      %v4956 = vpop.f32.mrb[0].mxu0
      %v4957 = vadd.f32 0.0, %v4956
      %v4958 = vpop.f32.mrb[0].mxu0
      %4959 = vmatprep.mubr.bf16.mxu0 0
      %4960 = vmatmul.mubr.bf16.gmra.mrb[0].mxu0 %v4770
      %v4961 = vpop.f32.mrb[0].mxu0
      %v4962 = vadd.f32 0.0, %v4961
      %v4963 = vpop.f32.mrb[0].mxu0
      %v4964 = vpop.f32.mrb[0].mxu0
      %v4965 = vadd.f32 0.0, %v4964
      %v4966 = vpop.f32.mrb[0].mxu0
      %4967 = vmatprep.mubr.bf16.mxu0 0
      %4968 = vmatmul.mubr.bf16.gmra.mrb[0].mxu0 %v4771
      %v4969 = vpop.f32.mrb[0].mxu0
      %v4970 = vadd.f32 0.0, %v4969
      %v4971 = vpop.f32.mrb[0].mxu0
      %v4972 = vpop.f32.mrb[0].mxu0
      %v4973 = vadd.f32 0.0, %v4972
      %v4974 = vpop.f32.mrb[0].mxu0
      %4975 = vmatprep.mubr.bf16.mxu0 0
      %4976 = vmatmul.mubr.bf16.gmra.mrb[0].mxu0 %v4772
      %v4977 = vpop.f32.mrb[0].mxu0
      %v4978 = vadd.f32 0.0, %v4977
      %v4979 = vpop.f32.mrb[0].mxu0
      %v4980 = vpop.f32.mrb[0].mxu0
      %v4981 = vadd.f32 0.0, %v4980
      %v4982 = vpop.f32.mrb[0].mxu0
      %4983 = vmatprep.mubr.bf16.mxu0 0
      %4984 = vmatmul.mubr.bf16.gmra.mrb[0].mxu0 %v4773
      %v4985 = vpop.f32.mrb[0].mxu0
      %v4986 = vadd.f32 0.0, %v4985
      %v4987 = vpop.f32.mrb[0].mxu0
      %v4988 = vpop.f32.mrb[0].mxu0
      %v4989 = vadd.f32 0.0, %v4988
      %v4990 = vpop.f32.mrb[0].mxu0
      %4991 = vmatprep.mubr.bf16.mxu0 0
      %4992 = vmatmul.mubr.bf16.gmra.mrb[0].mxu0 %v4774
      %v4993 = vpop.f32.mrb[0].mxu0
      %v4994 = vadd.f32 0.0, %v4993
      %v4995 = vpop.f32.mrb[0].mxu0
      %v4996 = vpop.f32.mrb[0].mxu0
      %v4997 = vadd.f32 0.0, %v4996
      %v4998 = vpop.f32.mrb[0].mxu0
      %4999 = vdwg.mxu0
      %v5000 = vadd.f32 %v4502, %v4874
      %v5001 = vadd.f32 %v4503, %v4877
      %v5002 = vadd.f32 %v4504, %v4882
      %v5003 = vadd.f32 %v4505, %v4885
      %v5004 = vadd.f32 %v4506, %v4890
      %v5005 = vadd.f32 %v4507, %v4893
      %v5006 = vadd.f32 %v4508, %v4898
      %v5007 = vadd.f32 %v4509, %v4901
      %v5008 = vadd.f32 %v4510, %v4906
      %v5009 = vadd.f32 %v4511, %v4909
      %v5010 = vadd.f32 %v4512, %v4914
      %v5011 = vadd.f32 %v4513, %v4917
      %v5012 = vadd.f32 %v4514, %v4922
      %v5013 = vadd.f32 %v4515, %v4925
      %v5014 = vadd.f32 %v4516, %v4930
      %v5015 = vadd.f32 %v4517, %v4933
      %v5016 = vadd.f32 %v4518, %v4938
      %v5017 = vadd.f32 %v4519, %v4941
      %v5018 = vadd.f32 %v4520, %v4946
      %v5019 = vadd.f32 %v4521, %v4949
      %v5020 = vadd.f32 %v4522, %v4954
      %v5021 = vadd.f32 %v4523, %v4957
      %v5022 = vadd.f32 %v4524, %v4962
      %v5023 = vadd.f32 %v4525, %v4965
      %v5024 = vadd.f32 %v4526, %v4970
      %v5025 = vadd.f32 %v4527, %v4973
      %v5026 = vadd.f32 %v4528, %v4978
      %v5027 = vadd.f32 %v4529, %v4981
      %v5028 = vadd.f32 %v4530, %v4986
      %v5029 = vadd.f32 %v4531, %v4989
      %v5030 = vadd.f32 %v4532, %v4994
      %v5031 = vadd.f32 %v4533, %v4997
      %v5032 = vld [vmem:[%s213] sm:$0x1]
      %v5034 = vlaneseq
      %v5035 = vshrl.u32 %v5034, 7
      %v5036 = vsub.s32 0, %v5035
      %v5037 = vrot.slane %v5032, %v5036
      %v5039 = vadd.f32 %v5000, %v5037
      %v5040 = vadd.f32 %v5001, %v5037
      %v5041 = vadd.f32 %v5002, %v5037
      %v5042 = vadd.f32 %v5003, %v5037
      %v5043 = vadd.f32 %v5004, %v5037
      %v5044 = vadd.f32 %v5005, %v5037
      %v5045 = vadd.f32 %v5006, %v5037
      %v5046 = vadd.f32 %v5007, %v5037
      %v5047 = vadd.f32 %v5008, %v5037
      %v5048 = vadd.f32 %v5009, %v5037
      %v5049 = vadd.f32 %v5010, %v5037
      %v5050 = vadd.f32 %v5011, %v5037
      %v5051 = vadd.f32 %v5012, %v5037
      %v5052 = vadd.f32 %v5013, %v5037
      %v5053 = vadd.f32 %v5014, %v5037
      %v5054 = vadd.f32 %v5015, %v5037
      %v5055 = vadd.f32 %v5016, %v5037
      %v5056 = vadd.f32 %v5017, %v5037
      %v5057 = vadd.f32 %v5018, %v5037
      %v5058 = vadd.f32 %v5019, %v5037
      %v5059 = vadd.f32 %v5020, %v5037
      %v5060 = vadd.f32 %v5021, %v5037
      %v5061 = vadd.f32 %v5022, %v5037
      %v5062 = vadd.f32 %v5023, %v5037
      %v5063 = vadd.f32 %v5024, %v5037
      %v5064 = vadd.f32 %v5025, %v5037
      %v5065 = vadd.f32 %v5026, %v5037
      %v5066 = vadd.f32 %v5027, %v5037
      %v5067 = vadd.f32 %v5028, %v5037
      %v5068 = vadd.f32 %v5029, %v5037
      %v5069 = vadd.f32 %v5030, %v5037
      %v5070 = vadd.f32 %v5031, %v5037
      %v5071 = vmax.f32 %v5039, 0.0
      %v5072 = vmax.f32 %v5040, 0.0
      %v5073 = vmax.f32 %v5041, 0.0
      %v5074 = vmax.f32 %v5042, 0.0
      %v5075 = vmax.f32 %v5043, 0.0
      %v5076 = vmax.f32 %v5044, 0.0
      %v5077 = vmax.f32 %v5045, 0.0
      %v5078 = vmax.f32 %v5046, 0.0
      %v5079 = vmax.f32 %v5047, 0.0
      %v5080 = vmax.f32 %v5048, 0.0
      %v5081 = vmax.f32 %v5049, 0.0
      %v5082 = vmax.f32 %v5050, 0.0
      %v5083 = vmax.f32 %v5051, 0.0
      %v5084 = vmax.f32 %v5052, 0.0
      %v5085 = vmax.f32 %v5053, 0.0
      %v5086 = vmax.f32 %v5054, 0.0
      %v5087 = vmax.f32 %v5055, 0.0
      %v5088 = vmax.f32 %v5056, 0.0
      %v5089 = vmax.f32 %v5057, 0.0
      %v5090 = vmax.f32 %v5058, 0.0
      %v5091 = vmax.f32 %v5059, 0.0
      %v5092 = vmax.f32 %v5060, 0.0
      %v5093 = vmax.f32 %v5061, 0.0
      %v5094 = vmax.f32 %v5062, 0.0
      %v5095 = vmax.f32 %v5063, 0.0
      %v5096 = vmax.f32 %v5064, 0.0
      %v5097 = vmax.f32 %v5065, 0.0
      %v5098 = vmax.f32 %v5066, 0.0
      %v5099 = vmax.f32 %v5067, 0.0
      %v5100 = vmax.f32 %v5068, 0.0
      %v5101 = vmax.f32 %v5069, 0.0
      %v5102 = vmax.f32 %v5070, 0.0
      %v5103 = vpack.c.bf16 %v5072, %v5071
      %v5104 = vpack.c.bf16 %v5074, %v5073
      %v5105 = vpack.c.bf16 %v5076, %v5075
      %v5106 = vpack.c.bf16 %v5078, %v5077
      %v5107 = vpack.c.bf16 %v5080, %v5079
      %v5108 = vpack.c.bf16 %v5082, %v5081
      %v5109 = vpack.c.bf16 %v5084, %v5083
      %v5110 = vpack.c.bf16 %v5086, %v5085
      %v5111 = vpack.c.bf16 %v5088, %v5087
      %v5112 = vpack.c.bf16 %v5090, %v5089
      %v5113 = vpack.c.bf16 %v5092, %v5091
      %v5114 = vpack.c.bf16 %v5094, %v5093
      %v5115 = vpack.c.bf16 %v5096, %v5095
      %v5116 = vpack.c.bf16 %v5098, %v5097
      %v5117 = vpack.c.bf16 %v5100, %v5099
      %v5118 = vpack.c.bf16 %v5102, %v5101
      %v5135 = vunpack.c.l.b16 %v5103
      %v5136 = vunpack.c.h.b16 %v5103
      %v5137 = vunpack.c.l.b16 %v5104
      %v5138 = vunpack.c.h.b16 %v5104
      %v5139 = vunpack.c.l.b16 %v5105
      %v5140 = vunpack.c.h.b16 %v5105
      %v5141 = vunpack.c.l.b16 %v5106
      %v5142 = vunpack.c.h.b16 %v5106
      %v5143 = vunpack.c.l.b16 %v5107
      %v5144 = vunpack.c.h.b16 %v5107
      %v5145 = vunpack.c.l.b16 %v5108
      %v5146 = vunpack.c.h.b16 %v5108
      %v5147 = vunpack.c.l.b16 %v5109
      %v5148 = vunpack.c.h.b16 %v5109
      %v5149 = vunpack.c.l.b16 %v5110
      %v5150 = vunpack.c.h.b16 %v5110
      %v5151 = vunpack.c.l.b16 %v5111
      %v5152 = vunpack.c.h.b16 %v5111
      %v5153 = vunpack.c.l.b16 %v5112
      %v5154 = vunpack.c.h.b16 %v5112
      %v5155 = vunpack.c.l.b16 %v5113
      %v5156 = vunpack.c.h.b16 %v5113
      %v5157 = vunpack.c.l.b16 %v5114
      %v5158 = vunpack.c.h.b16 %v5114
      %v5159 = vunpack.c.l.b16 %v5115
      %v5160 = vunpack.c.h.b16 %v5115
      %v5161 = vunpack.c.l.b16 %v5116
      %v5162 = vunpack.c.h.b16 %v5116
      %v5163 = vunpack.c.l.b16 %v5117
      %v5164 = vunpack.c.h.b16 %v5117
      %v5165 = vunpack.c.l.b16 %v5118
      %v5166 = vunpack.c.h.b16 %v5118
      %v5167 = vpack.c.b16 %v5135, %v5135
      %v5168 = vpack.c.b16 %v5136, %v5136
      %v5169 = vpack.c.b16 %v5137, %v5137
      %v5170 = vpack.c.b16 %v5138, %v5138
      %v5171 = vpack.c.b16 %v5139, %v5139
      %v5172 = vpack.c.b16 %v5140, %v5140
      %v5173 = vpack.c.b16 %v5141, %v5141
      %v5174 = vpack.c.b16 %v5142, %v5142
      %v5175 = vpack.c.b16 %v5143, %v5143
      %v5176 = vpack.c.b16 %v5144, %v5144
      %v5177 = vpack.c.b16 %v5145, %v5145
      %v5178 = vpack.c.b16 %v5146, %v5146
      %v5179 = vpack.c.b16 %v5147, %v5147
      %v5180 = vpack.c.b16 %v5148, %v5148
      %v5181 = vpack.c.b16 %v5149, %v5149
      %v5182 = vpack.c.b16 %v5150, %v5150
      %v5183 = vpack.c.b16 %v5151, %v5151
      %v5184 = vpack.c.b16 %v5152, %v5152
      %v5185 = vpack.c.b16 %v5153, %v5153
      %v5186 = vpack.c.b16 %v5154, %v5154
      %v5187 = vpack.c.b16 %v5155, %v5155
      %v5188 = vpack.c.b16 %v5156, %v5156
      %v5189 = vpack.c.b16 %v5157, %v5157
      %v5190 = vpack.c.b16 %v5158, %v5158
      %v5191 = vpack.c.b16 %v5159, %v5159
      %v5192 = vpack.c.b16 %v5160, %v5160
      %v5193 = vpack.c.b16 %v5161, %v5161
      %v5194 = vpack.c.b16 %v5162, %v5162
      %v5195 = vpack.c.b16 %v5163, %v5163
      %v5196 = vpack.c.b16 %v5164, %v5164
      %v5197 = vpack.c.b16 %v5165, %v5165
      %v5198 = vpack.c.b16 %v5166, %v5166
      %5231 = vst [vmem:[%s221] sm:$0xf] %v5167
      %5232 = vst [vmem:[%s221 + $0x4] sm:$0xf] %v5168
      %5233 = vst [vmem:[%s221 + $0x8] sm:$0xf] %v5169
      %5234 = vst [vmem:[%s221 + $0xc] sm:$0xf] %v5170
      %5235 = vst [vmem:[%s221 + $0x10] sm:$0xf] %v5171
      %5236 = vst [vmem:[%s221 + $0x14] sm:$0xf] %v5172
      %5237 = vst [vmem:[%s221 + $0x18] sm:$0xf] %v5173
      %5238 = vst [vmem:[%s221 + $0x1c] sm:$0xf] %v5174
      %5239 = vst [vmem:[%s221 + $0x20] sm:$0xf] %v5175
      %5240 = vst [vmem:[%s221 + $0x24] sm:$0xf] %v5176
      %5241 = vst [vmem:[%s221 + $0x28] sm:$0xf] %v5177
      %5242 = vst [vmem:[%s221 + $0x2c] sm:$0xf] %v5178
      %5243 = vst [vmem:[%s221 + $0x30] sm:$0xf] %v5179
      %5244 = vst [vmem:[%s221 + $0x34] sm:$0xf] %v5180
      %5245 = vst [vmem:[%s221 + $0x38] sm:$0xf] %v5181
      %5246 = vst [vmem:[%s221 + $0x3c] sm:$0xf] %v5182
      %5247 = vst [vmem:[%s221 + $0x40] sm:$0xf] %v5183
      %5248 = vst [vmem:[%s221 + $0x44] sm:$0xf] %v5184
      %5249 = vst [vmem:[%s221 + $0x48] sm:$0xf] %v5185
      %5250 = vst [vmem:[%s221 + $0x4c] sm:$0xf] %v5186
      %5251 = vst [vmem:[%s221 + $0x50] sm:$0xf] %v5187
      %5252 = vst [vmem:[%s221 + $0x54] sm:$0xf] %v5188
      %5253 = vst [vmem:[%s221 + $0x58] sm:$0xf] %v5189
      %5254 = vst [vmem:[%s221 + $0x5c] sm:$0xf] %v5190
      %5255 = vst [vmem:[%s221 + $0x60] sm:$0xf] %v5191
      %5256 = vst [vmem:[%s221 + $0x64] sm:$0xf] %v5192
      %5257 = vst [vmem:[%s221 + $0x68] sm:$0xf] %v5193
      %5258 = vst [vmem:[%s221 + $0x6c] sm:$0xf] %v5194
      %5259 = vst [vmem:[%s221 + $0x70] sm:$0xf] %v5195
      %5260 = vst [vmem:[%s221 + $0x74] sm:$0xf] %v5196
      %5261 = vst [vmem:[%s221 + $0x78] sm:$0xf] %v5197
      %5262 = vst [vmem:[%s221 + $0x7c] sm:$0xf] %v5198
      %p5263 = scmp.lt.s32.totalorder %s18, 1
      %s5264 = scalar_select %p5263, %s18, 1
      %p5265 = scmp.lt.s32.totalorder %s19, 0
      %s5266 = scalar_select %p5265, %s19, 0
      %s5267 = smul.addr %s5264, 32
      %s5268 = sadd.s32 %s5266, %s5267
      %s5269 = smul.addr %s5268, 4
      %s5270 = scalar_lea.vmem %s3, %s5269
      // Predicated region
      $region33: #{basic_block_forward.2} parent=31 // pred_check
        %p5271 = pneg %p124
      $region34: #{basic_block_forward.2} parent=31 // pred_check_branch
        %5273 = sbr.rel (%p5271) target = $region36
      $region35: #{basic_block_forward.2} parent=31 // pred_region
        _
      $region36: #{basic_block_forward.2} parent=31 // pred_fallthru
        _
    $region32: #{basic_block_forward.2} parent=5 // pred_fallthru
      _
    %p5274 = scmp.le.s32.totalorder 2, %s9
    // Predicated region
    $region37: #{basic_block_forward.2} parent=5 // pred_check
      %p5275 = pneg %p5274
    $region38: #{basic_block_forward.2} parent=5 // pred_check_branch
      %5277 = sbr.rel (%p5275) target = $region40
    $region39: #{basic_block_forward.2} parent=5 // pred_region
      %s5278 = ssub.s32 %s9, 2
      // Predicated region
      $region41: #{basic_block_forward.2} parent=39 // pred_check
        %p5279 = pneg %p130
      $region42: #{basic_block_forward.2} parent=39 // pred_check_branch
        %5281 = sbr.rel (%p5279) target = $region44
      $region43: #{basic_block_forward.2} parent=39 // pred_region
        %p5282 = scmp.lt.s32.totalorder %s20, 1
        %s5283 = scalar_select %p5282, %s20, 1
        %p5284 = scmp.lt.s32.totalorder %s21, 0
        %s5285 = scalar_select %p5284, %s21, 0
        %s5286 = smul.addr %s5283, 32
        %s5287 = sadd.s32 %s5285, %s5286
        %s5288 = smul.addr %s5287, 4
        %s5289 = scalar_lea.vmem %s3, %s5288
      $region44: #{basic_block_forward.2} parent=39 // pred_fallthru
        _
    $region40: #{basic_block_forward.2} parent=5 // pred_fallthru
      _
  $region6: #{basic_block_forward.2} parent=0 // loop_footer
    %s13 = sadd.s32 1, %s9
  $region7: #{basic_block_forward.2} parent=0 // loop_footer_branch
    %8 = sbr.rel target = $region3
  $region8: #{basic_block_forward.2} parent=0 // loop_exit
    _

</llo_original>
